<compile_context>
chip_gen: v5e
topology: v5e:2x2
jax: 0.10.0
libtpu: 0.0.40
codegen_flags: <defaults>
</compile_context>

<pallas_src>
import jax
import jax.numpy as jnp
from jax.experimental import pallas as pl
from jax.experimental.pallas import tpu as pltpu

K = 3        # conv kernel size
PAD = 1      # conv spatial padding
EPS = 1e-5   # BatchNorm3d eps
LANE = 128   # TPU lane width


# ----------------------------------------------------------------------------
# small helpers
# ----------------------------------------------------------------------------
def _round_up(x, m):
    return ((x + m - 1) // m) * m


def _vmem_budget():
    """Per-chip VMEM budget (bytes): ~75% of physical capacity, 48 MiB fallback."""
    cap = 64 * 1024 * 1024
    try:
        info = pltpu.get_tpu_info()
        cap = int(getattr(info, "vmem_capacity_bytes", cap))
    except Exception:
        pass
    return int(cap * 0.75)


def _plan_tiles(M, Kc, Cpad, in_dtype, y_dtype, budget):
    """Largest (tm, tk) whose double-buffered working set fits the VMEM budget."""
    ib = jnp.dtype(in_dtype).itemsize
    yb = jnp.dtype(y_dtype).itemsize
    tm_cands = [t for t in (1024, 512, 256, 128, 64, 32, 16, 8)
                if t <= max(_round_up(M, 8), 8)]
    # tk must be a multiple of LANE that divides Kc (Kc is a multiple of LANE).
    tk_cands = [t for t in range(Kc, 0, -LANE) if Kc % t == 0]
    for tm in tm_cands:
        for tk in tk_cands:
            need = (2 * tm * tk * ib          # double-buffered patch tiles
                    + 2 * tk * Cpad * ib      # double-buffered weight tiles
                    + 2 * tm * Cpad * yb      # double-buffered y output tiles
                    + 2 * 8 * Cpad * 4        # stats output tiles
                    + tm * Cpad * 4)          # f32 accumulator scratch
            if need <= budget * 0.85:
                return tm, tk
    return 8, LANE


# ----------------------------------------------------------------------------
# Pallas kernels
# ----------------------------------------------------------------------------
def _conv_stats_kernel(p_ref, w_ref, y_ref, stats_ref, acc_ref):
    """im2col matmul tile with K-axis accumulation + fused one-pass BN partials.

    p_ref:     (TM, TK)   im2col patches tile (compute dtype)
    w_ref:     (TK, Cpad) folded conv weight tile (compute dtype)
    y_ref:     (TM, Cpad) conv output tile (compute dtype), written at last k
    stats_ref: (8, Cpad)  row 0 = per-channel sum, row 1 = sum of squares
    acc_ref:   (TM, Cpad) f32 accumulator scratch
    """
    @pl.when(pl.program_id(1) == 0)
    def _():
        acc_ref[...] = jnp.zeros_like(acc_ref)

    acc_ref[...] += jnp.dot(p_ref[...], w_ref[...],
                            preferred_element_type=jnp.float32)

    @pl.when(pl.program_id(1) == pl.num_programs(1) - 1)
    def _():
        acc = acc_ref[...]
        y_ref[...] = acc.astype(y_ref.dtype)
        s = jnp.sum(acc, axis=0, keepdims=True)            # (1, Cpad)
        sq = jnp.sum(acc * acc, axis=0, keepdims=True)     # (1, Cpad)
        pad_rows = jnp.zeros((6, acc.shape[1]), jnp.float32)
        stats_ref[...] = jnp.concatenate([s, sq, pad_rows], axis=0)


def _bn_relu_kernel(y_ref, scale_ref, shift_ref, o_ref):
    """Per-channel affine (BN folded into scale/shift, rsqrt precomputed) + ReLU."""
    y = y_ref[...].astype(jnp.float32) * scale_ref[...] + shift_ref[...]
    o_ref[...] = jnp.maximum(y, 0.0).astype(o_ref.dtype)


# ----------------------------------------------------------------------------
# pallas_call wrappers
# ----------------------------------------------------------------------------
def _conv_with_stats(patches, weights, tm, tk, y_dtype, vmem_limit):
    """patches (Mp, Kc) @ weights (Kc, Cpad) -> y (Mp, Cpad) in y_dtype, plus
    per-channel sum / sum-of-squares taken from the f32 accumulator."""
    Mp, Kc = patches.shape
    Cpad = weights.shape[1]
    m_tiles, k_tiles = Mp // tm, Kc // tk

    y, stats = pl.pallas_call(
        _conv_stats_kernel,
        grid=(m_tiles, k_tiles),
        out_shape=(jax.ShapeDtypeStruct((Mp, Cpad), y_dtype),
                   jax.ShapeDtypeStruct((m_tiles * 8, Cpad), jnp.float32)),
        in_specs=[pl.BlockSpec((tm, tk), lambda i, k: (i, k)),
                  pl.BlockSpec((tk, Cpad), lambda i, k: (k, 0))],
        out_specs=(pl.BlockSpec((tm, Cpad), lambda i, k: (i, 0)),
                   pl.BlockSpec((8, Cpad), lambda i, k: (i, 0))),
        scratch_shapes=[pltpu.VMEM((tm, Cpad), jnp.float32)],
        compiler_params=pltpu.CompilerParams(
            dimension_semantics=("parallel", "arbitrary"),
            vmem_limit_bytes=int(vmem_limit)),
    )(patches, weights)

    stats = stats.reshape(m_tiles, 8, Cpad)
    col_sum = jnp.sum(stats[:, 0, :], axis=0)
    col_sumsq = jnp.sum(stats[:, 1, :], axis=0)
    return y, col_sum, col_sumsq


def _bn_relu(y, scale, shift, out_dtype, vmem_limit):
    """Apply y*scale + shift then ReLU, tiled over rows (lane-dense). Writes in
    place over y (input_output_aliases) when dtypes match."""
    Mp, Cpad = y.shape
    yb = jnp.dtype(y.dtype).itemsize
    ob = jnp.dtype(out_dtype).itemsize
    tm = 8
    for t in (2048, 1024, 512, 256, 128, 64, 32, 16, 8):
        if Mp % t == 0 and 2 * t * Cpad * (yb + ob) + 4 * Cpad * 4 <= vmem_limit * 0.85:
            tm = t
            break
    aliases = {0: 0} if jnp.dtype(y.dtype) == jnp.dtype(out_dtype) else {}

    return pl.pallas_call(
        _bn_relu_kernel,
        grid=(Mp // tm,),
        out_shape=jax.ShapeDtypeStruct((Mp, Cpad), out_dtype),
        in_specs=[pl.BlockSpec((tm, Cpad), lambda i: (i, 0)),
                  pl.BlockSpec((1, Cpad), lambda i: (0, 0)),
                  pl.BlockSpec((1, Cpad), lambda i: (0, 0))],
        out_specs=pl.BlockSpec((tm, Cpad), lambda i: (i, 0)),
        input_output_aliases=aliases,
        compiler_params=pltpu.CompilerParams(
            dimension_semantics=("parallel",),
            vmem_limit_bytes=int(vmem_limit)),
    )(y, scale, shift)


# ----------------------------------------------------------------------------
# layout plumbing (no FLOPs) + BN finalize
# ----------------------------------------------------------------------------
def _im2col_3d(x_ndhwc):
    """(N, D, H, W, C) -> (N*D*H*W, 27*C), zero spatial padding folded in.
    Dtype of x (compute dtype) is preserved throughout."""
    N, D, H, W, C = x_ndhwc.shape
    xp = jnp.pad(x_ndhwc, ((0, 0), (PAD, PAD), (PAD, PAD), (PAD, PAD), (0, 0)))
    cols = [xp[:, kd:kd + D, kh:kh + H, kw:kw + W, :]
            for kd in range(K) for kh in range(K) for kw in range(K)]
    patches = jnp.concatenate(cols, axis=-1)          # (N, D, H, W, 27*C)
    return patches.reshape(N * D * H * W, K * K * K * C)


def _pad2d(a, rows, cols):
    return jnp.pad(a, ((0, rows - a.shape[0]), (0, cols - a.shape[1])))


def _fold_conv_weights(w, Kc, Cpad, dtype):
    """(Cout, Cin, 3, 3, 3) -> (Kc, Cpad) matching the im2col column order."""
    Ci, Co = w.shape[1], w.shape[0]
    wf = jnp.transpose(w, (2, 3, 4, 1, 0)).reshape(K * K * K * Ci, Co)
    return _pad2d(wf, Kc, Cpad).astype(dtype)


def _bn_scale_shift(col_sum, col_sumsq, gamma, beta, M, Cpad):
    """Global training-mode BN stats (biased var) -> per-channel scale/shift.
    Padded channels get scale=shift=0 so they stay exactly zero."""
    C = gamma.shape[0]
    mean = col_sum[:C] / M
    var = jnp.maximum(col_sumsq[:C] / M - mean * mean, 0.0)
    inv = gamma * jax.lax.rsqrt(var + EPS)
    scale = jnp.pad(inv, (0, Cpad - C)).reshape(1, Cpad)
    shift = jnp.pad(beta - mean * inv, (0, Cpad - C)).reshape(1, Cpad)
    return scale.astype(jnp.float32), shift.astype(jnp.float32)


# ----------------------------------------------------------------------------
# public forward
# ----------------------------------------------------------------------------
def double_conv(x_ncdhw, w1, g1, b1, w2, g2, b2, *, compute_dtype=jnp.bfloat16):
    """Forward of DoubleConv (Conv3d(bias=False)->BN3d->ReLU) x 2.

    x_ncdhw: (N, Cin, D, H, W); w*: PyTorch Conv3d weights (Co, Ci, 3, 3, 3);
    g*/b*: BatchNorm3d weight/bias. Returns (N, Cout, D, H, W) float32.
    compute_dtype is the MXU-input / activation-storage dtype (default bf16;
    accumulation and all BN math stay in float32 on every chip generation).
    """
    N, Cin, D, H, W = x_ncdhw.shape
    Cmid, Cout = w1.shape[0], w2.shape[0]
    M = N * D * H * W
    Cmid_pad = _round_up(Cmid, LANE)
    Cout_pad = _round_up(Cout, LANE)
    K1 = _round_up(K * K * K * Cin, LANE)     # 27*Cin  -> lane-padded
    K2 = _round_up(K * K * K * Cmid, LANE)    # 27*Cmid -> lane-padded
    budget = _vmem_budget()

    # ---- conv #1: one K-tiled matmul per M tile, fused sum/sumsq partials ---
    x_ndhwc = jnp.transpose(x_ncdhw, (0, 2, 3, 4, 1)).astype(compute_dtype)
    tm1, tk1 = _plan_tiles(M, K1, Cmid_pad, compute_dtype, compute_dtype, budget)
    Mp1 = _round_up(M, tm1)                   # zero rows: 0 conv output, 0 stats
    p1 = _pad2d(_im2col_3d(x_ndhwc), Mp1, K1)
    w1f = _fold_conv_weights(w1, K1, Cmid_pad, compute_dtype)
    y1, s1, ss1 = _conv_with_stats(p1, w1f, tm1, tk1, compute_dtype, budget)
    scale1, shift1 = _bn_scale_shift(s1, ss1, g1, b1, M, Cmid_pad)
    a1 = _bn_relu(y1, scale1, shift1, compute_dtype, budget)     # in place over y1

    # ---- conv #2 -------------------------------------------------------------
    a1_sp = a1[:M, :Cmid].reshape(N, D, H, W, Cmid)
    tm2, tk2 = _plan_tiles(M, K2, Cout_pad, compute_dtype, compute_dtype, budget)
    Mp2 = _round_up(M, tm2)
    p2 = _pad2d(_im2col_3d(a1_sp), Mp2, K2)
    w2f = _fold_conv_weights(w2, K2, Cout_pad, compute_dtype)
    y2, s2, ss2 = _conv_with_stats(p2, w2f, tm2, tk2, compute_dtype, budget)
    scale2, shift2 = _bn_scale_shift(s2, ss2, g2, b2, M, Cout_pad)
    out = _bn_relu(y2, scale2, shift2, jnp.float32, budget)      # (Mp2, Cout_pad)

    out = out[:M, :Cout].reshape(N, D, H, W, Cout)
    return jnp.transpose(out, (0, 4, 1, 2, 3))                   # back to NCDHW


# ----------------------------------------------------------------------------
# plain-JAX reference (PyTorch semantics, NCDHW)
# ----------------------------------------------------------------------------
def reference_double_conv(x, w1, g1, b1, w2, g2, b2):
    def conv(x, w):
        return jax.lax.conv_general_dilated(
            x, w, window_strides=(1, 1, 1), padding=[(PAD, PAD)] * 3,
            dimension_numbers=("NCDHW", "OIDHW", "NCDHW"))

    def bn_relu(x, g, b):
        mean = jnp.mean(x, axis=(0, 2, 3, 4), keepdims=True)
        var = jnp.mean((x - mean) ** 2, axis=(0, 2, 3, 4), keepdims=True)
        y = (x - mean) * jax.lax.rsqrt(var + EPS)
        y = y * g.reshape(1, -1, 1, 1, 1) + b.reshape(1, -1, 1, 1, 1)
        return jnp.maximum(y, 0.0)

    y = bn_relu(conv(x, w1), g1, b1)
    return bn_relu(conv(y, w2), g2, b2)


if __name__ == "__main__":
    # DoubleConv(in_channels=4, out_channels=8)  (mid_channels defaults to out)
    N, Cin, Cmid, Cout, D, H, W = 2, 4, 8, 8, 16, 16, 16

    key = jax.random.PRNGKey(0)
    kx, k1, k2 = jax.random.split(key, 3)
    x = jax.random.normal(kx, (N, Cin, D, H, W), jnp.float32)
    w1 = jax.random.normal(k1, (Cmid, Cin, K, K, K), jnp.float32) * 0.1
    w2 = jax.random.normal(k2, (Cout, Cmid, K, K, K), jnp.float32) * 0.1
    # BatchNorm3d default init: gamma=1, beta=0
    g1 = jnp.ones((Cmid,), jnp.float32)
    b1 = jnp.zeros((Cmid,), jnp.float32)
    g2 = jnp.ones((Cout,), jnp.float32)
    b2 = jnp.zeros((Cout,), jnp.float32)

    fwd = jax.jit(double_conv, static_argnames=("compute_dtype",))
    ref = reference_double_conv(x, w1, g1, b1, w2, g2, b2)

    # f32 MXU-input path (tolerance covers TPU default-precision f32 matmuls).
    out_f32 = jax.block_until_ready(
        fwd(x, w1, g1, b1, w2, g2, b2, compute_dtype=jnp.float32))
    assert out_f32.shape == ref.shape == (N, Cout, D, H, W)
    err_f32 = float(jnp.max(jnp.abs(out_f32 - ref)))
    assert err_f32 < 2e-2, f"f32 max abs error {err_f32}"

    # Default bf16 MXU-input / bf16 activation-storage path; f32 accumulation
    # and f32 BN statistics. Tolerance sized for bf16 rounding of patches and
    # intermediate activations over 108/216-wide contractions.
    out_bf16 = jax.block_until_ready(fwd(x, w1, g1, b1, w2, g2, b2))
    err_bf16 = float(jnp.max(jnp.abs(out_bf16 - ref)))
    assert err_bf16 < 1.5e-1, f"bf16 max abs error {err_bf16}"

    print("KERNEL_OK")
</pallas_src>

<mosaic_0001>
module attributes {stable_mosaic.version = 11 : i64} {
  func.func @_conv_stats_kernel(%arg0: i32, %arg1: i32, %arg2: memref<1024x128xf32, #tpu.memory_space<vmem>>, %arg3: memref<128x128xf32, #tpu.memory_space<vmem>>, %arg4: memref<1024x128xf32, #tpu.memory_space<vmem>>, %arg5: memref<8x128xf32, #tpu.memory_space<vmem>>, %arg6: memref<1024x128xf32, #tpu.memory_space<vmem>>) attributes {dimension_semantics = [#tpu.dimension_semantics<parallel>, #tpu.dimension_semantics<arbitrary>], iteration_bounds = array<i64: 8, 1>, scalar_prefetch = 0 : i64, scratch_operands = 1 : i64, tpu.core_type = #tpu.core_type<tc>, window_params = [{transform_indices = @transform_0, window_bounds = array<i64: 1024, 128>}, {transform_indices = @transform_1, window_bounds = array<i64: 128, 128>}, {transform_indices = @transform_2, window_bounds = array<i64: 1024, 128>}, {transform_indices = @transform_3, window_bounds = array<i64: 8, 128>}]} {
    %c0_i32 = arith.constant 0 : i32
    %0 = arith.cmpi eq, %arg1, %c0_i32 : i32
    %1 = arith.extui %0 : i1 to i32
    %c0_i32_0 = arith.constant 0 : i32
    %2 = arith.cmpi ne, %1, %c0_i32_0 : i32
    scf.if %2 {
      %cst_10 = arith.constant 0.000000e+00 : f32
      %12 = vector.broadcast %cst_10 : f32 to vector<1024x128xf32>
      %c0_11 = arith.constant 0 : index
      %c0_12 = arith.constant 0 : index
      %13 = vector.load %arg6[%c0_11, %c0_12] : memref<1024x128xf32, #tpu.memory_space<vmem>>, vector<1024x128xf32>
      tpu.vector_store %arg6[%c0_11, %c0_12], %12 {strides = array<i32>} : memref<1024x128xf32, #tpu.memory_space<vmem>>, vector<1024x128xf32>,
    } else {
    }
    %c0 = arith.constant 0 : index
    %c0_1 = arith.constant 0 : index
    %3 = vector.load %arg6[%c0, %c0_1] : memref<1024x128xf32, #tpu.memory_space<vmem>>, vector<1024x128xf32>
    %c0_2 = arith.constant 0 : index
    %c0_3 = arith.constant 0 : index
    %4 = vector.load %arg2[%c0_2, %c0_3] : memref<1024x128xf32, #tpu.memory_space<vmem>>, vector<1024x128xf32>
    %c0_4 = arith.constant 0 : index
    %c0_5 = arith.constant 0 : index
    %5 = vector.load %arg3[%c0_4, %c0_5] : memref<128x128xf32, #tpu.memory_space<vmem>>, vector<128x128xf32>
    %cst = arith.constant dense<0.000000e+00> : vector<1024x128xf32>
    %6 = tpu.matmul %4, %5, %cst {dimension_numbers = #tpu.dot_dimension_numbers<[1], [0], [0], [1], [0, 0, 1, 1], [], []>} : vector<1024x128xf32>, vector<128x128xf32>, vector<1024x128xf32> -> vector<1024x128xf32>
    %7 = arith.addf %3, %6 : vector<1024x128xf32>
    %c0_6 = arith.constant 0 : index
    %c0_7 = arith.constant 0 : index
    %8 = vector.load %arg6[%c0_6, %c0_7] : memref<1024x128xf32, #tpu.memory_space<vmem>>, vector<1024x128xf32>
    tpu.vector_store %arg6[%c0_6, %c0_7], %7 {strides = array<i32>} : memref<1024x128xf32, #tpu.memory_space<vmem>>, vector<1024x128xf32>,
    %c0_i32_8 = arith.constant 0 : i32
    %9 = arith.cmpi eq, %arg1, %c0_i32_8 : i32
    %10 = arith.extui %9 : i1 to i32
    %c0_i32_9 = arith.constant 0 : i32
    %11 = arith.cmpi ne, %10, %c0_i32_9 : i32
    scf.if %11 {
      %c0_10 = arith.constant 0 : index
      %c0_11 = arith.constant 0 : index
      %12 = vector.load %arg6[%c0_10, %c0_11] : memref<1024x128xf32, #tpu.memory_space<vmem>>, vector<1024x128xf32>
      %c0_12 = arith.constant 0 : index
      %c0_13 = arith.constant 0 : index
      %13 = vector.load %arg4[%c0_12, %c0_13] : memref<1024x128xf32, #tpu.memory_space<vmem>>, vector<1024x128xf32>
      tpu.vector_store %arg4[%c0_12, %c0_13], %12 {strides = array<i32>} : memref<1024x128xf32, #tpu.memory_space<vmem>>, vector<1024x128xf32>,
      %cst_14 = arith.constant dense<0.000000e+00> : vector<128xf32>
      %14 = vector.multi_reduction <add>, %12, %cst_14 [0] : vector<1024x128xf32> to vector<128xf32>
      %15 = vector.shape_cast %14 : vector<128xf32> to vector<1x128xf32>
      %16 = arith.mulf %12, %12 : vector<1024x128xf32>
      %cst_15 = arith.constant dense<0.000000e+00> : vector<128xf32>
      %17 = vector.multi_reduction <add>, %16, %cst_15 [0] : vector<1024x128xf32> to vector<128xf32>
      %18 = vector.shape_cast %17 : vector<128xf32> to vector<1x128xf32>
      %cst_16 = arith.constant 0.000000e+00 : f32
      %19 = vector.broadcast %cst_16 : f32 to vector<6x128xf32>
      %20 = tpu.concatenate %15, %18, %19 in 0 : vector<1x128xf32>, vector<1x128xf32>, vector<6x128xf32> -> vector<8x128xf32>
      %c0_17 = arith.constant 0 : index
      %c0_18 = arith.constant 0 : index
      %21 = vector.load %arg5[%c0_17, %c0_18] : memref<8x128xf32, #tpu.memory_space<vmem>>, vector<8x128xf32>
      tpu.vector_store %arg5[%c0_17, %c0_18], %20 {strides = array<i32>} : memref<8x128xf32, #tpu.memory_space<vmem>>, vector<8x128xf32>,
    } else {
    }
    return
  }
  func.func @transform_0(%arg0: i32, %arg1: i32) -> (i32, i32) {
    %c0_i32 = arith.constant 0 : i32
    return %arg0, %arg1 : i32, i32
  }
  func.func @transform_1(%arg0: i32, %arg1: i32) -> (i32, i32) {
    %c0_i32 = arith.constant 0 : i32
    %c0_i32_0 = arith.constant 0 : i32
    return %arg1, %c0_i32 : i32, i32
  }
  func.func @transform_2(%arg0: i32, %arg1: i32) -> (i32, i32) {
    %c0_i32 = arith.constant 0 : i32
    %c0_i32_0 = arith.constant 0 : i32
    return %arg0, %c0_i32 : i32, i32
  }
  func.func @transform_3(%arg0: i32, %arg1: i32) -> (i32, i32) {
    %c0_i32 = arith.constant 0 : i32
    %c0_i32_0 = arith.constant 0 : i32
    return %arg0, %c0_i32 : i32, i32
  }
}

module attributes {stable_mosaic.version = 11 : i64} {
  func.func @_bn_relu_kernel(%arg0: i32, %arg1: memref<2048x128xf32, #tpu.memory_space<vmem>>, %arg2: memref<1x128xf32, #tpu.memory_space<vmem>>, %arg3: memref<1x128xf32, #tpu.memory_space<vmem>>, %arg4: memref<2048x128xf32, #tpu.memory_space<vmem>>) attributes {dimension_semantics = [#tpu.dimension_semantics<parallel>], iteration_bounds = array<i64: 4>, scalar_prefetch = 0 : i64, scratch_operands = 0 : i64, tpu.core_type = #tpu.core_type<tc>, window_params = [{transform_indices = @transform_0, window_bounds = array<i64: 2048, 128>}, {pipeline_mode = #tpu.pipeline_mode<synchronous>, transform_indices = @transform_1, window_bounds = array<i64: 1, 128>}, {pipeline_mode = #tpu.pipeline_mode<synchronous>, transform_indices = @transform_2, window_bounds = array<i64: 1, 128>}, {transform_indices = @transform_3, window_bounds = array<i64: 2048, 128>}]} {
    %c0 = arith.constant 0 : index
    %c0_0 = arith.constant 0 : index
    %0 = vector.load %arg1[%c0, %c0_0] : memref<2048x128xf32, #tpu.memory_space<vmem>>, vector<2048x128xf32>
    %c0_1 = arith.constant 0 : index
    %c0_2 = arith.constant 0 : index
    %1 = vector.load %arg2[%c0_1, %c0_2] : memref<1x128xf32, #tpu.memory_space<vmem>>, vector<1x128xf32>
    %2 = vector.broadcast %1 : vector<1x128xf32> to vector<2048x128xf32>
    %3 = arith.mulf %0, %2 : vector<2048x128xf32>
    %c0_3 = arith.constant 0 : index
    %c0_4 = arith.constant 0 : index
    %4 = vector.load %arg3[%c0_3, %c0_4] : memref<1x128xf32, #tpu.memory_space<vmem>>, vector<1x128xf32>
    %5 = vector.broadcast %4 : vector<1x128xf32> to vector<2048x128xf32>
    %6 = arith.addf %3, %5 : vector<2048x128xf32>
    %cst = arith.constant 0.000000e+00 : f32
    %7 = vector.broadcast %cst : f32 to vector<2048x128xf32>
    %8 = arith.maximumf %6, %7 : vector<2048x128xf32>
    %c0_5 = arith.constant 0 : index
    %c0_6 = arith.constant 0 : index
    %9 = vector.load %arg4[%c0_5, %c0_6] : memref<2048x128xf32, #tpu.memory_space<vmem>>, vector<2048x128xf32>
    tpu.vector_store %arg4[%c0_5, %c0_6], %8 {strides = array<i32>} : memref<2048x128xf32, #tpu.memory_space<vmem>>, vector<2048x128xf32>,
    return
  }
  func.func @transform_0(%arg0: i32) -> (i32, i32) {
    %c0_i32 = arith.constant 0 : i32
    %c0_i32_0 = arith.constant 0 : i32
    return %arg0, %c0_i32 : i32, i32
  }
  func.func @transform_1(%arg0: i32) -> (i32, i32) {
    %c0_i32 = arith.constant 0 : i32
    %c0_i32_0 = arith.constant 0 : i32
    %c0_i32_1 = arith.constant 0 : i32
    return %c0_i32, %c0_i32_0 : i32, i32
  }
  func.func @transform_2(%arg0: i32) -> (i32, i32) {
    %c0_i32 = arith.constant 0 : i32
    %c0_i32_0 = arith.constant 0 : i32
    %c0_i32_1 = arith.constant 0 : i32
    return %c0_i32, %c0_i32_0 : i32, i32
  }
  func.func @transform_3(%arg0: i32) -> (i32, i32) {
    %c0_i32 = arith.constant 0 : i32
    %c0_i32_0 = arith.constant 0 : i32
    return %arg0, %c0_i32 : i32, i32
  }
}

module attributes {stable_mosaic.version = 11 : i64} {
  func.func @_conv_stats_kernel(%arg0: i32, %arg1: i32, %arg2: memref<1024x256xf32, #tpu.memory_space<vmem>>, %arg3: memref<256x128xf32, #tpu.memory_space<vmem>>, %arg4: memref<1024x128xf32, #tpu.memory_space<vmem>>, %arg5: memref<8x128xf32, #tpu.memory_space<vmem>>, %arg6: memref<1024x128xf32, #tpu.memory_space<vmem>>) attributes {dimension_semantics = [#tpu.dimension_semantics<parallel>, #tpu.dimension_semantics<arbitrary>], iteration_bounds = array<i64: 8, 1>, scalar_prefetch = 0 : i64, scratch_operands = 1 : i64, tpu.core_type = #tpu.core_type<tc>, window_params = [{transform_indices = @transform_0, window_bounds = array<i64: 1024, 256>}, {transform_indices = @transform_1, window_bounds = array<i64: 256, 128>}, {transform_indices = @transform_2, window_bounds = array<i64: 1024, 128>}, {transform_indices = @transform_3, window_bounds = array<i64: 8, 128>}]} {
    %c0_i32 = arith.constant 0 : i32
    %0 = arith.cmpi eq, %arg1, %c0_i32 : i32
    %1 = arith.extui %0 : i1 to i32
    %c0_i32_0 = arith.constant 0 : i32
    %2 = arith.cmpi ne, %1, %c0_i32_0 : i32
    scf.if %2 {
      %cst_10 = arith.constant 0.000000e+00 : f32
      %12 = vector.broadcast %cst_10 : f32 to vector<1024x128xf32>
      %c0_11 = arith.constant 0 : index
      %c0_12 = arith.constant 0 : index
      %13 = vector.load %arg6[%c0_11, %c0_12] : memref<1024x128xf32, #tpu.memory_space<vmem>>, vector<1024x128xf32>
      tpu.vector_store %arg6[%c0_11, %c0_12], %12 {strides = array<i32>} : memref<1024x128xf32, #tpu.memory_space<vmem>>, vector<1024x128xf32>,
    } else {
    }
    %c0 = arith.constant 0 : index
    %c0_1 = arith.constant 0 : index
    %3 = vector.load %arg6[%c0, %c0_1] : memref<1024x128xf32, #tpu.memory_space<vmem>>, vector<1024x128xf32>
    %c0_2 = arith.constant 0 : index
    %c0_3 = arith.constant 0 : index
    %4 = vector.load %arg2[%c0_2, %c0_3] : memref<1024x256xf32, #tpu.memory_space<vmem>>, vector<1024x256xf32>
    %c0_4 = arith.constant 0 : index
    %c0_5 = arith.constant 0 : index
    %5 = vector.load %arg3[%c0_4, %c0_5] : memref<256x128xf32, #tpu.memory_space<vmem>>, vector<256x128xf32>
    %cst = arith.constant dense<0.000000e+00> : vector<1024x128xf32>
    %6 = tpu.matmul %4, %5, %cst {dimension_numbers = #tpu.dot_dimension_numbers<[1], [0], [0], [1], [0, 0, 1, 1], [], []>} : vector<1024x256xf32>, vector<256x128xf32>, vector<1024x128xf32> -> vector<1024x128xf32>
    %7 = arith.addf %3, %6 : vector<1024x128xf32>
    %c0_6 = arith.constant 0 : index
    %c0_7 = arith.constant 0 : index
    %8 = vector.load %arg6[%c0_6, %c0_7] : memref<1024x128xf32, #tpu.memory_space<vmem>>, vector<1024x128xf32>
    tpu.vector_store %arg6[%c0_6, %c0_7], %7 {strides = array<i32>} : memref<1024x128xf32, #tpu.memory_space<vmem>>, vector<1024x128xf32>,
    %c0_i32_8 = arith.constant 0 : i32
    %9 = arith.cmpi eq, %arg1, %c0_i32_8 : i32
    %10 = arith.extui %9 : i1 to i32
    %c0_i32_9 = arith.constant 0 : i32
    %11 = arith.cmpi ne, %10, %c0_i32_9 : i32
    scf.if %11 {
      %c0_10 = arith.constant 0 : index
      %c0_11 = arith.constant 0 : index
      %12 = vector.load %arg6[%c0_10, %c0_11] : memref<1024x128xf32, #tpu.memory_space<vmem>>, vector<1024x128xf32>
      %c0_12 = arith.constant 0 : index
      %c0_13 = arith.constant 0 : index
      %13 = vector.load %arg4[%c0_12, %c0_13] : memref<1024x128xf32, #tpu.memory_space<vmem>>, vector<1024x128xf32>
      tpu.vector_store %arg4[%c0_12, %c0_13], %12 {strides = array<i32>} : memref<1024x128xf32, #tpu.memory_space<vmem>>, vector<1024x128xf32>,
      %cst_14 = arith.constant dense<0.000000e+00> : vector<128xf32>
      %14 = vector.multi_reduction <add>, %12, %cst_14 [0] : vector<1024x128xf32> to vector<128xf32>
      %15 = vector.shape_cast %14 : vector<128xf32> to vector<1x128xf32>
      %16 = arith.mulf %12, %12 : vector<1024x128xf32>
      %cst_15 = arith.constant dense<0.000000e+00> : vector<128xf32>
      %17 = vector.multi_reduction <add>, %16, %cst_15 [0] : vector<1024x128xf32> to vector<128xf32>
      %18 = vector.shape_cast %17 : vector<128xf32> to vector<1x128xf32>
      %cst_16 = arith.constant 0.000000e+00 : f32
      %19 = vector.broadcast %cst_16 : f32 to vector<6x128xf32>
      %20 = tpu.concatenate %15, %18, %19 in 0 : vector<1x128xf32>, vector<1x128xf32>, vector<6x128xf32> -> vector<8x128xf32>
      %c0_17 = arith.constant 0 : index
      %c0_18 = arith.constant 0 : index
      %21 = vector.load %arg5[%c0_17, %c0_18] : memref<8x128xf32, #tpu.memory_space<vmem>>, vector<8x128xf32>
      tpu.vector_store %arg5[%c0_17, %c0_18], %20 {strides = array<i32>} : memref<8x128xf32, #tpu.memory_space<vmem>>, vector<8x128xf32>,
    } else {
    }
    return
  }
  func.func @transform_0(%arg0: i32, %arg1: i32) -> (i32, i32) {
    %c0_i32 = arith.constant 0 : i32
    return %arg0, %arg1 : i32, i32
  }
  func.func @transform_1(%arg0: i32, %arg1: i32) -> (i32, i32) {
    %c0_i32 = arith.constant 0 : i32
    %c0_i32_0 = arith.constant 0 : i32
    return %arg1, %c0_i32 : i32, i32
  }
  func.func @transform_2(%arg0: i32, %arg1: i32) -> (i32, i32) {
    %c0_i32 = arith.constant 0 : i32
    %c0_i32_0 = arith.constant 0 : i32
    return %arg0, %c0_i32 : i32, i32
  }
  func.func @transform_3(%arg0: i32, %arg1: i32) -> (i32, i32) {
    %c0_i32 = arith.constant 0 : i32
    %c0_i32_0 = arith.constant 0 : i32
    return %arg0, %c0_i32 : i32, i32
  }
}

</mosaic_0001>

<llo_original>
// kernel: double_conv.4
$region0: #{double_conv.4}
  #allocation0 [shape = 'u32[]', space=smem, size = 0x4, offset = 0x4, fixed_abs, tag = 'smem constant byte address 0x4 - core index']
  #allocation1 [shape = 'u32[72,128]{1,0:T(1,128)}', space=vmem, size = 0x9000, scoped, tag = 'internal scratch']
  #allocation2 [shape = 'f32[1024,128]{1,0:T(8,128)}', space=vmem, size = 0x80000, scoped, tag = 'scratch operand']
  %s0 = inlined_call_operand.vmem [shape: f32[8192,128], index: 0, kind: input, shape index: {}]
  %s1 = inlined_call_operand.vmem [shape: f32[128,128], index: 1, kind: input, shape index: {}]
  %s2 = inlined_call_operand.vmem [shape: f32[8192,128], index: 2, kind: output, shape index: {0}]
  %s3 = inlined_call_operand.vmem [shape: f32[64,128], index: 3, kind: output, shape index: {1}]
  %4 = xla_tuple %s2, %s3
  %s5 = sld [smem:[#allocation0]]
  $region57: #{double_conv.4} parent=0
    _
  %s7 = ssub.s32 1, %s5
  %s8 = scalar_select 0, %s7, %s5
  loop: start=0, step=1, limit=10
  $region2: #{double_conv.4} parent=0 // loop_pre_header
    _
  $region3: #{double_conv.4} parent=0 // loop_header
    %s10 = sphi 0, %s14
    %p11 = scmp.ge.s32.totalorder %s10, 10
    %s17 = sphi 0, %s29
    %s18 = sphi 0, %s25
    %s19 = sphi 0, %s17
    %s20 = sphi 0, %s18
    %s21 = sphi 0, %s19
    %s22 = sphi 0, %s20
    %s34 = sphi 0, %s36
    %s37 = sphi 0, %s34
    %s38 = sphi 0, %s37
    %s54 = sphi 0, %s38
    %s60 = sphi 0, %s62
    %s63 = sphi 0, %s60
    %s64 = sphi 0, %s63
    %s80 = sphi 0, %s64
    %s86 = sphi 0, %s88
    %s89 = sphi 0, %s86
    %s90 = sphi 0, %s89
    %s106 = sphi 0, %s90
    %s112 = sphi 0, %s114
    %s115 = sphi 0, %s112
    %s116 = sphi 0, %s115
    %s132 = sphi 0, %s116
  $region4: #{double_conv.4} parent=0 // loop_header_branch
    %13 = sbr.rel (%p11) target = $region8
  $region5: #{double_conv.4} parent=0 // loop_body
    %s15 = ssub.s32 %s10, 1
    %s16 = ssub.s32 %s10, 2
    %s23 = sadd.s32 1, %s18
    %p24 = scmp.ge.s32.totalorder %s23, 1
    %s25 = scalar_select %p24, 0, %s23
    %s26 = sadd.s32 1, %s17
    %s27 = scalar_select %p24, %s26, %s17
    %p28 = scmp.ge.s32.totalorder %s27, 8
    %s29 = scalar_select %p28, 0, %s27
    %s30 = ssub.s32 %s17, %s29
    %s31 = ssub.s32 %s18, %s25
    %s32 = sor.u32 %s30, %s31
    %p33 = scmp.eq.s32.totalorder %s32, 0
    %s35 = sadd.s32 %s34, 1
    %s36 = scalar_select %p33, %s34, %s35
    %p39 = pneg %p33
    %p40 = scmp.eq.s32.totalorder %s10, 7
    %p41 = por %p39, %p40
    %p42 = scmp.ne.s32.totalorder %s34, %s37
    %p43 = scmp.eq.s32.totalorder %s10, 0
    %p44 = por %p42, %p43
    %p45 = scmp.ne.s32.totalorder %s34, %s37
    %p46 = scmp.eq.s32.totalorder %s15, 7
    %p47 = por %p45, %p46
    %p48 = scmp.ne.s32.totalorder %s37, %s38
    %p49 = scmp.eq.s32.totalorder %s15, 0
    %p50 = por %p48, %p49
    %p51 = scmp.ne.s32.totalorder %s37, %s38
    %p52 = scmp.eq.s32.totalorder %s16, 7
    %p53 = por %p51, %p52
    %p55 = scmp.ne.s32.totalorder %s38, %s54
    %p56 = scmp.eq.s32.totalorder %s16, 0
    %p57 = por %p55, %p56
    %s58 = ssub.s32 %s18, %s25
    %p59 = scmp.eq.s32.totalorder %s58, 0
    %s61 = sadd.s32 %s60, 1
    %s62 = scalar_select %p59, %s60, %s61
    %p65 = pneg %p59
    %p66 = scmp.eq.s32.totalorder %s10, 7
    %p67 = por %p65, %p66
    %p68 = scmp.ne.s32.totalorder %s60, %s63
    %p69 = scmp.eq.s32.totalorder %s10, 0
    %p70 = por %p68, %p69
    %p71 = scmp.ne.s32.totalorder %s60, %s63
    %p72 = scmp.eq.s32.totalorder %s15, 7
    %p73 = por %p71, %p72
    %p74 = scmp.ne.s32.totalorder %s63, %s64
    %p75 = scmp.eq.s32.totalorder %s15, 0
    %p76 = por %p74, %p75
    %p77 = scmp.ne.s32.totalorder %s63, %s64
    %p78 = scmp.eq.s32.totalorder %s16, 7
    %p79 = por %p77, %p78
    %p81 = scmp.ne.s32.totalorder %s64, %s80
    %p82 = scmp.eq.s32.totalorder %s16, 0
    %p83 = por %p81, %p82
    %s84 = ssub.s32 %s17, %s29
    %p85 = scmp.eq.s32.totalorder %s84, 0
    %s87 = sadd.s32 %s86, 1
    %s88 = scalar_select %p85, %s86, %s87
    %p91 = pneg %p85
    %p92 = scmp.eq.s32.totalorder %s10, 7
    %p93 = por %p91, %p92
    %p94 = scmp.ne.s32.totalorder %s86, %s89
    %p95 = scmp.eq.s32.totalorder %s10, 0
    %p96 = por %p94, %p95
    %p97 = scmp.ne.s32.totalorder %s86, %s89
    %p98 = scmp.eq.s32.totalorder %s15, 7
    %p99 = por %p97, %p98
    %p100 = scmp.ne.s32.totalorder %s89, %s90
    %p101 = scmp.eq.s32.totalorder %s15, 0
    %p102 = por %p100, %p101
    %p103 = scmp.ne.s32.totalorder %s89, %s90
    %p104 = scmp.eq.s32.totalorder %s16, 7
    %p105 = por %p103, %p104
    %p107 = scmp.ne.s32.totalorder %s90, %s106
    %p108 = scmp.eq.s32.totalorder %s16, 0
    %p109 = por %p107, %p108
    %s110 = ssub.s32 %s17, %s29
    %p111 = scmp.eq.s32.totalorder %s110, 0
    %s113 = sadd.s32 %s112, 1
    %s114 = scalar_select %p111, %s112, %s113
    %p117 = pneg %p111
    %p118 = scmp.eq.s32.totalorder %s10, 7
    %p119 = por %p117, %p118
    %p120 = scmp.ne.s32.totalorder %s112, %s115
    %p121 = scmp.eq.s32.totalorder %s10, 0
    %p122 = por %p120, %p121
    %p123 = scmp.ne.s32.totalorder %s112, %s115
    %p124 = scmp.eq.s32.totalorder %s15, 7
    %p125 = por %p123, %p124
    %p126 = scmp.ne.s32.totalorder %s115, %s116
    %p127 = scmp.eq.s32.totalorder %s15, 0
    %p128 = por %p126, %p127
    %p129 = scmp.ne.s32.totalorder %s115, %s116
    %p130 = scmp.eq.s32.totalorder %s16, 7
    %p131 = por %p129, %p130
    %p133 = scmp.ne.s32.totalorder %s116, %s132
    %p134 = scmp.eq.s32.totalorder %s16, 0
    %p135 = por %p133, %p134
    %p136 = scmp.le.s32.totalorder 1, %s10
    %p137 = scmp.lt.s32.totalorder %s10, 9
    %p138 = pnand %p136, %p137
    %p139 = pneg %p138
    // Predicated region
    $region9: #{double_conv.4} parent=5 // pred_check
      _
    $region10: #{double_conv.4} parent=5 // pred_check_branch
      %141 = sbr.rel (%p138) target = $region12
    $region11: #{double_conv.4} parent=5 // pred_region
      %s142 = ssub.s32 %s10, 1
      // Predicated region
      $region13: #{double_conv.4} parent=11 // pred_check
        %p143 = pneg %p76
      $region14: #{double_conv.4} parent=11 // pred_check_branch
        %145 = sbr.rel (%p143) target = $region16
      $region15: #{double_conv.4} parent=11 // pred_region
        %s146 = smul.u32 16, %s20
        %p147 = scmp.lt.s32.totalorder %s146, 15
        %s148 = scalar_select %p147, %s146, 15
        %s149 = smul.addr %s148, 8
        %s150 = scalar_lea.vmem %s1, %s149
        %s151 = smul.u32 16, %s20
      $region16: #{double_conv.4} parent=11 // pred_fallthru
        _
    $region12: #{double_conv.4} parent=5 // pred_fallthru
      _
    %p152 = scmp.lt.s32.totalorder %s10, 8
    // Predicated region
    $region17: #{double_conv.4} parent=5 // pred_check
      %p153 = pneg %p152
    $region18: #{double_conv.4} parent=5 // pred_check_branch
      %155 = sbr.rel (%p153) target = $region20
    $region19: #{double_conv.4} parent=5 // pred_region
      // Predicated region
      $region21: #{double_conv.4} parent=19 // pred_check
        %p156 = pneg %p44
      $region22: #{double_conv.4} parent=19 // pred_check_branch
        %158 = sbr.rel (%p156) target = $region24
      $region23: #{double_conv.4} parent=19 // pred_region
        %s159 = smul.u32 128, %s17
        %p160 = scmp.lt.s32.totalorder %s159, 1023
        %s161 = scalar_select %p160, %s159, 1023
        %p162 = scmp.lt.s32.totalorder %s18, 0
        %s163 = scalar_select %p162, %s18, 0
        %s164 = sadd.s32 %s163, %s161
        %s165 = smul.addr %s164, 8
        %s166 = scalar_lea.vmem %s0, %s165
        %s167 = smul.u32 128, %s17
      $region24: #{double_conv.4} parent=19 // pred_fallthru
        _
    $region20: #{double_conv.4} parent=5 // pred_fallthru
      _
    %p168 = scmp.le.s32.totalorder 1, %s10
    %p169 = scmp.lt.s32.totalorder %s10, 9
    %p170 = pnand %p168, %p169
    %p171 = pneg %p170
    // Predicated region
    $region25: #{double_conv.4} parent=5 // pred_check
      _
    $region26: #{double_conv.4} parent=5 // pred_check_branch
      %173 = sbr.rel (%p170) target = $region28
    $region27: #{double_conv.4} parent=5 // pred_region
      %s174 = ssub.s32 %s10, 1
      %s175 = smul.u32 128, %s19
      %p176 = scmp.lt.s32.totalorder %s175, 1023
      %s177 = scalar_select %p176, %s175, 1023
      %p178 = scmp.lt.s32.totalorder %s20, 0
      %s179 = scalar_select %p178, %s20, 0
      %s180 = sadd.s32 %s179, %s177
      %s181 = smul.addr %s180, 8
      %s182 = scalar_lea.vmem %s0, %s181
      %p183 = pneg %p50
      %p184 = pneg %p47
      %s185 = smul.u32 16, %s20
      %p186 = scmp.lt.s32.totalorder %s185, 15
      %s187 = scalar_select %p186, %s185, 15
      %s188 = smul.addr %s187, 8
      %s189 = scalar_lea.vmem %s1, %s188
      %p190 = pneg %p76
      %p191 = pneg %p73
      %p192 = pneg %p102
      %p193 = pneg %p99
      %s194 = smul.u32 128, %s19
      %p195 = scmp.lt.s32.totalorder %s194, 1023
      %s196 = scalar_select %p195, %s194, 1023
      %s197 = smul.addr %s196, 8
      %s198 = scalar_lea.vmem %s2, %s197
      %p199 = pneg %p128
      %p200 = pneg %p125
      %p201 = scmp.lt.s32.totalorder %s19, 7
      %s202 = scalar_select %p201, %s19, 7
      %s203 = smul.addr %s202, 8
      %s204 = scalar_lea.vmem %s3, %s203
      %s205 = smul.u32 128, %s19
      %p206 = scmp.lt.s32.totalorder %s205, 1023
      %s207 = scalar_select %p206, %s205, 1023
      %p208 = scmp.lt.s32.totalorder %s20, 0
      %s209 = scalar_select %p208, %s20, 0
      %s210 = sadd.s32 %s209, %s207
      %s211 = smul.addr %s210, 8
      %s212 = scalar_lea.vmem %s0, %s211
      %s213 = smul.u32 128, %s19
      %s214 = smul.u32 16, %s20
      %p215 = scmp.lt.s32.totalorder %s214, 15
      %s216 = scalar_select %p215, %s214, 15
      %s217 = smul.addr %s216, 8
      %s218 = scalar_lea.vmem %s1, %s217
      %s219 = smul.u32 16, %s20
      %s220 = smul.u32 128, %s19
      %p221 = scmp.lt.s32.totalorder %s220, 1023
      %s222 = scalar_select %p221, %s220, 1023
      %s223 = smul.addr %s222, 8
      %s224 = scalar_lea.vmem %s2, %s223
      %s225 = smul.u32 128, %s19
      %p226 = scmp.lt.s32.totalorder %s19, 7
      %s227 = scalar_select %p226, %s19, 7
      %s228 = smul.addr %s227, 8
      %s229 = scalar_lea.vmem %s3, %s228
      %p230 = scmp.eq.s32.totalorder %s20, 0
      // Predicated region
      $region29: #{double_conv.4} parent=27 // pred_check
        %p231 = pneg %p230
      $region30: #{double_conv.4} parent=27 // pred_check_branch
        %233 = sbr.rel (%p231) target = $region32
      $region31: #{double_conv.4} parent=27 // pred_region
        %234 = vst [vmem:[#allocation2] sm:$0xff] 0.0
        %235 = vst [vmem:[#allocation2 + $0x8] sm:$0xff] 0.0
        %236 = vst [vmem:[#allocation2 + $0x10] sm:$0xff] 0.0
        %237 = vst [vmem:[#allocation2 + $0x18] sm:$0xff] 0.0
        %238 = vst [vmem:[#allocation2 + $0x20] sm:$0xff] 0.0
        %239 = vst [vmem:[#allocation2 + $0x28] sm:$0xff] 0.0
        %240 = vst [vmem:[#allocation2 + $0x30] sm:$0xff] 0.0
        %241 = vst [vmem:[#allocation2 + $0x38] sm:$0xff] 0.0
        %242 = vst [vmem:[#allocation2 + $0x40] sm:$0xff] 0.0
        %243 = vst [vmem:[#allocation2 + $0x48] sm:$0xff] 0.0
        %244 = vst [vmem:[#allocation2 + $0x50] sm:$0xff] 0.0
        %245 = vst [vmem:[#allocation2 + $0x58] sm:$0xff] 0.0
        %246 = vst [vmem:[#allocation2 + $0x60] sm:$0xff] 0.0
        %247 = vst [vmem:[#allocation2 + $0x68] sm:$0xff] 0.0
        %248 = vst [vmem:[#allocation2 + $0x70] sm:$0xff] 0.0
        %249 = vst [vmem:[#allocation2 + $0x78] sm:$0xff] 0.0
        %250 = vst [vmem:[#allocation2 + $0x80] sm:$0xff] 0.0
        %251 = vst [vmem:[#allocation2 + $0x88] sm:$0xff] 0.0
        %252 = vst [vmem:[#allocation2 + $0x90] sm:$0xff] 0.0
        %253 = vst [vmem:[#allocation2 + $0x98] sm:$0xff] 0.0
        %254 = vst [vmem:[#allocation2 + $0xa0] sm:$0xff] 0.0
        %255 = vst [vmem:[#allocation2 + $0xa8] sm:$0xff] 0.0
        %256 = vst [vmem:[#allocation2 + $0xb0] sm:$0xff] 0.0
        %257 = vst [vmem:[#allocation2 + $0xb8] sm:$0xff] 0.0
        %258 = vst [vmem:[#allocation2 + $0xc0] sm:$0xff] 0.0
        %259 = vst [vmem:[#allocation2 + $0xc8] sm:$0xff] 0.0
        %260 = vst [vmem:[#allocation2 + $0xd0] sm:$0xff] 0.0
        %261 = vst [vmem:[#allocation2 + $0xd8] sm:$0xff] 0.0
        %262 = vst [vmem:[#allocation2 + $0xe0] sm:$0xff] 0.0
        %263 = vst [vmem:[#allocation2 + $0xe8] sm:$0xff] 0.0
        %264 = vst [vmem:[#allocation2 + $0xf0] sm:$0xff] 0.0
        %265 = vst [vmem:[#allocation2 + $0xf8] sm:$0xff] 0.0
        %266 = vst [vmem:[#allocation2 + $0x100] sm:$0xff] 0.0
        %267 = vst [vmem:[#allocation2 + $0x108] sm:$0xff] 0.0
        %268 = vst [vmem:[#allocation2 + $0x110] sm:$0xff] 0.0
        %269 = vst [vmem:[#allocation2 + $0x118] sm:$0xff] 0.0
        %270 = vst [vmem:[#allocation2 + $0x120] sm:$0xff] 0.0
        %271 = vst [vmem:[#allocation2 + $0x128] sm:$0xff] 0.0
        %272 = vst [vmem:[#allocation2 + $0x130] sm:$0xff] 0.0
        %273 = vst [vmem:[#allocation2 + $0x138] sm:$0xff] 0.0
        %274 = vst [vmem:[#allocation2 + $0x140] sm:$0xff] 0.0
        %275 = vst [vmem:[#allocation2 + $0x148] sm:$0xff] 0.0
        %276 = vst [vmem:[#allocation2 + $0x150] sm:$0xff] 0.0
        %277 = vst [vmem:[#allocation2 + $0x158] sm:$0xff] 0.0
        %278 = vst [vmem:[#allocation2 + $0x160] sm:$0xff] 0.0
        %279 = vst [vmem:[#allocation2 + $0x168] sm:$0xff] 0.0
        %280 = vst [vmem:[#allocation2 + $0x170] sm:$0xff] 0.0
        %281 = vst [vmem:[#allocation2 + $0x178] sm:$0xff] 0.0
        %282 = vst [vmem:[#allocation2 + $0x180] sm:$0xff] 0.0
        %283 = vst [vmem:[#allocation2 + $0x188] sm:$0xff] 0.0
        %284 = vst [vmem:[#allocation2 + $0x190] sm:$0xff] 0.0
        %285 = vst [vmem:[#allocation2 + $0x198] sm:$0xff] 0.0
        %286 = vst [vmem:[#allocation2 + $0x1a0] sm:$0xff] 0.0
        %287 = vst [vmem:[#allocation2 + $0x1a8] sm:$0xff] 0.0
        %288 = vst [vmem:[#allocation2 + $0x1b0] sm:$0xff] 0.0
        %289 = vst [vmem:[#allocation2 + $0x1b8] sm:$0xff] 0.0
        %290 = vst [vmem:[#allocation2 + $0x1c0] sm:$0xff] 0.0
        %291 = vst [vmem:[#allocation2 + $0x1c8] sm:$0xff] 0.0
        %292 = vst [vmem:[#allocation2 + $0x1d0] sm:$0xff] 0.0
        %293 = vst [vmem:[#allocation2 + $0x1d8] sm:$0xff] 0.0
        %294 = vst [vmem:[#allocation2 + $0x1e0] sm:$0xff] 0.0
        %295 = vst [vmem:[#allocation2 + $0x1e8] sm:$0xff] 0.0
        %296 = vst [vmem:[#allocation2 + $0x1f0] sm:$0xff] 0.0
        %297 = vst [vmem:[#allocation2 + $0x1f8] sm:$0xff] 0.0
        %298 = vst [vmem:[#allocation2 + $0x200] sm:$0xff] 0.0
        %299 = vst [vmem:[#allocation2 + $0x208] sm:$0xff] 0.0
        %300 = vst [vmem:[#allocation2 + $0x210] sm:$0xff] 0.0
        %301 = vst [vmem:[#allocation2 + $0x218] sm:$0xff] 0.0
        %302 = vst [vmem:[#allocation2 + $0x220] sm:$0xff] 0.0
        %303 = vst [vmem:[#allocation2 + $0x228] sm:$0xff] 0.0
        %304 = vst [vmem:[#allocation2 + $0x230] sm:$0xff] 0.0
        %305 = vst [vmem:[#allocation2 + $0x238] sm:$0xff] 0.0
        %306 = vst [vmem:[#allocation2 + $0x240] sm:$0xff] 0.0
        %307 = vst [vmem:[#allocation2 + $0x248] sm:$0xff] 0.0
        %308 = vst [vmem:[#allocation2 + $0x250] sm:$0xff] 0.0
        %309 = vst [vmem:[#allocation2 + $0x258] sm:$0xff] 0.0
        %310 = vst [vmem:[#allocation2 + $0x260] sm:$0xff] 0.0
        %311 = vst [vmem:[#allocation2 + $0x268] sm:$0xff] 0.0
        %312 = vst [vmem:[#allocation2 + $0x270] sm:$0xff] 0.0
        %313 = vst [vmem:[#allocation2 + $0x278] sm:$0xff] 0.0
        %314 = vst [vmem:[#allocation2 + $0x280] sm:$0xff] 0.0
        %315 = vst [vmem:[#allocation2 + $0x288] sm:$0xff] 0.0
        %316 = vst [vmem:[#allocation2 + $0x290] sm:$0xff] 0.0
        %317 = vst [vmem:[#allocation2 + $0x298] sm:$0xff] 0.0
        %318 = vst [vmem:[#allocation2 + $0x2a0] sm:$0xff] 0.0
        %319 = vst [vmem:[#allocation2 + $0x2a8] sm:$0xff] 0.0
        %320 = vst [vmem:[#allocation2 + $0x2b0] sm:$0xff] 0.0
        %321 = vst [vmem:[#allocation2 + $0x2b8] sm:$0xff] 0.0
        %322 = vst [vmem:[#allocation2 + $0x2c0] sm:$0xff] 0.0
        %323 = vst [vmem:[#allocation2 + $0x2c8] sm:$0xff] 0.0
        %324 = vst [vmem:[#allocation2 + $0x2d0] sm:$0xff] 0.0
        %325 = vst [vmem:[#allocation2 + $0x2d8] sm:$0xff] 0.0
        %326 = vst [vmem:[#allocation2 + $0x2e0] sm:$0xff] 0.0
        %327 = vst [vmem:[#allocation2 + $0x2e8] sm:$0xff] 0.0
        %328 = vst [vmem:[#allocation2 + $0x2f0] sm:$0xff] 0.0
        %329 = vst [vmem:[#allocation2 + $0x2f8] sm:$0xff] 0.0
        %330 = vst [vmem:[#allocation2 + $0x300] sm:$0xff] 0.0
        %331 = vst [vmem:[#allocation2 + $0x308] sm:$0xff] 0.0
        %332 = vst [vmem:[#allocation2 + $0x310] sm:$0xff] 0.0
        %333 = vst [vmem:[#allocation2 + $0x318] sm:$0xff] 0.0
        %334 = vst [vmem:[#allocation2 + $0x320] sm:$0xff] 0.0
        %335 = vst [vmem:[#allocation2 + $0x328] sm:$0xff] 0.0
        %336 = vst [vmem:[#allocation2 + $0x330] sm:$0xff] 0.0
        %337 = vst [vmem:[#allocation2 + $0x338] sm:$0xff] 0.0
        %338 = vst [vmem:[#allocation2 + $0x340] sm:$0xff] 0.0
        %339 = vst [vmem:[#allocation2 + $0x348] sm:$0xff] 0.0
        %340 = vst [vmem:[#allocation2 + $0x350] sm:$0xff] 0.0
        %341 = vst [vmem:[#allocation2 + $0x358] sm:$0xff] 0.0
        %342 = vst [vmem:[#allocation2 + $0x360] sm:$0xff] 0.0
        %343 = vst [vmem:[#allocation2 + $0x368] sm:$0xff] 0.0
        %344 = vst [vmem:[#allocation2 + $0x370] sm:$0xff] 0.0
        %345 = vst [vmem:[#allocation2 + $0x378] sm:$0xff] 0.0
        %346 = vst [vmem:[#allocation2 + $0x380] sm:$0xff] 0.0
        %347 = vst [vmem:[#allocation2 + $0x388] sm:$0xff] 0.0
        %348 = vst [vmem:[#allocation2 + $0x390] sm:$0xff] 0.0
        %349 = vst [vmem:[#allocation2 + $0x398] sm:$0xff] 0.0
        %350 = vst [vmem:[#allocation2 + $0x3a0] sm:$0xff] 0.0
        %351 = vst [vmem:[#allocation2 + $0x3a8] sm:$0xff] 0.0
        %352 = vst [vmem:[#allocation2 + $0x3b0] sm:$0xff] 0.0
        %353 = vst [vmem:[#allocation2 + $0x3b8] sm:$0xff] 0.0
        %354 = vst [vmem:[#allocation2 + $0x3c0] sm:$0xff] 0.0
        %355 = vst [vmem:[#allocation2 + $0x3c8] sm:$0xff] 0.0
        %356 = vst [vmem:[#allocation2 + $0x3d0] sm:$0xff] 0.0
        %357 = vst [vmem:[#allocation2 + $0x3d8] sm:$0xff] 0.0
        %358 = vst [vmem:[#allocation2 + $0x3e0] sm:$0xff] 0.0
        %359 = vst [vmem:[#allocation2 + $0x3e8] sm:$0xff] 0.0
        %360 = vst [vmem:[#allocation2 + $0x3f0] sm:$0xff] 0.0
        %361 = vst [vmem:[#allocation2 + $0x3f8] sm:$0xff] 0.0
      $region32: #{double_conv.4} parent=27 // pred_fallthru
        _
      %v362 = vld [vmem:[#allocation2] sm:$0xff]
      %v363 = vld [vmem:[#allocation2 + $0x8] sm:$0xff]
      %v364 = vld [vmem:[#allocation2 + $0x10] sm:$0xff]
      %v365 = vld [vmem:[#allocation2 + $0x18] sm:$0xff]
      %v366 = vld [vmem:[#allocation2 + $0x20] sm:$0xff]
      %v367 = vld [vmem:[#allocation2 + $0x28] sm:$0xff]
      %v368 = vld [vmem:[#allocation2 + $0x30] sm:$0xff]
      %v369 = vld [vmem:[#allocation2 + $0x38] sm:$0xff]
      %v370 = vld [vmem:[#allocation2 + $0x40] sm:$0xff]
      %v371 = vld [vmem:[#allocation2 + $0x48] sm:$0xff]
      %v372 = vld [vmem:[#allocation2 + $0x50] sm:$0xff]
      %v373 = vld [vmem:[#allocation2 + $0x58] sm:$0xff]
      %v374 = vld [vmem:[#allocation2 + $0x60] sm:$0xff]
      %v375 = vld [vmem:[#allocation2 + $0x68] sm:$0xff]
      %v376 = vld [vmem:[#allocation2 + $0x70] sm:$0xff]
      %v377 = vld [vmem:[#allocation2 + $0x78] sm:$0xff]
      %v378 = vld [vmem:[#allocation2 + $0x80] sm:$0xff]
      %v379 = vld [vmem:[#allocation2 + $0x88] sm:$0xff]
      %v380 = vld [vmem:[#allocation2 + $0x90] sm:$0xff]
      %v381 = vld [vmem:[#allocation2 + $0x98] sm:$0xff]
      %v382 = vld [vmem:[#allocation2 + $0xa0] sm:$0xff]
      %v383 = vld [vmem:[#allocation2 + $0xa8] sm:$0xff]
      %v384 = vld [vmem:[#allocation2 + $0xb0] sm:$0xff]
      %v385 = vld [vmem:[#allocation2 + $0xb8] sm:$0xff]
      %v386 = vld [vmem:[#allocation2 + $0xc0] sm:$0xff]
      %v387 = vld [vmem:[#allocation2 + $0xc8] sm:$0xff]
      %v388 = vld [vmem:[#allocation2 + $0xd0] sm:$0xff]
      %v389 = vld [vmem:[#allocation2 + $0xd8] sm:$0xff]
      %v390 = vld [vmem:[#allocation2 + $0xe0] sm:$0xff]
      %v391 = vld [vmem:[#allocation2 + $0xe8] sm:$0xff]
      %v392 = vld [vmem:[#allocation2 + $0xf0] sm:$0xff]
      %v393 = vld [vmem:[#allocation2 + $0xf8] sm:$0xff]
      %v394 = vld [vmem:[#allocation2 + $0x100] sm:$0xff]
      %v395 = vld [vmem:[#allocation2 + $0x108] sm:$0xff]
      %v396 = vld [vmem:[#allocation2 + $0x110] sm:$0xff]
      %v397 = vld [vmem:[#allocation2 + $0x118] sm:$0xff]
      %v398 = vld [vmem:[#allocation2 + $0x120] sm:$0xff]
      %v399 = vld [vmem:[#allocation2 + $0x128] sm:$0xff]
      %v400 = vld [vmem:[#allocation2 + $0x130] sm:$0xff]
      %v401 = vld [vmem:[#allocation2 + $0x138] sm:$0xff]
      %v402 = vld [vmem:[#allocation2 + $0x140] sm:$0xff]
      %v403 = vld [vmem:[#allocation2 + $0x148] sm:$0xff]
      %v404 = vld [vmem:[#allocation2 + $0x150] sm:$0xff]
      %v405 = vld [vmem:[#allocation2 + $0x158] sm:$0xff]
      %v406 = vld [vmem:[#allocation2 + $0x160] sm:$0xff]
      %v407 = vld [vmem:[#allocation2 + $0x168] sm:$0xff]
      %v408 = vld [vmem:[#allocation2 + $0x170] sm:$0xff]
      %v409 = vld [vmem:[#allocation2 + $0x178] sm:$0xff]
      %v410 = vld [vmem:[#allocation2 + $0x180] sm:$0xff]
      %v411 = vld [vmem:[#allocation2 + $0x188] sm:$0xff]
      %v412 = vld [vmem:[#allocation2 + $0x190] sm:$0xff]
      %v413 = vld [vmem:[#allocation2 + $0x198] sm:$0xff]
      %v414 = vld [vmem:[#allocation2 + $0x1a0] sm:$0xff]
      %v415 = vld [vmem:[#allocation2 + $0x1a8] sm:$0xff]
      %v416 = vld [vmem:[#allocation2 + $0x1b0] sm:$0xff]
      %v417 = vld [vmem:[#allocation2 + $0x1b8] sm:$0xff]
      %v418 = vld [vmem:[#allocation2 + $0x1c0] sm:$0xff]
      %v419 = vld [vmem:[#allocation2 + $0x1c8] sm:$0xff]
      %v420 = vld [vmem:[#allocation2 + $0x1d0] sm:$0xff]
      %v421 = vld [vmem:[#allocation2 + $0x1d8] sm:$0xff]
      %v422 = vld [vmem:[#allocation2 + $0x1e0] sm:$0xff]
      %v423 = vld [vmem:[#allocation2 + $0x1e8] sm:$0xff]
      %v424 = vld [vmem:[#allocation2 + $0x1f0] sm:$0xff]
      %v425 = vld [vmem:[#allocation2 + $0x1f8] sm:$0xff]
      %v426 = vld [vmem:[#allocation2 + $0x200] sm:$0xff]
      %v427 = vld [vmem:[#allocation2 + $0x208] sm:$0xff]
      %v428 = vld [vmem:[#allocation2 + $0x210] sm:$0xff]
      %v429 = vld [vmem:[#allocation2 + $0x218] sm:$0xff]
      %v430 = vld [vmem:[#allocation2 + $0x220] sm:$0xff]
      %v431 = vld [vmem:[#allocation2 + $0x228] sm:$0xff]
      %v432 = vld [vmem:[#allocation2 + $0x230] sm:$0xff]
      %v433 = vld [vmem:[#allocation2 + $0x238] sm:$0xff]
      %v434 = vld [vmem:[#allocation2 + $0x240] sm:$0xff]
      %v435 = vld [vmem:[#allocation2 + $0x248] sm:$0xff]
      %v436 = vld [vmem:[#allocation2 + $0x250] sm:$0xff]
      %v437 = vld [vmem:[#allocation2 + $0x258] sm:$0xff]
      %v438 = vld [vmem:[#allocation2 + $0x260] sm:$0xff]
      %v439 = vld [vmem:[#allocation2 + $0x268] sm:$0xff]
      %v440 = vld [vmem:[#allocation2 + $0x270] sm:$0xff]
      %v441 = vld [vmem:[#allocation2 + $0x278] sm:$0xff]
      %v442 = vld [vmem:[#allocation2 + $0x280] sm:$0xff]
      %v443 = vld [vmem:[#allocation2 + $0x288] sm:$0xff]
      %v444 = vld [vmem:[#allocation2 + $0x290] sm:$0xff]
      %v445 = vld [vmem:[#allocation2 + $0x298] sm:$0xff]
      %v446 = vld [vmem:[#allocation2 + $0x2a0] sm:$0xff]
      %v447 = vld [vmem:[#allocation2 + $0x2a8] sm:$0xff]
      %v448 = vld [vmem:[#allocation2 + $0x2b0] sm:$0xff]
      %v449 = vld [vmem:[#allocation2 + $0x2b8] sm:$0xff]
      %v450 = vld [vmem:[#allocation2 + $0x2c0] sm:$0xff]
      %v451 = vld [vmem:[#allocation2 + $0x2c8] sm:$0xff]
      %v452 = vld [vmem:[#allocation2 + $0x2d0] sm:$0xff]
      %v453 = vld [vmem:[#allocation2 + $0x2d8] sm:$0xff]
      %v454 = vld [vmem:[#allocation2 + $0x2e0] sm:$0xff]
      %v455 = vld [vmem:[#allocation2 + $0x2e8] sm:$0xff]
      %v456 = vld [vmem:[#allocation2 + $0x2f0] sm:$0xff]
      %v457 = vld [vmem:[#allocation2 + $0x2f8] sm:$0xff]
      %v458 = vld [vmem:[#allocation2 + $0x300] sm:$0xff]
      %v459 = vld [vmem:[#allocation2 + $0x308] sm:$0xff]
      %v460 = vld [vmem:[#allocation2 + $0x310] sm:$0xff]
      %v461 = vld [vmem:[#allocation2 + $0x318] sm:$0xff]
      %v462 = vld [vmem:[#allocation2 + $0x320] sm:$0xff]
      %v463 = vld [vmem:[#allocation2 + $0x328] sm:$0xff]
      %v464 = vld [vmem:[#allocation2 + $0x330] sm:$0xff]
      %v465 = vld [vmem:[#allocation2 + $0x338] sm:$0xff]
      %v466 = vld [vmem:[#allocation2 + $0x340] sm:$0xff]
      %v467 = vld [vmem:[#allocation2 + $0x348] sm:$0xff]
      %v468 = vld [vmem:[#allocation2 + $0x350] sm:$0xff]
      %v469 = vld [vmem:[#allocation2 + $0x358] sm:$0xff]
      %v470 = vld [vmem:[#allocation2 + $0x360] sm:$0xff]
      %v471 = vld [vmem:[#allocation2 + $0x368] sm:$0xff]
      %v472 = vld [vmem:[#allocation2 + $0x370] sm:$0xff]
      %v473 = vld [vmem:[#allocation2 + $0x378] sm:$0xff]
      %v474 = vld [vmem:[#allocation2 + $0x380] sm:$0xff]
      %v475 = vld [vmem:[#allocation2 + $0x388] sm:$0xff]
      %v476 = vld [vmem:[#allocation2 + $0x390] sm:$0xff]
      %v477 = vld [vmem:[#allocation2 + $0x398] sm:$0xff]
      %v478 = vld [vmem:[#allocation2 + $0x3a0] sm:$0xff]
      %v479 = vld [vmem:[#allocation2 + $0x3a8] sm:$0xff]
      %v480 = vld [vmem:[#allocation2 + $0x3b0] sm:$0xff]
      %v481 = vld [vmem:[#allocation2 + $0x3b8] sm:$0xff]
      %v482 = vld [vmem:[#allocation2 + $0x3c0] sm:$0xff]
      %v483 = vld [vmem:[#allocation2 + $0x3c8] sm:$0xff]
      %v484 = vld [vmem:[#allocation2 + $0x3d0] sm:$0xff]
      %v485 = vld [vmem:[#allocation2 + $0x3d8] sm:$0xff]
      %v486 = vld [vmem:[#allocation2 + $0x3e0] sm:$0xff]
      %v487 = vld [vmem:[#allocation2 + $0x3e8] sm:$0xff]
      %v488 = vld [vmem:[#allocation2 + $0x3f0] sm:$0xff]
      %v489 = vld [vmem:[#allocation2 + $0x3f8] sm:$0xff]
      %v490 = vld [vmem:[%s212] sm:$0xff]
      %v491 = vld [vmem:[%s212 + $0x8] sm:$0xff]
      %v492 = vld [vmem:[%s212 + $0x10] sm:$0xff]
      %v493 = vld [vmem:[%s212 + $0x18] sm:$0xff]
      %v494 = vld [vmem:[%s212 + $0x20] sm:$0xff]
      %v495 = vld [vmem:[%s212 + $0x28] sm:$0xff]
      %v496 = vld [vmem:[%s212 + $0x30] sm:$0xff]
      %v497 = vld [vmem:[%s212 + $0x38] sm:$0xff]
      %v498 = vld [vmem:[%s212 + $0x40] sm:$0xff]
      %v499 = vld [vmem:[%s212 + $0x48] sm:$0xff]
      %v500 = vld [vmem:[%s212 + $0x50] sm:$0xff]
      %v501 = vld [vmem:[%s212 + $0x58] sm:$0xff]
      %v502 = vld [vmem:[%s212 + $0x60] sm:$0xff]
      %v503 = vld [vmem:[%s212 + $0x68] sm:$0xff]
      %v504 = vld [vmem:[%s212 + $0x70] sm:$0xff]
      %v505 = vld [vmem:[%s212 + $0x78] sm:$0xff]
      %v506 = vld [vmem:[%s212 + $0x80] sm:$0xff]
      %v507 = vld [vmem:[%s212 + $0x88] sm:$0xff]
      %v508 = vld [vmem:[%s212 + $0x90] sm:$0xff]
      %v509 = vld [vmem:[%s212 + $0x98] sm:$0xff]
      %v510 = vld [vmem:[%s212 + $0xa0] sm:$0xff]
      %v511 = vld [vmem:[%s212 + $0xa8] sm:$0xff]
      %v512 = vld [vmem:[%s212 + $0xb0] sm:$0xff]
      %v513 = vld [vmem:[%s212 + $0xb8] sm:$0xff]
      %v514 = vld [vmem:[%s212 + $0xc0] sm:$0xff]
      %v515 = vld [vmem:[%s212 + $0xc8] sm:$0xff]
      %v516 = vld [vmem:[%s212 + $0xd0] sm:$0xff]
      %v517 = vld [vmem:[%s212 + $0xd8] sm:$0xff]
      %v518 = vld [vmem:[%s212 + $0xe0] sm:$0xff]
      %v519 = vld [vmem:[%s212 + $0xe8] sm:$0xff]
      %v520 = vld [vmem:[%s212 + $0xf0] sm:$0xff]
      %v521 = vld [vmem:[%s212 + $0xf8] sm:$0xff]
      %v522 = vld [vmem:[%s212 + $0x100] sm:$0xff]
      %v523 = vld [vmem:[%s212 + $0x108] sm:$0xff]
      %v524 = vld [vmem:[%s212 + $0x110] sm:$0xff]
      %v525 = vld [vmem:[%s212 + $0x118] sm:$0xff]
      %v526 = vld [vmem:[%s212 + $0x120] sm:$0xff]
      %v527 = vld [vmem:[%s212 + $0x128] sm:$0xff]
      %v528 = vld [vmem:[%s212 + $0x130] sm:$0xff]
      %v529 = vld [vmem:[%s212 + $0x138] sm:$0xff]
      %v530 = vld [vmem:[%s212 + $0x140] sm:$0xff]
      %v531 = vld [vmem:[%s212 + $0x148] sm:$0xff]
      %v532 = vld [vmem:[%s212 + $0x150] sm:$0xff]
      %v533 = vld [vmem:[%s212 + $0x158] sm:$0xff]
      %v534 = vld [vmem:[%s212 + $0x160] sm:$0xff]
      %v535 = vld [vmem:[%s212 + $0x168] sm:$0xff]
      %v536 = vld [vmem:[%s212 + $0x170] sm:$0xff]
      %v537 = vld [vmem:[%s212 + $0x178] sm:$0xff]
      %v538 = vld [vmem:[%s212 + $0x180] sm:$0xff]
      %v539 = vld [vmem:[%s212 + $0x188] sm:$0xff]
      %v540 = vld [vmem:[%s212 + $0x190] sm:$0xff]
      %v541 = vld [vmem:[%s212 + $0x198] sm:$0xff]
      %v542 = vld [vmem:[%s212 + $0x1a0] sm:$0xff]
      %v543 = vld [vmem:[%s212 + $0x1a8] sm:$0xff]
      %v544 = vld [vmem:[%s212 + $0x1b0] sm:$0xff]
      %v545 = vld [vmem:[%s212 + $0x1b8] sm:$0xff]
      %v546 = vld [vmem:[%s212 + $0x1c0] sm:$0xff]
      %v547 = vld [vmem:[%s212 + $0x1c8] sm:$0xff]
      %v548 = vld [vmem:[%s212 + $0x1d0] sm:$0xff]
      %v549 = vld [vmem:[%s212 + $0x1d8] sm:$0xff]
      %v550 = vld [vmem:[%s212 + $0x1e0] sm:$0xff]
      %v551 = vld [vmem:[%s212 + $0x1e8] sm:$0xff]
      %v552 = vld [vmem:[%s212 + $0x1f0] sm:$0xff]
      %v553 = vld [vmem:[%s212 + $0x1f8] sm:$0xff]
      %v554 = vld [vmem:[%s212 + $0x200] sm:$0xff]
      %v555 = vld [vmem:[%s212 + $0x208] sm:$0xff]
      %v556 = vld [vmem:[%s212 + $0x210] sm:$0xff]
      %v557 = vld [vmem:[%s212 + $0x218] sm:$0xff]
      %v558 = vld [vmem:[%s212 + $0x220] sm:$0xff]
      %v559 = vld [vmem:[%s212 + $0x228] sm:$0xff]
      %v560 = vld [vmem:[%s212 + $0x230] sm:$0xff]
      %v561 = vld [vmem:[%s212 + $0x238] sm:$0xff]
      %v562 = vld [vmem:[%s212 + $0x240] sm:$0xff]
      %v563 = vld [vmem:[%s212 + $0x248] sm:$0xff]
      %v564 = vld [vmem:[%s212 + $0x250] sm:$0xff]
      %v565 = vld [vmem:[%s212 + $0x258] sm:$0xff]
      %v566 = vld [vmem:[%s212 + $0x260] sm:$0xff]
      %v567 = vld [vmem:[%s212 + $0x268] sm:$0xff]
      %v568 = vld [vmem:[%s212 + $0x270] sm:$0xff]
      %v569 = vld [vmem:[%s212 + $0x278] sm:$0xff]
      %v570 = vld [vmem:[%s212 + $0x280] sm:$0xff]
      %v571 = vld [vmem:[%s212 + $0x288] sm:$0xff]
      %v572 = vld [vmem:[%s212 + $0x290] sm:$0xff]
      %v573 = vld [vmem:[%s212 + $0x298] sm:$0xff]
      %v574 = vld [vmem:[%s212 + $0x2a0] sm:$0xff]
      %v575 = vld [vmem:[%s212 + $0x2a8] sm:$0xff]
      %v576 = vld [vmem:[%s212 + $0x2b0] sm:$0xff]
      %v577 = vld [vmem:[%s212 + $0x2b8] sm:$0xff]
      %v578 = vld [vmem:[%s212 + $0x2c0] sm:$0xff]
      %v579 = vld [vmem:[%s212 + $0x2c8] sm:$0xff]
      %v580 = vld [vmem:[%s212 + $0x2d0] sm:$0xff]
      %v581 = vld [vmem:[%s212 + $0x2d8] sm:$0xff]
      %v582 = vld [vmem:[%s212 + $0x2e0] sm:$0xff]
      %v583 = vld [vmem:[%s212 + $0x2e8] sm:$0xff]
      %v584 = vld [vmem:[%s212 + $0x2f0] sm:$0xff]
      %v585 = vld [vmem:[%s212 + $0x2f8] sm:$0xff]
      %v586 = vld [vmem:[%s212 + $0x300] sm:$0xff]
      %v587 = vld [vmem:[%s212 + $0x308] sm:$0xff]
      %v588 = vld [vmem:[%s212 + $0x310] sm:$0xff]
      %v589 = vld [vmem:[%s212 + $0x318] sm:$0xff]
      %v590 = vld [vmem:[%s212 + $0x320] sm:$0xff]
      %v591 = vld [vmem:[%s212 + $0x328] sm:$0xff]
      %v592 = vld [vmem:[%s212 + $0x330] sm:$0xff]
      %v593 = vld [vmem:[%s212 + $0x338] sm:$0xff]
      %v594 = vld [vmem:[%s212 + $0x340] sm:$0xff]
      %v595 = vld [vmem:[%s212 + $0x348] sm:$0xff]
      %v596 = vld [vmem:[%s212 + $0x350] sm:$0xff]
      %v597 = vld [vmem:[%s212 + $0x358] sm:$0xff]
      %v598 = vld [vmem:[%s212 + $0x360] sm:$0xff]
      %v599 = vld [vmem:[%s212 + $0x368] sm:$0xff]
      %v600 = vld [vmem:[%s212 + $0x370] sm:$0xff]
      %v601 = vld [vmem:[%s212 + $0x378] sm:$0xff]
      %v602 = vld [vmem:[%s212 + $0x380] sm:$0xff]
      %v603 = vld [vmem:[%s212 + $0x388] sm:$0xff]
      %v604 = vld [vmem:[%s212 + $0x390] sm:$0xff]
      %v605 = vld [vmem:[%s212 + $0x398] sm:$0xff]
      %v606 = vld [vmem:[%s212 + $0x3a0] sm:$0xff]
      %v607 = vld [vmem:[%s212 + $0x3a8] sm:$0xff]
      %v608 = vld [vmem:[%s212 + $0x3b0] sm:$0xff]
      %v609 = vld [vmem:[%s212 + $0x3b8] sm:$0xff]
      %v610 = vld [vmem:[%s212 + $0x3c0] sm:$0xff]
      %v611 = vld [vmem:[%s212 + $0x3c8] sm:$0xff]
      %v612 = vld [vmem:[%s212 + $0x3d0] sm:$0xff]
      %v613 = vld [vmem:[%s212 + $0x3d8] sm:$0xff]
      %v614 = vld [vmem:[%s212 + $0x3e0] sm:$0xff]
      %v615 = vld [vmem:[%s212 + $0x3e8] sm:$0xff]
      %v616 = vld [vmem:[%s212 + $0x3f0] sm:$0xff]
      %v617 = vld [vmem:[%s212 + $0x3f8] sm:$0xff]
      %v618 = vld [vmem:[%s218] sm:$0xff]
      %v619 = vld [vmem:[%s218 + $0x8] sm:$0xff]
      %v620 = vld [vmem:[%s218 + $0x10] sm:$0xff]
      %v621 = vld [vmem:[%s218 + $0x18] sm:$0xff]
      %v622 = vld [vmem:[%s218 + $0x20] sm:$0xff]
      %v623 = vld [vmem:[%s218 + $0x28] sm:$0xff]
      %v624 = vld [vmem:[%s218 + $0x30] sm:$0xff]
      %v625 = vld [vmem:[%s218 + $0x38] sm:$0xff]
      %v626 = vld [vmem:[%s218 + $0x40] sm:$0xff]
      %v627 = vld [vmem:[%s218 + $0x48] sm:$0xff]
      %v628 = vld [vmem:[%s218 + $0x50] sm:$0xff]
      %v629 = vld [vmem:[%s218 + $0x58] sm:$0xff]
      %v630 = vld [vmem:[%s218 + $0x60] sm:$0xff]
      %v631 = vld [vmem:[%s218 + $0x68] sm:$0xff]
      %v632 = vld [vmem:[%s218 + $0x70] sm:$0xff]
      %v633 = vld [vmem:[%s218 + $0x78] sm:$0xff]
      %634 = vmatpush.msra.mxu0 %v633
      %635 = vmatpush.msra.mxu0 %v632
      %636 = vmatpush.msra.mxu0 %v631
      %637 = vmatpush.msra.mxu0 %v630
      %638 = vmatpush.msra.mxu0 %v629
      %639 = vmatpush.msra.mxu0 %v628
      %640 = vmatpush.msra.mxu0 %v627
      %641 = vmatpush.msra.mxu0 %v626
      %642 = vmatpush.msra.mxu0 %v625
      %643 = vmatpush.msra.mxu0 %v624
      %644 = vmatpush.msra.mxu0 %v623
      %645 = vmatpush.msra.mxu0 %v622
      %646 = vmatpush.msra.mxu0 %v621
      %647 = vmatpush.msra.mxu0 %v620
      %648 = vmatpush.msra.mxu0 %v619
      %649 = vmatpush.msra.mxu0 %v618
      %650 = vmatmul.f32.gmra.mxu0 %v490
      %v651 = vpop.f32.mrf.mxu0
      %v652 = vadd.f32 0.0, %v651
      %653 = vmatmul.f32.gmra.mxu0 %v491
      %v654 = vpop.f32.mrf.mxu0
      %v655 = vadd.f32 0.0, %v654
      %656 = vmatmul.f32.gmra.mxu0 %v492
      %v657 = vpop.f32.mrf.mxu0
      %v658 = vadd.f32 0.0, %v657
      %659 = vmatmul.f32.gmra.mxu0 %v493
      %v660 = vpop.f32.mrf.mxu0
      %v661 = vadd.f32 0.0, %v660
      %662 = vmatmul.f32.gmra.mxu0 %v494
      %v663 = vpop.f32.mrf.mxu0
      %v664 = vadd.f32 0.0, %v663
      %665 = vmatmul.f32.gmra.mxu0 %v495
      %v666 = vpop.f32.mrf.mxu0
      %v667 = vadd.f32 0.0, %v666
      %668 = vmatmul.f32.gmra.mxu0 %v496
      %v669 = vpop.f32.mrf.mxu0
      %v670 = vadd.f32 0.0, %v669
      %671 = vmatmul.f32.gmra.mxu0 %v497
      %v672 = vpop.f32.mrf.mxu0
      %v673 = vadd.f32 0.0, %v672
      %674 = vmatmul.f32.gmra.mxu0 %v498
      %v675 = vpop.f32.mrf.mxu0
      %v676 = vadd.f32 0.0, %v675
      %677 = vmatmul.f32.gmra.mxu0 %v499
      %v678 = vpop.f32.mrf.mxu0
      %v679 = vadd.f32 0.0, %v678
      %680 = vmatmul.f32.gmra.mxu0 %v500
      %v681 = vpop.f32.mrf.mxu0
      %v682 = vadd.f32 0.0, %v681
      %683 = vmatmul.f32.gmra.mxu0 %v501
      %v684 = vpop.f32.mrf.mxu0
      %v685 = vadd.f32 0.0, %v684
      %686 = vmatmul.f32.gmra.mxu0 %v502
      %v687 = vpop.f32.mrf.mxu0
      %v688 = vadd.f32 0.0, %v687
      %689 = vmatmul.f32.gmra.mxu0 %v503
      %v690 = vpop.f32.mrf.mxu0
      %v691 = vadd.f32 0.0, %v690
      %692 = vmatmul.f32.gmra.mxu0 %v504
      %v693 = vpop.f32.mrf.mxu0
      %v694 = vadd.f32 0.0, %v693
      %695 = vmatmul.f32.gmra.mxu0 %v505
      %v696 = vpop.f32.mrf.mxu0
      %v697 = vadd.f32 0.0, %v696
      %698 = vmatmul.f32.gmra.mxu0 %v506
      %v699 = vpop.f32.mrf.mxu0
      %v700 = vadd.f32 0.0, %v699
      %701 = vmatmul.f32.gmra.mxu0 %v507
      %v702 = vpop.f32.mrf.mxu0
      %v703 = vadd.f32 0.0, %v702
      %704 = vmatmul.f32.gmra.mxu0 %v508
      %v705 = vpop.f32.mrf.mxu0
      %v706 = vadd.f32 0.0, %v705
      %707 = vmatmul.f32.gmra.mxu0 %v509
      %v708 = vpop.f32.mrf.mxu0
      %v709 = vadd.f32 0.0, %v708
      %710 = vmatmul.f32.gmra.mxu0 %v510
      %v711 = vpop.f32.mrf.mxu0
      %v712 = vadd.f32 0.0, %v711
      %713 = vmatmul.f32.gmra.mxu0 %v511
      %v714 = vpop.f32.mrf.mxu0
      %v715 = vadd.f32 0.0, %v714
      %716 = vmatmul.f32.gmra.mxu0 %v512
      %v717 = vpop.f32.mrf.mxu0
      %v718 = vadd.f32 0.0, %v717
      %719 = vmatmul.f32.gmra.mxu0 %v513
      %v720 = vpop.f32.mrf.mxu0
      %v721 = vadd.f32 0.0, %v720
      %722 = vmatmul.f32.gmra.mxu0 %v514
      %v723 = vpop.f32.mrf.mxu0
      %v724 = vadd.f32 0.0, %v723
      %725 = vmatmul.f32.gmra.mxu0 %v515
      %v726 = vpop.f32.mrf.mxu0
      %v727 = vadd.f32 0.0, %v726
      %728 = vmatmul.f32.gmra.mxu0 %v516
      %v729 = vpop.f32.mrf.mxu0
      %v730 = vadd.f32 0.0, %v729
      %731 = vmatmul.f32.gmra.mxu0 %v517
      %v732 = vpop.f32.mrf.mxu0
      %v733 = vadd.f32 0.0, %v732
      %734 = vmatmul.f32.gmra.mxu0 %v518
      %v735 = vpop.f32.mrf.mxu0
      %v736 = vadd.f32 0.0, %v735
      %737 = vmatmul.f32.gmra.mxu0 %v519
      %v738 = vpop.f32.mrf.mxu0
      %v739 = vadd.f32 0.0, %v738
      %740 = vmatmul.f32.gmra.mxu0 %v520
      %v741 = vpop.f32.mrf.mxu0
      %v742 = vadd.f32 0.0, %v741
      %743 = vmatmul.f32.gmra.mxu0 %v521
      %v744 = vpop.f32.mrf.mxu0
      %v745 = vadd.f32 0.0, %v744
      %746 = vmatmul.f32.gmra.mxu0 %v522
      %v747 = vpop.f32.mrf.mxu0
      %v748 = vadd.f32 0.0, %v747
      %749 = vmatmul.f32.gmra.mxu0 %v523
      %v750 = vpop.f32.mrf.mxu0
      %v751 = vadd.f32 0.0, %v750
      %752 = vmatmul.f32.gmra.mxu0 %v524
      %v753 = vpop.f32.mrf.mxu0
      %v754 = vadd.f32 0.0, %v753
      %755 = vmatmul.f32.gmra.mxu0 %v525
      %v756 = vpop.f32.mrf.mxu0
      %v757 = vadd.f32 0.0, %v756
      %758 = vmatmul.f32.gmra.mxu0 %v526
      %v759 = vpop.f32.mrf.mxu0
      %v760 = vadd.f32 0.0, %v759
      %761 = vmatmul.f32.gmra.mxu0 %v527
      %v762 = vpop.f32.mrf.mxu0
      %v763 = vadd.f32 0.0, %v762
      %764 = vmatmul.f32.gmra.mxu0 %v528
      %v765 = vpop.f32.mrf.mxu0
      %v766 = vadd.f32 0.0, %v765
      %767 = vmatmul.f32.gmra.mxu0 %v529
      %v768 = vpop.f32.mrf.mxu0
      %v769 = vadd.f32 0.0, %v768
      %770 = vmatmul.f32.gmra.mxu0 %v530
      %v771 = vpop.f32.mrf.mxu0
      %v772 = vadd.f32 0.0, %v771
      %773 = vmatmul.f32.gmra.mxu0 %v531
      %v774 = vpop.f32.mrf.mxu0
      %v775 = vadd.f32 0.0, %v774
      %776 = vmatmul.f32.gmra.mxu0 %v532
      %v777 = vpop.f32.mrf.mxu0
      %v778 = vadd.f32 0.0, %v777
      %779 = vmatmul.f32.gmra.mxu0 %v533
      %v780 = vpop.f32.mrf.mxu0
      %v781 = vadd.f32 0.0, %v780
      %782 = vmatmul.f32.gmra.mxu0 %v534
      %v783 = vpop.f32.mrf.mxu0
      %v784 = vadd.f32 0.0, %v783
      %785 = vmatmul.f32.gmra.mxu0 %v535
      %v786 = vpop.f32.mrf.mxu0
      %v787 = vadd.f32 0.0, %v786
      %788 = vmatmul.f32.gmra.mxu0 %v536
      %v789 = vpop.f32.mrf.mxu0
      %v790 = vadd.f32 0.0, %v789
      %791 = vmatmul.f32.gmra.mxu0 %v537
      %v792 = vpop.f32.mrf.mxu0
      %v793 = vadd.f32 0.0, %v792
      %794 = vmatmul.f32.gmra.mxu0 %v538
      %v795 = vpop.f32.mrf.mxu0
      %v796 = vadd.f32 0.0, %v795
      %797 = vmatmul.f32.gmra.mxu0 %v539
      %v798 = vpop.f32.mrf.mxu0
      %v799 = vadd.f32 0.0, %v798
      %800 = vmatmul.f32.gmra.mxu0 %v540
      %v801 = vpop.f32.mrf.mxu0
      %v802 = vadd.f32 0.0, %v801
      %803 = vmatmul.f32.gmra.mxu0 %v541
      %v804 = vpop.f32.mrf.mxu0
      %v805 = vadd.f32 0.0, %v804
      %806 = vmatmul.f32.gmra.mxu0 %v542
      %v807 = vpop.f32.mrf.mxu0
      %v808 = vadd.f32 0.0, %v807
      %809 = vmatmul.f32.gmra.mxu0 %v543
      %v810 = vpop.f32.mrf.mxu0
      %v811 = vadd.f32 0.0, %v810
      %812 = vmatmul.f32.gmra.mxu0 %v544
      %v813 = vpop.f32.mrf.mxu0
      %v814 = vadd.f32 0.0, %v813
      %815 = vmatmul.f32.gmra.mxu0 %v545
      %v816 = vpop.f32.mrf.mxu0
      %v817 = vadd.f32 0.0, %v816
      %818 = vmatmul.f32.gmra.mxu0 %v546
      %v819 = vpop.f32.mrf.mxu0
      %v820 = vadd.f32 0.0, %v819
      %821 = vmatmul.f32.gmra.mxu0 %v547
      %v822 = vpop.f32.mrf.mxu0
      %v823 = vadd.f32 0.0, %v822
      %824 = vmatmul.f32.gmra.mxu0 %v548
      %v825 = vpop.f32.mrf.mxu0
      %v826 = vadd.f32 0.0, %v825
      %827 = vmatmul.f32.gmra.mxu0 %v549
      %v828 = vpop.f32.mrf.mxu0
      %v829 = vadd.f32 0.0, %v828
      %830 = vmatmul.f32.gmra.mxu0 %v550
      %v831 = vpop.f32.mrf.mxu0
      %v832 = vadd.f32 0.0, %v831
      %833 = vmatmul.f32.gmra.mxu0 %v551
      %v834 = vpop.f32.mrf.mxu0
      %v835 = vadd.f32 0.0, %v834
      %836 = vmatmul.f32.gmra.mxu0 %v552
      %v837 = vpop.f32.mrf.mxu0
      %v838 = vadd.f32 0.0, %v837
      %839 = vmatmul.f32.gmra.mxu0 %v553
      %v840 = vpop.f32.mrf.mxu0
      %v841 = vadd.f32 0.0, %v840
      %842 = vmatmul.f32.gmra.mxu0 %v554
      %v843 = vpop.f32.mrf.mxu0
      %v844 = vadd.f32 0.0, %v843
      %845 = vmatmul.f32.gmra.mxu0 %v555
      %v846 = vpop.f32.mrf.mxu0
      %v847 = vadd.f32 0.0, %v846
      %848 = vmatmul.f32.gmra.mxu0 %v556
      %v849 = vpop.f32.mrf.mxu0
      %v850 = vadd.f32 0.0, %v849
      %851 = vmatmul.f32.gmra.mxu0 %v557
      %v852 = vpop.f32.mrf.mxu0
      %v853 = vadd.f32 0.0, %v852
      %854 = vmatmul.f32.gmra.mxu0 %v558
      %v855 = vpop.f32.mrf.mxu0
      %v856 = vadd.f32 0.0, %v855
      %857 = vmatmul.f32.gmra.mxu0 %v559
      %v858 = vpop.f32.mrf.mxu0
      %v859 = vadd.f32 0.0, %v858
      %860 = vmatmul.f32.gmra.mxu0 %v560
      %v861 = vpop.f32.mrf.mxu0
      %v862 = vadd.f32 0.0, %v861
      %863 = vmatmul.f32.gmra.mxu0 %v561
      %v864 = vpop.f32.mrf.mxu0
      %v865 = vadd.f32 0.0, %v864
      %866 = vmatmul.f32.gmra.mxu0 %v562
      %v867 = vpop.f32.mrf.mxu0
      %v868 = vadd.f32 0.0, %v867
      %869 = vmatmul.f32.gmra.mxu0 %v563
      %v870 = vpop.f32.mrf.mxu0
      %v871 = vadd.f32 0.0, %v870
      %872 = vmatmul.f32.gmra.mxu0 %v564
      %v873 = vpop.f32.mrf.mxu0
      %v874 = vadd.f32 0.0, %v873
      %875 = vmatmul.f32.gmra.mxu0 %v565
      %v876 = vpop.f32.mrf.mxu0
      %v877 = vadd.f32 0.0, %v876
      %878 = vmatmul.f32.gmra.mxu0 %v566
      %v879 = vpop.f32.mrf.mxu0
      %v880 = vadd.f32 0.0, %v879
      %881 = vmatmul.f32.gmra.mxu0 %v567
      %v882 = vpop.f32.mrf.mxu0
      %v883 = vadd.f32 0.0, %v882
      %884 = vmatmul.f32.gmra.mxu0 %v568
      %v885 = vpop.f32.mrf.mxu0
      %v886 = vadd.f32 0.0, %v885
      %887 = vmatmul.f32.gmra.mxu0 %v569
      %v888 = vpop.f32.mrf.mxu0
      %v889 = vadd.f32 0.0, %v888
      %890 = vmatmul.f32.gmra.mxu0 %v570
      %v891 = vpop.f32.mrf.mxu0
      %v892 = vadd.f32 0.0, %v891
      %893 = vmatmul.f32.gmra.mxu0 %v571
      %v894 = vpop.f32.mrf.mxu0
      %v895 = vadd.f32 0.0, %v894
      %896 = vmatmul.f32.gmra.mxu0 %v572
      %v897 = vpop.f32.mrf.mxu0
      %v898 = vadd.f32 0.0, %v897
      %899 = vmatmul.f32.gmra.mxu0 %v573
      %v900 = vpop.f32.mrf.mxu0
      %v901 = vadd.f32 0.0, %v900
      %902 = vmatmul.f32.gmra.mxu0 %v574
      %v903 = vpop.f32.mrf.mxu0
      %v904 = vadd.f32 0.0, %v903
      %905 = vmatmul.f32.gmra.mxu0 %v575
      %v906 = vpop.f32.mrf.mxu0
      %v907 = vadd.f32 0.0, %v906
      %908 = vmatmul.f32.gmra.mxu0 %v576
      %v909 = vpop.f32.mrf.mxu0
      %v910 = vadd.f32 0.0, %v909
      %911 = vmatmul.f32.gmra.mxu0 %v577
      %v912 = vpop.f32.mrf.mxu0
      %v913 = vadd.f32 0.0, %v912
      %914 = vmatmul.f32.gmra.mxu0 %v578
      %v915 = vpop.f32.mrf.mxu0
      %v916 = vadd.f32 0.0, %v915
      %917 = vmatmul.f32.gmra.mxu0 %v579
      %v918 = vpop.f32.mrf.mxu0
      %v919 = vadd.f32 0.0, %v918
      %920 = vmatmul.f32.gmra.mxu0 %v580
      %v921 = vpop.f32.mrf.mxu0
      %v922 = vadd.f32 0.0, %v921
      %923 = vmatmul.f32.gmra.mxu0 %v581
      %v924 = vpop.f32.mrf.mxu0
      %v925 = vadd.f32 0.0, %v924
      %926 = vmatmul.f32.gmra.mxu0 %v582
      %v927 = vpop.f32.mrf.mxu0
      %v928 = vadd.f32 0.0, %v927
      %929 = vmatmul.f32.gmra.mxu0 %v583
      %v930 = vpop.f32.mrf.mxu0
      %v931 = vadd.f32 0.0, %v930
      %932 = vmatmul.f32.gmra.mxu0 %v584
      %v933 = vpop.f32.mrf.mxu0
      %v934 = vadd.f32 0.0, %v933
      %935 = vmatmul.f32.gmra.mxu0 %v585
      %v936 = vpop.f32.mrf.mxu0
      %v937 = vadd.f32 0.0, %v936
      %938 = vmatmul.f32.gmra.mxu0 %v586
      %v939 = vpop.f32.mrf.mxu0
      %v940 = vadd.f32 0.0, %v939
      %941 = vmatmul.f32.gmra.mxu0 %v587
      %v942 = vpop.f32.mrf.mxu0
      %v943 = vadd.f32 0.0, %v942
      %944 = vmatmul.f32.gmra.mxu0 %v588
      %v945 = vpop.f32.mrf.mxu0
      %v946 = vadd.f32 0.0, %v945
      %947 = vmatmul.f32.gmra.mxu0 %v589
      %v948 = vpop.f32.mrf.mxu0
      %v949 = vadd.f32 0.0, %v948
      %950 = vmatmul.f32.gmra.mxu0 %v590
      %v951 = vpop.f32.mrf.mxu0
      %v952 = vadd.f32 0.0, %v951
      %953 = vmatmul.f32.gmra.mxu0 %v591
      %v954 = vpop.f32.mrf.mxu0
      %v955 = vadd.f32 0.0, %v954
      %956 = vmatmul.f32.gmra.mxu0 %v592
      %v957 = vpop.f32.mrf.mxu0
      %v958 = vadd.f32 0.0, %v957
      %959 = vmatmul.f32.gmra.mxu0 %v593
      %v960 = vpop.f32.mrf.mxu0
      %v961 = vadd.f32 0.0, %v960
      %962 = vmatmul.f32.gmra.mxu0 %v594
      %v963 = vpop.f32.mrf.mxu0
      %v964 = vadd.f32 0.0, %v963
      %965 = vmatmul.f32.gmra.mxu0 %v595
      %v966 = vpop.f32.mrf.mxu0
      %v967 = vadd.f32 0.0, %v966
      %968 = vmatmul.f32.gmra.mxu0 %v596
      %v969 = vpop.f32.mrf.mxu0
      %v970 = vadd.f32 0.0, %v969
      %971 = vmatmul.f32.gmra.mxu0 %v597
      %v972 = vpop.f32.mrf.mxu0
      %v973 = vadd.f32 0.0, %v972
      %974 = vmatmul.f32.gmra.mxu0 %v598
      %v975 = vpop.f32.mrf.mxu0
      %v976 = vadd.f32 0.0, %v975
      %977 = vmatmul.f32.gmra.mxu0 %v599
      %v978 = vpop.f32.mrf.mxu0
      %v979 = vadd.f32 0.0, %v978
      %980 = vmatmul.f32.gmra.mxu0 %v600
      %v981 = vpop.f32.mrf.mxu0
      %v982 = vadd.f32 0.0, %v981
      %983 = vmatmul.f32.gmra.mxu0 %v601
      %v984 = vpop.f32.mrf.mxu0
      %v985 = vadd.f32 0.0, %v984
      %986 = vmatmul.f32.gmra.mxu0 %v602
      %v987 = vpop.f32.mrf.mxu0
      %v988 = vadd.f32 0.0, %v987
      %989 = vmatmul.f32.gmra.mxu0 %v603
      %v990 = vpop.f32.mrf.mxu0
      %v991 = vadd.f32 0.0, %v990
      %992 = vmatmul.f32.gmra.mxu0 %v604
      %v993 = vpop.f32.mrf.mxu0
      %v994 = vadd.f32 0.0, %v993
      %995 = vmatmul.f32.gmra.mxu0 %v605
      %v996 = vpop.f32.mrf.mxu0
      %v997 = vadd.f32 0.0, %v996
      %998 = vmatmul.f32.gmra.mxu0 %v606
      %v999 = vpop.f32.mrf.mxu0
      %v1000 = vadd.f32 0.0, %v999
      %1001 = vmatmul.f32.gmra.mxu0 %v607
      %v1002 = vpop.f32.mrf.mxu0
      %v1003 = vadd.f32 0.0, %v1002
      %1004 = vmatmul.f32.gmra.mxu0 %v608
      %v1005 = vpop.f32.mrf.mxu0
      %v1006 = vadd.f32 0.0, %v1005
      %1007 = vmatmul.f32.gmra.mxu0 %v609
      %v1008 = vpop.f32.mrf.mxu0
      %v1009 = vadd.f32 0.0, %v1008
      %1010 = vmatmul.f32.gmra.mxu0 %v610
      %v1011 = vpop.f32.mrf.mxu0
      %v1012 = vadd.f32 0.0, %v1011
      %1013 = vmatmul.f32.gmra.mxu0 %v611
      %v1014 = vpop.f32.mrf.mxu0
      %v1015 = vadd.f32 0.0, %v1014
      %1016 = vmatmul.f32.gmra.mxu0 %v612
      %v1017 = vpop.f32.mrf.mxu0
      %v1018 = vadd.f32 0.0, %v1017
      %1019 = vmatmul.f32.gmra.mxu0 %v613
      %v1020 = vpop.f32.mrf.mxu0
      %v1021 = vadd.f32 0.0, %v1020
      %1022 = vmatmul.f32.gmra.mxu0 %v614
      %v1023 = vpop.f32.mrf.mxu0
      %v1024 = vadd.f32 0.0, %v1023
      %1025 = vmatmul.f32.gmra.mxu0 %v615
      %v1026 = vpop.f32.mrf.mxu0
      %v1027 = vadd.f32 0.0, %v1026
      %1028 = vmatmul.f32.gmra.mxu0 %v616
      %v1029 = vpop.f32.mrf.mxu0
      %v1030 = vadd.f32 0.0, %v1029
      %1031 = vmatmul.f32.gmra.mxu0 %v617
      %v1032 = vpop.f32.mrf.mxu0
      %v1033 = vadd.f32 0.0, %v1032
      %1034 = vdwg.mxu0
      %v1035 = vadd.f32 %v362, %v652
      %v1036 = vadd.f32 %v363, %v655
      %v1037 = vadd.f32 %v364, %v658
      %v1038 = vadd.f32 %v365, %v661
      %v1039 = vadd.f32 %v366, %v664
      %v1040 = vadd.f32 %v367, %v667
      %v1041 = vadd.f32 %v368, %v670
      %v1042 = vadd.f32 %v369, %v673
      %v1043 = vadd.f32 %v370, %v676
      %v1044 = vadd.f32 %v371, %v679
      %v1045 = vadd.f32 %v372, %v682
      %v1046 = vadd.f32 %v373, %v685
      %v1047 = vadd.f32 %v374, %v688
      %v1048 = vadd.f32 %v375, %v691
      %v1049 = vadd.f32 %v376, %v694
      %v1050 = vadd.f32 %v377, %v697
      %v1051 = vadd.f32 %v378, %v700
      %v1052 = vadd.f32 %v379, %v703
      %v1053 = vadd.f32 %v380, %v706
      %v1054 = vadd.f32 %v381, %v709
      %v1055 = vadd.f32 %v382, %v712
      %v1056 = vadd.f32 %v383, %v715
      %v1057 = vadd.f32 %v384, %v718
      %v1058 = vadd.f32 %v385, %v721
      %v1059 = vadd.f32 %v386, %v724
      %v1060 = vadd.f32 %v387, %v727
      %v1061 = vadd.f32 %v388, %v730
      %v1062 = vadd.f32 %v389, %v733
      %v1063 = vadd.f32 %v390, %v736
      %v1064 = vadd.f32 %v391, %v739
      %v1065 = vadd.f32 %v392, %v742
      %v1066 = vadd.f32 %v393, %v745
      %v1067 = vadd.f32 %v394, %v748
      %v1068 = vadd.f32 %v395, %v751
      %v1069 = vadd.f32 %v396, %v754
      %v1070 = vadd.f32 %v397, %v757
      %v1071 = vadd.f32 %v398, %v760
      %v1072 = vadd.f32 %v399, %v763
      %v1073 = vadd.f32 %v400, %v766
      %v1074 = vadd.f32 %v401, %v769
      %v1075 = vadd.f32 %v402, %v772
      %v1076 = vadd.f32 %v403, %v775
      %v1077 = vadd.f32 %v404, %v778
      %v1078 = vadd.f32 %v405, %v781
      %v1079 = vadd.f32 %v406, %v784
      %v1080 = vadd.f32 %v407, %v787
      %v1081 = vadd.f32 %v408, %v790
      %v1082 = vadd.f32 %v409, %v793
      %v1083 = vadd.f32 %v410, %v796
      %v1084 = vadd.f32 %v411, %v799
      %v1085 = vadd.f32 %v412, %v802
      %v1086 = vadd.f32 %v413, %v805
      %v1087 = vadd.f32 %v414, %v808
      %v1088 = vadd.f32 %v415, %v811
      %v1089 = vadd.f32 %v416, %v814
      %v1090 = vadd.f32 %v417, %v817
      %v1091 = vadd.f32 %v418, %v820
      %v1092 = vadd.f32 %v419, %v823
      %v1093 = vadd.f32 %v420, %v826
      %v1094 = vadd.f32 %v421, %v829
      %v1095 = vadd.f32 %v422, %v832
      %v1096 = vadd.f32 %v423, %v835
      %v1097 = vadd.f32 %v424, %v838
      %v1098 = vadd.f32 %v425, %v841
      %v1099 = vadd.f32 %v426, %v844
      %v1100 = vadd.f32 %v427, %v847
      %v1101 = vadd.f32 %v428, %v850
      %v1102 = vadd.f32 %v429, %v853
      %v1103 = vadd.f32 %v430, %v856
      %v1104 = vadd.f32 %v431, %v859
      %v1105 = vadd.f32 %v432, %v862
      %v1106 = vadd.f32 %v433, %v865
      %v1107 = vadd.f32 %v434, %v868
      %v1108 = vadd.f32 %v435, %v871
      %v1109 = vadd.f32 %v436, %v874
      %v1110 = vadd.f32 %v437, %v877
      %v1111 = vadd.f32 %v438, %v880
      %v1112 = vadd.f32 %v439, %v883
      %v1113 = vadd.f32 %v440, %v886
      %v1114 = vadd.f32 %v441, %v889
      %v1115 = vadd.f32 %v442, %v892
      %v1116 = vadd.f32 %v443, %v895
      %v1117 = vadd.f32 %v444, %v898
      %v1118 = vadd.f32 %v445, %v901
      %v1119 = vadd.f32 %v446, %v904
      %v1120 = vadd.f32 %v447, %v907
      %v1121 = vadd.f32 %v448, %v910
      %v1122 = vadd.f32 %v449, %v913
      %v1123 = vadd.f32 %v450, %v916
      %v1124 = vadd.f32 %v451, %v919
      %v1125 = vadd.f32 %v452, %v922
      %v1126 = vadd.f32 %v453, %v925
      %v1127 = vadd.f32 %v454, %v928
      %v1128 = vadd.f32 %v455, %v931
      %v1129 = vadd.f32 %v456, %v934
      %v1130 = vadd.f32 %v457, %v937
      %v1131 = vadd.f32 %v458, %v940
      %v1132 = vadd.f32 %v459, %v943
      %v1133 = vadd.f32 %v460, %v946
      %v1134 = vadd.f32 %v461, %v949
      %v1135 = vadd.f32 %v462, %v952
      %v1136 = vadd.f32 %v463, %v955
      %v1137 = vadd.f32 %v464, %v958
      %v1138 = vadd.f32 %v465, %v961
      %v1139 = vadd.f32 %v466, %v964
      %v1140 = vadd.f32 %v467, %v967
      %v1141 = vadd.f32 %v468, %v970
      %v1142 = vadd.f32 %v469, %v973
      %v1143 = vadd.f32 %v470, %v976
      %v1144 = vadd.f32 %v471, %v979
      %v1145 = vadd.f32 %v472, %v982
      %v1146 = vadd.f32 %v473, %v985
      %v1147 = vadd.f32 %v474, %v988
      %v1148 = vadd.f32 %v475, %v991
      %v1149 = vadd.f32 %v476, %v994
      %v1150 = vadd.f32 %v477, %v997
      %v1151 = vadd.f32 %v478, %v1000
      %v1152 = vadd.f32 %v479, %v1003
      %v1153 = vadd.f32 %v480, %v1006
      %v1154 = vadd.f32 %v481, %v1009
      %v1155 = vadd.f32 %v482, %v1012
      %v1156 = vadd.f32 %v483, %v1015
      %v1157 = vadd.f32 %v484, %v1018
      %v1158 = vadd.f32 %v485, %v1021
      %v1159 = vadd.f32 %v486, %v1024
      %v1160 = vadd.f32 %v487, %v1027
      %v1161 = vadd.f32 %v488, %v1030
      %v1162 = vadd.f32 %v489, %v1033
      %1163 = vst [vmem:[#allocation2] sm:$0xff] %v1035
      %1164 = vst [vmem:[#allocation2 + $0x8] sm:$0xff] %v1036
      %1165 = vst [vmem:[#allocation2 + $0x10] sm:$0xff] %v1037
      %1166 = vst [vmem:[#allocation2 + $0x18] sm:$0xff] %v1038
      %1167 = vst [vmem:[#allocation2 + $0x20] sm:$0xff] %v1039
      %1168 = vst [vmem:[#allocation2 + $0x28] sm:$0xff] %v1040
      %1169 = vst [vmem:[#allocation2 + $0x30] sm:$0xff] %v1041
      %1170 = vst [vmem:[#allocation2 + $0x38] sm:$0xff] %v1042
      %1171 = vst [vmem:[#allocation2 + $0x40] sm:$0xff] %v1043
      %1172 = vst [vmem:[#allocation2 + $0x48] sm:$0xff] %v1044
      %1173 = vst [vmem:[#allocation2 + $0x50] sm:$0xff] %v1045
      %1174 = vst [vmem:[#allocation2 + $0x58] sm:$0xff] %v1046
      %1175 = vst [vmem:[#allocation2 + $0x60] sm:$0xff] %v1047
      %1176 = vst [vmem:[#allocation2 + $0x68] sm:$0xff] %v1048
      %1177 = vst [vmem:[#allocation2 + $0x70] sm:$0xff] %v1049
      %1178 = vst [vmem:[#allocation2 + $0x78] sm:$0xff] %v1050
      %1179 = vst [vmem:[#allocation2 + $0x80] sm:$0xff] %v1051
      %1180 = vst [vmem:[#allocation2 + $0x88] sm:$0xff] %v1052
      %1181 = vst [vmem:[#allocation2 + $0x90] sm:$0xff] %v1053
      %1182 = vst [vmem:[#allocation2 + $0x98] sm:$0xff] %v1054
      %1183 = vst [vmem:[#allocation2 + $0xa0] sm:$0xff] %v1055
      %1184 = vst [vmem:[#allocation2 + $0xa8] sm:$0xff] %v1056
      %1185 = vst [vmem:[#allocation2 + $0xb0] sm:$0xff] %v1057
      %1186 = vst [vmem:[#allocation2 + $0xb8] sm:$0xff] %v1058
      %1187 = vst [vmem:[#allocation2 + $0xc0] sm:$0xff] %v1059
      %1188 = vst [vmem:[#allocation2 + $0xc8] sm:$0xff] %v1060
      %1189 = vst [vmem:[#allocation2 + $0xd0] sm:$0xff] %v1061
      %1190 = vst [vmem:[#allocation2 + $0xd8] sm:$0xff] %v1062
      %1191 = vst [vmem:[#allocation2 + $0xe0] sm:$0xff] %v1063
      %1192 = vst [vmem:[#allocation2 + $0xe8] sm:$0xff] %v1064
      %1193 = vst [vmem:[#allocation2 + $0xf0] sm:$0xff] %v1065
      %1194 = vst [vmem:[#allocation2 + $0xf8] sm:$0xff] %v1066
      %1195 = vst [vmem:[#allocation2 + $0x100] sm:$0xff] %v1067
      %1196 = vst [vmem:[#allocation2 + $0x108] sm:$0xff] %v1068
      %1197 = vst [vmem:[#allocation2 + $0x110] sm:$0xff] %v1069
      %1198 = vst [vmem:[#allocation2 + $0x118] sm:$0xff] %v1070
      %1199 = vst [vmem:[#allocation2 + $0x120] sm:$0xff] %v1071
      %1200 = vst [vmem:[#allocation2 + $0x128] sm:$0xff] %v1072
      %1201 = vst [vmem:[#allocation2 + $0x130] sm:$0xff] %v1073
      %1202 = vst [vmem:[#allocation2 + $0x138] sm:$0xff] %v1074
      %1203 = vst [vmem:[#allocation2 + $0x140] sm:$0xff] %v1075
      %1204 = vst [vmem:[#allocation2 + $0x148] sm:$0xff] %v1076
      %1205 = vst [vmem:[#allocation2 + $0x150] sm:$0xff] %v1077
      %1206 = vst [vmem:[#allocation2 + $0x158] sm:$0xff] %v1078
      %1207 = vst [vmem:[#allocation2 + $0x160] sm:$0xff] %v1079
      %1208 = vst [vmem:[#allocation2 + $0x168] sm:$0xff] %v1080
      %1209 = vst [vmem:[#allocation2 + $0x170] sm:$0xff] %v1081
      %1210 = vst [vmem:[#allocation2 + $0x178] sm:$0xff] %v1082
      %1211 = vst [vmem:[#allocation2 + $0x180] sm:$0xff] %v1083
      %1212 = vst [vmem:[#allocation2 + $0x188] sm:$0xff] %v1084
      %1213 = vst [vmem:[#allocation2 + $0x190] sm:$0xff] %v1085
      %1214 = vst [vmem:[#allocation2 + $0x198] sm:$0xff] %v1086
      %1215 = vst [vmem:[#allocation2 + $0x1a0] sm:$0xff] %v1087
      %1216 = vst [vmem:[#allocation2 + $0x1a8] sm:$0xff] %v1088
      %1217 = vst [vmem:[#allocation2 + $0x1b0] sm:$0xff] %v1089
      %1218 = vst [vmem:[#allocation2 + $0x1b8] sm:$0xff] %v1090
      %1219 = vst [vmem:[#allocation2 + $0x1c0] sm:$0xff] %v1091
      %1220 = vst [vmem:[#allocation2 + $0x1c8] sm:$0xff] %v1092
      %1221 = vst [vmem:[#allocation2 + $0x1d0] sm:$0xff] %v1093
      %1222 = vst [vmem:[#allocation2 + $0x1d8] sm:$0xff] %v1094
      %1223 = vst [vmem:[#allocation2 + $0x1e0] sm:$0xff] %v1095
      %1224 = vst [vmem:[#allocation2 + $0x1e8] sm:$0xff] %v1096
      %1225 = vst [vmem:[#allocation2 + $0x1f0] sm:$0xff] %v1097
      %1226 = vst [vmem:[#allocation2 + $0x1f8] sm:$0xff] %v1098
      %1227 = vst [vmem:[#allocation2 + $0x200] sm:$0xff] %v1099
      %1228 = vst [vmem:[#allocation2 + $0x208] sm:$0xff] %v1100
      %1229 = vst [vmem:[#allocation2 + $0x210] sm:$0xff] %v1101
      %1230 = vst [vmem:[#allocation2 + $0x218] sm:$0xff] %v1102
      %1231 = vst [vmem:[#allocation2 + $0x220] sm:$0xff] %v1103
      %1232 = vst [vmem:[#allocation2 + $0x228] sm:$0xff] %v1104
      %1233 = vst [vmem:[#allocation2 + $0x230] sm:$0xff] %v1105
      %1234 = vst [vmem:[#allocation2 + $0x238] sm:$0xff] %v1106
      %1235 = vst [vmem:[#allocation2 + $0x240] sm:$0xff] %v1107
      %1236 = vst [vmem:[#allocation2 + $0x248] sm:$0xff] %v1108
      %1237 = vst [vmem:[#allocation2 + $0x250] sm:$0xff] %v1109
      %1238 = vst [vmem:[#allocation2 + $0x258] sm:$0xff] %v1110
      %1239 = vst [vmem:[#allocation2 + $0x260] sm:$0xff] %v1111
      %1240 = vst [vmem:[#allocation2 + $0x268] sm:$0xff] %v1112
      %1241 = vst [vmem:[#allocation2 + $0x270] sm:$0xff] %v1113
      %1242 = vst [vmem:[#allocation2 + $0x278] sm:$0xff] %v1114
      %1243 = vst [vmem:[#allocation2 + $0x280] sm:$0xff] %v1115
      %1244 = vst [vmem:[#allocation2 + $0x288] sm:$0xff] %v1116
      %1245 = vst [vmem:[#allocation2 + $0x290] sm:$0xff] %v1117
      %1246 = vst [vmem:[#allocation2 + $0x298] sm:$0xff] %v1118
      %1247 = vst [vmem:[#allocation2 + $0x2a0] sm:$0xff] %v1119
      %1248 = vst [vmem:[#allocation2 + $0x2a8] sm:$0xff] %v1120
      %1249 = vst [vmem:[#allocation2 + $0x2b0] sm:$0xff] %v1121
      %1250 = vst [vmem:[#allocation2 + $0x2b8] sm:$0xff] %v1122
      %1251 = vst [vmem:[#allocation2 + $0x2c0] sm:$0xff] %v1123
      %1252 = vst [vmem:[#allocation2 + $0x2c8] sm:$0xff] %v1124
      %1253 = vst [vmem:[#allocation2 + $0x2d0] sm:$0xff] %v1125
      %1254 = vst [vmem:[#allocation2 + $0x2d8] sm:$0xff] %v1126
      %1255 = vst [vmem:[#allocation2 + $0x2e0] sm:$0xff] %v1127
      %1256 = vst [vmem:[#allocation2 + $0x2e8] sm:$0xff] %v1128
      %1257 = vst [vmem:[#allocation2 + $0x2f0] sm:$0xff] %v1129
      %1258 = vst [vmem:[#allocation2 + $0x2f8] sm:$0xff] %v1130
      %1259 = vst [vmem:[#allocation2 + $0x300] sm:$0xff] %v1131
      %1260 = vst [vmem:[#allocation2 + $0x308] sm:$0xff] %v1132
      %1261 = vst [vmem:[#allocation2 + $0x310] sm:$0xff] %v1133
      %1262 = vst [vmem:[#allocation2 + $0x318] sm:$0xff] %v1134
      %1263 = vst [vmem:[#allocation2 + $0x320] sm:$0xff] %v1135
      %1264 = vst [vmem:[#allocation2 + $0x328] sm:$0xff] %v1136
      %1265 = vst [vmem:[#allocation2 + $0x330] sm:$0xff] %v1137
      %1266 = vst [vmem:[#allocation2 + $0x338] sm:$0xff] %v1138
      %1267 = vst [vmem:[#allocation2 + $0x340] sm:$0xff] %v1139
      %1268 = vst [vmem:[#allocation2 + $0x348] sm:$0xff] %v1140
      %1269 = vst [vmem:[#allocation2 + $0x350] sm:$0xff] %v1141
      %1270 = vst [vmem:[#allocation2 + $0x358] sm:$0xff] %v1142
      %1271 = vst [vmem:[#allocation2 + $0x360] sm:$0xff] %v1143
      %1272 = vst [vmem:[#allocation2 + $0x368] sm:$0xff] %v1144
      %1273 = vst [vmem:[#allocation2 + $0x370] sm:$0xff] %v1145
      %1274 = vst [vmem:[#allocation2 + $0x378] sm:$0xff] %v1146
      %1275 = vst [vmem:[#allocation2 + $0x380] sm:$0xff] %v1147
      %1276 = vst [vmem:[#allocation2 + $0x388] sm:$0xff] %v1148
      %1277 = vst [vmem:[#allocation2 + $0x390] sm:$0xff] %v1149
      %1278 = vst [vmem:[#allocation2 + $0x398] sm:$0xff] %v1150
      %1279 = vst [vmem:[#allocation2 + $0x3a0] sm:$0xff] %v1151
      %1280 = vst [vmem:[#allocation2 + $0x3a8] sm:$0xff] %v1152
      %1281 = vst [vmem:[#allocation2 + $0x3b0] sm:$0xff] %v1153
      %1282 = vst [vmem:[#allocation2 + $0x3b8] sm:$0xff] %v1154
      %1283 = vst [vmem:[#allocation2 + $0x3c0] sm:$0xff] %v1155
      %1284 = vst [vmem:[#allocation2 + $0x3c8] sm:$0xff] %v1156
      %1285 = vst [vmem:[#allocation2 + $0x3d0] sm:$0xff] %v1157
      %1286 = vst [vmem:[#allocation2 + $0x3d8] sm:$0xff] %v1158
      %1287 = vst [vmem:[#allocation2 + $0x3e0] sm:$0xff] %v1159
      %1288 = vst [vmem:[#allocation2 + $0x3e8] sm:$0xff] %v1160
      %1289 = vst [vmem:[#allocation2 + $0x3f0] sm:$0xff] %v1161
      %1290 = vst [vmem:[#allocation2 + $0x3f8] sm:$0xff] %v1162
      // Predicated region
      $region33: #{double_conv.4} parent=27 // pred_check
        %p1291 = pneg %p230
      $region34: #{double_conv.4} parent=27 // pred_check_branch
        %1293 = sbr.rel (%p1291) target = $region36
      $region35: #{double_conv.4} parent=27 // pred_region
        %v1294 = vld [vmem:[#allocation2] sm:$0xff]
        %v1295 = vld [vmem:[#allocation2 + $0x8] sm:$0xff]
        %v1296 = vld [vmem:[#allocation2 + $0x10] sm:$0xff]
        %v1297 = vld [vmem:[#allocation2 + $0x18] sm:$0xff]
        %v1298 = vld [vmem:[#allocation2 + $0x20] sm:$0xff]
        %v1299 = vld [vmem:[#allocation2 + $0x28] sm:$0xff]
        %v1300 = vld [vmem:[#allocation2 + $0x30] sm:$0xff]
        %v1301 = vld [vmem:[#allocation2 + $0x38] sm:$0xff]
        %v1302 = vld [vmem:[#allocation2 + $0x40] sm:$0xff]
        %v1303 = vld [vmem:[#allocation2 + $0x48] sm:$0xff]
        %v1304 = vld [vmem:[#allocation2 + $0x50] sm:$0xff]
        %v1305 = vld [vmem:[#allocation2 + $0x58] sm:$0xff]
        %v1306 = vld [vmem:[#allocation2 + $0x60] sm:$0xff]
        %v1307 = vld [vmem:[#allocation2 + $0x68] sm:$0xff]
        %v1308 = vld [vmem:[#allocation2 + $0x70] sm:$0xff]
        %v1309 = vld [vmem:[#allocation2 + $0x78] sm:$0xff]
        %v1310 = vld [vmem:[#allocation2 + $0x80] sm:$0xff]
        %v1311 = vld [vmem:[#allocation2 + $0x88] sm:$0xff]
        %v1312 = vld [vmem:[#allocation2 + $0x90] sm:$0xff]
        %v1313 = vld [vmem:[#allocation2 + $0x98] sm:$0xff]
        %v1314 = vld [vmem:[#allocation2 + $0xa0] sm:$0xff]
        %v1315 = vld [vmem:[#allocation2 + $0xa8] sm:$0xff]
        %v1316 = vld [vmem:[#allocation2 + $0xb0] sm:$0xff]
        %v1317 = vld [vmem:[#allocation2 + $0xb8] sm:$0xff]
        %v1318 = vld [vmem:[#allocation2 + $0xc0] sm:$0xff]
        %v1319 = vld [vmem:[#allocation2 + $0xc8] sm:$0xff]
        %v1320 = vld [vmem:[#allocation2 + $0xd0] sm:$0xff]
        %v1321 = vld [vmem:[#allocation2 + $0xd8] sm:$0xff]
        %v1322 = vld [vmem:[#allocation2 + $0xe0] sm:$0xff]
        %v1323 = vld [vmem:[#allocation2 + $0xe8] sm:$0xff]
        %v1324 = vld [vmem:[#allocation2 + $0xf0] sm:$0xff]
        %v1325 = vld [vmem:[#allocation2 + $0xf8] sm:$0xff]
        %v1326 = vld [vmem:[#allocation2 + $0x100] sm:$0xff]
        %v1327 = vld [vmem:[#allocation2 + $0x108] sm:$0xff]
        %v1328 = vld [vmem:[#allocation2 + $0x110] sm:$0xff]
        %v1329 = vld [vmem:[#allocation2 + $0x118] sm:$0xff]
        %v1330 = vld [vmem:[#allocation2 + $0x120] sm:$0xff]
        %v1331 = vld [vmem:[#allocation2 + $0x128] sm:$0xff]
        %v1332 = vld [vmem:[#allocation2 + $0x130] sm:$0xff]
        %v1333 = vld [vmem:[#allocation2 + $0x138] sm:$0xff]
        %v1334 = vld [vmem:[#allocation2 + $0x140] sm:$0xff]
        %v1335 = vld [vmem:[#allocation2 + $0x148] sm:$0xff]
        %v1336 = vld [vmem:[#allocation2 + $0x150] sm:$0xff]
        %v1337 = vld [vmem:[#allocation2 + $0x158] sm:$0xff]
        %v1338 = vld [vmem:[#allocation2 + $0x160] sm:$0xff]
        %v1339 = vld [vmem:[#allocation2 + $0x168] sm:$0xff]
        %v1340 = vld [vmem:[#allocation2 + $0x170] sm:$0xff]
        %v1341 = vld [vmem:[#allocation2 + $0x178] sm:$0xff]
        %v1342 = vld [vmem:[#allocation2 + $0x180] sm:$0xff]
        %v1343 = vld [vmem:[#allocation2 + $0x188] sm:$0xff]
        %v1344 = vld [vmem:[#allocation2 + $0x190] sm:$0xff]
        %v1345 = vld [vmem:[#allocation2 + $0x198] sm:$0xff]
        %v1346 = vld [vmem:[#allocation2 + $0x1a0] sm:$0xff]
        %v1347 = vld [vmem:[#allocation2 + $0x1a8] sm:$0xff]
        %v1348 = vld [vmem:[#allocation2 + $0x1b0] sm:$0xff]
        %v1349 = vld [vmem:[#allocation2 + $0x1b8] sm:$0xff]
        %v1350 = vld [vmem:[#allocation2 + $0x1c0] sm:$0xff]
        %v1351 = vld [vmem:[#allocation2 + $0x1c8] sm:$0xff]
        %v1352 = vld [vmem:[#allocation2 + $0x1d0] sm:$0xff]
        %v1353 = vld [vmem:[#allocation2 + $0x1d8] sm:$0xff]
        %v1354 = vld [vmem:[#allocation2 + $0x1e0] sm:$0xff]
        %v1355 = vld [vmem:[#allocation2 + $0x1e8] sm:$0xff]
        %v1356 = vld [vmem:[#allocation2 + $0x1f0] sm:$0xff]
        %v1357 = vld [vmem:[#allocation2 + $0x1f8] sm:$0xff]
        %v1358 = vld [vmem:[#allocation2 + $0x200] sm:$0xff]
        %v1359 = vld [vmem:[#allocation2 + $0x208] sm:$0xff]
        %v1360 = vld [vmem:[#allocation2 + $0x210] sm:$0xff]
        %v1361 = vld [vmem:[#allocation2 + $0x218] sm:$0xff]
        %v1362 = vld [vmem:[#allocation2 + $0x220] sm:$0xff]
        %v1363 = vld [vmem:[#allocation2 + $0x228] sm:$0xff]
        %v1364 = vld [vmem:[#allocation2 + $0x230] sm:$0xff]
        %v1365 = vld [vmem:[#allocation2 + $0x238] sm:$0xff]
        %v1366 = vld [vmem:[#allocation2 + $0x240] sm:$0xff]
        %v1367 = vld [vmem:[#allocation2 + $0x248] sm:$0xff]
        %v1368 = vld [vmem:[#allocation2 + $0x250] sm:$0xff]
        %v1369 = vld [vmem:[#allocation2 + $0x258] sm:$0xff]
        %v1370 = vld [vmem:[#allocation2 + $0x260] sm:$0xff]
        %v1371 = vld [vmem:[#allocation2 + $0x268] sm:$0xff]
        %v1372 = vld [vmem:[#allocation2 + $0x270] sm:$0xff]
        %v1373 = vld [vmem:[#allocation2 + $0x278] sm:$0xff]
        %v1374 = vld [vmem:[#allocation2 + $0x280] sm:$0xff]
        %v1375 = vld [vmem:[#allocation2 + $0x288] sm:$0xff]
        %v1376 = vld [vmem:[#allocation2 + $0x290] sm:$0xff]
        %v1377 = vld [vmem:[#allocation2 + $0x298] sm:$0xff]
        %v1378 = vld [vmem:[#allocation2 + $0x2a0] sm:$0xff]
        %v1379 = vld [vmem:[#allocation2 + $0x2a8] sm:$0xff]
        %v1380 = vld [vmem:[#allocation2 + $0x2b0] sm:$0xff]
        %v1381 = vld [vmem:[#allocation2 + $0x2b8] sm:$0xff]
        %v1382 = vld [vmem:[#allocation2 + $0x2c0] sm:$0xff]
        %v1383 = vld [vmem:[#allocation2 + $0x2c8] sm:$0xff]
        %v1384 = vld [vmem:[#allocation2 + $0x2d0] sm:$0xff]
        %v1385 = vld [vmem:[#allocation2 + $0x2d8] sm:$0xff]
        %v1386 = vld [vmem:[#allocation2 + $0x2e0] sm:$0xff]
        %v1387 = vld [vmem:[#allocation2 + $0x2e8] sm:$0xff]
        %v1388 = vld [vmem:[#allocation2 + $0x2f0] sm:$0xff]
        %v1389 = vld [vmem:[#allocation2 + $0x2f8] sm:$0xff]
        %v1390 = vld [vmem:[#allocation2 + $0x300] sm:$0xff]
        %v1391 = vld [vmem:[#allocation2 + $0x308] sm:$0xff]
        %v1392 = vld [vmem:[#allocation2 + $0x310] sm:$0xff]
        %v1393 = vld [vmem:[#allocation2 + $0x318] sm:$0xff]
        %v1394 = vld [vmem:[#allocation2 + $0x320] sm:$0xff]
        %v1395 = vld [vmem:[#allocation2 + $0x328] sm:$0xff]
        %v1396 = vld [vmem:[#allocation2 + $0x330] sm:$0xff]
        %v1397 = vld [vmem:[#allocation2 + $0x338] sm:$0xff]
        %v1398 = vld [vmem:[#allocation2 + $0x340] sm:$0xff]
        %v1399 = vld [vmem:[#allocation2 + $0x348] sm:$0xff]
        %v1400 = vld [vmem:[#allocation2 + $0x350] sm:$0xff]
        %v1401 = vld [vmem:[#allocation2 + $0x358] sm:$0xff]
        %v1402 = vld [vmem:[#allocation2 + $0x360] sm:$0xff]
        %v1403 = vld [vmem:[#allocation2 + $0x368] sm:$0xff]
        %v1404 = vld [vmem:[#allocation2 + $0x370] sm:$0xff]
        %v1405 = vld [vmem:[#allocation2 + $0x378] sm:$0xff]
        %v1406 = vld [vmem:[#allocation2 + $0x380] sm:$0xff]
        %v1407 = vld [vmem:[#allocation2 + $0x388] sm:$0xff]
        %v1408 = vld [vmem:[#allocation2 + $0x390] sm:$0xff]
        %v1409 = vld [vmem:[#allocation2 + $0x398] sm:$0xff]
        %v1410 = vld [vmem:[#allocation2 + $0x3a0] sm:$0xff]
        %v1411 = vld [vmem:[#allocation2 + $0x3a8] sm:$0xff]
        %v1412 = vld [vmem:[#allocation2 + $0x3b0] sm:$0xff]
        %v1413 = vld [vmem:[#allocation2 + $0x3b8] sm:$0xff]
        %v1414 = vld [vmem:[#allocation2 + $0x3c0] sm:$0xff]
        %v1415 = vld [vmem:[#allocation2 + $0x3c8] sm:$0xff]
        %v1416 = vld [vmem:[#allocation2 + $0x3d0] sm:$0xff]
        %v1417 = vld [vmem:[#allocation2 + $0x3d8] sm:$0xff]
        %v1418 = vld [vmem:[#allocation2 + $0x3e0] sm:$0xff]
        %v1419 = vld [vmem:[#allocation2 + $0x3e8] sm:$0xff]
        %v1420 = vld [vmem:[#allocation2 + $0x3f0] sm:$0xff]
        %v1421 = vld [vmem:[#allocation2 + $0x3f8] sm:$0xff]
        %1422 = vst [vmem:[%s224] sm:$0xff] %v1294
        %1423 = vst [vmem:[%s224 + $0x8] sm:$0xff] %v1295
        %1424 = vst [vmem:[%s224 + $0x10] sm:$0xff] %v1296
        %1425 = vst [vmem:[%s224 + $0x18] sm:$0xff] %v1297
        %1426 = vst [vmem:[%s224 + $0x20] sm:$0xff] %v1298
        %1427 = vst [vmem:[%s224 + $0x28] sm:$0xff] %v1299
        %1428 = vst [vmem:[%s224 + $0x30] sm:$0xff] %v1300
        %1429 = vst [vmem:[%s224 + $0x38] sm:$0xff] %v1301
        %1430 = vst [vmem:[%s224 + $0x40] sm:$0xff] %v1302
        %1431 = vst [vmem:[%s224 + $0x48] sm:$0xff] %v1303
        %1432 = vst [vmem:[%s224 + $0x50] sm:$0xff] %v1304
        %1433 = vst [vmem:[%s224 + $0x58] sm:$0xff] %v1305
        %1434 = vst [vmem:[%s224 + $0x60] sm:$0xff] %v1306
        %1435 = vst [vmem:[%s224 + $0x68] sm:$0xff] %v1307
        %1436 = vst [vmem:[%s224 + $0x70] sm:$0xff] %v1308
        %1437 = vst [vmem:[%s224 + $0x78] sm:$0xff] %v1309
        %1438 = vst [vmem:[%s224 + $0x80] sm:$0xff] %v1310
        %1439 = vst [vmem:[%s224 + $0x88] sm:$0xff] %v1311
        %1440 = vst [vmem:[%s224 + $0x90] sm:$0xff] %v1312
        %1441 = vst [vmem:[%s224 + $0x98] sm:$0xff] %v1313
        %1442 = vst [vmem:[%s224 + $0xa0] sm:$0xff] %v1314
        %1443 = vst [vmem:[%s224 + $0xa8] sm:$0xff] %v1315
        %1444 = vst [vmem:[%s224 + $0xb0] sm:$0xff] %v1316
        %1445 = vst [vmem:[%s224 + $0xb8] sm:$0xff] %v1317
        %1446 = vst [vmem:[%s224 + $0xc0] sm:$0xff] %v1318
        %1447 = vst [vmem:[%s224 + $0xc8] sm:$0xff] %v1319
        %1448 = vst [vmem:[%s224 + $0xd0] sm:$0xff] %v1320
        %1449 = vst [vmem:[%s224 + $0xd8] sm:$0xff] %v1321
        %1450 = vst [vmem:[%s224 + $0xe0] sm:$0xff] %v1322
        %1451 = vst [vmem:[%s224 + $0xe8] sm:$0xff] %v1323
        %1452 = vst [vmem:[%s224 + $0xf0] sm:$0xff] %v1324
        %1453 = vst [vmem:[%s224 + $0xf8] sm:$0xff] %v1325
        %1454 = vst [vmem:[%s224 + $0x100] sm:$0xff] %v1326
        %1455 = vst [vmem:[%s224 + $0x108] sm:$0xff] %v1327
        %1456 = vst [vmem:[%s224 + $0x110] sm:$0xff] %v1328
        %1457 = vst [vmem:[%s224 + $0x118] sm:$0xff] %v1329
        %1458 = vst [vmem:[%s224 + $0x120] sm:$0xff] %v1330
        %1459 = vst [vmem:[%s224 + $0x128] sm:$0xff] %v1331
        %1460 = vst [vmem:[%s224 + $0x130] sm:$0xff] %v1332
        %1461 = vst [vmem:[%s224 + $0x138] sm:$0xff] %v1333
        %1462 = vst [vmem:[%s224 + $0x140] sm:$0xff] %v1334
        %1463 = vst [vmem:[%s224 + $0x148] sm:$0xff] %v1335
        %1464 = vst [vmem:[%s224 + $0x150] sm:$0xff] %v1336
        %1465 = vst [vmem:[%s224 + $0x158] sm:$0xff] %v1337
        %1466 = vst [vmem:[%s224 + $0x160] sm:$0xff] %v1338
        %1467 = vst [vmem:[%s224 + $0x168] sm:$0xff] %v1339
        %1468 = vst [vmem:[%s224 + $0x170] sm:$0xff] %v1340
        %1469 = vst [vmem:[%s224 + $0x178] sm:$0xff] %v1341
        %1470 = vst [vmem:[%s224 + $0x180] sm:$0xff] %v1342
        %1471 = vst [vmem:[%s224 + $0x188] sm:$0xff] %v1343
        %1472 = vst [vmem:[%s224 + $0x190] sm:$0xff] %v1344
        %1473 = vst [vmem:[%s224 + $0x198] sm:$0xff] %v1345
        %1474 = vst [vmem:[%s224 + $0x1a0] sm:$0xff] %v1346
        %1475 = vst [vmem:[%s224 + $0x1a8] sm:$0xff] %v1347
        %1476 = vst [vmem:[%s224 + $0x1b0] sm:$0xff] %v1348
        %1477 = vst [vmem:[%s224 + $0x1b8] sm:$0xff] %v1349
        %1478 = vst [vmem:[%s224 + $0x1c0] sm:$0xff] %v1350
        %1479 = vst [vmem:[%s224 + $0x1c8] sm:$0xff] %v1351
        %1480 = vst [vmem:[%s224 + $0x1d0] sm:$0xff] %v1352
        %1481 = vst [vmem:[%s224 + $0x1d8] sm:$0xff] %v1353
        %1482 = vst [vmem:[%s224 + $0x1e0] sm:$0xff] %v1354
        %1483 = vst [vmem:[%s224 + $0x1e8] sm:$0xff] %v1355
        %1484 = vst [vmem:[%s224 + $0x1f0] sm:$0xff] %v1356
        %1485 = vst [vmem:[%s224 + $0x1f8] sm:$0xff] %v1357
        %1486 = vst [vmem:[%s224 + $0x200] sm:$0xff] %v1358
        %1487 = vst [vmem:[%s224 + $0x208] sm:$0xff] %v1359
        %1488 = vst [vmem:[%s224 + $0x210] sm:$0xff] %v1360
        %1489 = vst [vmem:[%s224 + $0x218] sm:$0xff] %v1361
        %1490 = vst [vmem:[%s224 + $0x220] sm:$0xff] %v1362
        %1491 = vst [vmem:[%s224 + $0x228] sm:$0xff] %v1363
        %1492 = vst [vmem:[%s224 + $0x230] sm:$0xff] %v1364
        %1493 = vst [vmem:[%s224 + $0x238] sm:$0xff] %v1365
        %1494 = vst [vmem:[%s224 + $0x240] sm:$0xff] %v1366
        %1495 = vst [vmem:[%s224 + $0x248] sm:$0xff] %v1367
        %1496 = vst [vmem:[%s224 + $0x250] sm:$0xff] %v1368
        %1497 = vst [vmem:[%s224 + $0x258] sm:$0xff] %v1369
        %1498 = vst [vmem:[%s224 + $0x260] sm:$0xff] %v1370
        %1499 = vst [vmem:[%s224 + $0x268] sm:$0xff] %v1371
        %1500 = vst [vmem:[%s224 + $0x270] sm:$0xff] %v1372
        %1501 = vst [vmem:[%s224 + $0x278] sm:$0xff] %v1373
        %1502 = vst [vmem:[%s224 + $0x280] sm:$0xff] %v1374
        %1503 = vst [vmem:[%s224 + $0x288] sm:$0xff] %v1375
        %1504 = vst [vmem:[%s224 + $0x290] sm:$0xff] %v1376
        %1505 = vst [vmem:[%s224 + $0x298] sm:$0xff] %v1377
        %1506 = vst [vmem:[%s224 + $0x2a0] sm:$0xff] %v1378
        %1507 = vst [vmem:[%s224 + $0x2a8] sm:$0xff] %v1379
        %1508 = vst [vmem:[%s224 + $0x2b0] sm:$0xff] %v1380
        %1509 = vst [vmem:[%s224 + $0x2b8] sm:$0xff] %v1381
        %1510 = vst [vmem:[%s224 + $0x2c0] sm:$0xff] %v1382
        %1511 = vst [vmem:[%s224 + $0x2c8] sm:$0xff] %v1383
        %1512 = vst [vmem:[%s224 + $0x2d0] sm:$0xff] %v1384
        %1513 = vst [vmem:[%s224 + $0x2d8] sm:$0xff] %v1385
        %1514 = vst [vmem:[%s224 + $0x2e0] sm:$0xff] %v1386
        %1515 = vst [vmem:[%s224 + $0x2e8] sm:$0xff] %v1387
        %1516 = vst [vmem:[%s224 + $0x2f0] sm:$0xff] %v1388
        %1517 = vst [vmem:[%s224 + $0x2f8] sm:$0xff] %v1389
        %1518 = vst [vmem:[%s224 + $0x300] sm:$0xff] %v1390
        %1519 = vst [vmem:[%s224 + $0x308] sm:$0xff] %v1391
        %1520 = vst [vmem:[%s224 + $0x310] sm:$0xff] %v1392
        %1521 = vst [vmem:[%s224 + $0x318] sm:$0xff] %v1393
        %1522 = vst [vmem:[%s224 + $0x320] sm:$0xff] %v1394
        %1523 = vst [vmem:[%s224 + $0x328] sm:$0xff] %v1395
        %1524 = vst [vmem:[%s224 + $0x330] sm:$0xff] %v1396
        %1525 = vst [vmem:[%s224 + $0x338] sm:$0xff] %v1397
        %1526 = vst [vmem:[%s224 + $0x340] sm:$0xff] %v1398
        %1527 = vst [vmem:[%s224 + $0x348] sm:$0xff] %v1399
        %1528 = vst [vmem:[%s224 + $0x350] sm:$0xff] %v1400
        %1529 = vst [vmem:[%s224 + $0x358] sm:$0xff] %v1401
        %1530 = vst [vmem:[%s224 + $0x360] sm:$0xff] %v1402
        %1531 = vst [vmem:[%s224 + $0x368] sm:$0xff] %v1403
        %1532 = vst [vmem:[%s224 + $0x370] sm:$0xff] %v1404
        %1533 = vst [vmem:[%s224 + $0x378] sm:$0xff] %v1405
        %1534 = vst [vmem:[%s224 + $0x380] sm:$0xff] %v1406
        %1535 = vst [vmem:[%s224 + $0x388] sm:$0xff] %v1407
        %1536 = vst [vmem:[%s224 + $0x390] sm:$0xff] %v1408
        %1537 = vst [vmem:[%s224 + $0x398] sm:$0xff] %v1409
        %1538 = vst [vmem:[%s224 + $0x3a0] sm:$0xff] %v1410
        %1539 = vst [vmem:[%s224 + $0x3a8] sm:$0xff] %v1411
        %1540 = vst [vmem:[%s224 + $0x3b0] sm:$0xff] %v1412
        %1541 = vst [vmem:[%s224 + $0x3b8] sm:$0xff] %v1413
        %1542 = vst [vmem:[%s224 + $0x3c0] sm:$0xff] %v1414
        %1543 = vst [vmem:[%s224 + $0x3c8] sm:$0xff] %v1415
        %1544 = vst [vmem:[%s224 + $0x3d0] sm:$0xff] %v1416
        %1545 = vst [vmem:[%s224 + $0x3d8] sm:$0xff] %v1417
        %1546 = vst [vmem:[%s224 + $0x3e0] sm:$0xff] %v1418
        %1547 = vst [vmem:[%s224 + $0x3e8] sm:$0xff] %v1419
        %1548 = vst [vmem:[%s224 + $0x3f0] sm:$0xff] %v1420
        %1549 = vst [vmem:[%s224 + $0x3f8] sm:$0xff] %v1421
        %v1550 = vadd.f32 %v1294, %v1295
        %v1551 = vadd.f32 %v1550, %v1296
        %v1552 = vadd.f32 %v1551, %v1297
        %v1553 = vadd.f32 %v1552, %v1298
        %v1554 = vadd.f32 %v1553, %v1299
        %v1555 = vadd.f32 %v1554, %v1300
        %v1556 = vadd.f32 %v1555, %v1301
        %v1557 = vadd.f32 %v1556, %v1302
        %v1558 = vadd.f32 %v1557, %v1303
        %v1559 = vadd.f32 %v1558, %v1304
        %v1560 = vadd.f32 %v1559, %v1305
        %v1561 = vadd.f32 %v1560, %v1306
        %v1562 = vadd.f32 %v1561, %v1307
        %v1563 = vadd.f32 %v1562, %v1308
        %v1564 = vadd.f32 %v1563, %v1309
        %v1565 = vadd.f32 %v1564, %v1310
        %v1566 = vadd.f32 %v1565, %v1311
        %v1567 = vadd.f32 %v1566, %v1312
        %v1568 = vadd.f32 %v1567, %v1313
        %v1569 = vadd.f32 %v1568, %v1314
        %v1570 = vadd.f32 %v1569, %v1315
        %v1571 = vadd.f32 %v1570, %v1316
        %v1572 = vadd.f32 %v1571, %v1317
        %v1573 = vadd.f32 %v1572, %v1318
        %v1574 = vadd.f32 %v1573, %v1319
        %v1575 = vadd.f32 %v1574, %v1320
        %v1576 = vadd.f32 %v1575, %v1321
        %v1577 = vadd.f32 %v1576, %v1322
        %v1578 = vadd.f32 %v1577, %v1323
        %v1579 = vadd.f32 %v1578, %v1324
        %v1580 = vadd.f32 %v1579, %v1325
        %v1581 = vadd.f32 %v1580, %v1326
        %v1582 = vadd.f32 %v1581, %v1327
        %v1583 = vadd.f32 %v1582, %v1328
        %v1584 = vadd.f32 %v1583, %v1329
        %v1585 = vadd.f32 %v1584, %v1330
        %v1586 = vadd.f32 %v1585, %v1331
        %v1587 = vadd.f32 %v1586, %v1332
        %v1588 = vadd.f32 %v1587, %v1333
        %v1589 = vadd.f32 %v1588, %v1334
        %v1590 = vadd.f32 %v1589, %v1335
        %v1591 = vadd.f32 %v1590, %v1336
        %v1592 = vadd.f32 %v1591, %v1337
        %v1593 = vadd.f32 %v1592, %v1338
        %v1594 = vadd.f32 %v1593, %v1339
        %v1595 = vadd.f32 %v1594, %v1340
        %v1596 = vadd.f32 %v1595, %v1341
        %v1597 = vadd.f32 %v1596, %v1342
        %v1598 = vadd.f32 %v1597, %v1343
        %v1599 = vadd.f32 %v1598, %v1344
        %v1600 = vadd.f32 %v1599, %v1345
        %v1601 = vadd.f32 %v1600, %v1346
        %v1602 = vadd.f32 %v1601, %v1347
        %v1603 = vadd.f32 %v1602, %v1348
        %v1604 = vadd.f32 %v1603, %v1349
        %v1605 = vadd.f32 %v1604, %v1350
        %v1606 = vadd.f32 %v1605, %v1351
        %v1607 = vadd.f32 %v1606, %v1352
        %v1608 = vadd.f32 %v1607, %v1353
        %v1609 = vadd.f32 %v1608, %v1354
        %v1610 = vadd.f32 %v1609, %v1355
        %v1611 = vadd.f32 %v1610, %v1356
        %v1612 = vadd.f32 %v1611, %v1357
        %v1613 = vadd.f32 %v1612, %v1358
        %v1614 = vadd.f32 %v1613, %v1359
        %v1615 = vadd.f32 %v1614, %v1360
        %v1616 = vadd.f32 %v1615, %v1361
        %v1617 = vadd.f32 %v1616, %v1362
        %v1618 = vadd.f32 %v1617, %v1363
        %v1619 = vadd.f32 %v1618, %v1364
        %v1620 = vadd.f32 %v1619, %v1365
        %v1621 = vadd.f32 %v1620, %v1366
        %v1622 = vadd.f32 %v1621, %v1367
        %v1623 = vadd.f32 %v1622, %v1368
        %v1624 = vadd.f32 %v1623, %v1369
        %v1625 = vadd.f32 %v1624, %v1370
        %v1626 = vadd.f32 %v1625, %v1371
        %v1627 = vadd.f32 %v1626, %v1372
        %v1628 = vadd.f32 %v1627, %v1373
        %v1629 = vadd.f32 %v1628, %v1374
        %v1630 = vadd.f32 %v1629, %v1375
        %v1631 = vadd.f32 %v1630, %v1376
        %v1632 = vadd.f32 %v1631, %v1377
        %v1633 = vadd.f32 %v1632, %v1378
        %v1634 = vadd.f32 %v1633, %v1379
        %v1635 = vadd.f32 %v1634, %v1380
        %v1636 = vadd.f32 %v1635, %v1381
        %v1637 = vadd.f32 %v1636, %v1382
        %v1638 = vadd.f32 %v1637, %v1383
        %v1639 = vadd.f32 %v1638, %v1384
        %v1640 = vadd.f32 %v1639, %v1385
        %v1641 = vadd.f32 %v1640, %v1386
        %v1642 = vadd.f32 %v1641, %v1387
        %v1643 = vadd.f32 %v1642, %v1388
        %v1644 = vadd.f32 %v1643, %v1389
        %v1645 = vadd.f32 %v1644, %v1390
        %v1646 = vadd.f32 %v1645, %v1391
        %v1647 = vadd.f32 %v1646, %v1392
        %v1648 = vadd.f32 %v1647, %v1393
        %v1649 = vadd.f32 %v1648, %v1394
        %v1650 = vadd.f32 %v1649, %v1395
        %v1651 = vadd.f32 %v1650, %v1396
        %v1652 = vadd.f32 %v1651, %v1397
        %v1653 = vadd.f32 %v1652, %v1398
        %v1654 = vadd.f32 %v1653, %v1399
        %v1655 = vadd.f32 %v1654, %v1400
        %v1656 = vadd.f32 %v1655, %v1401
        %v1657 = vadd.f32 %v1656, %v1402
        %v1658 = vadd.f32 %v1657, %v1403
        %v1659 = vadd.f32 %v1658, %v1404
        %v1660 = vadd.f32 %v1659, %v1405
        %v1661 = vadd.f32 %v1660, %v1406
        %v1662 = vadd.f32 %v1661, %v1407
        %v1663 = vadd.f32 %v1662, %v1408
        %v1664 = vadd.f32 %v1663, %v1409
        %v1665 = vadd.f32 %v1664, %v1410
        %v1666 = vadd.f32 %v1665, %v1411
        %v1667 = vadd.f32 %v1666, %v1412
        %v1668 = vadd.f32 %v1667, %v1413
        %v1669 = vadd.f32 %v1668, %v1414
        %v1670 = vadd.f32 %v1669, %v1415
        %v1671 = vadd.f32 %v1670, %v1416
        %v1672 = vadd.f32 %v1671, %v1417
        %v1673 = vadd.f32 %v1672, %v1418
        %v1674 = vadd.f32 %v1673, %v1419
        %v1675 = vadd.f32 %v1674, %v1420
        %v1676 = vadd.f32 %v1675, %v1421
        %v1677 = vrot.slane %v1676, 4
        %v1678 = vadd.f32 %v1676, %v1677
        %v1679 = vrot.slane %v1678, 2
        %v1680 = vadd.f32 %v1678, %v1679
        %v1681 = vrot.slane %v1680, 1
        %v1682 = vadd.f32 %v1680, %v1681
        %v1683 = vmul.f32 %v1294, %v1294
        %v1684 = vmul.f32 %v1295, %v1295
        %v1685 = vmul.f32 %v1296, %v1296
        %v1686 = vmul.f32 %v1297, %v1297
        %v1687 = vmul.f32 %v1298, %v1298
        %v1688 = vmul.f32 %v1299, %v1299
        %v1689 = vmul.f32 %v1300, %v1300
        %v1690 = vmul.f32 %v1301, %v1301
        %v1691 = vmul.f32 %v1302, %v1302
        %v1692 = vmul.f32 %v1303, %v1303
        %v1693 = vmul.f32 %v1304, %v1304
        %v1694 = vmul.f32 %v1305, %v1305
        %v1695 = vmul.f32 %v1306, %v1306
        %v1696 = vmul.f32 %v1307, %v1307
        %v1697 = vmul.f32 %v1308, %v1308
        %v1698 = vmul.f32 %v1309, %v1309
        %v1699 = vmul.f32 %v1310, %v1310
        %v1700 = vmul.f32 %v1311, %v1311
        %v1701 = vmul.f32 %v1312, %v1312
        %v1702 = vmul.f32 %v1313, %v1313
        %v1703 = vmul.f32 %v1314, %v1314
        %v1704 = vmul.f32 %v1315, %v1315
        %v1705 = vmul.f32 %v1316, %v1316
        %v1706 = vmul.f32 %v1317, %v1317
        %v1707 = vmul.f32 %v1318, %v1318
        %v1708 = vmul.f32 %v1319, %v1319
        %v1709 = vmul.f32 %v1320, %v1320
        %v1710 = vmul.f32 %v1321, %v1321
        %v1711 = vmul.f32 %v1322, %v1322
        %v1712 = vmul.f32 %v1323, %v1323
        %v1713 = vmul.f32 %v1324, %v1324
        %v1714 = vmul.f32 %v1325, %v1325
        %v1715 = vmul.f32 %v1326, %v1326
        %v1716 = vmul.f32 %v1327, %v1327
        %v1717 = vmul.f32 %v1328, %v1328
        %v1718 = vmul.f32 %v1329, %v1329
        %v1719 = vmul.f32 %v1330, %v1330
        %v1720 = vmul.f32 %v1331, %v1331
        %v1721 = vmul.f32 %v1332, %v1332
        %v1722 = vmul.f32 %v1333, %v1333
        %v1723 = vmul.f32 %v1334, %v1334
        %v1724 = vmul.f32 %v1335, %v1335
        %v1725 = vmul.f32 %v1336, %v1336
        %v1726 = vmul.f32 %v1337, %v1337
        %v1727 = vmul.f32 %v1338, %v1338
        %v1728 = vmul.f32 %v1339, %v1339
        %v1729 = vmul.f32 %v1340, %v1340
        %v1730 = vmul.f32 %v1341, %v1341
        %v1731 = vmul.f32 %v1342, %v1342
        %v1732 = vmul.f32 %v1343, %v1343
        %v1733 = vmul.f32 %v1344, %v1344
        %v1734 = vmul.f32 %v1345, %v1345
        %v1735 = vmul.f32 %v1346, %v1346
        %v1736 = vmul.f32 %v1347, %v1347
        %v1737 = vmul.f32 %v1348, %v1348
        %v1738 = vmul.f32 %v1349, %v1349
        %v1739 = vmul.f32 %v1350, %v1350
        %v1740 = vmul.f32 %v1351, %v1351
        %v1741 = vmul.f32 %v1352, %v1352
        %v1742 = vmul.f32 %v1353, %v1353
        %v1743 = vmul.f32 %v1354, %v1354
        %v1744 = vmul.f32 %v1355, %v1355
        %v1745 = vmul.f32 %v1356, %v1356
        %v1746 = vmul.f32 %v1357, %v1357
        %v1747 = vmul.f32 %v1358, %v1358
        %v1748 = vmul.f32 %v1359, %v1359
        %v1749 = vmul.f32 %v1360, %v1360
        %v1750 = vmul.f32 %v1361, %v1361
        %v1751 = vmul.f32 %v1362, %v1362
        %v1752 = vmul.f32 %v1363, %v1363
        %v1753 = vmul.f32 %v1364, %v1364
        %v1754 = vmul.f32 %v1365, %v1365
        %v1755 = vmul.f32 %v1366, %v1366
        %v1756 = vmul.f32 %v1367, %v1367
        %v1757 = vmul.f32 %v1368, %v1368
        %v1758 = vmul.f32 %v1369, %v1369
        %v1759 = vmul.f32 %v1370, %v1370
        %v1760 = vmul.f32 %v1371, %v1371
        %v1761 = vmul.f32 %v1372, %v1372
        %v1762 = vmul.f32 %v1373, %v1373
        %v1763 = vmul.f32 %v1374, %v1374
        %v1764 = vmul.f32 %v1375, %v1375
        %v1765 = vmul.f32 %v1376, %v1376
        %v1766 = vmul.f32 %v1377, %v1377
        %v1767 = vmul.f32 %v1378, %v1378
        %v1768 = vmul.f32 %v1379, %v1379
        %v1769 = vmul.f32 %v1380, %v1380
        %v1770 = vmul.f32 %v1381, %v1381
        %v1771 = vmul.f32 %v1382, %v1382
        %v1772 = vmul.f32 %v1383, %v1383
        %v1773 = vmul.f32 %v1384, %v1384
        %v1774 = vmul.f32 %v1385, %v1385
        %v1775 = vmul.f32 %v1386, %v1386
        %v1776 = vmul.f32 %v1387, %v1387
        %v1777 = vmul.f32 %v1388, %v1388
        %v1778 = vmul.f32 %v1389, %v1389
        %v1779 = vmul.f32 %v1390, %v1390
        %v1780 = vmul.f32 %v1391, %v1391
        %v1781 = vmul.f32 %v1392, %v1392
        %v1782 = vmul.f32 %v1393, %v1393
        %v1783 = vmul.f32 %v1394, %v1394
        %v1784 = vmul.f32 %v1395, %v1395
        %v1785 = vmul.f32 %v1396, %v1396
        %v1786 = vmul.f32 %v1397, %v1397
        %v1787 = vmul.f32 %v1398, %v1398
        %v1788 = vmul.f32 %v1399, %v1399
        %v1789 = vmul.f32 %v1400, %v1400
        %v1790 = vmul.f32 %v1401, %v1401
        %v1791 = vmul.f32 %v1402, %v1402
        %v1792 = vmul.f32 %v1403, %v1403
        %v1793 = vmul.f32 %v1404, %v1404
        %v1794 = vmul.f32 %v1405, %v1405
        %v1795 = vmul.f32 %v1406, %v1406
        %v1796 = vmul.f32 %v1407, %v1407
        %v1797 = vmul.f32 %v1408, %v1408
        %v1798 = vmul.f32 %v1409, %v1409
        %v1799 = vmul.f32 %v1410, %v1410
        %v1800 = vmul.f32 %v1411, %v1411
        %v1801 = vmul.f32 %v1412, %v1412
        %v1802 = vmul.f32 %v1413, %v1413
        %v1803 = vmul.f32 %v1414, %v1414
        %v1804 = vmul.f32 %v1415, %v1415
        %v1805 = vmul.f32 %v1416, %v1416
        %v1806 = vmul.f32 %v1417, %v1417
        %v1807 = vmul.f32 %v1418, %v1418
        %v1808 = vmul.f32 %v1419, %v1419
        %v1809 = vmul.f32 %v1420, %v1420
        %v1810 = vmul.f32 %v1421, %v1421
        %v1811 = vadd.f32 %v1683, %v1684
        %v1812 = vadd.f32 %v1811, %v1685
        %v1813 = vadd.f32 %v1812, %v1686
        %v1814 = vadd.f32 %v1813, %v1687
        %v1815 = vadd.f32 %v1814, %v1688
        %v1816 = vadd.f32 %v1815, %v1689
        %v1817 = vadd.f32 %v1816, %v1690
        %v1818 = vadd.f32 %v1817, %v1691
        %v1819 = vadd.f32 %v1818, %v1692
        %v1820 = vadd.f32 %v1819, %v1693
        %v1821 = vadd.f32 %v1820, %v1694
        %v1822 = vadd.f32 %v1821, %v1695
        %v1823 = vadd.f32 %v1822, %v1696
        %v1824 = vadd.f32 %v1823, %v1697
        %v1825 = vadd.f32 %v1824, %v1698
        %v1826 = vadd.f32 %v1825, %v1699
        %v1827 = vadd.f32 %v1826, %v1700
        %v1828 = vadd.f32 %v1827, %v1701
        %v1829 = vadd.f32 %v1828, %v1702
        %v1830 = vadd.f32 %v1829, %v1703
        %v1831 = vadd.f32 %v1830, %v1704
        %v1832 = vadd.f32 %v1831, %v1705
        %v1833 = vadd.f32 %v1832, %v1706
        %v1834 = vadd.f32 %v1833, %v1707
        %v1835 = vadd.f32 %v1834, %v1708
        %v1836 = vadd.f32 %v1835, %v1709
        %v1837 = vadd.f32 %v1836, %v1710
        %v1838 = vadd.f32 %v1837, %v1711
        %v1839 = vadd.f32 %v1838, %v1712
        %v1840 = vadd.f32 %v1839, %v1713
        %v1841 = vadd.f32 %v1840, %v1714
        %v1842 = vadd.f32 %v1841, %v1715
        %v1843 = vadd.f32 %v1842, %v1716
        %v1844 = vadd.f32 %v1843, %v1717
        %v1845 = vadd.f32 %v1844, %v1718
        %v1846 = vadd.f32 %v1845, %v1719
        %v1847 = vadd.f32 %v1846, %v1720
        %v1848 = vadd.f32 %v1847, %v1721
        %v1849 = vadd.f32 %v1848, %v1722
        %v1850 = vadd.f32 %v1849, %v1723
        %v1851 = vadd.f32 %v1850, %v1724
        %v1852 = vadd.f32 %v1851, %v1725
        %v1853 = vadd.f32 %v1852, %v1726
        %v1854 = vadd.f32 %v1853, %v1727
        %v1855 = vadd.f32 %v1854, %v1728
        %v1856 = vadd.f32 %v1855, %v1729
        %v1857 = vadd.f32 %v1856, %v1730
        %v1858 = vadd.f32 %v1857, %v1731
        %v1859 = vadd.f32 %v1858, %v1732
        %v1860 = vadd.f32 %v1859, %v1733
        %v1861 = vadd.f32 %v1860, %v1734
        %v1862 = vadd.f32 %v1861, %v1735
        %v1863 = vadd.f32 %v1862, %v1736
        %v1864 = vadd.f32 %v1863, %v1737
        %v1865 = vadd.f32 %v1864, %v1738
        %v1866 = vadd.f32 %v1865, %v1739
        %v1867 = vadd.f32 %v1866, %v1740
        %v1868 = vadd.f32 %v1867, %v1741
        %v1869 = vadd.f32 %v1868, %v1742
        %v1870 = vadd.f32 %v1869, %v1743
        %v1871 = vadd.f32 %v1870, %v1744
        %v1872 = vadd.f32 %v1871, %v1745
        %v1873 = vadd.f32 %v1872, %v1746
        %v1874 = vadd.f32 %v1873, %v1747
        %v1875 = vadd.f32 %v1874, %v1748
        %v1876 = vadd.f32 %v1875, %v1749
        %v1877 = vadd.f32 %v1876, %v1750
        %v1878 = vadd.f32 %v1877, %v1751
        %v1879 = vadd.f32 %v1878, %v1752
        %v1880 = vadd.f32 %v1879, %v1753
        %v1881 = vadd.f32 %v1880, %v1754
        %v1882 = vadd.f32 %v1881, %v1755
        %v1883 = vadd.f32 %v1882, %v1756
        %v1884 = vadd.f32 %v1883, %v1757
        %v1885 = vadd.f32 %v1884, %v1758
        %v1886 = vadd.f32 %v1885, %v1759
        %v1887 = vadd.f32 %v1886, %v1760
        %v1888 = vadd.f32 %v1887, %v1761
        %v1889 = vadd.f32 %v1888, %v1762
        %v1890 = vadd.f32 %v1889, %v1763
        %v1891 = vadd.f32 %v1890, %v1764
        %v1892 = vadd.f32 %v1891, %v1765
        %v1893 = vadd.f32 %v1892, %v1766
        %v1894 = vadd.f32 %v1893, %v1767
        %v1895 = vadd.f32 %v1894, %v1768
        %v1896 = vadd.f32 %v1895, %v1769
        %v1897 = vadd.f32 %v1896, %v1770
        %v1898 = vadd.f32 %v1897, %v1771
        %v1899 = vadd.f32 %v1898, %v1772
        %v1900 = vadd.f32 %v1899, %v1773
        %v1901 = vadd.f32 %v1900, %v1774
        %v1902 = vadd.f32 %v1901, %v1775
        %v1903 = vadd.f32 %v1902, %v1776
        %v1904 = vadd.f32 %v1903, %v1777
        %v1905 = vadd.f32 %v1904, %v1778
        %v1906 = vadd.f32 %v1905, %v1779
        %v1907 = vadd.f32 %v1906, %v1780
        %v1908 = vadd.f32 %v1907, %v1781
        %v1909 = vadd.f32 %v1908, %v1782
        %v1910 = vadd.f32 %v1909, %v1783
        %v1911 = vadd.f32 %v1910, %v1784
        %v1912 = vadd.f32 %v1911, %v1785
        %v1913 = vadd.f32 %v1912, %v1786
        %v1914 = vadd.f32 %v1913, %v1787
        %v1915 = vadd.f32 %v1914, %v1788
        %v1916 = vadd.f32 %v1915, %v1789
        %v1917 = vadd.f32 %v1916, %v1790
        %v1918 = vadd.f32 %v1917, %v1791
        %v1919 = vadd.f32 %v1918, %v1792
        %v1920 = vadd.f32 %v1919, %v1793
        %v1921 = vadd.f32 %v1920, %v1794
        %v1922 = vadd.f32 %v1921, %v1795
        %v1923 = vadd.f32 %v1922, %v1796
        %v1924 = vadd.f32 %v1923, %v1797
        %v1925 = vadd.f32 %v1924, %v1798
        %v1926 = vadd.f32 %v1925, %v1799
        %v1927 = vadd.f32 %v1926, %v1800
        %v1928 = vadd.f32 %v1927, %v1801
        %v1929 = vadd.f32 %v1928, %v1802
        %v1930 = vadd.f32 %v1929, %v1803
        %v1931 = vadd.f32 %v1930, %v1804
        %v1932 = vadd.f32 %v1931, %v1805
        %v1933 = vadd.f32 %v1932, %v1806
        %v1934 = vadd.f32 %v1933, %v1807
        %v1935 = vadd.f32 %v1934, %v1808
        %v1936 = vadd.f32 %v1935, %v1809
        %v1937 = vadd.f32 %v1936, %v1810
        %v1938 = vrot.slane %v1937, 4
        %v1939 = vadd.f32 %v1937, %v1938
        %v1940 = vrot.slane %v1939, 2
        %v1941 = vadd.f32 %v1939, %v1940
        %v1942 = vrot.slane %v1941, 1
        %v1943 = vadd.f32 %v1941, %v1942
        %vm1944 = vcmask 1040384
        %v1945 = vsel %vm1944, %v1682, %v1943
        %vm1946 = vcmask 1041408
        %v1947 = vsel %vm1946, %v1945, 0.0
        %1948 = vst [vmem:[%s229] sm:$0xff] %v1947
      $region36: #{double_conv.4} parent=27 // pred_fallthru
        _
      %s1949 = smul.u32 128, %s19
      %p1950 = scmp.lt.s32.totalorder %s1949, 1023
      %s1951 = scalar_select %p1950, %s1949, 1023
      %s1952 = smul.addr %s1951, 8
      %s1953 = scalar_lea.vmem %s2, %s1952
      %p1954 = scmp.lt.s32.totalorder %s19, 7
      %s1955 = scalar_select %p1954, %s19, 7
      %s1956 = smul.addr %s1955, 8
      %s1957 = scalar_lea.vmem %s3, %s1956
      // Predicated region
      $region37: #{double_conv.4} parent=27 // pred_check
        %p1958 = pneg %p99
      $region38: #{double_conv.4} parent=27 // pred_check_branch
        %1960 = sbr.rel (%p1958) target = $region40
      $region39: #{double_conv.4} parent=27 // pred_region
        %s1961 = smul.u32 128, %s19
      $region40: #{double_conv.4} parent=27 // pred_fallthru
        _
      // Predicated region
      $region41: #{double_conv.4} parent=27 // pred_check
        %p1962 = pneg %p125
      $region42: #{double_conv.4} parent=27 // pred_check_branch
        %1964 = sbr.rel (%p1962) target = $region44
      $region43: #{double_conv.4} parent=27 // pred_region
        _
      $region44: #{double_conv.4} parent=27 // pred_fallthru
        _
    $region28: #{double_conv.4} parent=5 // pred_fallthru
      _
    %p1965 = scmp.le.s32.totalorder 2, %s10
    // Predicated region
    $region45: #{double_conv.4} parent=5 // pred_check
      %p1966 = pneg %p1965
    $region46: #{double_conv.4} parent=5 // pred_check_branch
      %1968 = sbr.rel (%p1966) target = $region48
    $region47: #{double_conv.4} parent=5 // pred_region
      %s1969 = ssub.s32 %s10, 2
      // Predicated region
      $region49: #{double_conv.4} parent=47 // pred_check
        %p1970 = pneg %p105
      $region50: #{double_conv.4} parent=47 // pred_check_branch
        %1972 = sbr.rel (%p1970) target = $region52
      $region51: #{double_conv.4} parent=47 // pred_region
        %s1973 = smul.u32 128, %s21
        %p1974 = scmp.lt.s32.totalorder %s1973, 1023
        %s1975 = scalar_select %p1974, %s1973, 1023
        %s1976 = smul.addr %s1975, 8
        %s1977 = scalar_lea.vmem %s2, %s1976
      $region52: #{double_conv.4} parent=47 // pred_fallthru
        _
      // Predicated region
      $region53: #{double_conv.4} parent=47 // pred_check
        %p1978 = pneg %p131
      $region54: #{double_conv.4} parent=47 // pred_check_branch
        %1980 = sbr.rel (%p1978) target = $region56
      $region55: #{double_conv.4} parent=47 // pred_region
        %p1981 = scmp.lt.s32.totalorder %s21, 7
        %s1982 = scalar_select %p1981, %s21, 7
        %s1983 = smul.addr %s1982, 8
        %s1984 = scalar_lea.vmem %s3, %s1983
      $region56: #{double_conv.4} parent=47 // pred_fallthru
        _
    $region48: #{double_conv.4} parent=5 // pred_fallthru
      _
  $region6: #{double_conv.4} parent=0 // loop_footer
    %s14 = sadd.s32 1, %s10
  $region7: #{double_conv.4} parent=0 // loop_footer_branch
    %9 = sbr.rel target = $region3
  $region8: #{double_conv.4} parent=0 // loop_exit
    _

// kernel: double_conv.5
$region0: #{double_conv.5}
  #allocation0 [shape = 'u32[]', space=smem, size = 0x4, offset = 0x4, fixed_abs, tag = 'smem constant byte address 0x4 - core index']
  #allocation1 [shape = 'u32[72,128]{1,0:T(1,128)}', space=vmem, size = 0x9000, scoped, tag = 'internal scratch']
  %s0 = inlined_call_operand.vmem [shape: f32[8192,128], index: 0, kind: input, shape index: {}, may-alias: {0,3}]
  %s1 = inlined_call_operand.vmem [shape: f32[1,128], index: 1, kind: input, shape index: {}]
  %s2 = inlined_call_operand.vmem [shape: f32[1,128], index: 2, kind: input, shape index: {}]
  %s3 = inlined_call_operand.vmem [shape: f32[8192,128], index: 3, kind: output, shape index: {}, may-alias: {0,3}]
  %s4 = sld [smem:[#allocation0]]
  $region45: #{double_conv.5} parent=0
    _
  %s6 = ssub.s32 1, %s4
  %s7 = scalar_select 0, %s6, %s4
  loop: start=0, step=1, limit=6
  $region2: #{double_conv.5} parent=0 // loop_pre_header
    _
  $region3: #{double_conv.5} parent=0 // loop_header
    %s9 = sphi 0, %s13
    %p10 = scmp.ge.s32.totalorder %s9, 6
    %s19 = sphi 0, %s21
    %s22 = sphi 0, %s19
    %s23 = sphi 0, %s22
    %s39 = sphi 0, %s23
    %s43 = sphi 0, %s43
    %s45 = sphi 0, %s43
    %s46 = sphi 0, %s45
    %s60 = sphi 0, %s46
    %s64 = sphi 0, %s64
    %s66 = sphi 0, %s64
    %s67 = sphi 0, %s66
    %s81 = sphi 0, %s67
    %s87 = sphi 0, %s89
    %s90 = sphi 0, %s87
    %s91 = sphi 0, %s90
    %s107 = sphi 0, %s91
  $region4: #{double_conv.5} parent=0 // loop_header_branch
    %12 = sbr.rel (%p10) target = $region8
  $region5: #{double_conv.5} parent=0 // loop_body
    %s14 = ssub.s32 %s9, 1
    %s15 = ssub.s32 %s9, 2
    %s16 = sadd.s32 %s9, 1
    %s17 = ssub.s32 %s9, %s16
    %p18 = scmp.eq.s32.totalorder %s17, 0
    %s20 = sadd.s32 %s19, 1
    %s21 = scalar_select %p18, %s19, %s20
    %p24 = pneg %p18
    %p25 = scmp.eq.s32.totalorder %s9, 3
    %p26 = por %p24, %p25
    %p27 = scmp.ne.s32.totalorder %s19, %s22
    %p28 = scmp.eq.s32.totalorder %s9, 0
    %p29 = por %p27, %p28
    %p30 = scmp.ne.s32.totalorder %s19, %s22
    %p31 = scmp.eq.s32.totalorder %s14, 3
    %p32 = por %p30, %p31
    %p33 = scmp.ne.s32.totalorder %s22, %s23
    %p34 = scmp.eq.s32.totalorder %s14, 0
    %p35 = por %p33, %p34
    %p36 = scmp.ne.s32.totalorder %s22, %s23
    %p37 = scmp.eq.s32.totalorder %s15, 3
    %p38 = por %p36, %p37
    %p40 = scmp.ne.s32.totalorder %s23, %s39
    %p41 = scmp.eq.s32.totalorder %s15, 0
    %p42 = por %p40, %p41
    %s44 = sadd.s32 %s43, 1
    %p47 = scmp.eq.s32.totalorder %s9, 3
    %p48 = scmp.ne.s32.totalorder %s43, %s45
    %p49 = scmp.eq.s32.totalorder %s9, 0
    %p50 = por %p48, %p49
    %p51 = scmp.ne.s32.totalorder %s43, %s45
    %p52 = scmp.eq.s32.totalorder %s14, 3
    %p53 = por %p51, %p52
    %p54 = scmp.ne.s32.totalorder %s45, %s46
    %p55 = scmp.eq.s32.totalorder %s14, 0
    %p56 = por %p54, %p55
    %p57 = scmp.ne.s32.totalorder %s45, %s46
    %p58 = scmp.eq.s32.totalorder %s15, 3
    %p59 = por %p57, %p58
    %p61 = scmp.ne.s32.totalorder %s46, %s60
    %p62 = scmp.eq.s32.totalorder %s15, 0
    %p63 = por %p61, %p62
    %s65 = sadd.s32 %s64, 1
    %p68 = scmp.eq.s32.totalorder %s9, 3
    %p69 = scmp.ne.s32.totalorder %s64, %s66
    %p70 = scmp.eq.s32.totalorder %s9, 0
    %p71 = por %p69, %p70
    %p72 = scmp.ne.s32.totalorder %s64, %s66
    %p73 = scmp.eq.s32.totalorder %s14, 3
    %p74 = por %p72, %p73
    %p75 = scmp.ne.s32.totalorder %s66, %s67
    %p76 = scmp.eq.s32.totalorder %s14, 0
    %p77 = por %p75, %p76
    %p78 = scmp.ne.s32.totalorder %s66, %s67
    %p79 = scmp.eq.s32.totalorder %s15, 3
    %p80 = por %p78, %p79
    %p82 = scmp.ne.s32.totalorder %s67, %s81
    %p83 = scmp.eq.s32.totalorder %s15, 0
    %p84 = por %p82, %p83
    %s85 = ssub.s32 %s9, %s16
    %p86 = scmp.eq.s32.totalorder %s85, 0
    %s88 = sadd.s32 %s87, 1
    %s89 = scalar_select %p86, %s87, %s88
    %p92 = pneg %p86
    %p93 = scmp.eq.s32.totalorder %s9, 3
    %p94 = por %p92, %p93
    %p95 = scmp.ne.s32.totalorder %s87, %s90
    %p96 = scmp.eq.s32.totalorder %s9, 0
    %p97 = por %p95, %p96
    %p98 = scmp.ne.s32.totalorder %s87, %s90
    %p99 = scmp.eq.s32.totalorder %s14, 3
    %p100 = por %p98, %p99
    %p101 = scmp.ne.s32.totalorder %s90, %s91
    %p102 = scmp.eq.s32.totalorder %s14, 0
    %p103 = por %p101, %p102
    %p104 = scmp.ne.s32.totalorder %s90, %s91
    %p105 = scmp.eq.s32.totalorder %s15, 3
    %p106 = por %p104, %p105
    %p108 = scmp.ne.s32.totalorder %s91, %s107
    %p109 = scmp.eq.s32.totalorder %s15, 0
    %p110 = por %p108, %p109
    %p111 = scmp.le.s32.totalorder 1, %s9
    %p112 = scmp.lt.s32.totalorder %s9, 5
    %p113 = pnand %p111, %p112
    %p114 = pneg %p113
    // Predicated region
    $region9: #{double_conv.5} parent=5 // pred_check
      _
    $region10: #{double_conv.5} parent=5 // pred_check_branch
      %116 = sbr.rel (%p113) target = $region12
    $region11: #{double_conv.5} parent=5 // pred_region
      %s117 = ssub.s32 %s9, 1
      // Predicated region
      $region13: #{double_conv.5} parent=11 // pred_check
        %p118 = pneg %p56
      $region14: #{double_conv.5} parent=11 // pred_check_branch
        %120 = sbr.rel (%p118) target = $region16
      $region15: #{double_conv.5} parent=11 // pred_region
        _
      $region16: #{double_conv.5} parent=11 // pred_fallthru
        _
      // Predicated region
      $region17: #{double_conv.5} parent=11 // pred_check
        %p121 = pneg %p77
      $region18: #{double_conv.5} parent=11 // pred_check_branch
        %123 = sbr.rel (%p121) target = $region20
      $region19: #{double_conv.5} parent=11 // pred_region
        _
      $region20: #{double_conv.5} parent=11 // pred_fallthru
        _
    $region12: #{double_conv.5} parent=5 // pred_fallthru
      _
    %p124 = scmp.lt.s32.totalorder %s9, 4
    // Predicated region
    $region21: #{double_conv.5} parent=5 // pred_check
      %p125 = pneg %p124
    $region22: #{double_conv.5} parent=5 // pred_check_branch
      %127 = sbr.rel (%p125) target = $region24
    $region23: #{double_conv.5} parent=5 // pred_region
      // Predicated region
      $region25: #{double_conv.5} parent=23 // pred_check
        %p128 = pneg %p29
      $region26: #{double_conv.5} parent=23 // pred_check_branch
        %130 = sbr.rel (%p128) target = $region28
      $region27: #{double_conv.5} parent=23 // pred_region
        %s131 = smul.u32 256, %s9
        %p132 = scmp.lt.s32.totalorder %s131, 1023
        %s133 = scalar_select %p132, %s131, 1023
        %s134 = smul.addr %s133, 8
        %s135 = scalar_lea.vmem %s0, %s134
        %s136 = smul.u32 256, %s9
      $region28: #{double_conv.5} parent=23 // pred_fallthru
        _
    $region24: #{double_conv.5} parent=5 // pred_fallthru
      _
    %p137 = scmp.le.s32.totalorder 1, %s9
    %p138 = scmp.lt.s32.totalorder %s9, 5
    %p139 = pnand %p137, %p138
    %p140 = pneg %p139
    // Predicated region
    $region29: #{double_conv.5} parent=5 // pred_check
      _
    $region30: #{double_conv.5} parent=5 // pred_check_branch
      %142 = sbr.rel (%p139) target = $region32
    $region31: #{double_conv.5} parent=5 // pred_region
      %s143 = ssub.s32 %s9, 1
      %s144 = smul.u32 256, %s14
      %p145 = scmp.lt.s32.totalorder %s144, 1023
      %s146 = scalar_select %p145, %s144, 1023
      %s147 = smul.addr %s146, 8
      %s148 = scalar_lea.vmem %s0, %s147
      %p149 = pneg %p35
      %p150 = pneg %p32
      %p151 = pneg %p56
      %p152 = pneg %p53
      %p153 = pneg %p77
      %p154 = pneg %p74
      %p155 = pneg %p103
      %p156 = pneg %p100
      %s157 = smul.u32 256, %s14
      %p158 = scmp.lt.s32.totalorder %s157, 1023
      %s159 = scalar_select %p158, %s157, 1023
      %s160 = smul.addr %s159, 8
      %s161 = scalar_lea.vmem %s3, %s160
      %s162 = smul.u32 256, %s14
      %p163 = scmp.lt.s32.totalorder %s162, 1023
      %s164 = scalar_select %p163, %s162, 1023
      %s165 = smul.addr %s164, 8
      %s166 = scalar_lea.vmem %s0, %s165
      %s167 = smul.u32 256, %s14
      %s168 = smul.u32 256, %s14
      %p169 = scmp.lt.s32.totalorder %s168, 1023
      %s170 = scalar_select %p169, %s168, 1023
      %s171 = smul.addr %s170, 8
      %s172 = scalar_lea.vmem %s3, %s171
      %s173 = smul.u32 256, %s14
      %v174 = vld [vmem:[%s166] sm:$0xff]
      %v175 = vld [vmem:[%s166 + $0x8] sm:$0xff]
      %v176 = vld [vmem:[%s166 + $0x10] sm:$0xff]
      %v177 = vld [vmem:[%s166 + $0x18] sm:$0xff]
      %v178 = vld [vmem:[%s166 + $0x20] sm:$0xff]
      %v179 = vld [vmem:[%s166 + $0x28] sm:$0xff]
      %v180 = vld [vmem:[%s166 + $0x30] sm:$0xff]
      %v181 = vld [vmem:[%s166 + $0x38] sm:$0xff]
      %v182 = vld [vmem:[%s166 + $0x40] sm:$0xff]
      %v183 = vld [vmem:[%s166 + $0x48] sm:$0xff]
      %v184 = vld [vmem:[%s166 + $0x50] sm:$0xff]
      %v185 = vld [vmem:[%s166 + $0x58] sm:$0xff]
      %v186 = vld [vmem:[%s166 + $0x60] sm:$0xff]
      %v187 = vld [vmem:[%s166 + $0x68] sm:$0xff]
      %v188 = vld [vmem:[%s166 + $0x70] sm:$0xff]
      %v189 = vld [vmem:[%s166 + $0x78] sm:$0xff]
      %v190 = vld [vmem:[%s166 + $0x80] sm:$0xff]
      %v191 = vld [vmem:[%s166 + $0x88] sm:$0xff]
      %v192 = vld [vmem:[%s166 + $0x90] sm:$0xff]
      %v193 = vld [vmem:[%s166 + $0x98] sm:$0xff]
      %v194 = vld [vmem:[%s166 + $0xa0] sm:$0xff]
      %v195 = vld [vmem:[%s166 + $0xa8] sm:$0xff]
      %v196 = vld [vmem:[%s166 + $0xb0] sm:$0xff]
      %v197 = vld [vmem:[%s166 + $0xb8] sm:$0xff]
      %v198 = vld [vmem:[%s166 + $0xc0] sm:$0xff]
      %v199 = vld [vmem:[%s166 + $0xc8] sm:$0xff]
      %v200 = vld [vmem:[%s166 + $0xd0] sm:$0xff]
      %v201 = vld [vmem:[%s166 + $0xd8] sm:$0xff]
      %v202 = vld [vmem:[%s166 + $0xe0] sm:$0xff]
      %v203 = vld [vmem:[%s166 + $0xe8] sm:$0xff]
      %v204 = vld [vmem:[%s166 + $0xf0] sm:$0xff]
      %v205 = vld [vmem:[%s166 + $0xf8] sm:$0xff]
      %v206 = vld [vmem:[%s166 + $0x100] sm:$0xff]
      %v207 = vld [vmem:[%s166 + $0x108] sm:$0xff]
      %v208 = vld [vmem:[%s166 + $0x110] sm:$0xff]
      %v209 = vld [vmem:[%s166 + $0x118] sm:$0xff]
      %v210 = vld [vmem:[%s166 + $0x120] sm:$0xff]
      %v211 = vld [vmem:[%s166 + $0x128] sm:$0xff]
      %v212 = vld [vmem:[%s166 + $0x130] sm:$0xff]
      %v213 = vld [vmem:[%s166 + $0x138] sm:$0xff]
      %v214 = vld [vmem:[%s166 + $0x140] sm:$0xff]
      %v215 = vld [vmem:[%s166 + $0x148] sm:$0xff]
      %v216 = vld [vmem:[%s166 + $0x150] sm:$0xff]
      %v217 = vld [vmem:[%s166 + $0x158] sm:$0xff]
      %v218 = vld [vmem:[%s166 + $0x160] sm:$0xff]
      %v219 = vld [vmem:[%s166 + $0x168] sm:$0xff]
      %v220 = vld [vmem:[%s166 + $0x170] sm:$0xff]
      %v221 = vld [vmem:[%s166 + $0x178] sm:$0xff]
      %v222 = vld [vmem:[%s166 + $0x180] sm:$0xff]
      %v223 = vld [vmem:[%s166 + $0x188] sm:$0xff]
      %v224 = vld [vmem:[%s166 + $0x190] sm:$0xff]
      %v225 = vld [vmem:[%s166 + $0x198] sm:$0xff]
      %v226 = vld [vmem:[%s166 + $0x1a0] sm:$0xff]
      %v227 = vld [vmem:[%s166 + $0x1a8] sm:$0xff]
      %v228 = vld [vmem:[%s166 + $0x1b0] sm:$0xff]
      %v229 = vld [vmem:[%s166 + $0x1b8] sm:$0xff]
      %v230 = vld [vmem:[%s166 + $0x1c0] sm:$0xff]
      %v231 = vld [vmem:[%s166 + $0x1c8] sm:$0xff]
      %v232 = vld [vmem:[%s166 + $0x1d0] sm:$0xff]
      %v233 = vld [vmem:[%s166 + $0x1d8] sm:$0xff]
      %v234 = vld [vmem:[%s166 + $0x1e0] sm:$0xff]
      %v235 = vld [vmem:[%s166 + $0x1e8] sm:$0xff]
      %v236 = vld [vmem:[%s166 + $0x1f0] sm:$0xff]
      %v237 = vld [vmem:[%s166 + $0x1f8] sm:$0xff]
      %v238 = vld [vmem:[%s166 + $0x200] sm:$0xff]
      %v239 = vld [vmem:[%s166 + $0x208] sm:$0xff]
      %v240 = vld [vmem:[%s166 + $0x210] sm:$0xff]
      %v241 = vld [vmem:[%s166 + $0x218] sm:$0xff]
      %v242 = vld [vmem:[%s166 + $0x220] sm:$0xff]
      %v243 = vld [vmem:[%s166 + $0x228] sm:$0xff]
      %v244 = vld [vmem:[%s166 + $0x230] sm:$0xff]
      %v245 = vld [vmem:[%s166 + $0x238] sm:$0xff]
      %v246 = vld [vmem:[%s166 + $0x240] sm:$0xff]
      %v247 = vld [vmem:[%s166 + $0x248] sm:$0xff]
      %v248 = vld [vmem:[%s166 + $0x250] sm:$0xff]
      %v249 = vld [vmem:[%s166 + $0x258] sm:$0xff]
      %v250 = vld [vmem:[%s166 + $0x260] sm:$0xff]
      %v251 = vld [vmem:[%s166 + $0x268] sm:$0xff]
      %v252 = vld [vmem:[%s166 + $0x270] sm:$0xff]
      %v253 = vld [vmem:[%s166 + $0x278] sm:$0xff]
      %v254 = vld [vmem:[%s166 + $0x280] sm:$0xff]
      %v255 = vld [vmem:[%s166 + $0x288] sm:$0xff]
      %v256 = vld [vmem:[%s166 + $0x290] sm:$0xff]
      %v257 = vld [vmem:[%s166 + $0x298] sm:$0xff]
      %v258 = vld [vmem:[%s166 + $0x2a0] sm:$0xff]
      %v259 = vld [vmem:[%s166 + $0x2a8] sm:$0xff]
      %v260 = vld [vmem:[%s166 + $0x2b0] sm:$0xff]
      %v261 = vld [vmem:[%s166 + $0x2b8] sm:$0xff]
      %v262 = vld [vmem:[%s166 + $0x2c0] sm:$0xff]
      %v263 = vld [vmem:[%s166 + $0x2c8] sm:$0xff]
      %v264 = vld [vmem:[%s166 + $0x2d0] sm:$0xff]
      %v265 = vld [vmem:[%s166 + $0x2d8] sm:$0xff]
      %v266 = vld [vmem:[%s166 + $0x2e0] sm:$0xff]
      %v267 = vld [vmem:[%s166 + $0x2e8] sm:$0xff]
      %v268 = vld [vmem:[%s166 + $0x2f0] sm:$0xff]
      %v269 = vld [vmem:[%s166 + $0x2f8] sm:$0xff]
      %v270 = vld [vmem:[%s166 + $0x300] sm:$0xff]
      %v271 = vld [vmem:[%s166 + $0x308] sm:$0xff]
      %v272 = vld [vmem:[%s166 + $0x310] sm:$0xff]
      %v273 = vld [vmem:[%s166 + $0x318] sm:$0xff]
      %v274 = vld [vmem:[%s166 + $0x320] sm:$0xff]
      %v275 = vld [vmem:[%s166 + $0x328] sm:$0xff]
      %v276 = vld [vmem:[%s166 + $0x330] sm:$0xff]
      %v277 = vld [vmem:[%s166 + $0x338] sm:$0xff]
      %v278 = vld [vmem:[%s166 + $0x340] sm:$0xff]
      %v279 = vld [vmem:[%s166 + $0x348] sm:$0xff]
      %v280 = vld [vmem:[%s166 + $0x350] sm:$0xff]
      %v281 = vld [vmem:[%s166 + $0x358] sm:$0xff]
      %v282 = vld [vmem:[%s166 + $0x360] sm:$0xff]
      %v283 = vld [vmem:[%s166 + $0x368] sm:$0xff]
      %v284 = vld [vmem:[%s166 + $0x370] sm:$0xff]
      %v285 = vld [vmem:[%s166 + $0x378] sm:$0xff]
      %v286 = vld [vmem:[%s166 + $0x380] sm:$0xff]
      %v287 = vld [vmem:[%s166 + $0x388] sm:$0xff]
      %v288 = vld [vmem:[%s166 + $0x390] sm:$0xff]
      %v289 = vld [vmem:[%s166 + $0x398] sm:$0xff]
      %v290 = vld [vmem:[%s166 + $0x3a0] sm:$0xff]
      %v291 = vld [vmem:[%s166 + $0x3a8] sm:$0xff]
      %v292 = vld [vmem:[%s166 + $0x3b0] sm:$0xff]
      %v293 = vld [vmem:[%s166 + $0x3b8] sm:$0xff]
      %v294 = vld [vmem:[%s166 + $0x3c0] sm:$0xff]
      %v295 = vld [vmem:[%s166 + $0x3c8] sm:$0xff]
      %v296 = vld [vmem:[%s166 + $0x3d0] sm:$0xff]
      %v297 = vld [vmem:[%s166 + $0x3d8] sm:$0xff]
      %v298 = vld [vmem:[%s166 + $0x3e0] sm:$0xff]
      %v299 = vld [vmem:[%s166 + $0x3e8] sm:$0xff]
      %v300 = vld [vmem:[%s166 + $0x3f0] sm:$0xff]
      %v301 = vld [vmem:[%s166 + $0x3f8] sm:$0xff]
      %v302 = vld [vmem:[%s166 + $0x400] sm:$0xff]
      %v303 = vld [vmem:[%s166 + $0x408] sm:$0xff]
      %v304 = vld [vmem:[%s166 + $0x410] sm:$0xff]
      %v305 = vld [vmem:[%s166 + $0x418] sm:$0xff]
      %v306 = vld [vmem:[%s166 + $0x420] sm:$0xff]
      %v307 = vld [vmem:[%s166 + $0x428] sm:$0xff]
      %v308 = vld [vmem:[%s166 + $0x430] sm:$0xff]
      %v309 = vld [vmem:[%s166 + $0x438] sm:$0xff]
      %v310 = vld [vmem:[%s166 + $0x440] sm:$0xff]
      %v311 = vld [vmem:[%s166 + $0x448] sm:$0xff]
      %v312 = vld [vmem:[%s166 + $0x450] sm:$0xff]
      %v313 = vld [vmem:[%s166 + $0x458] sm:$0xff]
      %v314 = vld [vmem:[%s166 + $0x460] sm:$0xff]
      %v315 = vld [vmem:[%s166 + $0x468] sm:$0xff]
      %v316 = vld [vmem:[%s166 + $0x470] sm:$0xff]
      %v317 = vld [vmem:[%s166 + $0x478] sm:$0xff]
      %v318 = vld [vmem:[%s166 + $0x480] sm:$0xff]
      %v319 = vld [vmem:[%s166 + $0x488] sm:$0xff]
      %v320 = vld [vmem:[%s166 + $0x490] sm:$0xff]
      %v321 = vld [vmem:[%s166 + $0x498] sm:$0xff]
      %v322 = vld [vmem:[%s166 + $0x4a0] sm:$0xff]
      %v323 = vld [vmem:[%s166 + $0x4a8] sm:$0xff]
      %v324 = vld [vmem:[%s166 + $0x4b0] sm:$0xff]
      %v325 = vld [vmem:[%s166 + $0x4b8] sm:$0xff]
      %v326 = vld [vmem:[%s166 + $0x4c0] sm:$0xff]
      %v327 = vld [vmem:[%s166 + $0x4c8] sm:$0xff]
      %v328 = vld [vmem:[%s166 + $0x4d0] sm:$0xff]
      %v329 = vld [vmem:[%s166 + $0x4d8] sm:$0xff]
      %v330 = vld [vmem:[%s166 + $0x4e0] sm:$0xff]
      %v331 = vld [vmem:[%s166 + $0x4e8] sm:$0xff]
      %v332 = vld [vmem:[%s166 + $0x4f0] sm:$0xff]
      %v333 = vld [vmem:[%s166 + $0x4f8] sm:$0xff]
      %v334 = vld [vmem:[%s166 + $0x500] sm:$0xff]
      %v335 = vld [vmem:[%s166 + $0x508] sm:$0xff]
      %v336 = vld [vmem:[%s166 + $0x510] sm:$0xff]
      %v337 = vld [vmem:[%s166 + $0x518] sm:$0xff]
      %v338 = vld [vmem:[%s166 + $0x520] sm:$0xff]
      %v339 = vld [vmem:[%s166 + $0x528] sm:$0xff]
      %v340 = vld [vmem:[%s166 + $0x530] sm:$0xff]
      %v341 = vld [vmem:[%s166 + $0x538] sm:$0xff]
      %v342 = vld [vmem:[%s166 + $0x540] sm:$0xff]
      %v343 = vld [vmem:[%s166 + $0x548] sm:$0xff]
      %v344 = vld [vmem:[%s166 + $0x550] sm:$0xff]
      %v345 = vld [vmem:[%s166 + $0x558] sm:$0xff]
      %v346 = vld [vmem:[%s166 + $0x560] sm:$0xff]
      %v347 = vld [vmem:[%s166 + $0x568] sm:$0xff]
      %v348 = vld [vmem:[%s166 + $0x570] sm:$0xff]
      %v349 = vld [vmem:[%s166 + $0x578] sm:$0xff]
      %v350 = vld [vmem:[%s166 + $0x580] sm:$0xff]
      %v351 = vld [vmem:[%s166 + $0x588] sm:$0xff]
      %v352 = vld [vmem:[%s166 + $0x590] sm:$0xff]
      %v353 = vld [vmem:[%s166 + $0x598] sm:$0xff]
      %v354 = vld [vmem:[%s166 + $0x5a0] sm:$0xff]
      %v355 = vld [vmem:[%s166 + $0x5a8] sm:$0xff]
      %v356 = vld [vmem:[%s166 + $0x5b0] sm:$0xff]
      %v357 = vld [vmem:[%s166 + $0x5b8] sm:$0xff]
      %v358 = vld [vmem:[%s166 + $0x5c0] sm:$0xff]
      %v359 = vld [vmem:[%s166 + $0x5c8] sm:$0xff]
      %v360 = vld [vmem:[%s166 + $0x5d0] sm:$0xff]
      %v361 = vld [vmem:[%s166 + $0x5d8] sm:$0xff]
      %v362 = vld [vmem:[%s166 + $0x5e0] sm:$0xff]
      %v363 = vld [vmem:[%s166 + $0x5e8] sm:$0xff]
      %v364 = vld [vmem:[%s166 + $0x5f0] sm:$0xff]
      %v365 = vld [vmem:[%s166 + $0x5f8] sm:$0xff]
      %v366 = vld [vmem:[%s166 + $0x600] sm:$0xff]
      %v367 = vld [vmem:[%s166 + $0x608] sm:$0xff]
      %v368 = vld [vmem:[%s166 + $0x610] sm:$0xff]
      %v369 = vld [vmem:[%s166 + $0x618] sm:$0xff]
      %v370 = vld [vmem:[%s166 + $0x620] sm:$0xff]
      %v371 = vld [vmem:[%s166 + $0x628] sm:$0xff]
      %v372 = vld [vmem:[%s166 + $0x630] sm:$0xff]
      %v373 = vld [vmem:[%s166 + $0x638] sm:$0xff]
      %v374 = vld [vmem:[%s166 + $0x640] sm:$0xff]
      %v375 = vld [vmem:[%s166 + $0x648] sm:$0xff]
      %v376 = vld [vmem:[%s166 + $0x650] sm:$0xff]
      %v377 = vld [vmem:[%s166 + $0x658] sm:$0xff]
      %v378 = vld [vmem:[%s166 + $0x660] sm:$0xff]
      %v379 = vld [vmem:[%s166 + $0x668] sm:$0xff]
      %v380 = vld [vmem:[%s166 + $0x670] sm:$0xff]
      %v381 = vld [vmem:[%s166 + $0x678] sm:$0xff]
      %v382 = vld [vmem:[%s166 + $0x680] sm:$0xff]
      %v383 = vld [vmem:[%s166 + $0x688] sm:$0xff]
      %v384 = vld [vmem:[%s166 + $0x690] sm:$0xff]
      %v385 = vld [vmem:[%s166 + $0x698] sm:$0xff]
      %v386 = vld [vmem:[%s166 + $0x6a0] sm:$0xff]
      %v387 = vld [vmem:[%s166 + $0x6a8] sm:$0xff]
      %v388 = vld [vmem:[%s166 + $0x6b0] sm:$0xff]
      %v389 = vld [vmem:[%s166 + $0x6b8] sm:$0xff]
      %v390 = vld [vmem:[%s166 + $0x6c0] sm:$0xff]
      %v391 = vld [vmem:[%s166 + $0x6c8] sm:$0xff]
      %v392 = vld [vmem:[%s166 + $0x6d0] sm:$0xff]
      %v393 = vld [vmem:[%s166 + $0x6d8] sm:$0xff]
      %v394 = vld [vmem:[%s166 + $0x6e0] sm:$0xff]
      %v395 = vld [vmem:[%s166 + $0x6e8] sm:$0xff]
      %v396 = vld [vmem:[%s166 + $0x6f0] sm:$0xff]
      %v397 = vld [vmem:[%s166 + $0x6f8] sm:$0xff]
      %v398 = vld [vmem:[%s166 + $0x700] sm:$0xff]
      %v399 = vld [vmem:[%s166 + $0x708] sm:$0xff]
      %v400 = vld [vmem:[%s166 + $0x710] sm:$0xff]
      %v401 = vld [vmem:[%s166 + $0x718] sm:$0xff]
      %v402 = vld [vmem:[%s166 + $0x720] sm:$0xff]
      %v403 = vld [vmem:[%s166 + $0x728] sm:$0xff]
      %v404 = vld [vmem:[%s166 + $0x730] sm:$0xff]
      %v405 = vld [vmem:[%s166 + $0x738] sm:$0xff]
      %v406 = vld [vmem:[%s166 + $0x740] sm:$0xff]
      %v407 = vld [vmem:[%s166 + $0x748] sm:$0xff]
      %v408 = vld [vmem:[%s166 + $0x750] sm:$0xff]
      %v409 = vld [vmem:[%s166 + $0x758] sm:$0xff]
      %v410 = vld [vmem:[%s166 + $0x760] sm:$0xff]
      %v411 = vld [vmem:[%s166 + $0x768] sm:$0xff]
      %v412 = vld [vmem:[%s166 + $0x770] sm:$0xff]
      %v413 = vld [vmem:[%s166 + $0x778] sm:$0xff]
      %v414 = vld [vmem:[%s166 + $0x780] sm:$0xff]
      %v415 = vld [vmem:[%s166 + $0x788] sm:$0xff]
      %v416 = vld [vmem:[%s166 + $0x790] sm:$0xff]
      %v417 = vld [vmem:[%s166 + $0x798] sm:$0xff]
      %v418 = vld [vmem:[%s166 + $0x7a0] sm:$0xff]
      %v419 = vld [vmem:[%s166 + $0x7a8] sm:$0xff]
      %v420 = vld [vmem:[%s166 + $0x7b0] sm:$0xff]
      %v421 = vld [vmem:[%s166 + $0x7b8] sm:$0xff]
      %v422 = vld [vmem:[%s166 + $0x7c0] sm:$0xff]
      %v423 = vld [vmem:[%s166 + $0x7c8] sm:$0xff]
      %v424 = vld [vmem:[%s166 + $0x7d0] sm:$0xff]
      %v425 = vld [vmem:[%s166 + $0x7d8] sm:$0xff]
      %v426 = vld [vmem:[%s166 + $0x7e0] sm:$0xff]
      %v427 = vld [vmem:[%s166 + $0x7e8] sm:$0xff]
      %v428 = vld [vmem:[%s166 + $0x7f0] sm:$0xff]
      %v429 = vld [vmem:[%s166 + $0x7f8] sm:$0xff]
      %v430 = vld [vmem:[%s1] sm:$0x1]
      %v432 = vperm.slane %v430, 0
      %v434 = vmul.f32 %v174, %v432
      %v435 = vmul.f32 %v175, %v432
      %v436 = vmul.f32 %v176, %v432
      %v437 = vmul.f32 %v177, %v432
      %v438 = vmul.f32 %v178, %v432
      %v439 = vmul.f32 %v179, %v432
      %v440 = vmul.f32 %v180, %v432
      %v441 = vmul.f32 %v181, %v432
      %v442 = vmul.f32 %v182, %v432
      %v443 = vmul.f32 %v183, %v432
      %v444 = vmul.f32 %v184, %v432
      %v445 = vmul.f32 %v185, %v432
      %v446 = vmul.f32 %v186, %v432
      %v447 = vmul.f32 %v187, %v432
      %v448 = vmul.f32 %v188, %v432
      %v449 = vmul.f32 %v189, %v432
      %v450 = vmul.f32 %v190, %v432
      %v451 = vmul.f32 %v191, %v432
      %v452 = vmul.f32 %v192, %v432
      %v453 = vmul.f32 %v193, %v432
      %v454 = vmul.f32 %v194, %v432
      %v455 = vmul.f32 %v195, %v432
      %v456 = vmul.f32 %v196, %v432
      %v457 = vmul.f32 %v197, %v432
      %v458 = vmul.f32 %v198, %v432
      %v459 = vmul.f32 %v199, %v432
      %v460 = vmul.f32 %v200, %v432
      %v461 = vmul.f32 %v201, %v432
      %v462 = vmul.f32 %v202, %v432
      %v463 = vmul.f32 %v203, %v432
      %v464 = vmul.f32 %v204, %v432
      %v465 = vmul.f32 %v205, %v432
      %v466 = vmul.f32 %v206, %v432
      %v467 = vmul.f32 %v207, %v432
      %v468 = vmul.f32 %v208, %v432
      %v469 = vmul.f32 %v209, %v432
      %v470 = vmul.f32 %v210, %v432
      %v471 = vmul.f32 %v211, %v432
      %v472 = vmul.f32 %v212, %v432
      %v473 = vmul.f32 %v213, %v432
      %v474 = vmul.f32 %v214, %v432
      %v475 = vmul.f32 %v215, %v432
      %v476 = vmul.f32 %v216, %v432
      %v477 = vmul.f32 %v217, %v432
      %v478 = vmul.f32 %v218, %v432
      %v479 = vmul.f32 %v219, %v432
      %v480 = vmul.f32 %v220, %v432
      %v481 = vmul.f32 %v221, %v432
      %v482 = vmul.f32 %v222, %v432
      %v483 = vmul.f32 %v223, %v432
      %v484 = vmul.f32 %v224, %v432
      %v485 = vmul.f32 %v225, %v432
      %v486 = vmul.f32 %v226, %v432
      %v487 = vmul.f32 %v227, %v432
      %v488 = vmul.f32 %v228, %v432
      %v489 = vmul.f32 %v229, %v432
      %v490 = vmul.f32 %v230, %v432
      %v491 = vmul.f32 %v231, %v432
      %v492 = vmul.f32 %v232, %v432
      %v493 = vmul.f32 %v233, %v432
      %v494 = vmul.f32 %v234, %v432
      %v495 = vmul.f32 %v235, %v432
      %v496 = vmul.f32 %v236, %v432
      %v497 = vmul.f32 %v237, %v432
      %v498 = vmul.f32 %v238, %v432
      %v499 = vmul.f32 %v239, %v432
      %v500 = vmul.f32 %v240, %v432
      %v501 = vmul.f32 %v241, %v432
      %v502 = vmul.f32 %v242, %v432
      %v503 = vmul.f32 %v243, %v432
      %v504 = vmul.f32 %v244, %v432
      %v505 = vmul.f32 %v245, %v432
      %v506 = vmul.f32 %v246, %v432
      %v507 = vmul.f32 %v247, %v432
      %v508 = vmul.f32 %v248, %v432
      %v509 = vmul.f32 %v249, %v432
      %v510 = vmul.f32 %v250, %v432
      %v511 = vmul.f32 %v251, %v432
      %v512 = vmul.f32 %v252, %v432
      %v513 = vmul.f32 %v253, %v432
      %v514 = vmul.f32 %v254, %v432
      %v515 = vmul.f32 %v255, %v432
      %v516 = vmul.f32 %v256, %v432
      %v517 = vmul.f32 %v257, %v432
      %v518 = vmul.f32 %v258, %v432
      %v519 = vmul.f32 %v259, %v432
      %v520 = vmul.f32 %v260, %v432
      %v521 = vmul.f32 %v261, %v432
      %v522 = vmul.f32 %v262, %v432
      %v523 = vmul.f32 %v263, %v432
      %v524 = vmul.f32 %v264, %v432
      %v525 = vmul.f32 %v265, %v432
      %v526 = vmul.f32 %v266, %v432
      %v527 = vmul.f32 %v267, %v432
      %v528 = vmul.f32 %v268, %v432
      %v529 = vmul.f32 %v269, %v432
      %v530 = vmul.f32 %v270, %v432
      %v531 = vmul.f32 %v271, %v432
      %v532 = vmul.f32 %v272, %v432
      %v533 = vmul.f32 %v273, %v432
      %v534 = vmul.f32 %v274, %v432
      %v535 = vmul.f32 %v275, %v432
      %v536 = vmul.f32 %v276, %v432
      %v537 = vmul.f32 %v277, %v432
      %v538 = vmul.f32 %v278, %v432
      %v539 = vmul.f32 %v279, %v432
      %v540 = vmul.f32 %v280, %v432
      %v541 = vmul.f32 %v281, %v432
      %v542 = vmul.f32 %v282, %v432
      %v543 = vmul.f32 %v283, %v432
      %v544 = vmul.f32 %v284, %v432
      %v545 = vmul.f32 %v285, %v432
      %v546 = vmul.f32 %v286, %v432
      %v547 = vmul.f32 %v287, %v432
      %v548 = vmul.f32 %v288, %v432
      %v549 = vmul.f32 %v289, %v432
      %v550 = vmul.f32 %v290, %v432
      %v551 = vmul.f32 %v291, %v432
      %v552 = vmul.f32 %v292, %v432
      %v553 = vmul.f32 %v293, %v432
      %v554 = vmul.f32 %v294, %v432
      %v555 = vmul.f32 %v295, %v432
      %v556 = vmul.f32 %v296, %v432
      %v557 = vmul.f32 %v297, %v432
      %v558 = vmul.f32 %v298, %v432
      %v559 = vmul.f32 %v299, %v432
      %v560 = vmul.f32 %v300, %v432
      %v561 = vmul.f32 %v301, %v432
      %v562 = vmul.f32 %v302, %v432
      %v563 = vmul.f32 %v303, %v432
      %v564 = vmul.f32 %v304, %v432
      %v565 = vmul.f32 %v305, %v432
      %v566 = vmul.f32 %v306, %v432
      %v567 = vmul.f32 %v307, %v432
      %v568 = vmul.f32 %v308, %v432
      %v569 = vmul.f32 %v309, %v432
      %v570 = vmul.f32 %v310, %v432
      %v571 = vmul.f32 %v311, %v432
      %v572 = vmul.f32 %v312, %v432
      %v573 = vmul.f32 %v313, %v432
      %v574 = vmul.f32 %v314, %v432
      %v575 = vmul.f32 %v315, %v432
      %v576 = vmul.f32 %v316, %v432
      %v577 = vmul.f32 %v317, %v432
      %v578 = vmul.f32 %v318, %v432
      %v579 = vmul.f32 %v319, %v432
      %v580 = vmul.f32 %v320, %v432
      %v581 = vmul.f32 %v321, %v432
      %v582 = vmul.f32 %v322, %v432
      %v583 = vmul.f32 %v323, %v432
      %v584 = vmul.f32 %v324, %v432
      %v585 = vmul.f32 %v325, %v432
      %v586 = vmul.f32 %v326, %v432
      %v587 = vmul.f32 %v327, %v432
      %v588 = vmul.f32 %v328, %v432
      %v589 = vmul.f32 %v329, %v432
      %v590 = vmul.f32 %v330, %v432
      %v591 = vmul.f32 %v331, %v432
      %v592 = vmul.f32 %v332, %v432
      %v593 = vmul.f32 %v333, %v432
      %v594 = vmul.f32 %v334, %v432
      %v595 = vmul.f32 %v335, %v432
      %v596 = vmul.f32 %v336, %v432
      %v597 = vmul.f32 %v337, %v432
      %v598 = vmul.f32 %v338, %v432
      %v599 = vmul.f32 %v339, %v432
      %v600 = vmul.f32 %v340, %v432
      %v601 = vmul.f32 %v341, %v432
      %v602 = vmul.f32 %v342, %v432
      %v603 = vmul.f32 %v343, %v432
      %v604 = vmul.f32 %v344, %v432
      %v605 = vmul.f32 %v345, %v432
      %v606 = vmul.f32 %v346, %v432
      %v607 = vmul.f32 %v347, %v432
      %v608 = vmul.f32 %v348, %v432
      %v609 = vmul.f32 %v349, %v432
      %v610 = vmul.f32 %v350, %v432
      %v611 = vmul.f32 %v351, %v432
      %v612 = vmul.f32 %v352, %v432
      %v613 = vmul.f32 %v353, %v432
      %v614 = vmul.f32 %v354, %v432
      %v615 = vmul.f32 %v355, %v432
      %v616 = vmul.f32 %v356, %v432
      %v617 = vmul.f32 %v357, %v432
      %v618 = vmul.f32 %v358, %v432
      %v619 = vmul.f32 %v359, %v432
      %v620 = vmul.f32 %v360, %v432
      %v621 = vmul.f32 %v361, %v432
      %v622 = vmul.f32 %v362, %v432
      %v623 = vmul.f32 %v363, %v432
      %v624 = vmul.f32 %v364, %v432
      %v625 = vmul.f32 %v365, %v432
      %v626 = vmul.f32 %v366, %v432
      %v627 = vmul.f32 %v367, %v432
      %v628 = vmul.f32 %v368, %v432
      %v629 = vmul.f32 %v369, %v432
      %v630 = vmul.f32 %v370, %v432
      %v631 = vmul.f32 %v371, %v432
      %v632 = vmul.f32 %v372, %v432
      %v633 = vmul.f32 %v373, %v432
      %v634 = vmul.f32 %v374, %v432
      %v635 = vmul.f32 %v375, %v432
      %v636 = vmul.f32 %v376, %v432
      %v637 = vmul.f32 %v377, %v432
      %v638 = vmul.f32 %v378, %v432
      %v639 = vmul.f32 %v379, %v432
      %v640 = vmul.f32 %v380, %v432
      %v641 = vmul.f32 %v381, %v432
      %v642 = vmul.f32 %v382, %v432
      %v643 = vmul.f32 %v383, %v432
      %v644 = vmul.f32 %v384, %v432
      %v645 = vmul.f32 %v385, %v432
      %v646 = vmul.f32 %v386, %v432
      %v647 = vmul.f32 %v387, %v432
      %v648 = vmul.f32 %v388, %v432
      %v649 = vmul.f32 %v389, %v432
      %v650 = vmul.f32 %v390, %v432
      %v651 = vmul.f32 %v391, %v432
      %v652 = vmul.f32 %v392, %v432
      %v653 = vmul.f32 %v393, %v432
      %v654 = vmul.f32 %v394, %v432
      %v655 = vmul.f32 %v395, %v432
      %v656 = vmul.f32 %v396, %v432
      %v657 = vmul.f32 %v397, %v432
      %v658 = vmul.f32 %v398, %v432
      %v659 = vmul.f32 %v399, %v432
      %v660 = vmul.f32 %v400, %v432
      %v661 = vmul.f32 %v401, %v432
      %v662 = vmul.f32 %v402, %v432
      %v663 = vmul.f32 %v403, %v432
      %v664 = vmul.f32 %v404, %v432
      %v665 = vmul.f32 %v405, %v432
      %v666 = vmul.f32 %v406, %v432
      %v667 = vmul.f32 %v407, %v432
      %v668 = vmul.f32 %v408, %v432
      %v669 = vmul.f32 %v409, %v432
      %v670 = vmul.f32 %v410, %v432
      %v671 = vmul.f32 %v411, %v432
      %v672 = vmul.f32 %v412, %v432
      %v673 = vmul.f32 %v413, %v432
      %v674 = vmul.f32 %v414, %v432
      %v675 = vmul.f32 %v415, %v432
      %v676 = vmul.f32 %v416, %v432
      %v677 = vmul.f32 %v417, %v432
      %v678 = vmul.f32 %v418, %v432
      %v679 = vmul.f32 %v419, %v432
      %v680 = vmul.f32 %v420, %v432
      %v681 = vmul.f32 %v421, %v432
      %v682 = vmul.f32 %v422, %v432
      %v683 = vmul.f32 %v423, %v432
      %v684 = vmul.f32 %v424, %v432
      %v685 = vmul.f32 %v425, %v432
      %v686 = vmul.f32 %v426, %v432
      %v687 = vmul.f32 %v427, %v432
      %v688 = vmul.f32 %v428, %v432
      %v689 = vmul.f32 %v429, %v432
      %v690 = vld [vmem:[%s2] sm:$0x1]
      %v692 = vperm.slane %v690, 0
      %v694 = vadd.f32 %v434, %v692
      %v695 = vadd.f32 %v435, %v692
      %v696 = vadd.f32 %v436, %v692
      %v697 = vadd.f32 %v437, %v692
      %v698 = vadd.f32 %v438, %v692
      %v699 = vadd.f32 %v439, %v692
      %v700 = vadd.f32 %v440, %v692
      %v701 = vadd.f32 %v441, %v692
      %v702 = vadd.f32 %v442, %v692
      %v703 = vadd.f32 %v443, %v692
      %v704 = vadd.f32 %v444, %v692
      %v705 = vadd.f32 %v445, %v692
      %v706 = vadd.f32 %v446, %v692
      %v707 = vadd.f32 %v447, %v692
      %v708 = vadd.f32 %v448, %v692
      %v709 = vadd.f32 %v449, %v692
      %v710 = vadd.f32 %v450, %v692
      %v711 = vadd.f32 %v451, %v692
      %v712 = vadd.f32 %v452, %v692
      %v713 = vadd.f32 %v453, %v692
      %v714 = vadd.f32 %v454, %v692
      %v715 = vadd.f32 %v455, %v692
      %v716 = vadd.f32 %v456, %v692
      %v717 = vadd.f32 %v457, %v692
      %v718 = vadd.f32 %v458, %v692
      %v719 = vadd.f32 %v459, %v692
      %v720 = vadd.f32 %v460, %v692
      %v721 = vadd.f32 %v461, %v692
      %v722 = vadd.f32 %v462, %v692
      %v723 = vadd.f32 %v463, %v692
      %v724 = vadd.f32 %v464, %v692
      %v725 = vadd.f32 %v465, %v692
      %v726 = vadd.f32 %v466, %v692
      %v727 = vadd.f32 %v467, %v692
      %v728 = vadd.f32 %v468, %v692
      %v729 = vadd.f32 %v469, %v692
      %v730 = vadd.f32 %v470, %v692
      %v731 = vadd.f32 %v471, %v692
      %v732 = vadd.f32 %v472, %v692
      %v733 = vadd.f32 %v473, %v692
      %v734 = vadd.f32 %v474, %v692
      %v735 = vadd.f32 %v475, %v692
      %v736 = vadd.f32 %v476, %v692
      %v737 = vadd.f32 %v477, %v692
      %v738 = vadd.f32 %v478, %v692
      %v739 = vadd.f32 %v479, %v692
      %v740 = vadd.f32 %v480, %v692
      %v741 = vadd.f32 %v481, %v692
      %v742 = vadd.f32 %v482, %v692
      %v743 = vadd.f32 %v483, %v692
      %v744 = vadd.f32 %v484, %v692
      %v745 = vadd.f32 %v485, %v692
      %v746 = vadd.f32 %v486, %v692
      %v747 = vadd.f32 %v487, %v692
      %v748 = vadd.f32 %v488, %v692
      %v749 = vadd.f32 %v489, %v692
      %v750 = vadd.f32 %v490, %v692
      %v751 = vadd.f32 %v491, %v692
      %v752 = vadd.f32 %v492, %v692
      %v753 = vadd.f32 %v493, %v692
      %v754 = vadd.f32 %v494, %v692
      %v755 = vadd.f32 %v495, %v692
      %v756 = vadd.f32 %v496, %v692
      %v757 = vadd.f32 %v497, %v692
      %v758 = vadd.f32 %v498, %v692
      %v759 = vadd.f32 %v499, %v692
      %v760 = vadd.f32 %v500, %v692
      %v761 = vadd.f32 %v501, %v692
      %v762 = vadd.f32 %v502, %v692
      %v763 = vadd.f32 %v503, %v692
      %v764 = vadd.f32 %v504, %v692
      %v765 = vadd.f32 %v505, %v692
      %v766 = vadd.f32 %v506, %v692
      %v767 = vadd.f32 %v507, %v692
      %v768 = vadd.f32 %v508, %v692
      %v769 = vadd.f32 %v509, %v692
      %v770 = vadd.f32 %v510, %v692
      %v771 = vadd.f32 %v511, %v692
      %v772 = vadd.f32 %v512, %v692
      %v773 = vadd.f32 %v513, %v692
      %v774 = vadd.f32 %v514, %v692
      %v775 = vadd.f32 %v515, %v692
      %v776 = vadd.f32 %v516, %v692
      %v777 = vadd.f32 %v517, %v692
      %v778 = vadd.f32 %v518, %v692
      %v779 = vadd.f32 %v519, %v692
      %v780 = vadd.f32 %v520, %v692
      %v781 = vadd.f32 %v521, %v692
      %v782 = vadd.f32 %v522, %v692
      %v783 = vadd.f32 %v523, %v692
      %v784 = vadd.f32 %v524, %v692
      %v785 = vadd.f32 %v525, %v692
      %v786 = vadd.f32 %v526, %v692
      %v787 = vadd.f32 %v527, %v692
      %v788 = vadd.f32 %v528, %v692
      %v789 = vadd.f32 %v529, %v692
      %v790 = vadd.f32 %v530, %v692
      %v791 = vadd.f32 %v531, %v692
      %v792 = vadd.f32 %v532, %v692
      %v793 = vadd.f32 %v533, %v692
      %v794 = vadd.f32 %v534, %v692
      %v795 = vadd.f32 %v535, %v692
      %v796 = vadd.f32 %v536, %v692
      %v797 = vadd.f32 %v537, %v692
      %v798 = vadd.f32 %v538, %v692
      %v799 = vadd.f32 %v539, %v692
      %v800 = vadd.f32 %v540, %v692
      %v801 = vadd.f32 %v541, %v692
      %v802 = vadd.f32 %v542, %v692
      %v803 = vadd.f32 %v543, %v692
      %v804 = vadd.f32 %v544, %v692
      %v805 = vadd.f32 %v545, %v692
      %v806 = vadd.f32 %v546, %v692
      %v807 = vadd.f32 %v547, %v692
      %v808 = vadd.f32 %v548, %v692
      %v809 = vadd.f32 %v549, %v692
      %v810 = vadd.f32 %v550, %v692
      %v811 = vadd.f32 %v551, %v692
      %v812 = vadd.f32 %v552, %v692
      %v813 = vadd.f32 %v553, %v692
      %v814 = vadd.f32 %v554, %v692
      %v815 = vadd.f32 %v555, %v692
      %v816 = vadd.f32 %v556, %v692
      %v817 = vadd.f32 %v557, %v692
      %v818 = vadd.f32 %v558, %v692
      %v819 = vadd.f32 %v559, %v692
      %v820 = vadd.f32 %v560, %v692
      %v821 = vadd.f32 %v561, %v692
      %v822 = vadd.f32 %v562, %v692
      %v823 = vadd.f32 %v563, %v692
      %v824 = vadd.f32 %v564, %v692
      %v825 = vadd.f32 %v565, %v692
      %v826 = vadd.f32 %v566, %v692
      %v827 = vadd.f32 %v567, %v692
      %v828 = vadd.f32 %v568, %v692
      %v829 = vadd.f32 %v569, %v692
      %v830 = vadd.f32 %v570, %v692
      %v831 = vadd.f32 %v571, %v692
      %v832 = vadd.f32 %v572, %v692
      %v833 = vadd.f32 %v573, %v692
      %v834 = vadd.f32 %v574, %v692
      %v835 = vadd.f32 %v575, %v692
      %v836 = vadd.f32 %v576, %v692
      %v837 = vadd.f32 %v577, %v692
      %v838 = vadd.f32 %v578, %v692
      %v839 = vadd.f32 %v579, %v692
      %v840 = vadd.f32 %v580, %v692
      %v841 = vadd.f32 %v581, %v692
      %v842 = vadd.f32 %v582, %v692
      %v843 = vadd.f32 %v583, %v692
      %v844 = vadd.f32 %v584, %v692
      %v845 = vadd.f32 %v585, %v692
      %v846 = vadd.f32 %v586, %v692
      %v847 = vadd.f32 %v587, %v692
      %v848 = vadd.f32 %v588, %v692
      %v849 = vadd.f32 %v589, %v692
      %v850 = vadd.f32 %v590, %v692
      %v851 = vadd.f32 %v591, %v692
      %v852 = vadd.f32 %v592, %v692
      %v853 = vadd.f32 %v593, %v692
      %v854 = vadd.f32 %v594, %v692
      %v855 = vadd.f32 %v595, %v692
      %v856 = vadd.f32 %v596, %v692
      %v857 = vadd.f32 %v597, %v692
      %v858 = vadd.f32 %v598, %v692
      %v859 = vadd.f32 %v599, %v692
      %v860 = vadd.f32 %v600, %v692
      %v861 = vadd.f32 %v601, %v692
      %v862 = vadd.f32 %v602, %v692
      %v863 = vadd.f32 %v603, %v692
      %v864 = vadd.f32 %v604, %v692
      %v865 = vadd.f32 %v605, %v692
      %v866 = vadd.f32 %v606, %v692
      %v867 = vadd.f32 %v607, %v692
      %v868 = vadd.f32 %v608, %v692
      %v869 = vadd.f32 %v609, %v692
      %v870 = vadd.f32 %v610, %v692
      %v871 = vadd.f32 %v611, %v692
      %v872 = vadd.f32 %v612, %v692
      %v873 = vadd.f32 %v613, %v692
      %v874 = vadd.f32 %v614, %v692
      %v875 = vadd.f32 %v615, %v692
      %v876 = vadd.f32 %v616, %v692
      %v877 = vadd.f32 %v617, %v692
      %v878 = vadd.f32 %v618, %v692
      %v879 = vadd.f32 %v619, %v692
      %v880 = vadd.f32 %v620, %v692
      %v881 = vadd.f32 %v621, %v692
      %v882 = vadd.f32 %v622, %v692
      %v883 = vadd.f32 %v623, %v692
      %v884 = vadd.f32 %v624, %v692
      %v885 = vadd.f32 %v625, %v692
      %v886 = vadd.f32 %v626, %v692
      %v887 = vadd.f32 %v627, %v692
      %v888 = vadd.f32 %v628, %v692
      %v889 = vadd.f32 %v629, %v692
      %v890 = vadd.f32 %v630, %v692
      %v891 = vadd.f32 %v631, %v692
      %v892 = vadd.f32 %v632, %v692
      %v893 = vadd.f32 %v633, %v692
      %v894 = vadd.f32 %v634, %v692
      %v895 = vadd.f32 %v635, %v692
      %v896 = vadd.f32 %v636, %v692
      %v897 = vadd.f32 %v637, %v692
      %v898 = vadd.f32 %v638, %v692
      %v899 = vadd.f32 %v639, %v692
      %v900 = vadd.f32 %v640, %v692
      %v901 = vadd.f32 %v641, %v692
      %v902 = vadd.f32 %v642, %v692
      %v903 = vadd.f32 %v643, %v692
      %v904 = vadd.f32 %v644, %v692
      %v905 = vadd.f32 %v645, %v692
      %v906 = vadd.f32 %v646, %v692
      %v907 = vadd.f32 %v647, %v692
      %v908 = vadd.f32 %v648, %v692
      %v909 = vadd.f32 %v649, %v692
      %v910 = vadd.f32 %v650, %v692
      %v911 = vadd.f32 %v651, %v692
      %v912 = vadd.f32 %v652, %v692
      %v913 = vadd.f32 %v653, %v692
      %v914 = vadd.f32 %v654, %v692
      %v915 = vadd.f32 %v655, %v692
      %v916 = vadd.f32 %v656, %v692
      %v917 = vadd.f32 %v657, %v692
      %v918 = vadd.f32 %v658, %v692
      %v919 = vadd.f32 %v659, %v692
      %v920 = vadd.f32 %v660, %v692
      %v921 = vadd.f32 %v661, %v692
      %v922 = vadd.f32 %v662, %v692
      %v923 = vadd.f32 %v663, %v692
      %v924 = vadd.f32 %v664, %v692
      %v925 = vadd.f32 %v665, %v692
      %v926 = vadd.f32 %v666, %v692
      %v927 = vadd.f32 %v667, %v692
      %v928 = vadd.f32 %v668, %v692
      %v929 = vadd.f32 %v669, %v692
      %v930 = vadd.f32 %v670, %v692
      %v931 = vadd.f32 %v671, %v692
      %v932 = vadd.f32 %v672, %v692
      %v933 = vadd.f32 %v673, %v692
      %v934 = vadd.f32 %v674, %v692
      %v935 = vadd.f32 %v675, %v692
      %v936 = vadd.f32 %v676, %v692
      %v937 = vadd.f32 %v677, %v692
      %v938 = vadd.f32 %v678, %v692
      %v939 = vadd.f32 %v679, %v692
      %v940 = vadd.f32 %v680, %v692
      %v941 = vadd.f32 %v681, %v692
      %v942 = vadd.f32 %v682, %v692
      %v943 = vadd.f32 %v683, %v692
      %v944 = vadd.f32 %v684, %v692
      %v945 = vadd.f32 %v685, %v692
      %v946 = vadd.f32 %v686, %v692
      %v947 = vadd.f32 %v687, %v692
      %v948 = vadd.f32 %v688, %v692
      %v949 = vadd.f32 %v689, %v692
      %v950 = vmax.f32 %v694, 0.0
      %v951 = vmax.f32 %v695, 0.0
      %v952 = vmax.f32 %v696, 0.0
      %v953 = vmax.f32 %v697, 0.0
      %v954 = vmax.f32 %v698, 0.0
      %v955 = vmax.f32 %v699, 0.0
      %v956 = vmax.f32 %v700, 0.0
      %v957 = vmax.f32 %v701, 0.0
      %v958 = vmax.f32 %v702, 0.0
      %v959 = vmax.f32 %v703, 0.0
      %v960 = vmax.f32 %v704, 0.0
      %v961 = vmax.f32 %v705, 0.0
      %v962 = vmax.f32 %v706, 0.0
      %v963 = vmax.f32 %v707, 0.0
      %v964 = vmax.f32 %v708, 0.0
      %v965 = vmax.f32 %v709, 0.0
      %v966 = vmax.f32 %v710, 0.0
      %v967 = vmax.f32 %v711, 0.0
      %v968 = vmax.f32 %v712, 0.0
      %v969 = vmax.f32 %v713, 0.0
      %v970 = vmax.f32 %v714, 0.0
      %v971 = vmax.f32 %v715, 0.0
      %v972 = vmax.f32 %v716, 0.0
      %v973 = vmax.f32 %v717, 0.0
      %v974 = vmax.f32 %v718, 0.0
      %v975 = vmax.f32 %v719, 0.0
      %v976 = vmax.f32 %v720, 0.0
      %v977 = vmax.f32 %v721, 0.0
      %v978 = vmax.f32 %v722, 0.0
      %v979 = vmax.f32 %v723, 0.0
      %v980 = vmax.f32 %v724, 0.0
      %v981 = vmax.f32 %v725, 0.0
      %v982 = vmax.f32 %v726, 0.0
      %v983 = vmax.f32 %v727, 0.0
      %v984 = vmax.f32 %v728, 0.0
      %v985 = vmax.f32 %v729, 0.0
      %v986 = vmax.f32 %v730, 0.0
      %v987 = vmax.f32 %v731, 0.0
      %v988 = vmax.f32 %v732, 0.0
      %v989 = vmax.f32 %v733, 0.0
      %v990 = vmax.f32 %v734, 0.0
      %v991 = vmax.f32 %v735, 0.0
      %v992 = vmax.f32 %v736, 0.0
      %v993 = vmax.f32 %v737, 0.0
      %v994 = vmax.f32 %v738, 0.0
      %v995 = vmax.f32 %v739, 0.0
      %v996 = vmax.f32 %v740, 0.0
      %v997 = vmax.f32 %v741, 0.0
      %v998 = vmax.f32 %v742, 0.0
      %v999 = vmax.f32 %v743, 0.0
      %v1000 = vmax.f32 %v744, 0.0
      %v1001 = vmax.f32 %v745, 0.0
      %v1002 = vmax.f32 %v746, 0.0
      %v1003 = vmax.f32 %v747, 0.0
      %v1004 = vmax.f32 %v748, 0.0
      %v1005 = vmax.f32 %v749, 0.0
      %v1006 = vmax.f32 %v750, 0.0
      %v1007 = vmax.f32 %v751, 0.0
      %v1008 = vmax.f32 %v752, 0.0
      %v1009 = vmax.f32 %v753, 0.0
      %v1010 = vmax.f32 %v754, 0.0
      %v1011 = vmax.f32 %v755, 0.0
      %v1012 = vmax.f32 %v756, 0.0
      %v1013 = vmax.f32 %v757, 0.0
      %v1014 = vmax.f32 %v758, 0.0
      %v1015 = vmax.f32 %v759, 0.0
      %v1016 = vmax.f32 %v760, 0.0
      %v1017 = vmax.f32 %v761, 0.0
      %v1018 = vmax.f32 %v762, 0.0
      %v1019 = vmax.f32 %v763, 0.0
      %v1020 = vmax.f32 %v764, 0.0
      %v1021 = vmax.f32 %v765, 0.0
      %v1022 = vmax.f32 %v766, 0.0
      %v1023 = vmax.f32 %v767, 0.0
      %v1024 = vmax.f32 %v768, 0.0
      %v1025 = vmax.f32 %v769, 0.0
      %v1026 = vmax.f32 %v770, 0.0
      %v1027 = vmax.f32 %v771, 0.0
      %v1028 = vmax.f32 %v772, 0.0
      %v1029 = vmax.f32 %v773, 0.0
      %v1030 = vmax.f32 %v774, 0.0
      %v1031 = vmax.f32 %v775, 0.0
      %v1032 = vmax.f32 %v776, 0.0
      %v1033 = vmax.f32 %v777, 0.0
      %v1034 = vmax.f32 %v778, 0.0
      %v1035 = vmax.f32 %v779, 0.0
      %v1036 = vmax.f32 %v780, 0.0
      %v1037 = vmax.f32 %v781, 0.0
      %v1038 = vmax.f32 %v782, 0.0
      %v1039 = vmax.f32 %v783, 0.0
      %v1040 = vmax.f32 %v784, 0.0
      %v1041 = vmax.f32 %v785, 0.0
      %v1042 = vmax.f32 %v786, 0.0
      %v1043 = vmax.f32 %v787, 0.0
      %v1044 = vmax.f32 %v788, 0.0
      %v1045 = vmax.f32 %v789, 0.0
      %v1046 = vmax.f32 %v790, 0.0
      %v1047 = vmax.f32 %v791, 0.0
      %v1048 = vmax.f32 %v792, 0.0
      %v1049 = vmax.f32 %v793, 0.0
      %v1050 = vmax.f32 %v794, 0.0
      %v1051 = vmax.f32 %v795, 0.0
      %v1052 = vmax.f32 %v796, 0.0
      %v1053 = vmax.f32 %v797, 0.0
      %v1054 = vmax.f32 %v798, 0.0
      %v1055 = vmax.f32 %v799, 0.0
      %v1056 = vmax.f32 %v800, 0.0
      %v1057 = vmax.f32 %v801, 0.0
      %v1058 = vmax.f32 %v802, 0.0
      %v1059 = vmax.f32 %v803, 0.0
      %v1060 = vmax.f32 %v804, 0.0
      %v1061 = vmax.f32 %v805, 0.0
      %v1062 = vmax.f32 %v806, 0.0
      %v1063 = vmax.f32 %v807, 0.0
      %v1064 = vmax.f32 %v808, 0.0
      %v1065 = vmax.f32 %v809, 0.0
      %v1066 = vmax.f32 %v810, 0.0
      %v1067 = vmax.f32 %v811, 0.0
      %v1068 = vmax.f32 %v812, 0.0
      %v1069 = vmax.f32 %v813, 0.0
      %v1070 = vmax.f32 %v814, 0.0
      %v1071 = vmax.f32 %v815, 0.0
      %v1072 = vmax.f32 %v816, 0.0
      %v1073 = vmax.f32 %v817, 0.0
      %v1074 = vmax.f32 %v818, 0.0
      %v1075 = vmax.f32 %v819, 0.0
      %v1076 = vmax.f32 %v820, 0.0
      %v1077 = vmax.f32 %v821, 0.0
      %v1078 = vmax.f32 %v822, 0.0
      %v1079 = vmax.f32 %v823, 0.0
      %v1080 = vmax.f32 %v824, 0.0
      %v1081 = vmax.f32 %v825, 0.0
      %v1082 = vmax.f32 %v826, 0.0
      %v1083 = vmax.f32 %v827, 0.0
      %v1084 = vmax.f32 %v828, 0.0
      %v1085 = vmax.f32 %v829, 0.0
      %v1086 = vmax.f32 %v830, 0.0
      %v1087 = vmax.f32 %v831, 0.0
      %v1088 = vmax.f32 %v832, 0.0
      %v1089 = vmax.f32 %v833, 0.0
      %v1090 = vmax.f32 %v834, 0.0
      %v1091 = vmax.f32 %v835, 0.0
      %v1092 = vmax.f32 %v836, 0.0
      %v1093 = vmax.f32 %v837, 0.0
      %v1094 = vmax.f32 %v838, 0.0
      %v1095 = vmax.f32 %v839, 0.0
      %v1096 = vmax.f32 %v840, 0.0
      %v1097 = vmax.f32 %v841, 0.0
      %v1098 = vmax.f32 %v842, 0.0
      %v1099 = vmax.f32 %v843, 0.0
      %v1100 = vmax.f32 %v844, 0.0
      %v1101 = vmax.f32 %v845, 0.0
      %v1102 = vmax.f32 %v846, 0.0
      %v1103 = vmax.f32 %v847, 0.0
      %v1104 = vmax.f32 %v848, 0.0
      %v1105 = vmax.f32 %v849, 0.0
      %v1106 = vmax.f32 %v850, 0.0
      %v1107 = vmax.f32 %v851, 0.0
      %v1108 = vmax.f32 %v852, 0.0
      %v1109 = vmax.f32 %v853, 0.0
      %v1110 = vmax.f32 %v854, 0.0
      %v1111 = vmax.f32 %v855, 0.0
      %v1112 = vmax.f32 %v856, 0.0
      %v1113 = vmax.f32 %v857, 0.0
      %v1114 = vmax.f32 %v858, 0.0
      %v1115 = vmax.f32 %v859, 0.0
      %v1116 = vmax.f32 %v860, 0.0
      %v1117 = vmax.f32 %v861, 0.0
      %v1118 = vmax.f32 %v862, 0.0
      %v1119 = vmax.f32 %v863, 0.0
      %v1120 = vmax.f32 %v864, 0.0
      %v1121 = vmax.f32 %v865, 0.0
      %v1122 = vmax.f32 %v866, 0.0
      %v1123 = vmax.f32 %v867, 0.0
      %v1124 = vmax.f32 %v868, 0.0
      %v1125 = vmax.f32 %v869, 0.0
      %v1126 = vmax.f32 %v870, 0.0
      %v1127 = vmax.f32 %v871, 0.0
      %v1128 = vmax.f32 %v872, 0.0
      %v1129 = vmax.f32 %v873, 0.0
      %v1130 = vmax.f32 %v874, 0.0
      %v1131 = vmax.f32 %v875, 0.0
      %v1132 = vmax.f32 %v876, 0.0
      %v1133 = vmax.f32 %v877, 0.0
      %v1134 = vmax.f32 %v878, 0.0
      %v1135 = vmax.f32 %v879, 0.0
      %v1136 = vmax.f32 %v880, 0.0
      %v1137 = vmax.f32 %v881, 0.0
      %v1138 = vmax.f32 %v882, 0.0
      %v1139 = vmax.f32 %v883, 0.0
      %v1140 = vmax.f32 %v884, 0.0
      %v1141 = vmax.f32 %v885, 0.0
      %v1142 = vmax.f32 %v886, 0.0
      %v1143 = vmax.f32 %v887, 0.0
      %v1144 = vmax.f32 %v888, 0.0
      %v1145 = vmax.f32 %v889, 0.0
      %v1146 = vmax.f32 %v890, 0.0
      %v1147 = vmax.f32 %v891, 0.0
      %v1148 = vmax.f32 %v892, 0.0
      %v1149 = vmax.f32 %v893, 0.0
      %v1150 = vmax.f32 %v894, 0.0
      %v1151 = vmax.f32 %v895, 0.0
      %v1152 = vmax.f32 %v896, 0.0
      %v1153 = vmax.f32 %v897, 0.0
      %v1154 = vmax.f32 %v898, 0.0
      %v1155 = vmax.f32 %v899, 0.0
      %v1156 = vmax.f32 %v900, 0.0
      %v1157 = vmax.f32 %v901, 0.0
      %v1158 = vmax.f32 %v902, 0.0
      %v1159 = vmax.f32 %v903, 0.0
      %v1160 = vmax.f32 %v904, 0.0
      %v1161 = vmax.f32 %v905, 0.0
      %v1162 = vmax.f32 %v906, 0.0
      %v1163 = vmax.f32 %v907, 0.0
      %v1164 = vmax.f32 %v908, 0.0
      %v1165 = vmax.f32 %v909, 0.0
      %v1166 = vmax.f32 %v910, 0.0
      %v1167 = vmax.f32 %v911, 0.0
      %v1168 = vmax.f32 %v912, 0.0
      %v1169 = vmax.f32 %v913, 0.0
      %v1170 = vmax.f32 %v914, 0.0
      %v1171 = vmax.f32 %v915, 0.0
      %v1172 = vmax.f32 %v916, 0.0
      %v1173 = vmax.f32 %v917, 0.0
      %v1174 = vmax.f32 %v918, 0.0
      %v1175 = vmax.f32 %v919, 0.0
      %v1176 = vmax.f32 %v920, 0.0
      %v1177 = vmax.f32 %v921, 0.0
      %v1178 = vmax.f32 %v922, 0.0
      %v1179 = vmax.f32 %v923, 0.0
      %v1180 = vmax.f32 %v924, 0.0
      %v1181 = vmax.f32 %v925, 0.0
      %v1182 = vmax.f32 %v926, 0.0
      %v1183 = vmax.f32 %v927, 0.0
      %v1184 = vmax.f32 %v928, 0.0
      %v1185 = vmax.f32 %v929, 0.0
      %v1186 = vmax.f32 %v930, 0.0
      %v1187 = vmax.f32 %v931, 0.0
      %v1188 = vmax.f32 %v932, 0.0
      %v1189 = vmax.f32 %v933, 0.0
      %v1190 = vmax.f32 %v934, 0.0
      %v1191 = vmax.f32 %v935, 0.0
      %v1192 = vmax.f32 %v936, 0.0
      %v1193 = vmax.f32 %v937, 0.0
      %v1194 = vmax.f32 %v938, 0.0
      %v1195 = vmax.f32 %v939, 0.0
      %v1196 = vmax.f32 %v940, 0.0
      %v1197 = vmax.f32 %v941, 0.0
      %v1198 = vmax.f32 %v942, 0.0
      %v1199 = vmax.f32 %v943, 0.0
      %v1200 = vmax.f32 %v944, 0.0
      %v1201 = vmax.f32 %v945, 0.0
      %v1202 = vmax.f32 %v946, 0.0
      %v1203 = vmax.f32 %v947, 0.0
      %v1204 = vmax.f32 %v948, 0.0
      %v1205 = vmax.f32 %v949, 0.0
      %1206 = vst [vmem:[%s172] sm:$0xff] %v950
      %1207 = vst [vmem:[%s172 + $0x8] sm:$0xff] %v951
      %1208 = vst [vmem:[%s172 + $0x10] sm:$0xff] %v952
      %1209 = vst [vmem:[%s172 + $0x18] sm:$0xff] %v953
      %1210 = vst [vmem:[%s172 + $0x20] sm:$0xff] %v954
      %1211 = vst [vmem:[%s172 + $0x28] sm:$0xff] %v955
      %1212 = vst [vmem:[%s172 + $0x30] sm:$0xff] %v956
      %1213 = vst [vmem:[%s172 + $0x38] sm:$0xff] %v957
      %1214 = vst [vmem:[%s172 + $0x40] sm:$0xff] %v958
      %1215 = vst [vmem:[%s172 + $0x48] sm:$0xff] %v959
      %1216 = vst [vmem:[%s172 + $0x50] sm:$0xff] %v960
      %1217 = vst [vmem:[%s172 + $0x58] sm:$0xff] %v961
      %1218 = vst [vmem:[%s172 + $0x60] sm:$0xff] %v962
      %1219 = vst [vmem:[%s172 + $0x68] sm:$0xff] %v963
      %1220 = vst [vmem:[%s172 + $0x70] sm:$0xff] %v964
      %1221 = vst [vmem:[%s172 + $0x78] sm:$0xff] %v965
      %1222 = vst [vmem:[%s172 + $0x80] sm:$0xff] %v966
      %1223 = vst [vmem:[%s172 + $0x88] sm:$0xff] %v967
      %1224 = vst [vmem:[%s172 + $0x90] sm:$0xff] %v968
      %1225 = vst [vmem:[%s172 + $0x98] sm:$0xff] %v969
      %1226 = vst [vmem:[%s172 + $0xa0] sm:$0xff] %v970
      %1227 = vst [vmem:[%s172 + $0xa8] sm:$0xff] %v971
      %1228 = vst [vmem:[%s172 + $0xb0] sm:$0xff] %v972
      %1229 = vst [vmem:[%s172 + $0xb8] sm:$0xff] %v973
      %1230 = vst [vmem:[%s172 + $0xc0] sm:$0xff] %v974
      %1231 = vst [vmem:[%s172 + $0xc8] sm:$0xff] %v975
      %1232 = vst [vmem:[%s172 + $0xd0] sm:$0xff] %v976
      %1233 = vst [vmem:[%s172 + $0xd8] sm:$0xff] %v977
      %1234 = vst [vmem:[%s172 + $0xe0] sm:$0xff] %v978
      %1235 = vst [vmem:[%s172 + $0xe8] sm:$0xff] %v979
      %1236 = vst [vmem:[%s172 + $0xf0] sm:$0xff] %v980
      %1237 = vst [vmem:[%s172 + $0xf8] sm:$0xff] %v981
      %1238 = vst [vmem:[%s172 + $0x100] sm:$0xff] %v982
      %1239 = vst [vmem:[%s172 + $0x108] sm:$0xff] %v983
      %1240 = vst [vmem:[%s172 + $0x110] sm:$0xff] %v984
      %1241 = vst [vmem:[%s172 + $0x118] sm:$0xff] %v985
      %1242 = vst [vmem:[%s172 + $0x120] sm:$0xff] %v986
      %1243 = vst [vmem:[%s172 + $0x128] sm:$0xff] %v987
      %1244 = vst [vmem:[%s172 + $0x130] sm:$0xff] %v988
      %1245 = vst [vmem:[%s172 + $0x138] sm:$0xff] %v989
      %1246 = vst [vmem:[%s172 + $0x140] sm:$0xff] %v990
      %1247 = vst [vmem:[%s172 + $0x148] sm:$0xff] %v991
      %1248 = vst [vmem:[%s172 + $0x150] sm:$0xff] %v992
      %1249 = vst [vmem:[%s172 + $0x158] sm:$0xff] %v993
      %1250 = vst [vmem:[%s172 + $0x160] sm:$0xff] %v994
      %1251 = vst [vmem:[%s172 + $0x168] sm:$0xff] %v995
      %1252 = vst [vmem:[%s172 + $0x170] sm:$0xff] %v996
      %1253 = vst [vmem:[%s172 + $0x178] sm:$0xff] %v997
      %1254 = vst [vmem:[%s172 + $0x180] sm:$0xff] %v998
      %1255 = vst [vmem:[%s172 + $0x188] sm:$0xff] %v999
      %1256 = vst [vmem:[%s172 + $0x190] sm:$0xff] %v1000
      %1257 = vst [vmem:[%s172 + $0x198] sm:$0xff] %v1001
      %1258 = vst [vmem:[%s172 + $0x1a0] sm:$0xff] %v1002
      %1259 = vst [vmem:[%s172 + $0x1a8] sm:$0xff] %v1003
      %1260 = vst [vmem:[%s172 + $0x1b0] sm:$0xff] %v1004
      %1261 = vst [vmem:[%s172 + $0x1b8] sm:$0xff] %v1005
      %1262 = vst [vmem:[%s172 + $0x1c0] sm:$0xff] %v1006
      %1263 = vst [vmem:[%s172 + $0x1c8] sm:$0xff] %v1007
      %1264 = vst [vmem:[%s172 + $0x1d0] sm:$0xff] %v1008
      %1265 = vst [vmem:[%s172 + $0x1d8] sm:$0xff] %v1009
      %1266 = vst [vmem:[%s172 + $0x1e0] sm:$0xff] %v1010
      %1267 = vst [vmem:[%s172 + $0x1e8] sm:$0xff] %v1011
      %1268 = vst [vmem:[%s172 + $0x1f0] sm:$0xff] %v1012
      %1269 = vst [vmem:[%s172 + $0x1f8] sm:$0xff] %v1013
      %1270 = vst [vmem:[%s172 + $0x200] sm:$0xff] %v1014
      %1271 = vst [vmem:[%s172 + $0x208] sm:$0xff] %v1015
      %1272 = vst [vmem:[%s172 + $0x210] sm:$0xff] %v1016
      %1273 = vst [vmem:[%s172 + $0x218] sm:$0xff] %v1017
      %1274 = vst [vmem:[%s172 + $0x220] sm:$0xff] %v1018
      %1275 = vst [vmem:[%s172 + $0x228] sm:$0xff] %v1019
      %1276 = vst [vmem:[%s172 + $0x230] sm:$0xff] %v1020
      %1277 = vst [vmem:[%s172 + $0x238] sm:$0xff] %v1021
      %1278 = vst [vmem:[%s172 + $0x240] sm:$0xff] %v1022
      %1279 = vst [vmem:[%s172 + $0x248] sm:$0xff] %v1023
      %1280 = vst [vmem:[%s172 + $0x250] sm:$0xff] %v1024
      %1281 = vst [vmem:[%s172 + $0x258] sm:$0xff] %v1025
      %1282 = vst [vmem:[%s172 + $0x260] sm:$0xff] %v1026
      %1283 = vst [vmem:[%s172 + $0x268] sm:$0xff] %v1027
      %1284 = vst [vmem:[%s172 + $0x270] sm:$0xff] %v1028
      %1285 = vst [vmem:[%s172 + $0x278] sm:$0xff] %v1029
      %1286 = vst [vmem:[%s172 + $0x280] sm:$0xff] %v1030
      %1287 = vst [vmem:[%s172 + $0x288] sm:$0xff] %v1031
      %1288 = vst [vmem:[%s172 + $0x290] sm:$0xff] %v1032
      %1289 = vst [vmem:[%s172 + $0x298] sm:$0xff] %v1033
      %1290 = vst [vmem:[%s172 + $0x2a0] sm:$0xff] %v1034
      %1291 = vst [vmem:[%s172 + $0x2a8] sm:$0xff] %v1035
      %1292 = vst [vmem:[%s172 + $0x2b0] sm:$0xff] %v1036
      %1293 = vst [vmem:[%s172 + $0x2b8] sm:$0xff] %v1037
      %1294 = vst [vmem:[%s172 + $0x2c0] sm:$0xff] %v1038
      %1295 = vst [vmem:[%s172 + $0x2c8] sm:$0xff] %v1039
      %1296 = vst [vmem:[%s172 + $0x2d0] sm:$0xff] %v1040
      %1297 = vst [vmem:[%s172 + $0x2d8] sm:$0xff] %v1041
      %1298 = vst [vmem:[%s172 + $0x2e0] sm:$0xff] %v1042
      %1299 = vst [vmem:[%s172 + $0x2e8] sm:$0xff] %v1043
      %1300 = vst [vmem:[%s172 + $0x2f0] sm:$0xff] %v1044
      %1301 = vst [vmem:[%s172 + $0x2f8] sm:$0xff] %v1045
      %1302 = vst [vmem:[%s172 + $0x300] sm:$0xff] %v1046
      %1303 = vst [vmem:[%s172 + $0x308] sm:$0xff] %v1047
      %1304 = vst [vmem:[%s172 + $0x310] sm:$0xff] %v1048
      %1305 = vst [vmem:[%s172 + $0x318] sm:$0xff] %v1049
      %1306 = vst [vmem:[%s172 + $0x320] sm:$0xff] %v1050
      %1307 = vst [vmem:[%s172 + $0x328] sm:$0xff] %v1051
      %1308 = vst [vmem:[%s172 + $0x330] sm:$0xff] %v1052
      %1309 = vst [vmem:[%s172 + $0x338] sm:$0xff] %v1053
      %1310 = vst [vmem:[%s172 + $0x340] sm:$0xff] %v1054
      %1311 = vst [vmem:[%s172 + $0x348] sm:$0xff] %v1055
      %1312 = vst [vmem:[%s172 + $0x350] sm:$0xff] %v1056
      %1313 = vst [vmem:[%s172 + $0x358] sm:$0xff] %v1057
      %1314 = vst [vmem:[%s172 + $0x360] sm:$0xff] %v1058
      %1315 = vst [vmem:[%s172 + $0x368] sm:$0xff] %v1059
      %1316 = vst [vmem:[%s172 + $0x370] sm:$0xff] %v1060
      %1317 = vst [vmem:[%s172 + $0x378] sm:$0xff] %v1061
      %1318 = vst [vmem:[%s172 + $0x380] sm:$0xff] %v1062
      %1319 = vst [vmem:[%s172 + $0x388] sm:$0xff] %v1063
      %1320 = vst [vmem:[%s172 + $0x390] sm:$0xff] %v1064
      %1321 = vst [vmem:[%s172 + $0x398] sm:$0xff] %v1065
      %1322 = vst [vmem:[%s172 + $0x3a0] sm:$0xff] %v1066
      %1323 = vst [vmem:[%s172 + $0x3a8] sm:$0xff] %v1067
      %1324 = vst [vmem:[%s172 + $0x3b0] sm:$0xff] %v1068
      %1325 = vst [vmem:[%s172 + $0x3b8] sm:$0xff] %v1069
      %1326 = vst [vmem:[%s172 + $0x3c0] sm:$0xff] %v1070
      %1327 = vst [vmem:[%s172 + $0x3c8] sm:$0xff] %v1071
      %1328 = vst [vmem:[%s172 + $0x3d0] sm:$0xff] %v1072
      %1329 = vst [vmem:[%s172 + $0x3d8] sm:$0xff] %v1073
      %1330 = vst [vmem:[%s172 + $0x3e0] sm:$0xff] %v1074
      %1331 = vst [vmem:[%s172 + $0x3e8] sm:$0xff] %v1075
      %1332 = vst [vmem:[%s172 + $0x3f0] sm:$0xff] %v1076
      %1333 = vst [vmem:[%s172 + $0x3f8] sm:$0xff] %v1077
      %1334 = vst [vmem:[%s172 + $0x400] sm:$0xff] %v1078
      %1335 = vst [vmem:[%s172 + $0x408] sm:$0xff] %v1079
      %1336 = vst [vmem:[%s172 + $0x410] sm:$0xff] %v1080
      %1337 = vst [vmem:[%s172 + $0x418] sm:$0xff] %v1081
      %1338 = vst [vmem:[%s172 + $0x420] sm:$0xff] %v1082
      %1339 = vst [vmem:[%s172 + $0x428] sm:$0xff] %v1083
      %1340 = vst [vmem:[%s172 + $0x430] sm:$0xff] %v1084
      %1341 = vst [vmem:[%s172 + $0x438] sm:$0xff] %v1085
      %1342 = vst [vmem:[%s172 + $0x440] sm:$0xff] %v1086
      %1343 = vst [vmem:[%s172 + $0x448] sm:$0xff] %v1087
      %1344 = vst [vmem:[%s172 + $0x450] sm:$0xff] %v1088
      %1345 = vst [vmem:[%s172 + $0x458] sm:$0xff] %v1089
      %1346 = vst [vmem:[%s172 + $0x460] sm:$0xff] %v1090
      %1347 = vst [vmem:[%s172 + $0x468] sm:$0xff] %v1091
      %1348 = vst [vmem:[%s172 + $0x470] sm:$0xff] %v1092
      %1349 = vst [vmem:[%s172 + $0x478] sm:$0xff] %v1093
      %1350 = vst [vmem:[%s172 + $0x480] sm:$0xff] %v1094
      %1351 = vst [vmem:[%s172 + $0x488] sm:$0xff] %v1095
      %1352 = vst [vmem:[%s172 + $0x490] sm:$0xff] %v1096
      %1353 = vst [vmem:[%s172 + $0x498] sm:$0xff] %v1097
      %1354 = vst [vmem:[%s172 + $0x4a0] sm:$0xff] %v1098
      %1355 = vst [vmem:[%s172 + $0x4a8] sm:$0xff] %v1099
      %1356 = vst [vmem:[%s172 + $0x4b0] sm:$0xff] %v1100
      %1357 = vst [vmem:[%s172 + $0x4b8] sm:$0xff] %v1101
      %1358 = vst [vmem:[%s172 + $0x4c0] sm:$0xff] %v1102
      %1359 = vst [vmem:[%s172 + $0x4c8] sm:$0xff] %v1103
      %1360 = vst [vmem:[%s172 + $0x4d0] sm:$0xff] %v1104
      %1361 = vst [vmem:[%s172 + $0x4d8] sm:$0xff] %v1105
      %1362 = vst [vmem:[%s172 + $0x4e0] sm:$0xff] %v1106
      %1363 = vst [vmem:[%s172 + $0x4e8] sm:$0xff] %v1107
      %1364 = vst [vmem:[%s172 + $0x4f0] sm:$0xff] %v1108
      %1365 = vst [vmem:[%s172 + $0x4f8] sm:$0xff] %v1109
      %1366 = vst [vmem:[%s172 + $0x500] sm:$0xff] %v1110
      %1367 = vst [vmem:[%s172 + $0x508] sm:$0xff] %v1111
      %1368 = vst [vmem:[%s172 + $0x510] sm:$0xff] %v1112
      %1369 = vst [vmem:[%s172 + $0x518] sm:$0xff] %v1113
      %1370 = vst [vmem:[%s172 + $0x520] sm:$0xff] %v1114
      %1371 = vst [vmem:[%s172 + $0x528] sm:$0xff] %v1115
      %1372 = vst [vmem:[%s172 + $0x530] sm:$0xff] %v1116
      %1373 = vst [vmem:[%s172 + $0x538] sm:$0xff] %v1117
      %1374 = vst [vmem:[%s172 + $0x540] sm:$0xff] %v1118
      %1375 = vst [vmem:[%s172 + $0x548] sm:$0xff] %v1119
      %1376 = vst [vmem:[%s172 + $0x550] sm:$0xff] %v1120
      %1377 = vst [vmem:[%s172 + $0x558] sm:$0xff] %v1121
      %1378 = vst [vmem:[%s172 + $0x560] sm:$0xff] %v1122
      %1379 = vst [vmem:[%s172 + $0x568] sm:$0xff] %v1123
      %1380 = vst [vmem:[%s172 + $0x570] sm:$0xff] %v1124
      %1381 = vst [vmem:[%s172 + $0x578] sm:$0xff] %v1125
      %1382 = vst [vmem:[%s172 + $0x580] sm:$0xff] %v1126
      %1383 = vst [vmem:[%s172 + $0x588] sm:$0xff] %v1127
      %1384 = vst [vmem:[%s172 + $0x590] sm:$0xff] %v1128
      %1385 = vst [vmem:[%s172 + $0x598] sm:$0xff] %v1129
      %1386 = vst [vmem:[%s172 + $0x5a0] sm:$0xff] %v1130
      %1387 = vst [vmem:[%s172 + $0x5a8] sm:$0xff] %v1131
      %1388 = vst [vmem:[%s172 + $0x5b0] sm:$0xff] %v1132
      %1389 = vst [vmem:[%s172 + $0x5b8] sm:$0xff] %v1133
      %1390 = vst [vmem:[%s172 + $0x5c0] sm:$0xff] %v1134
      %1391 = vst [vmem:[%s172 + $0x5c8] sm:$0xff] %v1135
      %1392 = vst [vmem:[%s172 + $0x5d0] sm:$0xff] %v1136
      %1393 = vst [vmem:[%s172 + $0x5d8] sm:$0xff] %v1137
      %1394 = vst [vmem:[%s172 + $0x5e0] sm:$0xff] %v1138
      %1395 = vst [vmem:[%s172 + $0x5e8] sm:$0xff] %v1139
      %1396 = vst [vmem:[%s172 + $0x5f0] sm:$0xff] %v1140
      %1397 = vst [vmem:[%s172 + $0x5f8] sm:$0xff] %v1141
      %1398 = vst [vmem:[%s172 + $0x600] sm:$0xff] %v1142
      %1399 = vst [vmem:[%s172 + $0x608] sm:$0xff] %v1143
      %1400 = vst [vmem:[%s172 + $0x610] sm:$0xff] %v1144
      %1401 = vst [vmem:[%s172 + $0x618] sm:$0xff] %v1145
      %1402 = vst [vmem:[%s172 + $0x620] sm:$0xff] %v1146
      %1403 = vst [vmem:[%s172 + $0x628] sm:$0xff] %v1147
      %1404 = vst [vmem:[%s172 + $0x630] sm:$0xff] %v1148
      %1405 = vst [vmem:[%s172 + $0x638] sm:$0xff] %v1149
      %1406 = vst [vmem:[%s172 + $0x640] sm:$0xff] %v1150
      %1407 = vst [vmem:[%s172 + $0x648] sm:$0xff] %v1151
      %1408 = vst [vmem:[%s172 + $0x650] sm:$0xff] %v1152
      %1409 = vst [vmem:[%s172 + $0x658] sm:$0xff] %v1153
      %1410 = vst [vmem:[%s172 + $0x660] sm:$0xff] %v1154
      %1411 = vst [vmem:[%s172 + $0x668] sm:$0xff] %v1155
      %1412 = vst [vmem:[%s172 + $0x670] sm:$0xff] %v1156
      %1413 = vst [vmem:[%s172 + $0x678] sm:$0xff] %v1157
      %1414 = vst [vmem:[%s172 + $0x680] sm:$0xff] %v1158
      %1415 = vst [vmem:[%s172 + $0x688] sm:$0xff] %v1159
      %1416 = vst [vmem:[%s172 + $0x690] sm:$0xff] %v1160
      %1417 = vst [vmem:[%s172 + $0x698] sm:$0xff] %v1161
      %1418 = vst [vmem:[%s172 + $0x6a0] sm:$0xff] %v1162
      %1419 = vst [vmem:[%s172 + $0x6a8] sm:$0xff] %v1163
      %1420 = vst [vmem:[%s172 + $0x6b0] sm:$0xff] %v1164
      %1421 = vst [vmem:[%s172 + $0x6b8] sm:$0xff] %v1165
      %1422 = vst [vmem:[%s172 + $0x6c0] sm:$0xff] %v1166
      %1423 = vst [vmem:[%s172 + $0x6c8] sm:$0xff] %v1167
      %1424 = vst [vmem:[%s172 + $0x6d0] sm:$0xff] %v1168
      %1425 = vst [vmem:[%s172 + $0x6d8] sm:$0xff] %v1169
      %1426 = vst [vmem:[%s172 + $0x6e0] sm:$0xff] %v1170
      %1427 = vst [vmem:[%s172 + $0x6e8] sm:$0xff] %v1171
      %1428 = vst [vmem:[%s172 + $0x6f0] sm:$0xff] %v1172
      %1429 = vst [vmem:[%s172 + $0x6f8] sm:$0xff] %v1173
      %1430 = vst [vmem:[%s172 + $0x700] sm:$0xff] %v1174
      %1431 = vst [vmem:[%s172 + $0x708] sm:$0xff] %v1175
      %1432 = vst [vmem:[%s172 + $0x710] sm:$0xff] %v1176
      %1433 = vst [vmem:[%s172 + $0x718] sm:$0xff] %v1177
      %1434 = vst [vmem:[%s172 + $0x720] sm:$0xff] %v1178
      %1435 = vst [vmem:[%s172 + $0x728] sm:$0xff] %v1179
      %1436 = vst [vmem:[%s172 + $0x730] sm:$0xff] %v1180
      %1437 = vst [vmem:[%s172 + $0x738] sm:$0xff] %v1181
      %1438 = vst [vmem:[%s172 + $0x740] sm:$0xff] %v1182
      %1439 = vst [vmem:[%s172 + $0x748] sm:$0xff] %v1183
      %1440 = vst [vmem:[%s172 + $0x750] sm:$0xff] %v1184
      %1441 = vst [vmem:[%s172 + $0x758] sm:$0xff] %v1185
      %1442 = vst [vmem:[%s172 + $0x760] sm:$0xff] %v1186
      %1443 = vst [vmem:[%s172 + $0x768] sm:$0xff] %v1187
      %1444 = vst [vmem:[%s172 + $0x770] sm:$0xff] %v1188
      %1445 = vst [vmem:[%s172 + $0x778] sm:$0xff] %v1189
      %1446 = vst [vmem:[%s172 + $0x780] sm:$0xff] %v1190
      %1447 = vst [vmem:[%s172 + $0x788] sm:$0xff] %v1191
      %1448 = vst [vmem:[%s172 + $0x790] sm:$0xff] %v1192
      %1449 = vst [vmem:[%s172 + $0x798] sm:$0xff] %v1193
      %1450 = vst [vmem:[%s172 + $0x7a0] sm:$0xff] %v1194
      %1451 = vst [vmem:[%s172 + $0x7a8] sm:$0xff] %v1195
      %1452 = vst [vmem:[%s172 + $0x7b0] sm:$0xff] %v1196
      %1453 = vst [vmem:[%s172 + $0x7b8] sm:$0xff] %v1197
      %1454 = vst [vmem:[%s172 + $0x7c0] sm:$0xff] %v1198
      %1455 = vst [vmem:[%s172 + $0x7c8] sm:$0xff] %v1199
      %1456 = vst [vmem:[%s172 + $0x7d0] sm:$0xff] %v1200
      %1457 = vst [vmem:[%s172 + $0x7d8] sm:$0xff] %v1201
      %1458 = vst [vmem:[%s172 + $0x7e0] sm:$0xff] %v1202
      %1459 = vst [vmem:[%s172 + $0x7e8] sm:$0xff] %v1203
      %1460 = vst [vmem:[%s172 + $0x7f0] sm:$0xff] %v1204
      %1461 = vst [vmem:[%s172 + $0x7f8] sm:$0xff] %v1205
      %s1462 = smul.u32 256, %s14
      %p1463 = scmp.lt.s32.totalorder %s1462, 1023
      %s1464 = scalar_select %p1463, %s1462, 1023
      %s1465 = smul.addr %s1464, 8
      %s1466 = scalar_lea.vmem %s3, %s1465
      // Predicated region
      $region33: #{double_conv.5} parent=31 // pred_check
        %p1467 = pneg %p100
      $region34: #{double_conv.5} parent=31 // pred_check_branch
        %1469 = sbr.rel (%p1467) target = $region36
      $region35: #{double_conv.5} parent=31 // pred_region
        %s1470 = smul.u32 256, %s14
      $region36: #{double_conv.5} parent=31 // pred_fallthru
        _
    $region32: #{double_conv.5} parent=5 // pred_fallthru
      _
    %p1471 = scmp.le.s32.totalorder 2, %s9
    // Predicated region
    $region37: #{double_conv.5} parent=5 // pred_check
      %p1472 = pneg %p1471
    $region38: #{double_conv.5} parent=5 // pred_check_branch
      %1474 = sbr.rel (%p1472) target = $region40
    $region39: #{double_conv.5} parent=5 // pred_region
      %s1475 = ssub.s32 %s9, 2
      // Predicated region
      $region41: #{double_conv.5} parent=39 // pred_check
        %p1476 = pneg %p106
      $region42: #{double_conv.5} parent=39 // pred_check_branch
        %1478 = sbr.rel (%p1476) target = $region44
      $region43: #{double_conv.5} parent=39 // pred_region
        %s1479 = smul.u32 256, %s15
        %p1480 = scmp.lt.s32.totalorder %s1479, 1023
        %s1481 = scalar_select %p1480, %s1479, 1023
        %s1482 = smul.addr %s1481, 8
        %s1483 = scalar_lea.vmem %s3, %s1482
      $region44: #{double_conv.5} parent=39 // pred_fallthru
        _
    $region40: #{double_conv.5} parent=5 // pred_fallthru
      _
  $region6: #{double_conv.5} parent=0 // loop_footer
    %s13 = sadd.s32 1, %s9
  $region7: #{double_conv.5} parent=0 // loop_footer_branch
    %8 = sbr.rel target = $region3
  $region8: #{double_conv.5} parent=0 // loop_exit
    _

// kernel: double_conv.6
$region0: #{double_conv.6}
  #allocation0 [shape = 'u32[]', space=smem, size = 0x4, offset = 0x4, fixed_abs, tag = 'smem constant byte address 0x4 - core index']
  #allocation1 [shape = 'u32[72,128]{1,0:T(1,128)}', space=vmem, size = 0x9000, scoped, tag = 'internal scratch']
  #allocation2 [shape = 'f32[1024,128]{1,0:T(8,128)}', space=vmem, size = 0x80000, scoped, tag = 'scratch operand']
  %s0 = inlined_call_operand.vmem [shape: f32[8192,256], index: 0, kind: input, shape index: {}]
  %s1 = inlined_call_operand.vmem [shape: f32[256,128], index: 1, kind: input, shape index: {}]
  %s2 = inlined_call_operand.vmem [shape: f32[8192,128], index: 2, kind: output, shape index: {0}]
  %s3 = inlined_call_operand.vmem [shape: f32[64,128], index: 3, kind: output, shape index: {1}]
  %4 = xla_tuple %s2, %s3
  %s5 = sld [smem:[#allocation0]]
  $region57: #{double_conv.6} parent=0
    _
  %s7 = ssub.s32 1, %s5
  %s8 = scalar_select 0, %s7, %s5
  loop: start=0, step=1, limit=10
  $region2: #{double_conv.6} parent=0 // loop_pre_header
    _
  $region3: #{double_conv.6} parent=0 // loop_header
    %s10 = sphi 0, %s14
    %p11 = scmp.ge.s32.totalorder %s10, 10
    %s17 = sphi 0, %s29
    %s18 = sphi 0, %s25
    %s19 = sphi 0, %s17
    %s20 = sphi 0, %s18
    %s21 = sphi 0, %s19
    %s22 = sphi 0, %s20
    %s34 = sphi 0, %s36
    %s37 = sphi 0, %s34
    %s38 = sphi 0, %s37
    %s54 = sphi 0, %s38
    %s60 = sphi 0, %s62
    %s63 = sphi 0, %s60
    %s64 = sphi 0, %s63
    %s80 = sphi 0, %s64
    %s86 = sphi 0, %s88
    %s89 = sphi 0, %s86
    %s90 = sphi 0, %s89
    %s106 = sphi 0, %s90
    %s112 = sphi 0, %s114
    %s115 = sphi 0, %s112
    %s116 = sphi 0, %s115
    %s132 = sphi 0, %s116
  $region4: #{double_conv.6} parent=0 // loop_header_branch
    %13 = sbr.rel (%p11) target = $region8
  $region5: #{double_conv.6} parent=0 // loop_body
    %s15 = ssub.s32 %s10, 1
    %s16 = ssub.s32 %s10, 2
    %s23 = sadd.s32 1, %s18
    %p24 = scmp.ge.s32.totalorder %s23, 1
    %s25 = scalar_select %p24, 0, %s23
    %s26 = sadd.s32 1, %s17
    %s27 = scalar_select %p24, %s26, %s17
    %p28 = scmp.ge.s32.totalorder %s27, 8
    %s29 = scalar_select %p28, 0, %s27
    %s30 = ssub.s32 %s17, %s29
    %s31 = ssub.s32 %s18, %s25
    %s32 = sor.u32 %s30, %s31
    %p33 = scmp.eq.s32.totalorder %s32, 0
    %s35 = sadd.s32 %s34, 1
    %s36 = scalar_select %p33, %s34, %s35
    %p39 = pneg %p33
    %p40 = scmp.eq.s32.totalorder %s10, 7
    %p41 = por %p39, %p40
    %p42 = scmp.ne.s32.totalorder %s34, %s37
    %p43 = scmp.eq.s32.totalorder %s10, 0
    %p44 = por %p42, %p43
    %p45 = scmp.ne.s32.totalorder %s34, %s37
    %p46 = scmp.eq.s32.totalorder %s15, 7
    %p47 = por %p45, %p46
    %p48 = scmp.ne.s32.totalorder %s37, %s38
    %p49 = scmp.eq.s32.totalorder %s15, 0
    %p50 = por %p48, %p49
    %p51 = scmp.ne.s32.totalorder %s37, %s38
    %p52 = scmp.eq.s32.totalorder %s16, 7
    %p53 = por %p51, %p52
    %p55 = scmp.ne.s32.totalorder %s38, %s54
    %p56 = scmp.eq.s32.totalorder %s16, 0
    %p57 = por %p55, %p56
    %s58 = ssub.s32 %s18, %s25
    %p59 = scmp.eq.s32.totalorder %s58, 0
    %s61 = sadd.s32 %s60, 1
    %s62 = scalar_select %p59, %s60, %s61
    %p65 = pneg %p59
    %p66 = scmp.eq.s32.totalorder %s10, 7
    %p67 = por %p65, %p66
    %p68 = scmp.ne.s32.totalorder %s60, %s63
    %p69 = scmp.eq.s32.totalorder %s10, 0
    %p70 = por %p68, %p69
    %p71 = scmp.ne.s32.totalorder %s60, %s63
    %p72 = scmp.eq.s32.totalorder %s15, 7
    %p73 = por %p71, %p72
    %p74 = scmp.ne.s32.totalorder %s63, %s64
    %p75 = scmp.eq.s32.totalorder %s15, 0
    %p76 = por %p74, %p75
    %p77 = scmp.ne.s32.totalorder %s63, %s64
    %p78 = scmp.eq.s32.totalorder %s16, 7
    %p79 = por %p77, %p78
    %p81 = scmp.ne.s32.totalorder %s64, %s80
    %p82 = scmp.eq.s32.totalorder %s16, 0
    %p83 = por %p81, %p82
    %s84 = ssub.s32 %s17, %s29
    %p85 = scmp.eq.s32.totalorder %s84, 0
    %s87 = sadd.s32 %s86, 1
    %s88 = scalar_select %p85, %s86, %s87
    %p91 = pneg %p85
    %p92 = scmp.eq.s32.totalorder %s10, 7
    %p93 = por %p91, %p92
    %p94 = scmp.ne.s32.totalorder %s86, %s89
    %p95 = scmp.eq.s32.totalorder %s10, 0
    %p96 = por %p94, %p95
    %p97 = scmp.ne.s32.totalorder %s86, %s89
    %p98 = scmp.eq.s32.totalorder %s15, 7
    %p99 = por %p97, %p98
    %p100 = scmp.ne.s32.totalorder %s89, %s90
    %p101 = scmp.eq.s32.totalorder %s15, 0
    %p102 = por %p100, %p101
    %p103 = scmp.ne.s32.totalorder %s89, %s90
    %p104 = scmp.eq.s32.totalorder %s16, 7
    %p105 = por %p103, %p104
    %p107 = scmp.ne.s32.totalorder %s90, %s106
    %p108 = scmp.eq.s32.totalorder %s16, 0
    %p109 = por %p107, %p108
    %s110 = ssub.s32 %s17, %s29
    %p111 = scmp.eq.s32.totalorder %s110, 0
    %s113 = sadd.s32 %s112, 1
    %s114 = scalar_select %p111, %s112, %s113
    %p117 = pneg %p111
    %p118 = scmp.eq.s32.totalorder %s10, 7
    %p119 = por %p117, %p118
    %p120 = scmp.ne.s32.totalorder %s112, %s115
    %p121 = scmp.eq.s32.totalorder %s10, 0
    %p122 = por %p120, %p121
    %p123 = scmp.ne.s32.totalorder %s112, %s115
    %p124 = scmp.eq.s32.totalorder %s15, 7
    %p125 = por %p123, %p124
    %p126 = scmp.ne.s32.totalorder %s115, %s116
    %p127 = scmp.eq.s32.totalorder %s15, 0
    %p128 = por %p126, %p127
    %p129 = scmp.ne.s32.totalorder %s115, %s116
    %p130 = scmp.eq.s32.totalorder %s16, 7
    %p131 = por %p129, %p130
    %p133 = scmp.ne.s32.totalorder %s116, %s132
    %p134 = scmp.eq.s32.totalorder %s16, 0
    %p135 = por %p133, %p134
    %p136 = scmp.le.s32.totalorder 1, %s10
    %p137 = scmp.lt.s32.totalorder %s10, 9
    %p138 = pnand %p136, %p137
    %p139 = pneg %p138
    // Predicated region
    $region9: #{double_conv.6} parent=5 // pred_check
      _
    $region10: #{double_conv.6} parent=5 // pred_check_branch
      %141 = sbr.rel (%p138) target = $region12
    $region11: #{double_conv.6} parent=5 // pred_region
      %s142 = ssub.s32 %s10, 1
      // Predicated region
      $region13: #{double_conv.6} parent=11 // pred_check
        %p143 = pneg %p76
      $region14: #{double_conv.6} parent=11 // pred_check_branch
        %145 = sbr.rel (%p143) target = $region16
      $region15: #{double_conv.6} parent=11 // pred_region
        %s146 = smul.u32 32, %s20
        %p147 = scmp.lt.s32.totalorder %s146, 31
        %s148 = scalar_select %p147, %s146, 31
        %s149 = smul.addr %s148, 8
        %s150 = scalar_lea.vmem %s1, %s149
        %s151 = smul.u32 32, %s20
      $region16: #{double_conv.6} parent=11 // pred_fallthru
        _
    $region12: #{double_conv.6} parent=5 // pred_fallthru
      _
    %p152 = scmp.lt.s32.totalorder %s10, 8
    // Predicated region
    $region17: #{double_conv.6} parent=5 // pred_check
      %p153 = pneg %p152
    $region18: #{double_conv.6} parent=5 // pred_check_branch
      %155 = sbr.rel (%p153) target = $region20
    $region19: #{double_conv.6} parent=5 // pred_region
      // Predicated region
      $region21: #{double_conv.6} parent=19 // pred_check
        %p156 = pneg %p44
      $region22: #{double_conv.6} parent=19 // pred_check_branch
        %158 = sbr.rel (%p156) target = $region24
      $region23: #{double_conv.6} parent=19 // pred_region
        %s159 = smul.u32 128, %s17
        %s160 = smul.u32 2, %s18
        %p161 = scmp.lt.s32.totalorder %s159, 1023
        %s162 = scalar_select %p161, %s159, 1023
        %p163 = scmp.lt.s32.totalorder %s160, 1
        %s164 = scalar_select %p163, %s160, 1
        %s165 = smul.addr %s162, 2
        %s166 = sadd.s32 %s164, %s165
        %s167 = smul.addr %s166, 8
        %s168 = scalar_lea.vmem %s0, %s167
        %s169 = smul.u32 128, %s17
        %s170 = smul.u32 2, %s18
      $region24: #{double_conv.6} parent=19 // pred_fallthru
        _
    $region20: #{double_conv.6} parent=5 // pred_fallthru
      _
    %p171 = scmp.le.s32.totalorder 1, %s10
    %p172 = scmp.lt.s32.totalorder %s10, 9
    %p173 = pnand %p171, %p172
    %p174 = pneg %p173
    // Predicated region
    $region25: #{double_conv.6} parent=5 // pred_check
      _
    $region26: #{double_conv.6} parent=5 // pred_check_branch
      %176 = sbr.rel (%p173) target = $region28
    $region27: #{double_conv.6} parent=5 // pred_region
      %s177 = ssub.s32 %s10, 1
      %s178 = smul.u32 128, %s19
      %s179 = smul.u32 2, %s20
      %p180 = scmp.lt.s32.totalorder %s178, 1023
      %s181 = scalar_select %p180, %s178, 1023
      %p182 = scmp.lt.s32.totalorder %s179, 1
      %s183 = scalar_select %p182, %s179, 1
      %s184 = smul.addr %s181, 2
      %s185 = sadd.s32 %s183, %s184
      %s186 = smul.addr %s185, 8
      %s187 = scalar_lea.vmem %s0, %s186
      %p188 = pneg %p50
      %p189 = pneg %p47
      %s190 = smul.u32 32, %s20
      %p191 = scmp.lt.s32.totalorder %s190, 31
      %s192 = scalar_select %p191, %s190, 31
      %s193 = smul.addr %s192, 8
      %s194 = scalar_lea.vmem %s1, %s193
      %p195 = pneg %p76
      %p196 = pneg %p73
      %p197 = pneg %p102
      %p198 = pneg %p99
      %s199 = smul.u32 128, %s19
      %p200 = scmp.lt.s32.totalorder %s199, 1023
      %s201 = scalar_select %p200, %s199, 1023
      %s202 = smul.addr %s201, 8
      %s203 = scalar_lea.vmem %s2, %s202
      %p204 = pneg %p128
      %p205 = pneg %p125
      %p206 = scmp.lt.s32.totalorder %s19, 7
      %s207 = scalar_select %p206, %s19, 7
      %s208 = smul.addr %s207, 8
      %s209 = scalar_lea.vmem %s3, %s208
      %s210 = smul.u32 128, %s19
      %s211 = smul.u32 2, %s20
      %p212 = scmp.lt.s32.totalorder %s210, 1023
      %s213 = scalar_select %p212, %s210, 1023
      %p214 = scmp.lt.s32.totalorder %s211, 1
      %s215 = scalar_select %p214, %s211, 1
      %s216 = smul.addr %s213, 2
      %s217 = sadd.s32 %s215, %s216
      %s218 = smul.addr %s217, 8
      %s219 = scalar_lea.vmem %s0, %s218
      %s220 = smul.u32 128, %s19
      %s221 = smul.u32 2, %s20
      %s222 = smul.u32 32, %s20
      %p223 = scmp.lt.s32.totalorder %s222, 31
      %s224 = scalar_select %p223, %s222, 31
      %s225 = smul.addr %s224, 8
      %s226 = scalar_lea.vmem %s1, %s225
      %s227 = smul.u32 32, %s20
      %s228 = smul.u32 128, %s19
      %p229 = scmp.lt.s32.totalorder %s228, 1023
      %s230 = scalar_select %p229, %s228, 1023
      %s231 = smul.addr %s230, 8
      %s232 = scalar_lea.vmem %s2, %s231
      %s233 = smul.u32 128, %s19
      %p234 = scmp.lt.s32.totalorder %s19, 7
      %s235 = scalar_select %p234, %s19, 7
      %s236 = smul.addr %s235, 8
      %s237 = scalar_lea.vmem %s3, %s236
      %p238 = scmp.eq.s32.totalorder %s20, 0
      // Predicated region
      $region29: #{double_conv.6} parent=27 // pred_check
        %p239 = pneg %p238
      $region30: #{double_conv.6} parent=27 // pred_check_branch
        %241 = sbr.rel (%p239) target = $region32
      $region31: #{double_conv.6} parent=27 // pred_region
        %242 = vst [vmem:[#allocation2] sm:$0xff] 0.0
        %243 = vst [vmem:[#allocation2 + $0x8] sm:$0xff] 0.0
        %244 = vst [vmem:[#allocation2 + $0x10] sm:$0xff] 0.0
        %245 = vst [vmem:[#allocation2 + $0x18] sm:$0xff] 0.0
        %246 = vst [vmem:[#allocation2 + $0x20] sm:$0xff] 0.0
        %247 = vst [vmem:[#allocation2 + $0x28] sm:$0xff] 0.0
        %248 = vst [vmem:[#allocation2 + $0x30] sm:$0xff] 0.0
        %249 = vst [vmem:[#allocation2 + $0x38] sm:$0xff] 0.0
        %250 = vst [vmem:[#allocation2 + $0x40] sm:$0xff] 0.0
        %251 = vst [vmem:[#allocation2 + $0x48] sm:$0xff] 0.0
        %252 = vst [vmem:[#allocation2 + $0x50] sm:$0xff] 0.0
        %253 = vst [vmem:[#allocation2 + $0x58] sm:$0xff] 0.0
        %254 = vst [vmem:[#allocation2 + $0x60] sm:$0xff] 0.0
        %255 = vst [vmem:[#allocation2 + $0x68] sm:$0xff] 0.0
        %256 = vst [vmem:[#allocation2 + $0x70] sm:$0xff] 0.0
        %257 = vst [vmem:[#allocation2 + $0x78] sm:$0xff] 0.0
        %258 = vst [vmem:[#allocation2 + $0x80] sm:$0xff] 0.0
        %259 = vst [vmem:[#allocation2 + $0x88] sm:$0xff] 0.0
        %260 = vst [vmem:[#allocation2 + $0x90] sm:$0xff] 0.0
        %261 = vst [vmem:[#allocation2 + $0x98] sm:$0xff] 0.0
        %262 = vst [vmem:[#allocation2 + $0xa0] sm:$0xff] 0.0
        %263 = vst [vmem:[#allocation2 + $0xa8] sm:$0xff] 0.0
        %264 = vst [vmem:[#allocation2 + $0xb0] sm:$0xff] 0.0
        %265 = vst [vmem:[#allocation2 + $0xb8] sm:$0xff] 0.0
        %266 = vst [vmem:[#allocation2 + $0xc0] sm:$0xff] 0.0
        %267 = vst [vmem:[#allocation2 + $0xc8] sm:$0xff] 0.0
        %268 = vst [vmem:[#allocation2 + $0xd0] sm:$0xff] 0.0
        %269 = vst [vmem:[#allocation2 + $0xd8] sm:$0xff] 0.0
        %270 = vst [vmem:[#allocation2 + $0xe0] sm:$0xff] 0.0
        %271 = vst [vmem:[#allocation2 + $0xe8] sm:$0xff] 0.0
        %272 = vst [vmem:[#allocation2 + $0xf0] sm:$0xff] 0.0
        %273 = vst [vmem:[#allocation2 + $0xf8] sm:$0xff] 0.0
        %274 = vst [vmem:[#allocation2 + $0x100] sm:$0xff] 0.0
        %275 = vst [vmem:[#allocation2 + $0x108] sm:$0xff] 0.0
        %276 = vst [vmem:[#allocation2 + $0x110] sm:$0xff] 0.0
        %277 = vst [vmem:[#allocation2 + $0x118] sm:$0xff] 0.0
        %278 = vst [vmem:[#allocation2 + $0x120] sm:$0xff] 0.0
        %279 = vst [vmem:[#allocation2 + $0x128] sm:$0xff] 0.0
        %280 = vst [vmem:[#allocation2 + $0x130] sm:$0xff] 0.0
        %281 = vst [vmem:[#allocation2 + $0x138] sm:$0xff] 0.0
        %282 = vst [vmem:[#allocation2 + $0x140] sm:$0xff] 0.0
        %283 = vst [vmem:[#allocation2 + $0x148] sm:$0xff] 0.0
        %284 = vst [vmem:[#allocation2 + $0x150] sm:$0xff] 0.0
        %285 = vst [vmem:[#allocation2 + $0x158] sm:$0xff] 0.0
        %286 = vst [vmem:[#allocation2 + $0x160] sm:$0xff] 0.0
        %287 = vst [vmem:[#allocation2 + $0x168] sm:$0xff] 0.0
        %288 = vst [vmem:[#allocation2 + $0x170] sm:$0xff] 0.0
        %289 = vst [vmem:[#allocation2 + $0x178] sm:$0xff] 0.0
        %290 = vst [vmem:[#allocation2 + $0x180] sm:$0xff] 0.0
        %291 = vst [vmem:[#allocation2 + $0x188] sm:$0xff] 0.0
        %292 = vst [vmem:[#allocation2 + $0x190] sm:$0xff] 0.0
        %293 = vst [vmem:[#allocation2 + $0x198] sm:$0xff] 0.0
        %294 = vst [vmem:[#allocation2 + $0x1a0] sm:$0xff] 0.0
        %295 = vst [vmem:[#allocation2 + $0x1a8] sm:$0xff] 0.0
        %296 = vst [vmem:[#allocation2 + $0x1b0] sm:$0xff] 0.0
        %297 = vst [vmem:[#allocation2 + $0x1b8] sm:$0xff] 0.0
        %298 = vst [vmem:[#allocation2 + $0x1c0] sm:$0xff] 0.0
        %299 = vst [vmem:[#allocation2 + $0x1c8] sm:$0xff] 0.0
        %300 = vst [vmem:[#allocation2 + $0x1d0] sm:$0xff] 0.0
        %301 = vst [vmem:[#allocation2 + $0x1d8] sm:$0xff] 0.0
        %302 = vst [vmem:[#allocation2 + $0x1e0] sm:$0xff] 0.0
        %303 = vst [vmem:[#allocation2 + $0x1e8] sm:$0xff] 0.0
        %304 = vst [vmem:[#allocation2 + $0x1f0] sm:$0xff] 0.0
        %305 = vst [vmem:[#allocation2 + $0x1f8] sm:$0xff] 0.0
        %306 = vst [vmem:[#allocation2 + $0x200] sm:$0xff] 0.0
        %307 = vst [vmem:[#allocation2 + $0x208] sm:$0xff] 0.0
        %308 = vst [vmem:[#allocation2 + $0x210] sm:$0xff] 0.0
        %309 = vst [vmem:[#allocation2 + $0x218] sm:$0xff] 0.0
        %310 = vst [vmem:[#allocation2 + $0x220] sm:$0xff] 0.0
        %311 = vst [vmem:[#allocation2 + $0x228] sm:$0xff] 0.0
        %312 = vst [vmem:[#allocation2 + $0x230] sm:$0xff] 0.0
        %313 = vst [vmem:[#allocation2 + $0x238] sm:$0xff] 0.0
        %314 = vst [vmem:[#allocation2 + $0x240] sm:$0xff] 0.0
        %315 = vst [vmem:[#allocation2 + $0x248] sm:$0xff] 0.0
        %316 = vst [vmem:[#allocation2 + $0x250] sm:$0xff] 0.0
        %317 = vst [vmem:[#allocation2 + $0x258] sm:$0xff] 0.0
        %318 = vst [vmem:[#allocation2 + $0x260] sm:$0xff] 0.0
        %319 = vst [vmem:[#allocation2 + $0x268] sm:$0xff] 0.0
        %320 = vst [vmem:[#allocation2 + $0x270] sm:$0xff] 0.0
        %321 = vst [vmem:[#allocation2 + $0x278] sm:$0xff] 0.0
        %322 = vst [vmem:[#allocation2 + $0x280] sm:$0xff] 0.0
        %323 = vst [vmem:[#allocation2 + $0x288] sm:$0xff] 0.0
        %324 = vst [vmem:[#allocation2 + $0x290] sm:$0xff] 0.0
        %325 = vst [vmem:[#allocation2 + $0x298] sm:$0xff] 0.0
        %326 = vst [vmem:[#allocation2 + $0x2a0] sm:$0xff] 0.0
        %327 = vst [vmem:[#allocation2 + $0x2a8] sm:$0xff] 0.0
        %328 = vst [vmem:[#allocation2 + $0x2b0] sm:$0xff] 0.0
        %329 = vst [vmem:[#allocation2 + $0x2b8] sm:$0xff] 0.0
        %330 = vst [vmem:[#allocation2 + $0x2c0] sm:$0xff] 0.0
        %331 = vst [vmem:[#allocation2 + $0x2c8] sm:$0xff] 0.0
        %332 = vst [vmem:[#allocation2 + $0x2d0] sm:$0xff] 0.0
        %333 = vst [vmem:[#allocation2 + $0x2d8] sm:$0xff] 0.0
        %334 = vst [vmem:[#allocation2 + $0x2e0] sm:$0xff] 0.0
        %335 = vst [vmem:[#allocation2 + $0x2e8] sm:$0xff] 0.0
        %336 = vst [vmem:[#allocation2 + $0x2f0] sm:$0xff] 0.0
        %337 = vst [vmem:[#allocation2 + $0x2f8] sm:$0xff] 0.0
        %338 = vst [vmem:[#allocation2 + $0x300] sm:$0xff] 0.0
        %339 = vst [vmem:[#allocation2 + $0x308] sm:$0xff] 0.0
        %340 = vst [vmem:[#allocation2 + $0x310] sm:$0xff] 0.0
        %341 = vst [vmem:[#allocation2 + $0x318] sm:$0xff] 0.0
        %342 = vst [vmem:[#allocation2 + $0x320] sm:$0xff] 0.0
        %343 = vst [vmem:[#allocation2 + $0x328] sm:$0xff] 0.0
        %344 = vst [vmem:[#allocation2 + $0x330] sm:$0xff] 0.0
        %345 = vst [vmem:[#allocation2 + $0x338] sm:$0xff] 0.0
        %346 = vst [vmem:[#allocation2 + $0x340] sm:$0xff] 0.0
        %347 = vst [vmem:[#allocation2 + $0x348] sm:$0xff] 0.0
        %348 = vst [vmem:[#allocation2 + $0x350] sm:$0xff] 0.0
        %349 = vst [vmem:[#allocation2 + $0x358] sm:$0xff] 0.0
        %350 = vst [vmem:[#allocation2 + $0x360] sm:$0xff] 0.0
        %351 = vst [vmem:[#allocation2 + $0x368] sm:$0xff] 0.0
        %352 = vst [vmem:[#allocation2 + $0x370] sm:$0xff] 0.0
        %353 = vst [vmem:[#allocation2 + $0x378] sm:$0xff] 0.0
        %354 = vst [vmem:[#allocation2 + $0x380] sm:$0xff] 0.0
        %355 = vst [vmem:[#allocation2 + $0x388] sm:$0xff] 0.0
        %356 = vst [vmem:[#allocation2 + $0x390] sm:$0xff] 0.0
        %357 = vst [vmem:[#allocation2 + $0x398] sm:$0xff] 0.0
        %358 = vst [vmem:[#allocation2 + $0x3a0] sm:$0xff] 0.0
        %359 = vst [vmem:[#allocation2 + $0x3a8] sm:$0xff] 0.0
        %360 = vst [vmem:[#allocation2 + $0x3b0] sm:$0xff] 0.0
        %361 = vst [vmem:[#allocation2 + $0x3b8] sm:$0xff] 0.0
        %362 = vst [vmem:[#allocation2 + $0x3c0] sm:$0xff] 0.0
        %363 = vst [vmem:[#allocation2 + $0x3c8] sm:$0xff] 0.0
        %364 = vst [vmem:[#allocation2 + $0x3d0] sm:$0xff] 0.0
        %365 = vst [vmem:[#allocation2 + $0x3d8] sm:$0xff] 0.0
        %366 = vst [vmem:[#allocation2 + $0x3e0] sm:$0xff] 0.0
        %367 = vst [vmem:[#allocation2 + $0x3e8] sm:$0xff] 0.0
        %368 = vst [vmem:[#allocation2 + $0x3f0] sm:$0xff] 0.0
        %369 = vst [vmem:[#allocation2 + $0x3f8] sm:$0xff] 0.0
      $region32: #{double_conv.6} parent=27 // pred_fallthru
        _
      %v370 = vld [vmem:[#allocation2] sm:$0xff]
      %v371 = vld [vmem:[#allocation2 + $0x8] sm:$0xff]
      %v372 = vld [vmem:[#allocation2 + $0x10] sm:$0xff]
      %v373 = vld [vmem:[#allocation2 + $0x18] sm:$0xff]
      %v374 = vld [vmem:[#allocation2 + $0x20] sm:$0xff]
      %v375 = vld [vmem:[#allocation2 + $0x28] sm:$0xff]
      %v376 = vld [vmem:[#allocation2 + $0x30] sm:$0xff]
      %v377 = vld [vmem:[#allocation2 + $0x38] sm:$0xff]
      %v378 = vld [vmem:[#allocation2 + $0x40] sm:$0xff]
      %v379 = vld [vmem:[#allocation2 + $0x48] sm:$0xff]
      %v380 = vld [vmem:[#allocation2 + $0x50] sm:$0xff]
      %v381 = vld [vmem:[#allocation2 + $0x58] sm:$0xff]
      %v382 = vld [vmem:[#allocation2 + $0x60] sm:$0xff]
      %v383 = vld [vmem:[#allocation2 + $0x68] sm:$0xff]
      %v384 = vld [vmem:[#allocation2 + $0x70] sm:$0xff]
      %v385 = vld [vmem:[#allocation2 + $0x78] sm:$0xff]
      %v386 = vld [vmem:[#allocation2 + $0x80] sm:$0xff]
      %v387 = vld [vmem:[#allocation2 + $0x88] sm:$0xff]
      %v388 = vld [vmem:[#allocation2 + $0x90] sm:$0xff]
      %v389 = vld [vmem:[#allocation2 + $0x98] sm:$0xff]
      %v390 = vld [vmem:[#allocation2 + $0xa0] sm:$0xff]
      %v391 = vld [vmem:[#allocation2 + $0xa8] sm:$0xff]
      %v392 = vld [vmem:[#allocation2 + $0xb0] sm:$0xff]
      %v393 = vld [vmem:[#allocation2 + $0xb8] sm:$0xff]
      %v394 = vld [vmem:[#allocation2 + $0xc0] sm:$0xff]
      %v395 = vld [vmem:[#allocation2 + $0xc8] sm:$0xff]
      %v396 = vld [vmem:[#allocation2 + $0xd0] sm:$0xff]
      %v397 = vld [vmem:[#allocation2 + $0xd8] sm:$0xff]
      %v398 = vld [vmem:[#allocation2 + $0xe0] sm:$0xff]
      %v399 = vld [vmem:[#allocation2 + $0xe8] sm:$0xff]
      %v400 = vld [vmem:[#allocation2 + $0xf0] sm:$0xff]
      %v401 = vld [vmem:[#allocation2 + $0xf8] sm:$0xff]
      %v402 = vld [vmem:[#allocation2 + $0x100] sm:$0xff]
      %v403 = vld [vmem:[#allocation2 + $0x108] sm:$0xff]
      %v404 = vld [vmem:[#allocation2 + $0x110] sm:$0xff]
      %v405 = vld [vmem:[#allocation2 + $0x118] sm:$0xff]
      %v406 = vld [vmem:[#allocation2 + $0x120] sm:$0xff]
      %v407 = vld [vmem:[#allocation2 + $0x128] sm:$0xff]
      %v408 = vld [vmem:[#allocation2 + $0x130] sm:$0xff]
      %v409 = vld [vmem:[#allocation2 + $0x138] sm:$0xff]
      %v410 = vld [vmem:[#allocation2 + $0x140] sm:$0xff]
      %v411 = vld [vmem:[#allocation2 + $0x148] sm:$0xff]
      %v412 = vld [vmem:[#allocation2 + $0x150] sm:$0xff]
      %v413 = vld [vmem:[#allocation2 + $0x158] sm:$0xff]
      %v414 = vld [vmem:[#allocation2 + $0x160] sm:$0xff]
      %v415 = vld [vmem:[#allocation2 + $0x168] sm:$0xff]
      %v416 = vld [vmem:[#allocation2 + $0x170] sm:$0xff]
      %v417 = vld [vmem:[#allocation2 + $0x178] sm:$0xff]
      %v418 = vld [vmem:[#allocation2 + $0x180] sm:$0xff]
      %v419 = vld [vmem:[#allocation2 + $0x188] sm:$0xff]
      %v420 = vld [vmem:[#allocation2 + $0x190] sm:$0xff]
      %v421 = vld [vmem:[#allocation2 + $0x198] sm:$0xff]
      %v422 = vld [vmem:[#allocation2 + $0x1a0] sm:$0xff]
      %v423 = vld [vmem:[#allocation2 + $0x1a8] sm:$0xff]
      %v424 = vld [vmem:[#allocation2 + $0x1b0] sm:$0xff]
      %v425 = vld [vmem:[#allocation2 + $0x1b8] sm:$0xff]
      %v426 = vld [vmem:[#allocation2 + $0x1c0] sm:$0xff]
      %v427 = vld [vmem:[#allocation2 + $0x1c8] sm:$0xff]
      %v428 = vld [vmem:[#allocation2 + $0x1d0] sm:$0xff]
      %v429 = vld [vmem:[#allocation2 + $0x1d8] sm:$0xff]
      %v430 = vld [vmem:[#allocation2 + $0x1e0] sm:$0xff]
      %v431 = vld [vmem:[#allocation2 + $0x1e8] sm:$0xff]
      %v432 = vld [vmem:[#allocation2 + $0x1f0] sm:$0xff]
      %v433 = vld [vmem:[#allocation2 + $0x1f8] sm:$0xff]
      %v434 = vld [vmem:[#allocation2 + $0x200] sm:$0xff]
      %v435 = vld [vmem:[#allocation2 + $0x208] sm:$0xff]
      %v436 = vld [vmem:[#allocation2 + $0x210] sm:$0xff]
      %v437 = vld [vmem:[#allocation2 + $0x218] sm:$0xff]
      %v438 = vld [vmem:[#allocation2 + $0x220] sm:$0xff]
      %v439 = vld [vmem:[#allocation2 + $0x228] sm:$0xff]
      %v440 = vld [vmem:[#allocation2 + $0x230] sm:$0xff]
      %v441 = vld [vmem:[#allocation2 + $0x238] sm:$0xff]
      %v442 = vld [vmem:[#allocation2 + $0x240] sm:$0xff]
      %v443 = vld [vmem:[#allocation2 + $0x248] sm:$0xff]
      %v444 = vld [vmem:[#allocation2 + $0x250] sm:$0xff]
      %v445 = vld [vmem:[#allocation2 + $0x258] sm:$0xff]
      %v446 = vld [vmem:[#allocation2 + $0x260] sm:$0xff]
      %v447 = vld [vmem:[#allocation2 + $0x268] sm:$0xff]
      %v448 = vld [vmem:[#allocation2 + $0x270] sm:$0xff]
      %v449 = vld [vmem:[#allocation2 + $0x278] sm:$0xff]
      %v450 = vld [vmem:[#allocation2 + $0x280] sm:$0xff]
      %v451 = vld [vmem:[#allocation2 + $0x288] sm:$0xff]
      %v452 = vld [vmem:[#allocation2 + $0x290] sm:$0xff]
      %v453 = vld [vmem:[#allocation2 + $0x298] sm:$0xff]
      %v454 = vld [vmem:[#allocation2 + $0x2a0] sm:$0xff]
      %v455 = vld [vmem:[#allocation2 + $0x2a8] sm:$0xff]
      %v456 = vld [vmem:[#allocation2 + $0x2b0] sm:$0xff]
      %v457 = vld [vmem:[#allocation2 + $0x2b8] sm:$0xff]
      %v458 = vld [vmem:[#allocation2 + $0x2c0] sm:$0xff]
      %v459 = vld [vmem:[#allocation2 + $0x2c8] sm:$0xff]
      %v460 = vld [vmem:[#allocation2 + $0x2d0] sm:$0xff]
      %v461 = vld [vmem:[#allocation2 + $0x2d8] sm:$0xff]
      %v462 = vld [vmem:[#allocation2 + $0x2e0] sm:$0xff]
      %v463 = vld [vmem:[#allocation2 + $0x2e8] sm:$0xff]
      %v464 = vld [vmem:[#allocation2 + $0x2f0] sm:$0xff]
      %v465 = vld [vmem:[#allocation2 + $0x2f8] sm:$0xff]
      %v466 = vld [vmem:[#allocation2 + $0x300] sm:$0xff]
      %v467 = vld [vmem:[#allocation2 + $0x308] sm:$0xff]
      %v468 = vld [vmem:[#allocation2 + $0x310] sm:$0xff]
      %v469 = vld [vmem:[#allocation2 + $0x318] sm:$0xff]
      %v470 = vld [vmem:[#allocation2 + $0x320] sm:$0xff]
      %v471 = vld [vmem:[#allocation2 + $0x328] sm:$0xff]
      %v472 = vld [vmem:[#allocation2 + $0x330] sm:$0xff]
      %v473 = vld [vmem:[#allocation2 + $0x338] sm:$0xff]
      %v474 = vld [vmem:[#allocation2 + $0x340] sm:$0xff]
      %v475 = vld [vmem:[#allocation2 + $0x348] sm:$0xff]
      %v476 = vld [vmem:[#allocation2 + $0x350] sm:$0xff]
      %v477 = vld [vmem:[#allocation2 + $0x358] sm:$0xff]
      %v478 = vld [vmem:[#allocation2 + $0x360] sm:$0xff]
      %v479 = vld [vmem:[#allocation2 + $0x368] sm:$0xff]
      %v480 = vld [vmem:[#allocation2 + $0x370] sm:$0xff]
      %v481 = vld [vmem:[#allocation2 + $0x378] sm:$0xff]
      %v482 = vld [vmem:[#allocation2 + $0x380] sm:$0xff]
      %v483 = vld [vmem:[#allocation2 + $0x388] sm:$0xff]
      %v484 = vld [vmem:[#allocation2 + $0x390] sm:$0xff]
      %v485 = vld [vmem:[#allocation2 + $0x398] sm:$0xff]
      %v486 = vld [vmem:[#allocation2 + $0x3a0] sm:$0xff]
      %v487 = vld [vmem:[#allocation2 + $0x3a8] sm:$0xff]
      %v488 = vld [vmem:[#allocation2 + $0x3b0] sm:$0xff]
      %v489 = vld [vmem:[#allocation2 + $0x3b8] sm:$0xff]
      %v490 = vld [vmem:[#allocation2 + $0x3c0] sm:$0xff]
      %v491 = vld [vmem:[#allocation2 + $0x3c8] sm:$0xff]
      %v492 = vld [vmem:[#allocation2 + $0x3d0] sm:$0xff]
      %v493 = vld [vmem:[#allocation2 + $0x3d8] sm:$0xff]
      %v494 = vld [vmem:[#allocation2 + $0x3e0] sm:$0xff]
      %v495 = vld [vmem:[#allocation2 + $0x3e8] sm:$0xff]
      %v496 = vld [vmem:[#allocation2 + $0x3f0] sm:$0xff]
      %v497 = vld [vmem:[#allocation2 + $0x3f8] sm:$0xff]
      %v498 = vld [vmem:[%s219] sm:$0xff]
      %v499 = vld [vmem:[%s219 + $0x8] sm:$0xff]
      %v500 = vld [vmem:[%s219 + $0x10] sm:$0xff]
      %v501 = vld [vmem:[%s219 + $0x18] sm:$0xff]
      %v502 = vld [vmem:[%s219 + $0x20] sm:$0xff]
      %v503 = vld [vmem:[%s219 + $0x28] sm:$0xff]
      %v504 = vld [vmem:[%s219 + $0x30] sm:$0xff]
      %v505 = vld [vmem:[%s219 + $0x38] sm:$0xff]
      %v506 = vld [vmem:[%s219 + $0x40] sm:$0xff]
      %v507 = vld [vmem:[%s219 + $0x48] sm:$0xff]
      %v508 = vld [vmem:[%s219 + $0x50] sm:$0xff]
      %v509 = vld [vmem:[%s219 + $0x58] sm:$0xff]
      %v510 = vld [vmem:[%s219 + $0x60] sm:$0xff]
      %v511 = vld [vmem:[%s219 + $0x68] sm:$0xff]
      %v512 = vld [vmem:[%s219 + $0x70] sm:$0xff]
      %v513 = vld [vmem:[%s219 + $0x78] sm:$0xff]
      %v514 = vld [vmem:[%s219 + $0x80] sm:$0xff]
      %v515 = vld [vmem:[%s219 + $0x88] sm:$0xff]
      %v516 = vld [vmem:[%s219 + $0x90] sm:$0xff]
      %v517 = vld [vmem:[%s219 + $0x98] sm:$0xff]
      %v518 = vld [vmem:[%s219 + $0xa0] sm:$0xff]
      %v519 = vld [vmem:[%s219 + $0xa8] sm:$0xff]
      %v520 = vld [vmem:[%s219 + $0xb0] sm:$0xff]
      %v521 = vld [vmem:[%s219 + $0xb8] sm:$0xff]
      %v522 = vld [vmem:[%s219 + $0xc0] sm:$0xff]
      %v523 = vld [vmem:[%s219 + $0xc8] sm:$0xff]
      %v524 = vld [vmem:[%s219 + $0xd0] sm:$0xff]
      %v525 = vld [vmem:[%s219 + $0xd8] sm:$0xff]
      %v526 = vld [vmem:[%s219 + $0xe0] sm:$0xff]
      %v527 = vld [vmem:[%s219 + $0xe8] sm:$0xff]
      %v528 = vld [vmem:[%s219 + $0xf0] sm:$0xff]
      %v529 = vld [vmem:[%s219 + $0xf8] sm:$0xff]
      %v530 = vld [vmem:[%s219 + $0x100] sm:$0xff]
      %v531 = vld [vmem:[%s219 + $0x108] sm:$0xff]
      %v532 = vld [vmem:[%s219 + $0x110] sm:$0xff]
      %v533 = vld [vmem:[%s219 + $0x118] sm:$0xff]
      %v534 = vld [vmem:[%s219 + $0x120] sm:$0xff]
      %v535 = vld [vmem:[%s219 + $0x128] sm:$0xff]
      %v536 = vld [vmem:[%s219 + $0x130] sm:$0xff]
      %v537 = vld [vmem:[%s219 + $0x138] sm:$0xff]
      %v538 = vld [vmem:[%s219 + $0x140] sm:$0xff]
      %v539 = vld [vmem:[%s219 + $0x148] sm:$0xff]
      %v540 = vld [vmem:[%s219 + $0x150] sm:$0xff]
      %v541 = vld [vmem:[%s219 + $0x158] sm:$0xff]
      %v542 = vld [vmem:[%s219 + $0x160] sm:$0xff]
      %v543 = vld [vmem:[%s219 + $0x168] sm:$0xff]
      %v544 = vld [vmem:[%s219 + $0x170] sm:$0xff]
      %v545 = vld [vmem:[%s219 + $0x178] sm:$0xff]
      %v546 = vld [vmem:[%s219 + $0x180] sm:$0xff]
      %v547 = vld [vmem:[%s219 + $0x188] sm:$0xff]
      %v548 = vld [vmem:[%s219 + $0x190] sm:$0xff]
      %v549 = vld [vmem:[%s219 + $0x198] sm:$0xff]
      %v550 = vld [vmem:[%s219 + $0x1a0] sm:$0xff]
      %v551 = vld [vmem:[%s219 + $0x1a8] sm:$0xff]
      %v552 = vld [vmem:[%s219 + $0x1b0] sm:$0xff]
      %v553 = vld [vmem:[%s219 + $0x1b8] sm:$0xff]
      %v554 = vld [vmem:[%s219 + $0x1c0] sm:$0xff]
      %v555 = vld [vmem:[%s219 + $0x1c8] sm:$0xff]
      %v556 = vld [vmem:[%s219 + $0x1d0] sm:$0xff]
      %v557 = vld [vmem:[%s219 + $0x1d8] sm:$0xff]
      %v558 = vld [vmem:[%s219 + $0x1e0] sm:$0xff]
      %v559 = vld [vmem:[%s219 + $0x1e8] sm:$0xff]
      %v560 = vld [vmem:[%s219 + $0x1f0] sm:$0xff]
      %v561 = vld [vmem:[%s219 + $0x1f8] sm:$0xff]
      %v562 = vld [vmem:[%s219 + $0x200] sm:$0xff]
      %v563 = vld [vmem:[%s219 + $0x208] sm:$0xff]
      %v564 = vld [vmem:[%s219 + $0x210] sm:$0xff]
      %v565 = vld [vmem:[%s219 + $0x218] sm:$0xff]
      %v566 = vld [vmem:[%s219 + $0x220] sm:$0xff]
      %v567 = vld [vmem:[%s219 + $0x228] sm:$0xff]
      %v568 = vld [vmem:[%s219 + $0x230] sm:$0xff]
      %v569 = vld [vmem:[%s219 + $0x238] sm:$0xff]
      %v570 = vld [vmem:[%s219 + $0x240] sm:$0xff]
      %v571 = vld [vmem:[%s219 + $0x248] sm:$0xff]
      %v572 = vld [vmem:[%s219 + $0x250] sm:$0xff]
      %v573 = vld [vmem:[%s219 + $0x258] sm:$0xff]
      %v574 = vld [vmem:[%s219 + $0x260] sm:$0xff]
      %v575 = vld [vmem:[%s219 + $0x268] sm:$0xff]
      %v576 = vld [vmem:[%s219 + $0x270] sm:$0xff]
      %v577 = vld [vmem:[%s219 + $0x278] sm:$0xff]
      %v578 = vld [vmem:[%s219 + $0x280] sm:$0xff]
      %v579 = vld [vmem:[%s219 + $0x288] sm:$0xff]
      %v580 = vld [vmem:[%s219 + $0x290] sm:$0xff]
      %v581 = vld [vmem:[%s219 + $0x298] sm:$0xff]
      %v582 = vld [vmem:[%s219 + $0x2a0] sm:$0xff]
      %v583 = vld [vmem:[%s219 + $0x2a8] sm:$0xff]
      %v584 = vld [vmem:[%s219 + $0x2b0] sm:$0xff]
      %v585 = vld [vmem:[%s219 + $0x2b8] sm:$0xff]
      %v586 = vld [vmem:[%s219 + $0x2c0] sm:$0xff]
      %v587 = vld [vmem:[%s219 + $0x2c8] sm:$0xff]
      %v588 = vld [vmem:[%s219 + $0x2d0] sm:$0xff]
      %v589 = vld [vmem:[%s219 + $0x2d8] sm:$0xff]
      %v590 = vld [vmem:[%s219 + $0x2e0] sm:$0xff]
      %v591 = vld [vmem:[%s219 + $0x2e8] sm:$0xff]
      %v592 = vld [vmem:[%s219 + $0x2f0] sm:$0xff]
      %v593 = vld [vmem:[%s219 + $0x2f8] sm:$0xff]
      %v594 = vld [vmem:[%s219 + $0x300] sm:$0xff]
      %v595 = vld [vmem:[%s219 + $0x308] sm:$0xff]
      %v596 = vld [vmem:[%s219 + $0x310] sm:$0xff]
      %v597 = vld [vmem:[%s219 + $0x318] sm:$0xff]
      %v598 = vld [vmem:[%s219 + $0x320] sm:$0xff]
      %v599 = vld [vmem:[%s219 + $0x328] sm:$0xff]
      %v600 = vld [vmem:[%s219 + $0x330] sm:$0xff]
      %v601 = vld [vmem:[%s219 + $0x338] sm:$0xff]
      %v602 = vld [vmem:[%s219 + $0x340] sm:$0xff]
      %v603 = vld [vmem:[%s219 + $0x348] sm:$0xff]
      %v604 = vld [vmem:[%s219 + $0x350] sm:$0xff]
      %v605 = vld [vmem:[%s219 + $0x358] sm:$0xff]
      %v606 = vld [vmem:[%s219 + $0x360] sm:$0xff]
      %v607 = vld [vmem:[%s219 + $0x368] sm:$0xff]
      %v608 = vld [vmem:[%s219 + $0x370] sm:$0xff]
      %v609 = vld [vmem:[%s219 + $0x378] sm:$0xff]
      %v610 = vld [vmem:[%s219 + $0x380] sm:$0xff]
      %v611 = vld [vmem:[%s219 + $0x388] sm:$0xff]
      %v612 = vld [vmem:[%s219 + $0x390] sm:$0xff]
      %v613 = vld [vmem:[%s219 + $0x398] sm:$0xff]
      %v614 = vld [vmem:[%s219 + $0x3a0] sm:$0xff]
      %v615 = vld [vmem:[%s219 + $0x3a8] sm:$0xff]
      %v616 = vld [vmem:[%s219 + $0x3b0] sm:$0xff]
      %v617 = vld [vmem:[%s219 + $0x3b8] sm:$0xff]
      %v618 = vld [vmem:[%s219 + $0x3c0] sm:$0xff]
      %v619 = vld [vmem:[%s219 + $0x3c8] sm:$0xff]
      %v620 = vld [vmem:[%s219 + $0x3d0] sm:$0xff]
      %v621 = vld [vmem:[%s219 + $0x3d8] sm:$0xff]
      %v622 = vld [vmem:[%s219 + $0x3e0] sm:$0xff]
      %v623 = vld [vmem:[%s219 + $0x3e8] sm:$0xff]
      %v624 = vld [vmem:[%s219 + $0x3f0] sm:$0xff]
      %v625 = vld [vmem:[%s219 + $0x3f8] sm:$0xff]
      %v626 = vld [vmem:[%s219 + $0x400] sm:$0xff]
      %v627 = vld [vmem:[%s219 + $0x408] sm:$0xff]
      %v628 = vld [vmem:[%s219 + $0x410] sm:$0xff]
      %v629 = vld [vmem:[%s219 + $0x418] sm:$0xff]
      %v630 = vld [vmem:[%s219 + $0x420] sm:$0xff]
      %v631 = vld [vmem:[%s219 + $0x428] sm:$0xff]
      %v632 = vld [vmem:[%s219 + $0x430] sm:$0xff]
      %v633 = vld [vmem:[%s219 + $0x438] sm:$0xff]
      %v634 = vld [vmem:[%s219 + $0x440] sm:$0xff]
      %v635 = vld [vmem:[%s219 + $0x448] sm:$0xff]
      %v636 = vld [vmem:[%s219 + $0x450] sm:$0xff]
      %v637 = vld [vmem:[%s219 + $0x458] sm:$0xff]
      %v638 = vld [vmem:[%s219 + $0x460] sm:$0xff]
      %v639 = vld [vmem:[%s219 + $0x468] sm:$0xff]
      %v640 = vld [vmem:[%s219 + $0x470] sm:$0xff]
      %v641 = vld [vmem:[%s219 + $0x478] sm:$0xff]
      %v642 = vld [vmem:[%s219 + $0x480] sm:$0xff]
      %v643 = vld [vmem:[%s219 + $0x488] sm:$0xff]
      %v644 = vld [vmem:[%s219 + $0x490] sm:$0xff]
      %v645 = vld [vmem:[%s219 + $0x498] sm:$0xff]
      %v646 = vld [vmem:[%s219 + $0x4a0] sm:$0xff]
      %v647 = vld [vmem:[%s219 + $0x4a8] sm:$0xff]
      %v648 = vld [vmem:[%s219 + $0x4b0] sm:$0xff]
      %v649 = vld [vmem:[%s219 + $0x4b8] sm:$0xff]
      %v650 = vld [vmem:[%s219 + $0x4c0] sm:$0xff]
      %v651 = vld [vmem:[%s219 + $0x4c8] sm:$0xff]
      %v652 = vld [vmem:[%s219 + $0x4d0] sm:$0xff]
      %v653 = vld [vmem:[%s219 + $0x4d8] sm:$0xff]
      %v654 = vld [vmem:[%s219 + $0x4e0] sm:$0xff]
      %v655 = vld [vmem:[%s219 + $0x4e8] sm:$0xff]
      %v656 = vld [vmem:[%s219 + $0x4f0] sm:$0xff]
      %v657 = vld [vmem:[%s219 + $0x4f8] sm:$0xff]
      %v658 = vld [vmem:[%s219 + $0x500] sm:$0xff]
      %v659 = vld [vmem:[%s219 + $0x508] sm:$0xff]
      %v660 = vld [vmem:[%s219 + $0x510] sm:$0xff]
      %v661 = vld [vmem:[%s219 + $0x518] sm:$0xff]
      %v662 = vld [vmem:[%s219 + $0x520] sm:$0xff]
      %v663 = vld [vmem:[%s219 + $0x528] sm:$0xff]
      %v664 = vld [vmem:[%s219 + $0x530] sm:$0xff]
      %v665 = vld [vmem:[%s219 + $0x538] sm:$0xff]
      %v666 = vld [vmem:[%s219 + $0x540] sm:$0xff]
      %v667 = vld [vmem:[%s219 + $0x548] sm:$0xff]
      %v668 = vld [vmem:[%s219 + $0x550] sm:$0xff]
      %v669 = vld [vmem:[%s219 + $0x558] sm:$0xff]
      %v670 = vld [vmem:[%s219 + $0x560] sm:$0xff]
      %v671 = vld [vmem:[%s219 + $0x568] sm:$0xff]
      %v672 = vld [vmem:[%s219 + $0x570] sm:$0xff]
      %v673 = vld [vmem:[%s219 + $0x578] sm:$0xff]
      %v674 = vld [vmem:[%s219 + $0x580] sm:$0xff]
      %v675 = vld [vmem:[%s219 + $0x588] sm:$0xff]
      %v676 = vld [vmem:[%s219 + $0x590] sm:$0xff]
      %v677 = vld [vmem:[%s219 + $0x598] sm:$0xff]
      %v678 = vld [vmem:[%s219 + $0x5a0] sm:$0xff]
      %v679 = vld [vmem:[%s219 + $0x5a8] sm:$0xff]
      %v680 = vld [vmem:[%s219 + $0x5b0] sm:$0xff]
      %v681 = vld [vmem:[%s219 + $0x5b8] sm:$0xff]
      %v682 = vld [vmem:[%s219 + $0x5c0] sm:$0xff]
      %v683 = vld [vmem:[%s219 + $0x5c8] sm:$0xff]
      %v684 = vld [vmem:[%s219 + $0x5d0] sm:$0xff]
      %v685 = vld [vmem:[%s219 + $0x5d8] sm:$0xff]
      %v686 = vld [vmem:[%s219 + $0x5e0] sm:$0xff]
      %v687 = vld [vmem:[%s219 + $0x5e8] sm:$0xff]
      %v688 = vld [vmem:[%s219 + $0x5f0] sm:$0xff]
      %v689 = vld [vmem:[%s219 + $0x5f8] sm:$0xff]
      %v690 = vld [vmem:[%s219 + $0x600] sm:$0xff]
      %v691 = vld [vmem:[%s219 + $0x608] sm:$0xff]
      %v692 = vld [vmem:[%s219 + $0x610] sm:$0xff]
      %v693 = vld [vmem:[%s219 + $0x618] sm:$0xff]
      %v694 = vld [vmem:[%s219 + $0x620] sm:$0xff]
      %v695 = vld [vmem:[%s219 + $0x628] sm:$0xff]
      %v696 = vld [vmem:[%s219 + $0x630] sm:$0xff]
      %v697 = vld [vmem:[%s219 + $0x638] sm:$0xff]
      %v698 = vld [vmem:[%s219 + $0x640] sm:$0xff]
      %v699 = vld [vmem:[%s219 + $0x648] sm:$0xff]
      %v700 = vld [vmem:[%s219 + $0x650] sm:$0xff]
      %v701 = vld [vmem:[%s219 + $0x658] sm:$0xff]
      %v702 = vld [vmem:[%s219 + $0x660] sm:$0xff]
      %v703 = vld [vmem:[%s219 + $0x668] sm:$0xff]
      %v704 = vld [vmem:[%s219 + $0x670] sm:$0xff]
      %v705 = vld [vmem:[%s219 + $0x678] sm:$0xff]
      %v706 = vld [vmem:[%s219 + $0x680] sm:$0xff]
      %v707 = vld [vmem:[%s219 + $0x688] sm:$0xff]
      %v708 = vld [vmem:[%s219 + $0x690] sm:$0xff]
      %v709 = vld [vmem:[%s219 + $0x698] sm:$0xff]
      %v710 = vld [vmem:[%s219 + $0x6a0] sm:$0xff]
      %v711 = vld [vmem:[%s219 + $0x6a8] sm:$0xff]
      %v712 = vld [vmem:[%s219 + $0x6b0] sm:$0xff]
      %v713 = vld [vmem:[%s219 + $0x6b8] sm:$0xff]
      %v714 = vld [vmem:[%s219 + $0x6c0] sm:$0xff]
      %v715 = vld [vmem:[%s219 + $0x6c8] sm:$0xff]
      %v716 = vld [vmem:[%s219 + $0x6d0] sm:$0xff]
      %v717 = vld [vmem:[%s219 + $0x6d8] sm:$0xff]
      %v718 = vld [vmem:[%s219 + $0x6e0] sm:$0xff]
      %v719 = vld [vmem:[%s219 + $0x6e8] sm:$0xff]
      %v720 = vld [vmem:[%s219 + $0x6f0] sm:$0xff]
      %v721 = vld [vmem:[%s219 + $0x6f8] sm:$0xff]
      %v722 = vld [vmem:[%s219 + $0x700] sm:$0xff]
      %v723 = vld [vmem:[%s219 + $0x708] sm:$0xff]
      %v724 = vld [vmem:[%s219 + $0x710] sm:$0xff]
      %v725 = vld [vmem:[%s219 + $0x718] sm:$0xff]
      %v726 = vld [vmem:[%s219 + $0x720] sm:$0xff]
      %v727 = vld [vmem:[%s219 + $0x728] sm:$0xff]
      %v728 = vld [vmem:[%s219 + $0x730] sm:$0xff]
      %v729 = vld [vmem:[%s219 + $0x738] sm:$0xff]
      %v730 = vld [vmem:[%s219 + $0x740] sm:$0xff]
      %v731 = vld [vmem:[%s219 + $0x748] sm:$0xff]
      %v732 = vld [vmem:[%s219 + $0x750] sm:$0xff]
      %v733 = vld [vmem:[%s219 + $0x758] sm:$0xff]
      %v734 = vld [vmem:[%s219 + $0x760] sm:$0xff]
      %v735 = vld [vmem:[%s219 + $0x768] sm:$0xff]
      %v736 = vld [vmem:[%s219 + $0x770] sm:$0xff]
      %v737 = vld [vmem:[%s219 + $0x778] sm:$0xff]
      %v738 = vld [vmem:[%s219 + $0x780] sm:$0xff]
      %v739 = vld [vmem:[%s219 + $0x788] sm:$0xff]
      %v740 = vld [vmem:[%s219 + $0x790] sm:$0xff]
      %v741 = vld [vmem:[%s219 + $0x798] sm:$0xff]
      %v742 = vld [vmem:[%s219 + $0x7a0] sm:$0xff]
      %v743 = vld [vmem:[%s219 + $0x7a8] sm:$0xff]
      %v744 = vld [vmem:[%s219 + $0x7b0] sm:$0xff]
      %v745 = vld [vmem:[%s219 + $0x7b8] sm:$0xff]
      %v746 = vld [vmem:[%s219 + $0x7c0] sm:$0xff]
      %v747 = vld [vmem:[%s219 + $0x7c8] sm:$0xff]
      %v748 = vld [vmem:[%s219 + $0x7d0] sm:$0xff]
      %v749 = vld [vmem:[%s219 + $0x7d8] sm:$0xff]
      %v750 = vld [vmem:[%s219 + $0x7e0] sm:$0xff]
      %v751 = vld [vmem:[%s219 + $0x7e8] sm:$0xff]
      %v752 = vld [vmem:[%s219 + $0x7f0] sm:$0xff]
      %v753 = vld [vmem:[%s219 + $0x7f8] sm:$0xff]
      %v754 = vld [vmem:[%s226] sm:$0xff]
      %v755 = vld [vmem:[%s226 + $0x8] sm:$0xff]
      %v756 = vld [vmem:[%s226 + $0x10] sm:$0xff]
      %v757 = vld [vmem:[%s226 + $0x18] sm:$0xff]
      %v758 = vld [vmem:[%s226 + $0x20] sm:$0xff]
      %v759 = vld [vmem:[%s226 + $0x28] sm:$0xff]
      %v760 = vld [vmem:[%s226 + $0x30] sm:$0xff]
      %v761 = vld [vmem:[%s226 + $0x38] sm:$0xff]
      %v762 = vld [vmem:[%s226 + $0x40] sm:$0xff]
      %v763 = vld [vmem:[%s226 + $0x48] sm:$0xff]
      %v764 = vld [vmem:[%s226 + $0x50] sm:$0xff]
      %v765 = vld [vmem:[%s226 + $0x58] sm:$0xff]
      %v766 = vld [vmem:[%s226 + $0x60] sm:$0xff]
      %v767 = vld [vmem:[%s226 + $0x68] sm:$0xff]
      %v768 = vld [vmem:[%s226 + $0x70] sm:$0xff]
      %v769 = vld [vmem:[%s226 + $0x78] sm:$0xff]
      %v770 = vld [vmem:[%s226 + $0x80] sm:$0xff]
      %v771 = vld [vmem:[%s226 + $0x88] sm:$0xff]
      %v772 = vld [vmem:[%s226 + $0x90] sm:$0xff]
      %v773 = vld [vmem:[%s226 + $0x98] sm:$0xff]
      %v774 = vld [vmem:[%s226 + $0xa0] sm:$0xff]
      %v775 = vld [vmem:[%s226 + $0xa8] sm:$0xff]
      %v776 = vld [vmem:[%s226 + $0xb0] sm:$0xff]
      %v777 = vld [vmem:[%s226 + $0xb8] sm:$0xff]
      %v778 = vld [vmem:[%s226 + $0xc0] sm:$0xff]
      %v779 = vld [vmem:[%s226 + $0xc8] sm:$0xff]
      %v780 = vld [vmem:[%s226 + $0xd0] sm:$0xff]
      %v781 = vld [vmem:[%s226 + $0xd8] sm:$0xff]
      %v782 = vld [vmem:[%s226 + $0xe0] sm:$0xff]
      %v783 = vld [vmem:[%s226 + $0xe8] sm:$0xff]
      %v784 = vld [vmem:[%s226 + $0xf0] sm:$0xff]
      %v785 = vld [vmem:[%s226 + $0xf8] sm:$0xff]
      %786 = vmatpush.msra.mxu0 %v769
      %787 = vmatpush.msra.mxu0 %v768
      %788 = vmatpush.msra.mxu0 %v767
      %789 = vmatpush.msra.mxu0 %v766
      %790 = vmatpush.msra.mxu0 %v765
      %791 = vmatpush.msra.mxu0 %v764
      %792 = vmatpush.msra.mxu0 %v763
      %793 = vmatpush.msra.mxu0 %v762
      %794 = vmatpush.msra.mxu0 %v761
      %795 = vmatpush.msra.mxu0 %v760
      %796 = vmatpush.msra.mxu0 %v759
      %797 = vmatpush.msra.mxu0 %v758
      %798 = vmatpush.msra.mxu0 %v757
      %799 = vmatpush.msra.mxu0 %v756
      %800 = vmatpush.msra.mxu0 %v755
      %801 = vmatpush.msra.mxu0 %v754
      %802 = vmatmul.f32.gmra.mxu0 %v498
      %v803 = vpop.f32.mrf.mxu0
      %v804 = vadd.f32 0.0, %v803
      %805 = vmatmul.f32.gmra.mxu0 %v500
      %v806 = vpop.f32.mrf.mxu0
      %v807 = vadd.f32 0.0, %v806
      %808 = vmatmul.f32.gmra.mxu0 %v502
      %v809 = vpop.f32.mrf.mxu0
      %v810 = vadd.f32 0.0, %v809
      %811 = vmatmul.f32.gmra.mxu0 %v504
      %v812 = vpop.f32.mrf.mxu0
      %v813 = vadd.f32 0.0, %v812
      %814 = vmatmul.f32.gmra.mxu0 %v506
      %v815 = vpop.f32.mrf.mxu0
      %v816 = vadd.f32 0.0, %v815
      %817 = vmatmul.f32.gmra.mxu0 %v508
      %v818 = vpop.f32.mrf.mxu0
      %v819 = vadd.f32 0.0, %v818
      %820 = vmatmul.f32.gmra.mxu0 %v510
      %v821 = vpop.f32.mrf.mxu0
      %v822 = vadd.f32 0.0, %v821
      %823 = vmatmul.f32.gmra.mxu0 %v512
      %v824 = vpop.f32.mrf.mxu0
      %v825 = vadd.f32 0.0, %v824
      %826 = vmatmul.f32.gmra.mxu0 %v514
      %v827 = vpop.f32.mrf.mxu0
      %v828 = vadd.f32 0.0, %v827
      %829 = vmatmul.f32.gmra.mxu0 %v516
      %v830 = vpop.f32.mrf.mxu0
      %v831 = vadd.f32 0.0, %v830
      %832 = vmatmul.f32.gmra.mxu0 %v518
      %v833 = vpop.f32.mrf.mxu0
      %v834 = vadd.f32 0.0, %v833
      %835 = vmatmul.f32.gmra.mxu0 %v520
      %v836 = vpop.f32.mrf.mxu0
      %v837 = vadd.f32 0.0, %v836
      %838 = vmatmul.f32.gmra.mxu0 %v522
      %v839 = vpop.f32.mrf.mxu0
      %v840 = vadd.f32 0.0, %v839
      %841 = vmatmul.f32.gmra.mxu0 %v524
      %v842 = vpop.f32.mrf.mxu0
      %v843 = vadd.f32 0.0, %v842
      %844 = vmatmul.f32.gmra.mxu0 %v526
      %v845 = vpop.f32.mrf.mxu0
      %v846 = vadd.f32 0.0, %v845
      %847 = vmatmul.f32.gmra.mxu0 %v528
      %v848 = vpop.f32.mrf.mxu0
      %v849 = vadd.f32 0.0, %v848
      %850 = vmatmul.f32.gmra.mxu0 %v530
      %v851 = vpop.f32.mrf.mxu0
      %v852 = vadd.f32 0.0, %v851
      %853 = vmatmul.f32.gmra.mxu0 %v532
      %v854 = vpop.f32.mrf.mxu0
      %v855 = vadd.f32 0.0, %v854
      %856 = vmatmul.f32.gmra.mxu0 %v534
      %v857 = vpop.f32.mrf.mxu0
      %v858 = vadd.f32 0.0, %v857
      %859 = vmatmul.f32.gmra.mxu0 %v536
      %v860 = vpop.f32.mrf.mxu0
      %v861 = vadd.f32 0.0, %v860
      %862 = vmatmul.f32.gmra.mxu0 %v538
      %v863 = vpop.f32.mrf.mxu0
      %v864 = vadd.f32 0.0, %v863
      %865 = vmatmul.f32.gmra.mxu0 %v540
      %v866 = vpop.f32.mrf.mxu0
      %v867 = vadd.f32 0.0, %v866
      %868 = vmatmul.f32.gmra.mxu0 %v542
      %v869 = vpop.f32.mrf.mxu0
      %v870 = vadd.f32 0.0, %v869
      %871 = vmatmul.f32.gmra.mxu0 %v544
      %v872 = vpop.f32.mrf.mxu0
      %v873 = vadd.f32 0.0, %v872
      %874 = vmatmul.f32.gmra.mxu0 %v546
      %v875 = vpop.f32.mrf.mxu0
      %v876 = vadd.f32 0.0, %v875
      %877 = vmatmul.f32.gmra.mxu0 %v548
      %v878 = vpop.f32.mrf.mxu0
      %v879 = vadd.f32 0.0, %v878
      %880 = vmatmul.f32.gmra.mxu0 %v550
      %v881 = vpop.f32.mrf.mxu0
      %v882 = vadd.f32 0.0, %v881
      %883 = vmatmul.f32.gmra.mxu0 %v552
      %v884 = vpop.f32.mrf.mxu0
      %v885 = vadd.f32 0.0, %v884
      %886 = vmatmul.f32.gmra.mxu0 %v554
      %v887 = vpop.f32.mrf.mxu0
      %v888 = vadd.f32 0.0, %v887
      %889 = vmatmul.f32.gmra.mxu0 %v556
      %v890 = vpop.f32.mrf.mxu0
      %v891 = vadd.f32 0.0, %v890
      %892 = vmatmul.f32.gmra.mxu0 %v558
      %v893 = vpop.f32.mrf.mxu0
      %v894 = vadd.f32 0.0, %v893
      %895 = vmatmul.f32.gmra.mxu0 %v560
      %v896 = vpop.f32.mrf.mxu0
      %v897 = vadd.f32 0.0, %v896
      %898 = vmatmul.f32.gmra.mxu0 %v562
      %v899 = vpop.f32.mrf.mxu0
      %v900 = vadd.f32 0.0, %v899
      %901 = vmatmul.f32.gmra.mxu0 %v564
      %v902 = vpop.f32.mrf.mxu0
      %v903 = vadd.f32 0.0, %v902
      %904 = vmatmul.f32.gmra.mxu0 %v566
      %v905 = vpop.f32.mrf.mxu0
      %v906 = vadd.f32 0.0, %v905
      %907 = vmatmul.f32.gmra.mxu0 %v568
      %v908 = vpop.f32.mrf.mxu0
      %v909 = vadd.f32 0.0, %v908
      %910 = vmatmul.f32.gmra.mxu0 %v570
      %v911 = vpop.f32.mrf.mxu0
      %v912 = vadd.f32 0.0, %v911
      %913 = vmatmul.f32.gmra.mxu0 %v572
      %v914 = vpop.f32.mrf.mxu0
      %v915 = vadd.f32 0.0, %v914
      %916 = vmatmul.f32.gmra.mxu0 %v574
      %v917 = vpop.f32.mrf.mxu0
      %v918 = vadd.f32 0.0, %v917
      %919 = vmatmul.f32.gmra.mxu0 %v576
      %v920 = vpop.f32.mrf.mxu0
      %v921 = vadd.f32 0.0, %v920
      %922 = vmatmul.f32.gmra.mxu0 %v578
      %v923 = vpop.f32.mrf.mxu0
      %v924 = vadd.f32 0.0, %v923
      %925 = vmatmul.f32.gmra.mxu0 %v580
      %v926 = vpop.f32.mrf.mxu0
      %v927 = vadd.f32 0.0, %v926
      %928 = vmatmul.f32.gmra.mxu0 %v582
      %v929 = vpop.f32.mrf.mxu0
      %v930 = vadd.f32 0.0, %v929
      %931 = vmatmul.f32.gmra.mxu0 %v584
      %v932 = vpop.f32.mrf.mxu0
      %v933 = vadd.f32 0.0, %v932
      %934 = vmatmul.f32.gmra.mxu0 %v586
      %v935 = vpop.f32.mrf.mxu0
      %v936 = vadd.f32 0.0, %v935
      %937 = vmatmul.f32.gmra.mxu0 %v588
      %v938 = vpop.f32.mrf.mxu0
      %v939 = vadd.f32 0.0, %v938
      %940 = vmatmul.f32.gmra.mxu0 %v590
      %v941 = vpop.f32.mrf.mxu0
      %v942 = vadd.f32 0.0, %v941
      %943 = vmatmul.f32.gmra.mxu0 %v592
      %v944 = vpop.f32.mrf.mxu0
      %v945 = vadd.f32 0.0, %v944
      %946 = vmatmul.f32.gmra.mxu0 %v594
      %v947 = vpop.f32.mrf.mxu0
      %v948 = vadd.f32 0.0, %v947
      %949 = vmatmul.f32.gmra.mxu0 %v596
      %v950 = vpop.f32.mrf.mxu0
      %v951 = vadd.f32 0.0, %v950
      %952 = vmatmul.f32.gmra.mxu0 %v598
      %v953 = vpop.f32.mrf.mxu0
      %v954 = vadd.f32 0.0, %v953
      %955 = vmatmul.f32.gmra.mxu0 %v600
      %v956 = vpop.f32.mrf.mxu0
      %v957 = vadd.f32 0.0, %v956
      %958 = vmatmul.f32.gmra.mxu0 %v602
      %v959 = vpop.f32.mrf.mxu0
      %v960 = vadd.f32 0.0, %v959
      %961 = vmatmul.f32.gmra.mxu0 %v604
      %v962 = vpop.f32.mrf.mxu0
      %v963 = vadd.f32 0.0, %v962
      %964 = vmatmul.f32.gmra.mxu0 %v606
      %v965 = vpop.f32.mrf.mxu0
      %v966 = vadd.f32 0.0, %v965
      %967 = vmatmul.f32.gmra.mxu0 %v608
      %v968 = vpop.f32.mrf.mxu0
      %v969 = vadd.f32 0.0, %v968
      %970 = vmatmul.f32.gmra.mxu0 %v610
      %v971 = vpop.f32.mrf.mxu0
      %v972 = vadd.f32 0.0, %v971
      %973 = vmatmul.f32.gmra.mxu0 %v612
      %v974 = vpop.f32.mrf.mxu0
      %v975 = vadd.f32 0.0, %v974
      %976 = vmatmul.f32.gmra.mxu0 %v614
      %v977 = vpop.f32.mrf.mxu0
      %v978 = vadd.f32 0.0, %v977
      %979 = vmatmul.f32.gmra.mxu0 %v616
      %v980 = vpop.f32.mrf.mxu0
      %v981 = vadd.f32 0.0, %v980
      %982 = vmatmul.f32.gmra.mxu0 %v618
      %v983 = vpop.f32.mrf.mxu0
      %v984 = vadd.f32 0.0, %v983
      %985 = vmatmul.f32.gmra.mxu0 %v620
      %v986 = vpop.f32.mrf.mxu0
      %v987 = vadd.f32 0.0, %v986
      %988 = vmatmul.f32.gmra.mxu0 %v622
      %v989 = vpop.f32.mrf.mxu0
      %v990 = vadd.f32 0.0, %v989
      %991 = vmatmul.f32.gmra.mxu0 %v624
      %v992 = vpop.f32.mrf.mxu0
      %v993 = vadd.f32 0.0, %v992
      %994 = vmatmul.f32.gmra.mxu0 %v626
      %v995 = vpop.f32.mrf.mxu0
      %v996 = vadd.f32 0.0, %v995
      %997 = vmatmul.f32.gmra.mxu0 %v628
      %v998 = vpop.f32.mrf.mxu0
      %v999 = vadd.f32 0.0, %v998
      %1000 = vmatmul.f32.gmra.mxu0 %v630
      %v1001 = vpop.f32.mrf.mxu0
      %v1002 = vadd.f32 0.0, %v1001
      %1003 = vmatmul.f32.gmra.mxu0 %v632
      %v1004 = vpop.f32.mrf.mxu0
      %v1005 = vadd.f32 0.0, %v1004
      %1006 = vmatmul.f32.gmra.mxu0 %v634
      %v1007 = vpop.f32.mrf.mxu0
      %v1008 = vadd.f32 0.0, %v1007
      %1009 = vmatmul.f32.gmra.mxu0 %v636
      %v1010 = vpop.f32.mrf.mxu0
      %v1011 = vadd.f32 0.0, %v1010
      %1012 = vmatmul.f32.gmra.mxu0 %v638
      %v1013 = vpop.f32.mrf.mxu0
      %v1014 = vadd.f32 0.0, %v1013
      %1015 = vmatmul.f32.gmra.mxu0 %v640
      %v1016 = vpop.f32.mrf.mxu0
      %v1017 = vadd.f32 0.0, %v1016
      %1018 = vmatmul.f32.gmra.mxu0 %v642
      %v1019 = vpop.f32.mrf.mxu0
      %v1020 = vadd.f32 0.0, %v1019
      %1021 = vmatmul.f32.gmra.mxu0 %v644
      %v1022 = vpop.f32.mrf.mxu0
      %v1023 = vadd.f32 0.0, %v1022
      %1024 = vmatmul.f32.gmra.mxu0 %v646
      %v1025 = vpop.f32.mrf.mxu0
      %v1026 = vadd.f32 0.0, %v1025
      %1027 = vmatmul.f32.gmra.mxu0 %v648
      %v1028 = vpop.f32.mrf.mxu0
      %v1029 = vadd.f32 0.0, %v1028
      %1030 = vmatmul.f32.gmra.mxu0 %v650
      %v1031 = vpop.f32.mrf.mxu0
      %v1032 = vadd.f32 0.0, %v1031
      %1033 = vmatmul.f32.gmra.mxu0 %v652
      %v1034 = vpop.f32.mrf.mxu0
      %v1035 = vadd.f32 0.0, %v1034
      %1036 = vmatmul.f32.gmra.mxu0 %v654
      %v1037 = vpop.f32.mrf.mxu0
      %v1038 = vadd.f32 0.0, %v1037
      %1039 = vmatmul.f32.gmra.mxu0 %v656
      %v1040 = vpop.f32.mrf.mxu0
      %v1041 = vadd.f32 0.0, %v1040
      %1042 = vmatmul.f32.gmra.mxu0 %v658
      %v1043 = vpop.f32.mrf.mxu0
      %v1044 = vadd.f32 0.0, %v1043
      %1045 = vmatmul.f32.gmra.mxu0 %v660
      %v1046 = vpop.f32.mrf.mxu0
      %v1047 = vadd.f32 0.0, %v1046
      %1048 = vmatmul.f32.gmra.mxu0 %v662
      %v1049 = vpop.f32.mrf.mxu0
      %v1050 = vadd.f32 0.0, %v1049
      %1051 = vmatmul.f32.gmra.mxu0 %v664
      %v1052 = vpop.f32.mrf.mxu0
      %v1053 = vadd.f32 0.0, %v1052
      %1054 = vmatmul.f32.gmra.mxu0 %v666
      %v1055 = vpop.f32.mrf.mxu0
      %v1056 = vadd.f32 0.0, %v1055
      %1057 = vmatmul.f32.gmra.mxu0 %v668
      %v1058 = vpop.f32.mrf.mxu0
      %v1059 = vadd.f32 0.0, %v1058
      %1060 = vmatmul.f32.gmra.mxu0 %v670
      %v1061 = vpop.f32.mrf.mxu0
      %v1062 = vadd.f32 0.0, %v1061
      %1063 = vmatmul.f32.gmra.mxu0 %v672
      %v1064 = vpop.f32.mrf.mxu0
      %v1065 = vadd.f32 0.0, %v1064
      %1066 = vmatmul.f32.gmra.mxu0 %v674
      %v1067 = vpop.f32.mrf.mxu0
      %v1068 = vadd.f32 0.0, %v1067
      %1069 = vmatmul.f32.gmra.mxu0 %v676
      %v1070 = vpop.f32.mrf.mxu0
      %v1071 = vadd.f32 0.0, %v1070
      %1072 = vmatmul.f32.gmra.mxu0 %v678
      %v1073 = vpop.f32.mrf.mxu0
      %v1074 = vadd.f32 0.0, %v1073
      %1075 = vmatmul.f32.gmra.mxu0 %v680
      %v1076 = vpop.f32.mrf.mxu0
      %v1077 = vadd.f32 0.0, %v1076
      %1078 = vmatmul.f32.gmra.mxu0 %v682
      %v1079 = vpop.f32.mrf.mxu0
      %v1080 = vadd.f32 0.0, %v1079
      %1081 = vmatmul.f32.gmra.mxu0 %v684
      %v1082 = vpop.f32.mrf.mxu0
      %v1083 = vadd.f32 0.0, %v1082
      %1084 = vmatmul.f32.gmra.mxu0 %v686
      %v1085 = vpop.f32.mrf.mxu0
      %v1086 = vadd.f32 0.0, %v1085
      %1087 = vmatmul.f32.gmra.mxu0 %v688
      %v1088 = vpop.f32.mrf.mxu0
      %v1089 = vadd.f32 0.0, %v1088
      %1090 = vmatmul.f32.gmra.mxu0 %v690
      %v1091 = vpop.f32.mrf.mxu0
      %v1092 = vadd.f32 0.0, %v1091
      %1093 = vmatmul.f32.gmra.mxu0 %v692
      %v1094 = vpop.f32.mrf.mxu0
      %v1095 = vadd.f32 0.0, %v1094
      %1096 = vmatmul.f32.gmra.mxu0 %v694
      %v1097 = vpop.f32.mrf.mxu0
      %v1098 = vadd.f32 0.0, %v1097
      %1099 = vmatmul.f32.gmra.mxu0 %v696
      %v1100 = vpop.f32.mrf.mxu0
      %v1101 = vadd.f32 0.0, %v1100
      %1102 = vmatmul.f32.gmra.mxu0 %v698
      %v1103 = vpop.f32.mrf.mxu0
      %v1104 = vadd.f32 0.0, %v1103
      %1105 = vmatmul.f32.gmra.mxu0 %v700
      %v1106 = vpop.f32.mrf.mxu0
      %v1107 = vadd.f32 0.0, %v1106
      %1108 = vmatmul.f32.gmra.mxu0 %v702
      %v1109 = vpop.f32.mrf.mxu0
      %v1110 = vadd.f32 0.0, %v1109
      %1111 = vmatmul.f32.gmra.mxu0 %v704
      %v1112 = vpop.f32.mrf.mxu0
      %v1113 = vadd.f32 0.0, %v1112
      %1114 = vmatmul.f32.gmra.mxu0 %v706
      %v1115 = vpop.f32.mrf.mxu0
      %v1116 = vadd.f32 0.0, %v1115
      %1117 = vmatmul.f32.gmra.mxu0 %v708
      %v1118 = vpop.f32.mrf.mxu0
      %v1119 = vadd.f32 0.0, %v1118
      %1120 = vmatmul.f32.gmra.mxu0 %v710
      %v1121 = vpop.f32.mrf.mxu0
      %v1122 = vadd.f32 0.0, %v1121
      %1123 = vmatmul.f32.gmra.mxu0 %v712
      %v1124 = vpop.f32.mrf.mxu0
      %v1125 = vadd.f32 0.0, %v1124
      %1126 = vmatmul.f32.gmra.mxu0 %v714
      %v1127 = vpop.f32.mrf.mxu0
      %v1128 = vadd.f32 0.0, %v1127
      %1129 = vmatmul.f32.gmra.mxu0 %v716
      %v1130 = vpop.f32.mrf.mxu0
      %v1131 = vadd.f32 0.0, %v1130
      %1132 = vmatmul.f32.gmra.mxu0 %v718
      %v1133 = vpop.f32.mrf.mxu0
      %v1134 = vadd.f32 0.0, %v1133
      %1135 = vmatmul.f32.gmra.mxu0 %v720
      %v1136 = vpop.f32.mrf.mxu0
      %v1137 = vadd.f32 0.0, %v1136
      %1138 = vmatmul.f32.gmra.mxu0 %v722
      %v1139 = vpop.f32.mrf.mxu0
      %v1140 = vadd.f32 0.0, %v1139
      %1141 = vmatmul.f32.gmra.mxu0 %v724
      %v1142 = vpop.f32.mrf.mxu0
      %v1143 = vadd.f32 0.0, %v1142
      %1144 = vmatmul.f32.gmra.mxu0 %v726
      %v1145 = vpop.f32.mrf.mxu0
      %v1146 = vadd.f32 0.0, %v1145
      %1147 = vmatmul.f32.gmra.mxu0 %v728
      %v1148 = vpop.f32.mrf.mxu0
      %v1149 = vadd.f32 0.0, %v1148
      %1150 = vmatmul.f32.gmra.mxu0 %v730
      %v1151 = vpop.f32.mrf.mxu0
      %v1152 = vadd.f32 0.0, %v1151
      %1153 = vmatmul.f32.gmra.mxu0 %v732
      %v1154 = vpop.f32.mrf.mxu0
      %v1155 = vadd.f32 0.0, %v1154
      %1156 = vmatmul.f32.gmra.mxu0 %v734
      %v1157 = vpop.f32.mrf.mxu0
      %v1158 = vadd.f32 0.0, %v1157
      %1159 = vmatmul.f32.gmra.mxu0 %v736
      %v1160 = vpop.f32.mrf.mxu0
      %v1161 = vadd.f32 0.0, %v1160
      %1162 = vmatmul.f32.gmra.mxu0 %v738
      %v1163 = vpop.f32.mrf.mxu0
      %v1164 = vadd.f32 0.0, %v1163
      %1165 = vmatmul.f32.gmra.mxu0 %v740
      %v1166 = vpop.f32.mrf.mxu0
      %v1167 = vadd.f32 0.0, %v1166
      %1168 = vmatmul.f32.gmra.mxu0 %v742
      %v1169 = vpop.f32.mrf.mxu0
      %v1170 = vadd.f32 0.0, %v1169
      %1171 = vmatmul.f32.gmra.mxu0 %v744
      %v1172 = vpop.f32.mrf.mxu0
      %v1173 = vadd.f32 0.0, %v1172
      %1174 = vmatmul.f32.gmra.mxu0 %v746
      %v1175 = vpop.f32.mrf.mxu0
      %v1176 = vadd.f32 0.0, %v1175
      %1177 = vmatmul.f32.gmra.mxu0 %v748
      %v1178 = vpop.f32.mrf.mxu0
      %v1179 = vadd.f32 0.0, %v1178
      %1180 = vmatmul.f32.gmra.mxu0 %v750
      %v1181 = vpop.f32.mrf.mxu0
      %v1182 = vadd.f32 0.0, %v1181
      %1183 = vmatmul.f32.gmra.mxu0 %v752
      %v1184 = vpop.f32.mrf.mxu0
      %v1185 = vadd.f32 0.0, %v1184
      %1186 = vdwg.mxu0
      %1187 = vmatpush.msra.mxu0 %v785
      %1188 = vmatpush.msra.mxu0 %v784
      %1189 = vmatpush.msra.mxu0 %v783
      %1190 = vmatpush.msra.mxu0 %v782
      %1191 = vmatpush.msra.mxu0 %v781
      %1192 = vmatpush.msra.mxu0 %v780
      %1193 = vmatpush.msra.mxu0 %v779
      %1194 = vmatpush.msra.mxu0 %v778
      %1195 = vmatpush.msra.mxu0 %v777
      %1196 = vmatpush.msra.mxu0 %v776
      %1197 = vmatpush.msra.mxu0 %v775
      %1198 = vmatpush.msra.mxu0 %v774
      %1199 = vmatpush.msra.mxu0 %v773
      %1200 = vmatpush.msra.mxu0 %v772
      %1201 = vmatpush.msra.mxu0 %v771
      %1202 = vmatpush.msra.mxu0 %v770
      %1203 = vmatmul.f32.gmra.mxu0 %v499
      %v1204 = vpop.f32.mrf.mxu0
      %v1205 = vadd.f32 %v804, %v1204
      %1206 = vmatmul.f32.gmra.mxu0 %v501
      %v1207 = vpop.f32.mrf.mxu0
      %v1208 = vadd.f32 %v807, %v1207
      %1209 = vmatmul.f32.gmra.mxu0 %v503
      %v1210 = vpop.f32.mrf.mxu0
      %v1211 = vadd.f32 %v810, %v1210
      %1212 = vmatmul.f32.gmra.mxu0 %v505
      %v1213 = vpop.f32.mrf.mxu0
      %v1214 = vadd.f32 %v813, %v1213
      %1215 = vmatmul.f32.gmra.mxu0 %v507
      %v1216 = vpop.f32.mrf.mxu0
      %v1217 = vadd.f32 %v816, %v1216
      %1218 = vmatmul.f32.gmra.mxu0 %v509
      %v1219 = vpop.f32.mrf.mxu0
      %v1220 = vadd.f32 %v819, %v1219
      %1221 = vmatmul.f32.gmra.mxu0 %v511
      %v1222 = vpop.f32.mrf.mxu0
      %v1223 = vadd.f32 %v822, %v1222
      %1224 = vmatmul.f32.gmra.mxu0 %v513
      %v1225 = vpop.f32.mrf.mxu0
      %v1226 = vadd.f32 %v825, %v1225
      %1227 = vmatmul.f32.gmra.mxu0 %v515
      %v1228 = vpop.f32.mrf.mxu0
      %v1229 = vadd.f32 %v828, %v1228
      %1230 = vmatmul.f32.gmra.mxu0 %v517
      %v1231 = vpop.f32.mrf.mxu0
      %v1232 = vadd.f32 %v831, %v1231
      %1233 = vmatmul.f32.gmra.mxu0 %v519
      %v1234 = vpop.f32.mrf.mxu0
      %v1235 = vadd.f32 %v834, %v1234
      %1236 = vmatmul.f32.gmra.mxu0 %v521
      %v1237 = vpop.f32.mrf.mxu0
      %v1238 = vadd.f32 %v837, %v1237
      %1239 = vmatmul.f32.gmra.mxu0 %v523
      %v1240 = vpop.f32.mrf.mxu0
      %v1241 = vadd.f32 %v840, %v1240
      %1242 = vmatmul.f32.gmra.mxu0 %v525
      %v1243 = vpop.f32.mrf.mxu0
      %v1244 = vadd.f32 %v843, %v1243
      %1245 = vmatmul.f32.gmra.mxu0 %v527
      %v1246 = vpop.f32.mrf.mxu0
      %v1247 = vadd.f32 %v846, %v1246
      %1248 = vmatmul.f32.gmra.mxu0 %v529
      %v1249 = vpop.f32.mrf.mxu0
      %v1250 = vadd.f32 %v849, %v1249
      %1251 = vmatmul.f32.gmra.mxu0 %v531
      %v1252 = vpop.f32.mrf.mxu0
      %v1253 = vadd.f32 %v852, %v1252
      %1254 = vmatmul.f32.gmra.mxu0 %v533
      %v1255 = vpop.f32.mrf.mxu0
      %v1256 = vadd.f32 %v855, %v1255
      %1257 = vmatmul.f32.gmra.mxu0 %v535
      %v1258 = vpop.f32.mrf.mxu0
      %v1259 = vadd.f32 %v858, %v1258
      %1260 = vmatmul.f32.gmra.mxu0 %v537
      %v1261 = vpop.f32.mrf.mxu0
      %v1262 = vadd.f32 %v861, %v1261
      %1263 = vmatmul.f32.gmra.mxu0 %v539
      %v1264 = vpop.f32.mrf.mxu0
      %v1265 = vadd.f32 %v864, %v1264
      %1266 = vmatmul.f32.gmra.mxu0 %v541
      %v1267 = vpop.f32.mrf.mxu0
      %v1268 = vadd.f32 %v867, %v1267
      %1269 = vmatmul.f32.gmra.mxu0 %v543
      %v1270 = vpop.f32.mrf.mxu0
      %v1271 = vadd.f32 %v870, %v1270
      %1272 = vmatmul.f32.gmra.mxu0 %v545
      %v1273 = vpop.f32.mrf.mxu0
      %v1274 = vadd.f32 %v873, %v1273
      %1275 = vmatmul.f32.gmra.mxu0 %v547
      %v1276 = vpop.f32.mrf.mxu0
      %v1277 = vadd.f32 %v876, %v1276
      %1278 = vmatmul.f32.gmra.mxu0 %v549
      %v1279 = vpop.f32.mrf.mxu0
      %v1280 = vadd.f32 %v879, %v1279
      %1281 = vmatmul.f32.gmra.mxu0 %v551
      %v1282 = vpop.f32.mrf.mxu0
      %v1283 = vadd.f32 %v882, %v1282
      %1284 = vmatmul.f32.gmra.mxu0 %v553
      %v1285 = vpop.f32.mrf.mxu0
      %v1286 = vadd.f32 %v885, %v1285
      %1287 = vmatmul.f32.gmra.mxu0 %v555
      %v1288 = vpop.f32.mrf.mxu0
      %v1289 = vadd.f32 %v888, %v1288
      %1290 = vmatmul.f32.gmra.mxu0 %v557
      %v1291 = vpop.f32.mrf.mxu0
      %v1292 = vadd.f32 %v891, %v1291
      %1293 = vmatmul.f32.gmra.mxu0 %v559
      %v1294 = vpop.f32.mrf.mxu0
      %v1295 = vadd.f32 %v894, %v1294
      %1296 = vmatmul.f32.gmra.mxu0 %v561
      %v1297 = vpop.f32.mrf.mxu0
      %v1298 = vadd.f32 %v897, %v1297
      %1299 = vmatmul.f32.gmra.mxu0 %v563
      %v1300 = vpop.f32.mrf.mxu0
      %v1301 = vadd.f32 %v900, %v1300
      %1302 = vmatmul.f32.gmra.mxu0 %v565
      %v1303 = vpop.f32.mrf.mxu0
      %v1304 = vadd.f32 %v903, %v1303
      %1305 = vmatmul.f32.gmra.mxu0 %v567
      %v1306 = vpop.f32.mrf.mxu0
      %v1307 = vadd.f32 %v906, %v1306
      %1308 = vmatmul.f32.gmra.mxu0 %v569
      %v1309 = vpop.f32.mrf.mxu0
      %v1310 = vadd.f32 %v909, %v1309
      %1311 = vmatmul.f32.gmra.mxu0 %v571
      %v1312 = vpop.f32.mrf.mxu0
      %v1313 = vadd.f32 %v912, %v1312
      %1314 = vmatmul.f32.gmra.mxu0 %v573
      %v1315 = vpop.f32.mrf.mxu0
      %v1316 = vadd.f32 %v915, %v1315
      %1317 = vmatmul.f32.gmra.mxu0 %v575
      %v1318 = vpop.f32.mrf.mxu0
      %v1319 = vadd.f32 %v918, %v1318
      %1320 = vmatmul.f32.gmra.mxu0 %v577
      %v1321 = vpop.f32.mrf.mxu0
      %v1322 = vadd.f32 %v921, %v1321
      %1323 = vmatmul.f32.gmra.mxu0 %v579
      %v1324 = vpop.f32.mrf.mxu0
      %v1325 = vadd.f32 %v924, %v1324
      %1326 = vmatmul.f32.gmra.mxu0 %v581
      %v1327 = vpop.f32.mrf.mxu0
      %v1328 = vadd.f32 %v927, %v1327
      %1329 = vmatmul.f32.gmra.mxu0 %v583
      %v1330 = vpop.f32.mrf.mxu0
      %v1331 = vadd.f32 %v930, %v1330
      %1332 = vmatmul.f32.gmra.mxu0 %v585
      %v1333 = vpop.f32.mrf.mxu0
      %v1334 = vadd.f32 %v933, %v1333
      %1335 = vmatmul.f32.gmra.mxu0 %v587
      %v1336 = vpop.f32.mrf.mxu0
      %v1337 = vadd.f32 %v936, %v1336
      %1338 = vmatmul.f32.gmra.mxu0 %v589
      %v1339 = vpop.f32.mrf.mxu0
      %v1340 = vadd.f32 %v939, %v1339
      %1341 = vmatmul.f32.gmra.mxu0 %v591
      %v1342 = vpop.f32.mrf.mxu0
      %v1343 = vadd.f32 %v942, %v1342
      %1344 = vmatmul.f32.gmra.mxu0 %v593
      %v1345 = vpop.f32.mrf.mxu0
      %v1346 = vadd.f32 %v945, %v1345
      %1347 = vmatmul.f32.gmra.mxu0 %v595
      %v1348 = vpop.f32.mrf.mxu0
      %v1349 = vadd.f32 %v948, %v1348
      %1350 = vmatmul.f32.gmra.mxu0 %v597
      %v1351 = vpop.f32.mrf.mxu0
      %v1352 = vadd.f32 %v951, %v1351
      %1353 = vmatmul.f32.gmra.mxu0 %v599
      %v1354 = vpop.f32.mrf.mxu0
      %v1355 = vadd.f32 %v954, %v1354
      %1356 = vmatmul.f32.gmra.mxu0 %v601
      %v1357 = vpop.f32.mrf.mxu0
      %v1358 = vadd.f32 %v957, %v1357
      %1359 = vmatmul.f32.gmra.mxu0 %v603
      %v1360 = vpop.f32.mrf.mxu0
      %v1361 = vadd.f32 %v960, %v1360
      %1362 = vmatmul.f32.gmra.mxu0 %v605
      %v1363 = vpop.f32.mrf.mxu0
      %v1364 = vadd.f32 %v963, %v1363
      %1365 = vmatmul.f32.gmra.mxu0 %v607
      %v1366 = vpop.f32.mrf.mxu0
      %v1367 = vadd.f32 %v966, %v1366
      %1368 = vmatmul.f32.gmra.mxu0 %v609
      %v1369 = vpop.f32.mrf.mxu0
      %v1370 = vadd.f32 %v969, %v1369
      %1371 = vmatmul.f32.gmra.mxu0 %v611
      %v1372 = vpop.f32.mrf.mxu0
      %v1373 = vadd.f32 %v972, %v1372
      %1374 = vmatmul.f32.gmra.mxu0 %v613
      %v1375 = vpop.f32.mrf.mxu0
      %v1376 = vadd.f32 %v975, %v1375
      %1377 = vmatmul.f32.gmra.mxu0 %v615
      %v1378 = vpop.f32.mrf.mxu0
      %v1379 = vadd.f32 %v978, %v1378
      %1380 = vmatmul.f32.gmra.mxu0 %v617
      %v1381 = vpop.f32.mrf.mxu0
      %v1382 = vadd.f32 %v981, %v1381
      %1383 = vmatmul.f32.gmra.mxu0 %v619
      %v1384 = vpop.f32.mrf.mxu0
      %v1385 = vadd.f32 %v984, %v1384
      %1386 = vmatmul.f32.gmra.mxu0 %v621
      %v1387 = vpop.f32.mrf.mxu0
      %v1388 = vadd.f32 %v987, %v1387
      %1389 = vmatmul.f32.gmra.mxu0 %v623
      %v1390 = vpop.f32.mrf.mxu0
      %v1391 = vadd.f32 %v990, %v1390
      %1392 = vmatmul.f32.gmra.mxu0 %v625
      %v1393 = vpop.f32.mrf.mxu0
      %v1394 = vadd.f32 %v993, %v1393
      %1395 = vmatmul.f32.gmra.mxu0 %v627
      %v1396 = vpop.f32.mrf.mxu0
      %v1397 = vadd.f32 %v996, %v1396
      %1398 = vmatmul.f32.gmra.mxu0 %v629
      %v1399 = vpop.f32.mrf.mxu0
      %v1400 = vadd.f32 %v999, %v1399
      %1401 = vmatmul.f32.gmra.mxu0 %v631
      %v1402 = vpop.f32.mrf.mxu0
      %v1403 = vadd.f32 %v1002, %v1402
      %1404 = vmatmul.f32.gmra.mxu0 %v633
      %v1405 = vpop.f32.mrf.mxu0
      %v1406 = vadd.f32 %v1005, %v1405
      %1407 = vmatmul.f32.gmra.mxu0 %v635
      %v1408 = vpop.f32.mrf.mxu0
      %v1409 = vadd.f32 %v1008, %v1408
      %1410 = vmatmul.f32.gmra.mxu0 %v637
      %v1411 = vpop.f32.mrf.mxu0
      %v1412 = vadd.f32 %v1011, %v1411
      %1413 = vmatmul.f32.gmra.mxu0 %v639
      %v1414 = vpop.f32.mrf.mxu0
      %v1415 = vadd.f32 %v1014, %v1414
      %1416 = vmatmul.f32.gmra.mxu0 %v641
      %v1417 = vpop.f32.mrf.mxu0
      %v1418 = vadd.f32 %v1017, %v1417
      %1419 = vmatmul.f32.gmra.mxu0 %v643
      %v1420 = vpop.f32.mrf.mxu0
      %v1421 = vadd.f32 %v1020, %v1420
      %1422 = vmatmul.f32.gmra.mxu0 %v645
      %v1423 = vpop.f32.mrf.mxu0
      %v1424 = vadd.f32 %v1023, %v1423
      %1425 = vmatmul.f32.gmra.mxu0 %v647
      %v1426 = vpop.f32.mrf.mxu0
      %v1427 = vadd.f32 %v1026, %v1426
      %1428 = vmatmul.f32.gmra.mxu0 %v649
      %v1429 = vpop.f32.mrf.mxu0
      %v1430 = vadd.f32 %v1029, %v1429
      %1431 = vmatmul.f32.gmra.mxu0 %v651
      %v1432 = vpop.f32.mrf.mxu0
      %v1433 = vadd.f32 %v1032, %v1432
      %1434 = vmatmul.f32.gmra.mxu0 %v653
      %v1435 = vpop.f32.mrf.mxu0
      %v1436 = vadd.f32 %v1035, %v1435
      %1437 = vmatmul.f32.gmra.mxu0 %v655
      %v1438 = vpop.f32.mrf.mxu0
      %v1439 = vadd.f32 %v1038, %v1438
      %1440 = vmatmul.f32.gmra.mxu0 %v657
      %v1441 = vpop.f32.mrf.mxu0
      %v1442 = vadd.f32 %v1041, %v1441
      %1443 = vmatmul.f32.gmra.mxu0 %v659
      %v1444 = vpop.f32.mrf.mxu0
      %v1445 = vadd.f32 %v1044, %v1444
      %1446 = vmatmul.f32.gmra.mxu0 %v661
      %v1447 = vpop.f32.mrf.mxu0
      %v1448 = vadd.f32 %v1047, %v1447
      %1449 = vmatmul.f32.gmra.mxu0 %v663
      %v1450 = vpop.f32.mrf.mxu0
      %v1451 = vadd.f32 %v1050, %v1450
      %1452 = vmatmul.f32.gmra.mxu0 %v665
      %v1453 = vpop.f32.mrf.mxu0
      %v1454 = vadd.f32 %v1053, %v1453
      %1455 = vmatmul.f32.gmra.mxu0 %v667
      %v1456 = vpop.f32.mrf.mxu0
      %v1457 = vadd.f32 %v1056, %v1456
      %1458 = vmatmul.f32.gmra.mxu0 %v669
      %v1459 = vpop.f32.mrf.mxu0
      %v1460 = vadd.f32 %v1059, %v1459
      %1461 = vmatmul.f32.gmra.mxu0 %v671
      %v1462 = vpop.f32.mrf.mxu0
      %v1463 = vadd.f32 %v1062, %v1462
      %1464 = vmatmul.f32.gmra.mxu0 %v673
      %v1465 = vpop.f32.mrf.mxu0
      %v1466 = vadd.f32 %v1065, %v1465
      %1467 = vmatmul.f32.gmra.mxu0 %v675
      %v1468 = vpop.f32.mrf.mxu0
      %v1469 = vadd.f32 %v1068, %v1468
      %1470 = vmatmul.f32.gmra.mxu0 %v677
      %v1471 = vpop.f32.mrf.mxu0
      %v1472 = vadd.f32 %v1071, %v1471
      %1473 = vmatmul.f32.gmra.mxu0 %v679
      %v1474 = vpop.f32.mrf.mxu0
      %v1475 = vadd.f32 %v1074, %v1474
      %1476 = vmatmul.f32.gmra.mxu0 %v681
      %v1477 = vpop.f32.mrf.mxu0
      %v1478 = vadd.f32 %v1077, %v1477
      %1479 = vmatmul.f32.gmra.mxu0 %v683
      %v1480 = vpop.f32.mrf.mxu0
      %v1481 = vadd.f32 %v1080, %v1480
      %1482 = vmatmul.f32.gmra.mxu0 %v685
      %v1483 = vpop.f32.mrf.mxu0
      %v1484 = vadd.f32 %v1083, %v1483
      %1485 = vmatmul.f32.gmra.mxu0 %v687
      %v1486 = vpop.f32.mrf.mxu0
      %v1487 = vadd.f32 %v1086, %v1486
      %1488 = vmatmul.f32.gmra.mxu0 %v689
      %v1489 = vpop.f32.mrf.mxu0
      %v1490 = vadd.f32 %v1089, %v1489
      %1491 = vmatmul.f32.gmra.mxu0 %v691
      %v1492 = vpop.f32.mrf.mxu0
      %v1493 = vadd.f32 %v1092, %v1492
      %1494 = vmatmul.f32.gmra.mxu0 %v693
      %v1495 = vpop.f32.mrf.mxu0
      %v1496 = vadd.f32 %v1095, %v1495
      %1497 = vmatmul.f32.gmra.mxu0 %v695
      %v1498 = vpop.f32.mrf.mxu0
      %v1499 = vadd.f32 %v1098, %v1498
      %1500 = vmatmul.f32.gmra.mxu0 %v697
      %v1501 = vpop.f32.mrf.mxu0
      %v1502 = vadd.f32 %v1101, %v1501
      %1503 = vmatmul.f32.gmra.mxu0 %v699
      %v1504 = vpop.f32.mrf.mxu0
      %v1505 = vadd.f32 %v1104, %v1504
      %1506 = vmatmul.f32.gmra.mxu0 %v701
      %v1507 = vpop.f32.mrf.mxu0
      %v1508 = vadd.f32 %v1107, %v1507
      %1509 = vmatmul.f32.gmra.mxu0 %v703
      %v1510 = vpop.f32.mrf.mxu0
      %v1511 = vadd.f32 %v1110, %v1510
      %1512 = vmatmul.f32.gmra.mxu0 %v705
      %v1513 = vpop.f32.mrf.mxu0
      %v1514 = vadd.f32 %v1113, %v1513
      %1515 = vmatmul.f32.gmra.mxu0 %v707
      %v1516 = vpop.f32.mrf.mxu0
      %v1517 = vadd.f32 %v1116, %v1516
      %1518 = vmatmul.f32.gmra.mxu0 %v709
      %v1519 = vpop.f32.mrf.mxu0
      %v1520 = vadd.f32 %v1119, %v1519
      %1521 = vmatmul.f32.gmra.mxu0 %v711
      %v1522 = vpop.f32.mrf.mxu0
      %v1523 = vadd.f32 %v1122, %v1522
      %1524 = vmatmul.f32.gmra.mxu0 %v713
      %v1525 = vpop.f32.mrf.mxu0
      %v1526 = vadd.f32 %v1125, %v1525
      %1527 = vmatmul.f32.gmra.mxu0 %v715
      %v1528 = vpop.f32.mrf.mxu0
      %v1529 = vadd.f32 %v1128, %v1528
      %1530 = vmatmul.f32.gmra.mxu0 %v717
      %v1531 = vpop.f32.mrf.mxu0
      %v1532 = vadd.f32 %v1131, %v1531
      %1533 = vmatmul.f32.gmra.mxu0 %v719
      %v1534 = vpop.f32.mrf.mxu0
      %v1535 = vadd.f32 %v1134, %v1534
      %1536 = vmatmul.f32.gmra.mxu0 %v721
      %v1537 = vpop.f32.mrf.mxu0
      %v1538 = vadd.f32 %v1137, %v1537
      %1539 = vmatmul.f32.gmra.mxu0 %v723
      %v1540 = vpop.f32.mrf.mxu0
      %v1541 = vadd.f32 %v1140, %v1540
      %1542 = vmatmul.f32.gmra.mxu0 %v725
      %v1543 = vpop.f32.mrf.mxu0
      %v1544 = vadd.f32 %v1143, %v1543
      %1545 = vmatmul.f32.gmra.mxu0 %v727
      %v1546 = vpop.f32.mrf.mxu0
      %v1547 = vadd.f32 %v1146, %v1546
      %1548 = vmatmul.f32.gmra.mxu0 %v729
      %v1549 = vpop.f32.mrf.mxu0
      %v1550 = vadd.f32 %v1149, %v1549
      %1551 = vmatmul.f32.gmra.mxu0 %v731
      %v1552 = vpop.f32.mrf.mxu0
      %v1553 = vadd.f32 %v1152, %v1552
      %1554 = vmatmul.f32.gmra.mxu0 %v733
      %v1555 = vpop.f32.mrf.mxu0
      %v1556 = vadd.f32 %v1155, %v1555
      %1557 = vmatmul.f32.gmra.mxu0 %v735
      %v1558 = vpop.f32.mrf.mxu0
      %v1559 = vadd.f32 %v1158, %v1558
      %1560 = vmatmul.f32.gmra.mxu0 %v737
      %v1561 = vpop.f32.mrf.mxu0
      %v1562 = vadd.f32 %v1161, %v1561
      %1563 = vmatmul.f32.gmra.mxu0 %v739
      %v1564 = vpop.f32.mrf.mxu0
      %v1565 = vadd.f32 %v1164, %v1564
      %1566 = vmatmul.f32.gmra.mxu0 %v741
      %v1567 = vpop.f32.mrf.mxu0
      %v1568 = vadd.f32 %v1167, %v1567
      %1569 = vmatmul.f32.gmra.mxu0 %v743
      %v1570 = vpop.f32.mrf.mxu0
      %v1571 = vadd.f32 %v1170, %v1570
      %1572 = vmatmul.f32.gmra.mxu0 %v745
      %v1573 = vpop.f32.mrf.mxu0
      %v1574 = vadd.f32 %v1173, %v1573
      %1575 = vmatmul.f32.gmra.mxu0 %v747
      %v1576 = vpop.f32.mrf.mxu0
      %v1577 = vadd.f32 %v1176, %v1576
      %1578 = vmatmul.f32.gmra.mxu0 %v749
      %v1579 = vpop.f32.mrf.mxu0
      %v1580 = vadd.f32 %v1179, %v1579
      %1581 = vmatmul.f32.gmra.mxu0 %v751
      %v1582 = vpop.f32.mrf.mxu0
      %v1583 = vadd.f32 %v1182, %v1582
      %1584 = vmatmul.f32.gmra.mxu0 %v753
      %v1585 = vpop.f32.mrf.mxu0
      %v1586 = vadd.f32 %v1185, %v1585
      %1587 = vdwg.mxu0
      %v1588 = vadd.f32 %v370, %v1205
      %v1589 = vadd.f32 %v371, %v1208
      %v1590 = vadd.f32 %v372, %v1211
      %v1591 = vadd.f32 %v373, %v1214
      %v1592 = vadd.f32 %v374, %v1217
      %v1593 = vadd.f32 %v375, %v1220
      %v1594 = vadd.f32 %v376, %v1223
      %v1595 = vadd.f32 %v377, %v1226
      %v1596 = vadd.f32 %v378, %v1229
      %v1597 = vadd.f32 %v379, %v1232
      %v1598 = vadd.f32 %v380, %v1235
      %v1599 = vadd.f32 %v381, %v1238
      %v1600 = vadd.f32 %v382, %v1241
      %v1601 = vadd.f32 %v383, %v1244
      %v1602 = vadd.f32 %v384, %v1247
      %v1603 = vadd.f32 %v385, %v1250
      %v1604 = vadd.f32 %v386, %v1253
      %v1605 = vadd.f32 %v387, %v1256
      %v1606 = vadd.f32 %v388, %v1259
      %v1607 = vadd.f32 %v389, %v1262
      %v1608 = vadd.f32 %v390, %v1265
      %v1609 = vadd.f32 %v391, %v1268
      %v1610 = vadd.f32 %v392, %v1271
      %v1611 = vadd.f32 %v393, %v1274
      %v1612 = vadd.f32 %v394, %v1277
      %v1613 = vadd.f32 %v395, %v1280
      %v1614 = vadd.f32 %v396, %v1283
      %v1615 = vadd.f32 %v397, %v1286
      %v1616 = vadd.f32 %v398, %v1289
      %v1617 = vadd.f32 %v399, %v1292
      %v1618 = vadd.f32 %v400, %v1295
      %v1619 = vadd.f32 %v401, %v1298
      %v1620 = vadd.f32 %v402, %v1301
      %v1621 = vadd.f32 %v403, %v1304
      %v1622 = vadd.f32 %v404, %v1307
      %v1623 = vadd.f32 %v405, %v1310
      %v1624 = vadd.f32 %v406, %v1313
      %v1625 = vadd.f32 %v407, %v1316
      %v1626 = vadd.f32 %v408, %v1319
      %v1627 = vadd.f32 %v409, %v1322
      %v1628 = vadd.f32 %v410, %v1325
      %v1629 = vadd.f32 %v411, %v1328
      %v1630 = vadd.f32 %v412, %v1331
      %v1631 = vadd.f32 %v413, %v1334
      %v1632 = vadd.f32 %v414, %v1337
      %v1633 = vadd.f32 %v415, %v1340
      %v1634 = vadd.f32 %v416, %v1343
      %v1635 = vadd.f32 %v417, %v1346
      %v1636 = vadd.f32 %v418, %v1349
      %v1637 = vadd.f32 %v419, %v1352
      %v1638 = vadd.f32 %v420, %v1355
      %v1639 = vadd.f32 %v421, %v1358
      %v1640 = vadd.f32 %v422, %v1361
      %v1641 = vadd.f32 %v423, %v1364
      %v1642 = vadd.f32 %v424, %v1367
      %v1643 = vadd.f32 %v425, %v1370
      %v1644 = vadd.f32 %v426, %v1373
      %v1645 = vadd.f32 %v427, %v1376
      %v1646 = vadd.f32 %v428, %v1379
      %v1647 = vadd.f32 %v429, %v1382
      %v1648 = vadd.f32 %v430, %v1385
      %v1649 = vadd.f32 %v431, %v1388
      %v1650 = vadd.f32 %v432, %v1391
      %v1651 = vadd.f32 %v433, %v1394
      %v1652 = vadd.f32 %v434, %v1397
      %v1653 = vadd.f32 %v435, %v1400
      %v1654 = vadd.f32 %v436, %v1403
      %v1655 = vadd.f32 %v437, %v1406
      %v1656 = vadd.f32 %v438, %v1409
      %v1657 = vadd.f32 %v439, %v1412
      %v1658 = vadd.f32 %v440, %v1415
      %v1659 = vadd.f32 %v441, %v1418
      %v1660 = vadd.f32 %v442, %v1421
      %v1661 = vadd.f32 %v443, %v1424
      %v1662 = vadd.f32 %v444, %v1427
      %v1663 = vadd.f32 %v445, %v1430
      %v1664 = vadd.f32 %v446, %v1433
      %v1665 = vadd.f32 %v447, %v1436
      %v1666 = vadd.f32 %v448, %v1439
      %v1667 = vadd.f32 %v449, %v1442
      %v1668 = vadd.f32 %v450, %v1445
      %v1669 = vadd.f32 %v451, %v1448
      %v1670 = vadd.f32 %v452, %v1451
      %v1671 = vadd.f32 %v453, %v1454
      %v1672 = vadd.f32 %v454, %v1457
      %v1673 = vadd.f32 %v455, %v1460
      %v1674 = vadd.f32 %v456, %v1463
      %v1675 = vadd.f32 %v457, %v1466
      %v1676 = vadd.f32 %v458, %v1469
      %v1677 = vadd.f32 %v459, %v1472
      %v1678 = vadd.f32 %v460, %v1475
      %v1679 = vadd.f32 %v461, %v1478
      %v1680 = vadd.f32 %v462, %v1481
      %v1681 = vadd.f32 %v463, %v1484
      %v1682 = vadd.f32 %v464, %v1487
      %v1683 = vadd.f32 %v465, %v1490
      %v1684 = vadd.f32 %v466, %v1493
      %v1685 = vadd.f32 %v467, %v1496
      %v1686 = vadd.f32 %v468, %v1499
      %v1687 = vadd.f32 %v469, %v1502
      %v1688 = vadd.f32 %v470, %v1505
      %v1689 = vadd.f32 %v471, %v1508
      %v1690 = vadd.f32 %v472, %v1511
      %v1691 = vadd.f32 %v473, %v1514
      %v1692 = vadd.f32 %v474, %v1517
      %v1693 = vadd.f32 %v475, %v1520
      %v1694 = vadd.f32 %v476, %v1523
      %v1695 = vadd.f32 %v477, %v1526
      %v1696 = vadd.f32 %v478, %v1529
      %v1697 = vadd.f32 %v479, %v1532
      %v1698 = vadd.f32 %v480, %v1535
      %v1699 = vadd.f32 %v481, %v1538
      %v1700 = vadd.f32 %v482, %v1541
      %v1701 = vadd.f32 %v483, %v1544
      %v1702 = vadd.f32 %v484, %v1547
      %v1703 = vadd.f32 %v485, %v1550
      %v1704 = vadd.f32 %v486, %v1553
      %v1705 = vadd.f32 %v487, %v1556
      %v1706 = vadd.f32 %v488, %v1559
      %v1707 = vadd.f32 %v489, %v1562
      %v1708 = vadd.f32 %v490, %v1565
      %v1709 = vadd.f32 %v491, %v1568
      %v1710 = vadd.f32 %v492, %v1571
      %v1711 = vadd.f32 %v493, %v1574
      %v1712 = vadd.f32 %v494, %v1577
      %v1713 = vadd.f32 %v495, %v1580
      %v1714 = vadd.f32 %v496, %v1583
      %v1715 = vadd.f32 %v497, %v1586
      %1716 = vst [vmem:[#allocation2] sm:$0xff] %v1588
      %1717 = vst [vmem:[#allocation2 + $0x8] sm:$0xff] %v1589
      %1718 = vst [vmem:[#allocation2 + $0x10] sm:$0xff] %v1590
      %1719 = vst [vmem:[#allocation2 + $0x18] sm:$0xff] %v1591
      %1720 = vst [vmem:[#allocation2 + $0x20] sm:$0xff] %v1592
      %1721 = vst [vmem:[#allocation2 + $0x28] sm:$0xff] %v1593
      %1722 = vst [vmem:[#allocation2 + $0x30] sm:$0xff] %v1594
      %1723 = vst [vmem:[#allocation2 + $0x38] sm:$0xff] %v1595
      %1724 = vst [vmem:[#allocation2 + $0x40] sm:$0xff] %v1596
      %1725 = vst [vmem:[#allocation2 + $0x48] sm:$0xff] %v1597
      %1726 = vst [vmem:[#allocation2 + $0x50] sm:$0xff] %v1598
      %1727 = vst [vmem:[#allocation2 + $0x58] sm:$0xff] %v1599
      %1728 = vst [vmem:[#allocation2 + $0x60] sm:$0xff] %v1600
      %1729 = vst [vmem:[#allocation2 + $0x68] sm:$0xff] %v1601
      %1730 = vst [vmem:[#allocation2 + $0x70] sm:$0xff] %v1602
      %1731 = vst [vmem:[#allocation2 + $0x78] sm:$0xff] %v1603
      %1732 = vst [vmem:[#allocation2 + $0x80] sm:$0xff] %v1604
      %1733 = vst [vmem:[#allocation2 + $0x88] sm:$0xff] %v1605
      %1734 = vst [vmem:[#allocation2 + $0x90] sm:$0xff] %v1606
      %1735 = vst [vmem:[#allocation2 + $0x98] sm:$0xff] %v1607
      %1736 = vst [vmem:[#allocation2 + $0xa0] sm:$0xff] %v1608
      %1737 = vst [vmem:[#allocation2 + $0xa8] sm:$0xff] %v1609
      %1738 = vst [vmem:[#allocation2 + $0xb0] sm:$0xff] %v1610
      %1739 = vst [vmem:[#allocation2 + $0xb8] sm:$0xff] %v1611
      %1740 = vst [vmem:[#allocation2 + $0xc0] sm:$0xff] %v1612
      %1741 = vst [vmem:[#allocation2 + $0xc8] sm:$0xff] %v1613
      %1742 = vst [vmem:[#allocation2 + $0xd0] sm:$0xff] %v1614
      %1743 = vst [vmem:[#allocation2 + $0xd8] sm:$0xff] %v1615
      %1744 = vst [vmem:[#allocation2 + $0xe0] sm:$0xff] %v1616
      %1745 = vst [vmem:[#allocation2 + $0xe8] sm:$0xff] %v1617
      %1746 = vst [vmem:[#allocation2 + $0xf0] sm:$0xff] %v1618
      %1747 = vst [vmem:[#allocation2 + $0xf8] sm:$0xff] %v1619
      %1748 = vst [vmem:[#allocation2 + $0x100] sm:$0xff] %v1620
      %1749 = vst [vmem:[#allocation2 + $0x108] sm:$0xff] %v1621
      %1750 = vst [vmem:[#allocation2 + $0x110] sm:$0xff] %v1622
      %1751 = vst [vmem:[#allocation2 + $0x118] sm:$0xff] %v1623
      %1752 = vst [vmem:[#allocation2 + $0x120] sm:$0xff] %v1624
      %1753 = vst [vmem:[#allocation2 + $0x128] sm:$0xff] %v1625
      %1754 = vst [vmem:[#allocation2 + $0x130] sm:$0xff] %v1626
      %1755 = vst [vmem:[#allocation2 + $0x138] sm:$0xff] %v1627
      %1756 = vst [vmem:[#allocation2 + $0x140] sm:$0xff] %v1628
      %1757 = vst [vmem:[#allocation2 + $0x148] sm:$0xff] %v1629
      %1758 = vst [vmem:[#allocation2 + $0x150] sm:$0xff] %v1630
      %1759 = vst [vmem:[#allocation2 + $0x158] sm:$0xff] %v1631
      %1760 = vst [vmem:[#allocation2 + $0x160] sm:$0xff] %v1632
      %1761 = vst [vmem:[#allocation2 + $0x168] sm:$0xff] %v1633
      %1762 = vst [vmem:[#allocation2 + $0x170] sm:$0xff] %v1634
      %1763 = vst [vmem:[#allocation2 + $0x178] sm:$0xff] %v1635
      %1764 = vst [vmem:[#allocation2 + $0x180] sm:$0xff] %v1636
      %1765 = vst [vmem:[#allocation2 + $0x188] sm:$0xff] %v1637
      %1766 = vst [vmem:[#allocation2 + $0x190] sm:$0xff] %v1638
      %1767 = vst [vmem:[#allocation2 + $0x198] sm:$0xff] %v1639
      %1768 = vst [vmem:[#allocation2 + $0x1a0] sm:$0xff] %v1640
      %1769 = vst [vmem:[#allocation2 + $0x1a8] sm:$0xff] %v1641
      %1770 = vst [vmem:[#allocation2 + $0x1b0] sm:$0xff] %v1642
      %1771 = vst [vmem:[#allocation2 + $0x1b8] sm:$0xff] %v1643
      %1772 = vst [vmem:[#allocation2 + $0x1c0] sm:$0xff] %v1644
      %1773 = vst [vmem:[#allocation2 + $0x1c8] sm:$0xff] %v1645
      %1774 = vst [vmem:[#allocation2 + $0x1d0] sm:$0xff] %v1646
      %1775 = vst [vmem:[#allocation2 + $0x1d8] sm:$0xff] %v1647
      %1776 = vst [vmem:[#allocation2 + $0x1e0] sm:$0xff] %v1648
      %1777 = vst [vmem:[#allocation2 + $0x1e8] sm:$0xff] %v1649
      %1778 = vst [vmem:[#allocation2 + $0x1f0] sm:$0xff] %v1650
      %1779 = vst [vmem:[#allocation2 + $0x1f8] sm:$0xff] %v1651
      %1780 = vst [vmem:[#allocation2 + $0x200] sm:$0xff] %v1652
      %1781 = vst [vmem:[#allocation2 + $0x208] sm:$0xff] %v1653
      %1782 = vst [vmem:[#allocation2 + $0x210] sm:$0xff] %v1654
      %1783 = vst [vmem:[#allocation2 + $0x218] sm:$0xff] %v1655
      %1784 = vst [vmem:[#allocation2 + $0x220] sm:$0xff] %v1656
      %1785 = vst [vmem:[#allocation2 + $0x228] sm:$0xff] %v1657
      %1786 = vst [vmem:[#allocation2 + $0x230] sm:$0xff] %v1658
      %1787 = vst [vmem:[#allocation2 + $0x238] sm:$0xff] %v1659
      %1788 = vst [vmem:[#allocation2 + $0x240] sm:$0xff] %v1660
      %1789 = vst [vmem:[#allocation2 + $0x248] sm:$0xff] %v1661
      %1790 = vst [vmem:[#allocation2 + $0x250] sm:$0xff] %v1662
      %1791 = vst [vmem:[#allocation2 + $0x258] sm:$0xff] %v1663
      %1792 = vst [vmem:[#allocation2 + $0x260] sm:$0xff] %v1664
      %1793 = vst [vmem:[#allocation2 + $0x268] sm:$0xff] %v1665
      %1794 = vst [vmem:[#allocation2 + $0x270] sm:$0xff] %v1666
      %1795 = vst [vmem:[#allocation2 + $0x278] sm:$0xff] %v1667
      %1796 = vst [vmem:[#allocation2 + $0x280] sm:$0xff] %v1668
      %1797 = vst [vmem:[#allocation2 + $0x288] sm:$0xff] %v1669
      %1798 = vst [vmem:[#allocation2 + $0x290] sm:$0xff] %v1670
      %1799 = vst [vmem:[#allocation2 + $0x298] sm:$0xff] %v1671
      %1800 = vst [vmem:[#allocation2 + $0x2a0] sm:$0xff] %v1672
      %1801 = vst [vmem:[#allocation2 + $0x2a8] sm:$0xff] %v1673
      %1802 = vst [vmem:[#allocation2 + $0x2b0] sm:$0xff] %v1674
      %1803 = vst [vmem:[#allocation2 + $0x2b8] sm:$0xff] %v1675
      %1804 = vst [vmem:[#allocation2 + $0x2c0] sm:$0xff] %v1676
      %1805 = vst [vmem:[#allocation2 + $0x2c8] sm:$0xff] %v1677
      %1806 = vst [vmem:[#allocation2 + $0x2d0] sm:$0xff] %v1678
      %1807 = vst [vmem:[#allocation2 + $0x2d8] sm:$0xff] %v1679
      %1808 = vst [vmem:[#allocation2 + $0x2e0] sm:$0xff] %v1680
      %1809 = vst [vmem:[#allocation2 + $0x2e8] sm:$0xff] %v1681
      %1810 = vst [vmem:[#allocation2 + $0x2f0] sm:$0xff] %v1682
      %1811 = vst [vmem:[#allocation2 + $0x2f8] sm:$0xff] %v1683
      %1812 = vst [vmem:[#allocation2 + $0x300] sm:$0xff] %v1684
      %1813 = vst [vmem:[#allocation2 + $0x308] sm:$0xff] %v1685
      %1814 = vst [vmem:[#allocation2 + $0x310] sm:$0xff] %v1686
      %1815 = vst [vmem:[#allocation2 + $0x318] sm:$0xff] %v1687
      %1816 = vst [vmem:[#allocation2 + $0x320] sm:$0xff] %v1688
      %1817 = vst [vmem:[#allocation2 + $0x328] sm:$0xff] %v1689
      %1818 = vst [vmem:[#allocation2 + $0x330] sm:$0xff] %v1690
      %1819 = vst [vmem:[#allocation2 + $0x338] sm:$0xff] %v1691
      %1820 = vst [vmem:[#allocation2 + $0x340] sm:$0xff] %v1692
      %1821 = vst [vmem:[#allocation2 + $0x348] sm:$0xff] %v1693
      %1822 = vst [vmem:[#allocation2 + $0x350] sm:$0xff] %v1694
      %1823 = vst [vmem:[#allocation2 + $0x358] sm:$0xff] %v1695
      %1824 = vst [vmem:[#allocation2 + $0x360] sm:$0xff] %v1696
      %1825 = vst [vmem:[#allocation2 + $0x368] sm:$0xff] %v1697
      %1826 = vst [vmem:[#allocation2 + $0x370] sm:$0xff] %v1698
      %1827 = vst [vmem:[#allocation2 + $0x378] sm:$0xff] %v1699
      %1828 = vst [vmem:[#allocation2 + $0x380] sm:$0xff] %v1700
      %1829 = vst [vmem:[#allocation2 + $0x388] sm:$0xff] %v1701
      %1830 = vst [vmem:[#allocation2 + $0x390] sm:$0xff] %v1702
      %1831 = vst [vmem:[#allocation2 + $0x398] sm:$0xff] %v1703
      %1832 = vst [vmem:[#allocation2 + $0x3a0] sm:$0xff] %v1704
      %1833 = vst [vmem:[#allocation2 + $0x3a8] sm:$0xff] %v1705
      %1834 = vst [vmem:[#allocation2 + $0x3b0] sm:$0xff] %v1706
      %1835 = vst [vmem:[#allocation2 + $0x3b8] sm:$0xff] %v1707
      %1836 = vst [vmem:[#allocation2 + $0x3c0] sm:$0xff] %v1708
      %1837 = vst [vmem:[#allocation2 + $0x3c8] sm:$0xff] %v1709
      %1838 = vst [vmem:[#allocation2 + $0x3d0] sm:$0xff] %v1710
      %1839 = vst [vmem:[#allocation2 + $0x3d8] sm:$0xff] %v1711
      %1840 = vst [vmem:[#allocation2 + $0x3e0] sm:$0xff] %v1712
      %1841 = vst [vmem:[#allocation2 + $0x3e8] sm:$0xff] %v1713
      %1842 = vst [vmem:[#allocation2 + $0x3f0] sm:$0xff] %v1714
      %1843 = vst [vmem:[#allocation2 + $0x3f8] sm:$0xff] %v1715
      // Predicated region
      $region33: #{double_conv.6} parent=27 // pred_check
        %p1844 = pneg %p238
      $region34: #{double_conv.6} parent=27 // pred_check_branch
        %1846 = sbr.rel (%p1844) target = $region36
      $region35: #{double_conv.6} parent=27 // pred_region
        %v1847 = vld [vmem:[#allocation2] sm:$0xff]
        %v1848 = vld [vmem:[#allocation2 + $0x8] sm:$0xff]
        %v1849 = vld [vmem:[#allocation2 + $0x10] sm:$0xff]
        %v1850 = vld [vmem:[#allocation2 + $0x18] sm:$0xff]
        %v1851 = vld [vmem:[#allocation2 + $0x20] sm:$0xff]
        %v1852 = vld [vmem:[#allocation2 + $0x28] sm:$0xff]
        %v1853 = vld [vmem:[#allocation2 + $0x30] sm:$0xff]
        %v1854 = vld [vmem:[#allocation2 + $0x38] sm:$0xff]
        %v1855 = vld [vmem:[#allocation2 + $0x40] sm:$0xff]
        %v1856 = vld [vmem:[#allocation2 + $0x48] sm:$0xff]
        %v1857 = vld [vmem:[#allocation2 + $0x50] sm:$0xff]
        %v1858 = vld [vmem:[#allocation2 + $0x58] sm:$0xff]
        %v1859 = vld [vmem:[#allocation2 + $0x60] sm:$0xff]
        %v1860 = vld [vmem:[#allocation2 + $0x68] sm:$0xff]
        %v1861 = vld [vmem:[#allocation2 + $0x70] sm:$0xff]
        %v1862 = vld [vmem:[#allocation2 + $0x78] sm:$0xff]
        %v1863 = vld [vmem:[#allocation2 + $0x80] sm:$0xff]
        %v1864 = vld [vmem:[#allocation2 + $0x88] sm:$0xff]
        %v1865 = vld [vmem:[#allocation2 + $0x90] sm:$0xff]
        %v1866 = vld [vmem:[#allocation2 + $0x98] sm:$0xff]
        %v1867 = vld [vmem:[#allocation2 + $0xa0] sm:$0xff]
        %v1868 = vld [vmem:[#allocation2 + $0xa8] sm:$0xff]
        %v1869 = vld [vmem:[#allocation2 + $0xb0] sm:$0xff]
        %v1870 = vld [vmem:[#allocation2 + $0xb8] sm:$0xff]
        %v1871 = vld [vmem:[#allocation2 + $0xc0] sm:$0xff]
        %v1872 = vld [vmem:[#allocation2 + $0xc8] sm:$0xff]
        %v1873 = vld [vmem:[#allocation2 + $0xd0] sm:$0xff]
        %v1874 = vld [vmem:[#allocation2 + $0xd8] sm:$0xff]
        %v1875 = vld [vmem:[#allocation2 + $0xe0] sm:$0xff]
        %v1876 = vld [vmem:[#allocation2 + $0xe8] sm:$0xff]
        %v1877 = vld [vmem:[#allocation2 + $0xf0] sm:$0xff]
        %v1878 = vld [vmem:[#allocation2 + $0xf8] sm:$0xff]
        %v1879 = vld [vmem:[#allocation2 + $0x100] sm:$0xff]
        %v1880 = vld [vmem:[#allocation2 + $0x108] sm:$0xff]
        %v1881 = vld [vmem:[#allocation2 + $0x110] sm:$0xff]
        %v1882 = vld [vmem:[#allocation2 + $0x118] sm:$0xff]
        %v1883 = vld [vmem:[#allocation2 + $0x120] sm:$0xff]
        %v1884 = vld [vmem:[#allocation2 + $0x128] sm:$0xff]
        %v1885 = vld [vmem:[#allocation2 + $0x130] sm:$0xff]
        %v1886 = vld [vmem:[#allocation2 + $0x138] sm:$0xff]
        %v1887 = vld [vmem:[#allocation2 + $0x140] sm:$0xff]
        %v1888 = vld [vmem:[#allocation2 + $0x148] sm:$0xff]
        %v1889 = vld [vmem:[#allocation2 + $0x150] sm:$0xff]
        %v1890 = vld [vmem:[#allocation2 + $0x158] sm:$0xff]
        %v1891 = vld [vmem:[#allocation2 + $0x160] sm:$0xff]
        %v1892 = vld [vmem:[#allocation2 + $0x168] sm:$0xff]
        %v1893 = vld [vmem:[#allocation2 + $0x170] sm:$0xff]
        %v1894 = vld [vmem:[#allocation2 + $0x178] sm:$0xff]
        %v1895 = vld [vmem:[#allocation2 + $0x180] sm:$0xff]
        %v1896 = vld [vmem:[#allocation2 + $0x188] sm:$0xff]
        %v1897 = vld [vmem:[#allocation2 + $0x190] sm:$0xff]
        %v1898 = vld [vmem:[#allocation2 + $0x198] sm:$0xff]
        %v1899 = vld [vmem:[#allocation2 + $0x1a0] sm:$0xff]
        %v1900 = vld [vmem:[#allocation2 + $0x1a8] sm:$0xff]
        %v1901 = vld [vmem:[#allocation2 + $0x1b0] sm:$0xff]
        %v1902 = vld [vmem:[#allocation2 + $0x1b8] sm:$0xff]
        %v1903 = vld [vmem:[#allocation2 + $0x1c0] sm:$0xff]
        %v1904 = vld [vmem:[#allocation2 + $0x1c8] sm:$0xff]
        %v1905 = vld [vmem:[#allocation2 + $0x1d0] sm:$0xff]
        %v1906 = vld [vmem:[#allocation2 + $0x1d8] sm:$0xff]
        %v1907 = vld [vmem:[#allocation2 + $0x1e0] sm:$0xff]
        %v1908 = vld [vmem:[#allocation2 + $0x1e8] sm:$0xff]
        %v1909 = vld [vmem:[#allocation2 + $0x1f0] sm:$0xff]
        %v1910 = vld [vmem:[#allocation2 + $0x1f8] sm:$0xff]
        %v1911 = vld [vmem:[#allocation2 + $0x200] sm:$0xff]
        %v1912 = vld [vmem:[#allocation2 + $0x208] sm:$0xff]
        %v1913 = vld [vmem:[#allocation2 + $0x210] sm:$0xff]
        %v1914 = vld [vmem:[#allocation2 + $0x218] sm:$0xff]
        %v1915 = vld [vmem:[#allocation2 + $0x220] sm:$0xff]
        %v1916 = vld [vmem:[#allocation2 + $0x228] sm:$0xff]
        %v1917 = vld [vmem:[#allocation2 + $0x230] sm:$0xff]
        %v1918 = vld [vmem:[#allocation2 + $0x238] sm:$0xff]
        %v1919 = vld [vmem:[#allocation2 + $0x240] sm:$0xff]
        %v1920 = vld [vmem:[#allocation2 + $0x248] sm:$0xff]
        %v1921 = vld [vmem:[#allocation2 + $0x250] sm:$0xff]
        %v1922 = vld [vmem:[#allocation2 + $0x258] sm:$0xff]
        %v1923 = vld [vmem:[#allocation2 + $0x260] sm:$0xff]
        %v1924 = vld [vmem:[#allocation2 + $0x268] sm:$0xff]
        %v1925 = vld [vmem:[#allocation2 + $0x270] sm:$0xff]
        %v1926 = vld [vmem:[#allocation2 + $0x278] sm:$0xff]
        %v1927 = vld [vmem:[#allocation2 + $0x280] sm:$0xff]
        %v1928 = vld [vmem:[#allocation2 + $0x288] sm:$0xff]
        %v1929 = vld [vmem:[#allocation2 + $0x290] sm:$0xff]
        %v1930 = vld [vmem:[#allocation2 + $0x298] sm:$0xff]
        %v1931 = vld [vmem:[#allocation2 + $0x2a0] sm:$0xff]
        %v1932 = vld [vmem:[#allocation2 + $0x2a8] sm:$0xff]
        %v1933 = vld [vmem:[#allocation2 + $0x2b0] sm:$0xff]
        %v1934 = vld [vmem:[#allocation2 + $0x2b8] sm:$0xff]
        %v1935 = vld [vmem:[#allocation2 + $0x2c0] sm:$0xff]
        %v1936 = vld [vmem:[#allocation2 + $0x2c8] sm:$0xff]
        %v1937 = vld [vmem:[#allocation2 + $0x2d0] sm:$0xff]
        %v1938 = vld [vmem:[#allocation2 + $0x2d8] sm:$0xff]
        %v1939 = vld [vmem:[#allocation2 + $0x2e0] sm:$0xff]
        %v1940 = vld [vmem:[#allocation2 + $0x2e8] sm:$0xff]
        %v1941 = vld [vmem:[#allocation2 + $0x2f0] sm:$0xff]
        %v1942 = vld [vmem:[#allocation2 + $0x2f8] sm:$0xff]
        %v1943 = vld [vmem:[#allocation2 + $0x300] sm:$0xff]
        %v1944 = vld [vmem:[#allocation2 + $0x308] sm:$0xff]
        %v1945 = vld [vmem:[#allocation2 + $0x310] sm:$0xff]
        %v1946 = vld [vmem:[#allocation2 + $0x318] sm:$0xff]
        %v1947 = vld [vmem:[#allocation2 + $0x320] sm:$0xff]
        %v1948 = vld [vmem:[#allocation2 + $0x328] sm:$0xff]
        %v1949 = vld [vmem:[#allocation2 + $0x330] sm:$0xff]
        %v1950 = vld [vmem:[#allocation2 + $0x338] sm:$0xff]
        %v1951 = vld [vmem:[#allocation2 + $0x340] sm:$0xff]
        %v1952 = vld [vmem:[#allocation2 + $0x348] sm:$0xff]
        %v1953 = vld [vmem:[#allocation2 + $0x350] sm:$0xff]
        %v1954 = vld [vmem:[#allocation2 + $0x358] sm:$0xff]
        %v1955 = vld [vmem:[#allocation2 + $0x360] sm:$0xff]
        %v1956 = vld [vmem:[#allocation2 + $0x368] sm:$0xff]
        %v1957 = vld [vmem:[#allocation2 + $0x370] sm:$0xff]
        %v1958 = vld [vmem:[#allocation2 + $0x378] sm:$0xff]
        %v1959 = vld [vmem:[#allocation2 + $0x380] sm:$0xff]
        %v1960 = vld [vmem:[#allocation2 + $0x388] sm:$0xff]
        %v1961 = vld [vmem:[#allocation2 + $0x390] sm:$0xff]
        %v1962 = vld [vmem:[#allocation2 + $0x398] sm:$0xff]
        %v1963 = vld [vmem:[#allocation2 + $0x3a0] sm:$0xff]
        %v1964 = vld [vmem:[#allocation2 + $0x3a8] sm:$0xff]
        %v1965 = vld [vmem:[#allocation2 + $0x3b0] sm:$0xff]
        %v1966 = vld [vmem:[#allocation2 + $0x3b8] sm:$0xff]
        %v1967 = vld [vmem:[#allocation2 + $0x3c0] sm:$0xff]
        %v1968 = vld [vmem:[#allocation2 + $0x3c8] sm:$0xff]
        %v1969 = vld [vmem:[#allocation2 + $0x3d0] sm:$0xff]
        %v1970 = vld [vmem:[#allocation2 + $0x3d8] sm:$0xff]
        %v1971 = vld [vmem:[#allocation2 + $0x3e0] sm:$0xff]
        %v1972 = vld [vmem:[#allocation2 + $0x3e8] sm:$0xff]
        %v1973 = vld [vmem:[#allocation2 + $0x3f0] sm:$0xff]
        %v1974 = vld [vmem:[#allocation2 + $0x3f8] sm:$0xff]
        %1975 = vst [vmem:[%s232] sm:$0xff] %v1847
        %1976 = vst [vmem:[%s232 + $0x8] sm:$0xff] %v1848
        %1977 = vst [vmem:[%s232 + $0x10] sm:$0xff] %v1849
        %1978 = vst [vmem:[%s232 + $0x18] sm:$0xff] %v1850
        %1979 = vst [vmem:[%s232 + $0x20] sm:$0xff] %v1851
        %1980 = vst [vmem:[%s232 + $0x28] sm:$0xff] %v1852
        %1981 = vst [vmem:[%s232 + $0x30] sm:$0xff] %v1853
        %1982 = vst [vmem:[%s232 + $0x38] sm:$0xff] %v1854
        %1983 = vst [vmem:[%s232 + $0x40] sm:$0xff] %v1855
        %1984 = vst [vmem:[%s232 + $0x48] sm:$0xff] %v1856
        %1985 = vst [vmem:[%s232 + $0x50] sm:$0xff] %v1857
        %1986 = vst [vmem:[%s232 + $0x58] sm:$0xff] %v1858
        %1987 = vst [vmem:[%s232 + $0x60] sm:$0xff] %v1859
        %1988 = vst [vmem:[%s232 + $0x68] sm:$0xff] %v1860
        %1989 = vst [vmem:[%s232 + $0x70] sm:$0xff] %v1861
        %1990 = vst [vmem:[%s232 + $0x78] sm:$0xff] %v1862
        %1991 = vst [vmem:[%s232 + $0x80] sm:$0xff] %v1863
        %1992 = vst [vmem:[%s232 + $0x88] sm:$0xff] %v1864
        %1993 = vst [vmem:[%s232 + $0x90] sm:$0xff] %v1865
        %1994 = vst [vmem:[%s232 + $0x98] sm:$0xff] %v1866
        %1995 = vst [vmem:[%s232 + $0xa0] sm:$0xff] %v1867
        %1996 = vst [vmem:[%s232 + $0xa8] sm:$0xff] %v1868
        %1997 = vst [vmem:[%s232 + $0xb0] sm:$0xff] %v1869
        %1998 = vst [vmem:[%s232 + $0xb8] sm:$0xff] %v1870
        %1999 = vst [vmem:[%s232 + $0xc0] sm:$0xff] %v1871
        %2000 = vst [vmem:[%s232 + $0xc8] sm:$0xff] %v1872
        %2001 = vst [vmem:[%s232 + $0xd0] sm:$0xff] %v1873
        %2002 = vst [vmem:[%s232 + $0xd8] sm:$0xff] %v1874
        %2003 = vst [vmem:[%s232 + $0xe0] sm:$0xff] %v1875
        %2004 = vst [vmem:[%s232 + $0xe8] sm:$0xff] %v1876
        %2005 = vst [vmem:[%s232 + $0xf0] sm:$0xff] %v1877
        %2006 = vst [vmem:[%s232 + $0xf8] sm:$0xff] %v1878
        %2007 = vst [vmem:[%s232 + $0x100] sm:$0xff] %v1879
        %2008 = vst [vmem:[%s232 + $0x108] sm:$0xff] %v1880
        %2009 = vst [vmem:[%s232 + $0x110] sm:$0xff] %v1881
        %2010 = vst [vmem:[%s232 + $0x118] sm:$0xff] %v1882
        %2011 = vst [vmem:[%s232 + $0x120] sm:$0xff] %v1883
        %2012 = vst [vmem:[%s232 + $0x128] sm:$0xff] %v1884
        %2013 = vst [vmem:[%s232 + $0x130] sm:$0xff] %v1885
        %2014 = vst [vmem:[%s232 + $0x138] sm:$0xff] %v1886
        %2015 = vst [vmem:[%s232 + $0x140] sm:$0xff] %v1887
        %2016 = vst [vmem:[%s232 + $0x148] sm:$0xff] %v1888
        %2017 = vst [vmem:[%s232 + $0x150] sm:$0xff] %v1889
        %2018 = vst [vmem:[%s232 + $0x158] sm:$0xff] %v1890
        %2019 = vst [vmem:[%s232 + $0x160] sm:$0xff] %v1891
        %2020 = vst [vmem:[%s232 + $0x168] sm:$0xff] %v1892
        %2021 = vst [vmem:[%s232 + $0x170] sm:$0xff] %v1893
        %2022 = vst [vmem:[%s232 + $0x178] sm:$0xff] %v1894
        %2023 = vst [vmem:[%s232 + $0x180] sm:$0xff] %v1895
        %2024 = vst [vmem:[%s232 + $0x188] sm:$0xff] %v1896
        %2025 = vst [vmem:[%s232 + $0x190] sm:$0xff] %v1897
        %2026 = vst [vmem:[%s232 + $0x198] sm:$0xff] %v1898
        %2027 = vst [vmem:[%s232 + $0x1a0] sm:$0xff] %v1899
        %2028 = vst [vmem:[%s232 + $0x1a8] sm:$0xff] %v1900
        %2029 = vst [vmem:[%s232 + $0x1b0] sm:$0xff] %v1901
        %2030 = vst [vmem:[%s232 + $0x1b8] sm:$0xff] %v1902
        %2031 = vst [vmem:[%s232 + $0x1c0] sm:$0xff] %v1903
        %2032 = vst [vmem:[%s232 + $0x1c8] sm:$0xff] %v1904
        %2033 = vst [vmem:[%s232 + $0x1d0] sm:$0xff] %v1905
        %2034 = vst [vmem:[%s232 + $0x1d8] sm:$0xff] %v1906
        %2035 = vst [vmem:[%s232 + $0x1e0] sm:$0xff] %v1907
        %2036 = vst [vmem:[%s232 + $0x1e8] sm:$0xff] %v1908
        %2037 = vst [vmem:[%s232 + $0x1f0] sm:$0xff] %v1909
        %2038 = vst [vmem:[%s232 + $0x1f8] sm:$0xff] %v1910
        %2039 = vst [vmem:[%s232 + $0x200] sm:$0xff] %v1911
        %2040 = vst [vmem:[%s232 + $0x208] sm:$0xff] %v1912
        %2041 = vst [vmem:[%s232 + $0x210] sm:$0xff] %v1913
        %2042 = vst [vmem:[%s232 + $0x218] sm:$0xff] %v1914
        %2043 = vst [vmem:[%s232 + $0x220] sm:$0xff] %v1915
        %2044 = vst [vmem:[%s232 + $0x228] sm:$0xff] %v1916
        %2045 = vst [vmem:[%s232 + $0x230] sm:$0xff] %v1917
        %2046 = vst [vmem:[%s232 + $0x238] sm:$0xff] %v1918
        %2047 = vst [vmem:[%s232 + $0x240] sm:$0xff] %v1919
        %2048 = vst [vmem:[%s232 + $0x248] sm:$0xff] %v1920
        %2049 = vst [vmem:[%s232 + $0x250] sm:$0xff] %v1921
        %2050 = vst [vmem:[%s232 + $0x258] sm:$0xff] %v1922
        %2051 = vst [vmem:[%s232 + $0x260] sm:$0xff] %v1923
        %2052 = vst [vmem:[%s232 + $0x268] sm:$0xff] %v1924
        %2053 = vst [vmem:[%s232 + $0x270] sm:$0xff] %v1925
        %2054 = vst [vmem:[%s232 + $0x278] sm:$0xff] %v1926
        %2055 = vst [vmem:[%s232 + $0x280] sm:$0xff] %v1927
        %2056 = vst [vmem:[%s232 + $0x288] sm:$0xff] %v1928
        %2057 = vst [vmem:[%s232 + $0x290] sm:$0xff] %v1929
        %2058 = vst [vmem:[%s232 + $0x298] sm:$0xff] %v1930
        %2059 = vst [vmem:[%s232 + $0x2a0] sm:$0xff] %v1931
        %2060 = vst [vmem:[%s232 + $0x2a8] sm:$0xff] %v1932
        %2061 = vst [vmem:[%s232 + $0x2b0] sm:$0xff] %v1933
        %2062 = vst [vmem:[%s232 + $0x2b8] sm:$0xff] %v1934
        %2063 = vst [vmem:[%s232 + $0x2c0] sm:$0xff] %v1935
        %2064 = vst [vmem:[%s232 + $0x2c8] sm:$0xff] %v1936
        %2065 = vst [vmem:[%s232 + $0x2d0] sm:$0xff] %v1937
        %2066 = vst [vmem:[%s232 + $0x2d8] sm:$0xff] %v1938
        %2067 = vst [vmem:[%s232 + $0x2e0] sm:$0xff] %v1939
        %2068 = vst [vmem:[%s232 + $0x2e8] sm:$0xff] %v1940
        %2069 = vst [vmem:[%s232 + $0x2f0] sm:$0xff] %v1941
        %2070 = vst [vmem:[%s232 + $0x2f8] sm:$0xff] %v1942
        %2071 = vst [vmem:[%s232 + $0x300] sm:$0xff] %v1943
        %2072 = vst [vmem:[%s232 + $0x308] sm:$0xff] %v1944
        %2073 = vst [vmem:[%s232 + $0x310] sm:$0xff] %v1945
        %2074 = vst [vmem:[%s232 + $0x318] sm:$0xff] %v1946
        %2075 = vst [vmem:[%s232 + $0x320] sm:$0xff] %v1947
        %2076 = vst [vmem:[%s232 + $0x328] sm:$0xff] %v1948
        %2077 = vst [vmem:[%s232 + $0x330] sm:$0xff] %v1949
        %2078 = vst [vmem:[%s232 + $0x338] sm:$0xff] %v1950
        %2079 = vst [vmem:[%s232 + $0x340] sm:$0xff] %v1951
        %2080 = vst [vmem:[%s232 + $0x348] sm:$0xff] %v1952
        %2081 = vst [vmem:[%s232 + $0x350] sm:$0xff] %v1953
        %2082 = vst [vmem:[%s232 + $0x358] sm:$0xff] %v1954
        %2083 = vst [vmem:[%s232 + $0x360] sm:$0xff] %v1955
        %2084 = vst [vmem:[%s232 + $0x368] sm:$0xff] %v1956
        %2085 = vst [vmem:[%s232 + $0x370] sm:$0xff] %v1957
        %2086 = vst [vmem:[%s232 + $0x378] sm:$0xff] %v1958
        %2087 = vst [vmem:[%s232 + $0x380] sm:$0xff] %v1959
        %2088 = vst [vmem:[%s232 + $0x388] sm:$0xff] %v1960
        %2089 = vst [vmem:[%s232 + $0x390] sm:$0xff] %v1961
        %2090 = vst [vmem:[%s232 + $0x398] sm:$0xff] %v1962
        %2091 = vst [vmem:[%s232 + $0x3a0] sm:$0xff] %v1963
        %2092 = vst [vmem:[%s232 + $0x3a8] sm:$0xff] %v1964
        %2093 = vst [vmem:[%s232 + $0x3b0] sm:$0xff] %v1965
        %2094 = vst [vmem:[%s232 + $0x3b8] sm:$0xff] %v1966
        %2095 = vst [vmem:[%s232 + $0x3c0] sm:$0xff] %v1967
        %2096 = vst [vmem:[%s232 + $0x3c8] sm:$0xff] %v1968
        %2097 = vst [vmem:[%s232 + $0x3d0] sm:$0xff] %v1969
        %2098 = vst [vmem:[%s232 + $0x3d8] sm:$0xff] %v1970
        %2099 = vst [vmem:[%s232 + $0x3e0] sm:$0xff] %v1971
        %2100 = vst [vmem:[%s232 + $0x3e8] sm:$0xff] %v1972
        %2101 = vst [vmem:[%s232 + $0x3f0] sm:$0xff] %v1973
        %2102 = vst [vmem:[%s232 + $0x3f8] sm:$0xff] %v1974
        %v2103 = vadd.f32 %v1847, %v1848
        %v2104 = vadd.f32 %v2103, %v1849
        %v2105 = vadd.f32 %v2104, %v1850
        %v2106 = vadd.f32 %v2105, %v1851
        %v2107 = vadd.f32 %v2106, %v1852
        %v2108 = vadd.f32 %v2107, %v1853
        %v2109 = vadd.f32 %v2108, %v1854
        %v2110 = vadd.f32 %v2109, %v1855
        %v2111 = vadd.f32 %v2110, %v1856
        %v2112 = vadd.f32 %v2111, %v1857
        %v2113 = vadd.f32 %v2112, %v1858
        %v2114 = vadd.f32 %v2113, %v1859
        %v2115 = vadd.f32 %v2114, %v1860
        %v2116 = vadd.f32 %v2115, %v1861
        %v2117 = vadd.f32 %v2116, %v1862
        %v2118 = vadd.f32 %v2117, %v1863
        %v2119 = vadd.f32 %v2118, %v1864
        %v2120 = vadd.f32 %v2119, %v1865
        %v2121 = vadd.f32 %v2120, %v1866
        %v2122 = vadd.f32 %v2121, %v1867
        %v2123 = vadd.f32 %v2122, %v1868
        %v2124 = vadd.f32 %v2123, %v1869
        %v2125 = vadd.f32 %v2124, %v1870
        %v2126 = vadd.f32 %v2125, %v1871
        %v2127 = vadd.f32 %v2126, %v1872
        %v2128 = vadd.f32 %v2127, %v1873
        %v2129 = vadd.f32 %v2128, %v1874
        %v2130 = vadd.f32 %v2129, %v1875
        %v2131 = vadd.f32 %v2130, %v1876
        %v2132 = vadd.f32 %v2131, %v1877
        %v2133 = vadd.f32 %v2132, %v1878
        %v2134 = vadd.f32 %v2133, %v1879
        %v2135 = vadd.f32 %v2134, %v1880
        %v2136 = vadd.f32 %v2135, %v1881
        %v2137 = vadd.f32 %v2136, %v1882
        %v2138 = vadd.f32 %v2137, %v1883
        %v2139 = vadd.f32 %v2138, %v1884
        %v2140 = vadd.f32 %v2139, %v1885
        %v2141 = vadd.f32 %v2140, %v1886
        %v2142 = vadd.f32 %v2141, %v1887
        %v2143 = vadd.f32 %v2142, %v1888
        %v2144 = vadd.f32 %v2143, %v1889
        %v2145 = vadd.f32 %v2144, %v1890
        %v2146 = vadd.f32 %v2145, %v1891
        %v2147 = vadd.f32 %v2146, %v1892
        %v2148 = vadd.f32 %v2147, %v1893
        %v2149 = vadd.f32 %v2148, %v1894
        %v2150 = vadd.f32 %v2149, %v1895
        %v2151 = vadd.f32 %v2150, %v1896
        %v2152 = vadd.f32 %v2151, %v1897
        %v2153 = vadd.f32 %v2152, %v1898
        %v2154 = vadd.f32 %v2153, %v1899
        %v2155 = vadd.f32 %v2154, %v1900
        %v2156 = vadd.f32 %v2155, %v1901
        %v2157 = vadd.f32 %v2156, %v1902
        %v2158 = vadd.f32 %v2157, %v1903
        %v2159 = vadd.f32 %v2158, %v1904
        %v2160 = vadd.f32 %v2159, %v1905
        %v2161 = vadd.f32 %v2160, %v1906
        %v2162 = vadd.f32 %v2161, %v1907
        %v2163 = vadd.f32 %v2162, %v1908
        %v2164 = vadd.f32 %v2163, %v1909
        %v2165 = vadd.f32 %v2164, %v1910
        %v2166 = vadd.f32 %v2165, %v1911
        %v2167 = vadd.f32 %v2166, %v1912
        %v2168 = vadd.f32 %v2167, %v1913
        %v2169 = vadd.f32 %v2168, %v1914
        %v2170 = vadd.f32 %v2169, %v1915
        %v2171 = vadd.f32 %v2170, %v1916
        %v2172 = vadd.f32 %v2171, %v1917
        %v2173 = vadd.f32 %v2172, %v1918
        %v2174 = vadd.f32 %v2173, %v1919
        %v2175 = vadd.f32 %v2174, %v1920
        %v2176 = vadd.f32 %v2175, %v1921
        %v2177 = vadd.f32 %v2176, %v1922
        %v2178 = vadd.f32 %v2177, %v1923
        %v2179 = vadd.f32 %v2178, %v1924
        %v2180 = vadd.f32 %v2179, %v1925
        %v2181 = vadd.f32 %v2180, %v1926
        %v2182 = vadd.f32 %v2181, %v1927
        %v2183 = vadd.f32 %v2182, %v1928
        %v2184 = vadd.f32 %v2183, %v1929
        %v2185 = vadd.f32 %v2184, %v1930
        %v2186 = vadd.f32 %v2185, %v1931
        %v2187 = vadd.f32 %v2186, %v1932
        %v2188 = vadd.f32 %v2187, %v1933
        %v2189 = vadd.f32 %v2188, %v1934
        %v2190 = vadd.f32 %v2189, %v1935
        %v2191 = vadd.f32 %v2190, %v1936
        %v2192 = vadd.f32 %v2191, %v1937
        %v2193 = vadd.f32 %v2192, %v1938
        %v2194 = vadd.f32 %v2193, %v1939
        %v2195 = vadd.f32 %v2194, %v1940
        %v2196 = vadd.f32 %v2195, %v1941
        %v2197 = vadd.f32 %v2196, %v1942
        %v2198 = vadd.f32 %v2197, %v1943
        %v2199 = vadd.f32 %v2198, %v1944
        %v2200 = vadd.f32 %v2199, %v1945
        %v2201 = vadd.f32 %v2200, %v1946
        %v2202 = vadd.f32 %v2201, %v1947
        %v2203 = vadd.f32 %v2202, %v1948
        %v2204 = vadd.f32 %v2203, %v1949
        %v2205 = vadd.f32 %v2204, %v1950
        %v2206 = vadd.f32 %v2205, %v1951
        %v2207 = vadd.f32 %v2206, %v1952
        %v2208 = vadd.f32 %v2207, %v1953
        %v2209 = vadd.f32 %v2208, %v1954
        %v2210 = vadd.f32 %v2209, %v1955
        %v2211 = vadd.f32 %v2210, %v1956
        %v2212 = vadd.f32 %v2211, %v1957
        %v2213 = vadd.f32 %v2212, %v1958
        %v2214 = vadd.f32 %v2213, %v1959
        %v2215 = vadd.f32 %v2214, %v1960
        %v2216 = vadd.f32 %v2215, %v1961
        %v2217 = vadd.f32 %v2216, %v1962
        %v2218 = vadd.f32 %v2217, %v1963
        %v2219 = vadd.f32 %v2218, %v1964
        %v2220 = vadd.f32 %v2219, %v1965
        %v2221 = vadd.f32 %v2220, %v1966
        %v2222 = vadd.f32 %v2221, %v1967
        %v2223 = vadd.f32 %v2222, %v1968
        %v2224 = vadd.f32 %v2223, %v1969
        %v2225 = vadd.f32 %v2224, %v1970
        %v2226 = vadd.f32 %v2225, %v1971
        %v2227 = vadd.f32 %v2226, %v1972
        %v2228 = vadd.f32 %v2227, %v1973
        %v2229 = vadd.f32 %v2228, %v1974
        %v2230 = vrot.slane %v2229, 4
        %v2231 = vadd.f32 %v2229, %v2230
        %v2232 = vrot.slane %v2231, 2
        %v2233 = vadd.f32 %v2231, %v2232
        %v2234 = vrot.slane %v2233, 1
        %v2235 = vadd.f32 %v2233, %v2234
        %v2236 = vmul.f32 %v1847, %v1847
        %v2237 = vmul.f32 %v1848, %v1848
        %v2238 = vmul.f32 %v1849, %v1849
        %v2239 = vmul.f32 %v1850, %v1850
        %v2240 = vmul.f32 %v1851, %v1851
        %v2241 = vmul.f32 %v1852, %v1852
        %v2242 = vmul.f32 %v1853, %v1853
        %v2243 = vmul.f32 %v1854, %v1854
        %v2244 = vmul.f32 %v1855, %v1855
        %v2245 = vmul.f32 %v1856, %v1856
        %v2246 = vmul.f32 %v1857, %v1857
        %v2247 = vmul.f32 %v1858, %v1858
        %v2248 = vmul.f32 %v1859, %v1859
        %v2249 = vmul.f32 %v1860, %v1860
        %v2250 = vmul.f32 %v1861, %v1861
        %v2251 = vmul.f32 %v1862, %v1862
        %v2252 = vmul.f32 %v1863, %v1863
        %v2253 = vmul.f32 %v1864, %v1864
        %v2254 = vmul.f32 %v1865, %v1865
        %v2255 = vmul.f32 %v1866, %v1866
        %v2256 = vmul.f32 %v1867, %v1867
        %v2257 = vmul.f32 %v1868, %v1868
        %v2258 = vmul.f32 %v1869, %v1869
        %v2259 = vmul.f32 %v1870, %v1870
        %v2260 = vmul.f32 %v1871, %v1871
        %v2261 = vmul.f32 %v1872, %v1872
        %v2262 = vmul.f32 %v1873, %v1873
        %v2263 = vmul.f32 %v1874, %v1874
        %v2264 = vmul.f32 %v1875, %v1875
        %v2265 = vmul.f32 %v1876, %v1876
        %v2266 = vmul.f32 %v1877, %v1877
        %v2267 = vmul.f32 %v1878, %v1878
        %v2268 = vmul.f32 %v1879, %v1879
        %v2269 = vmul.f32 %v1880, %v1880
        %v2270 = vmul.f32 %v1881, %v1881
        %v2271 = vmul.f32 %v1882, %v1882
        %v2272 = vmul.f32 %v1883, %v1883
        %v2273 = vmul.f32 %v1884, %v1884
        %v2274 = vmul.f32 %v1885, %v1885
        %v2275 = vmul.f32 %v1886, %v1886
        %v2276 = vmul.f32 %v1887, %v1887
        %v2277 = vmul.f32 %v1888, %v1888
        %v2278 = vmul.f32 %v1889, %v1889
        %v2279 = vmul.f32 %v1890, %v1890
        %v2280 = vmul.f32 %v1891, %v1891
        %v2281 = vmul.f32 %v1892, %v1892
        %v2282 = vmul.f32 %v1893, %v1893
        %v2283 = vmul.f32 %v1894, %v1894
        %v2284 = vmul.f32 %v1895, %v1895
        %v2285 = vmul.f32 %v1896, %v1896
        %v2286 = vmul.f32 %v1897, %v1897
        %v2287 = vmul.f32 %v1898, %v1898
        %v2288 = vmul.f32 %v1899, %v1899
        %v2289 = vmul.f32 %v1900, %v1900
        %v2290 = vmul.f32 %v1901, %v1901
        %v2291 = vmul.f32 %v1902, %v1902
        %v2292 = vmul.f32 %v1903, %v1903
        %v2293 = vmul.f32 %v1904, %v1904
        %v2294 = vmul.f32 %v1905, %v1905
        %v2295 = vmul.f32 %v1906, %v1906
        %v2296 = vmul.f32 %v1907, %v1907
        %v2297 = vmul.f32 %v1908, %v1908
        %v2298 = vmul.f32 %v1909, %v1909
        %v2299 = vmul.f32 %v1910, %v1910
        %v2300 = vmul.f32 %v1911, %v1911
        %v2301 = vmul.f32 %v1912, %v1912
        %v2302 = vmul.f32 %v1913, %v1913
        %v2303 = vmul.f32 %v1914, %v1914
        %v2304 = vmul.f32 %v1915, %v1915
        %v2305 = vmul.f32 %v1916, %v1916
        %v2306 = vmul.f32 %v1917, %v1917
        %v2307 = vmul.f32 %v1918, %v1918
        %v2308 = vmul.f32 %v1919, %v1919
        %v2309 = vmul.f32 %v1920, %v1920
        %v2310 = vmul.f32 %v1921, %v1921
        %v2311 = vmul.f32 %v1922, %v1922
        %v2312 = vmul.f32 %v1923, %v1923
        %v2313 = vmul.f32 %v1924, %v1924
        %v2314 = vmul.f32 %v1925, %v1925
        %v2315 = vmul.f32 %v1926, %v1926
        %v2316 = vmul.f32 %v1927, %v1927
        %v2317 = vmul.f32 %v1928, %v1928
        %v2318 = vmul.f32 %v1929, %v1929
        %v2319 = vmul.f32 %v1930, %v1930
        %v2320 = vmul.f32 %v1931, %v1931
        %v2321 = vmul.f32 %v1932, %v1932
        %v2322 = vmul.f32 %v1933, %v1933
        %v2323 = vmul.f32 %v1934, %v1934
        %v2324 = vmul.f32 %v1935, %v1935
        %v2325 = vmul.f32 %v1936, %v1936
        %v2326 = vmul.f32 %v1937, %v1937
        %v2327 = vmul.f32 %v1938, %v1938
        %v2328 = vmul.f32 %v1939, %v1939
        %v2329 = vmul.f32 %v1940, %v1940
        %v2330 = vmul.f32 %v1941, %v1941
        %v2331 = vmul.f32 %v1942, %v1942
        %v2332 = vmul.f32 %v1943, %v1943
        %v2333 = vmul.f32 %v1944, %v1944
        %v2334 = vmul.f32 %v1945, %v1945
        %v2335 = vmul.f32 %v1946, %v1946
        %v2336 = vmul.f32 %v1947, %v1947
        %v2337 = vmul.f32 %v1948, %v1948
        %v2338 = vmul.f32 %v1949, %v1949
        %v2339 = vmul.f32 %v1950, %v1950
        %v2340 = vmul.f32 %v1951, %v1951
        %v2341 = vmul.f32 %v1952, %v1952
        %v2342 = vmul.f32 %v1953, %v1953
        %v2343 = vmul.f32 %v1954, %v1954
        %v2344 = vmul.f32 %v1955, %v1955
        %v2345 = vmul.f32 %v1956, %v1956
        %v2346 = vmul.f32 %v1957, %v1957
        %v2347 = vmul.f32 %v1958, %v1958
        %v2348 = vmul.f32 %v1959, %v1959
        %v2349 = vmul.f32 %v1960, %v1960
        %v2350 = vmul.f32 %v1961, %v1961
        %v2351 = vmul.f32 %v1962, %v1962
        %v2352 = vmul.f32 %v1963, %v1963
        %v2353 = vmul.f32 %v1964, %v1964
        %v2354 = vmul.f32 %v1965, %v1965
        %v2355 = vmul.f32 %v1966, %v1966
        %v2356 = vmul.f32 %v1967, %v1967
        %v2357 = vmul.f32 %v1968, %v1968
        %v2358 = vmul.f32 %v1969, %v1969
        %v2359 = vmul.f32 %v1970, %v1970
        %v2360 = vmul.f32 %v1971, %v1971
        %v2361 = vmul.f32 %v1972, %v1972
        %v2362 = vmul.f32 %v1973, %v1973
        %v2363 = vmul.f32 %v1974, %v1974
        %v2364 = vadd.f32 %v2236, %v2237
        %v2365 = vadd.f32 %v2364, %v2238
        %v2366 = vadd.f32 %v2365, %v2239
        %v2367 = vadd.f32 %v2366, %v2240
        %v2368 = vadd.f32 %v2367, %v2241
        %v2369 = vadd.f32 %v2368, %v2242
        %v2370 = vadd.f32 %v2369, %v2243
        %v2371 = vadd.f32 %v2370, %v2244
        %v2372 = vadd.f32 %v2371, %v2245
        %v2373 = vadd.f32 %v2372, %v2246
        %v2374 = vadd.f32 %v2373, %v2247
        %v2375 = vadd.f32 %v2374, %v2248
        %v2376 = vadd.f32 %v2375, %v2249
        %v2377 = vadd.f32 %v2376, %v2250
        %v2378 = vadd.f32 %v2377, %v2251
        %v2379 = vadd.f32 %v2378, %v2252
        %v2380 = vadd.f32 %v2379, %v2253
        %v2381 = vadd.f32 %v2380, %v2254
        %v2382 = vadd.f32 %v2381, %v2255
        %v2383 = vadd.f32 %v2382, %v2256
        %v2384 = vadd.f32 %v2383, %v2257
        %v2385 = vadd.f32 %v2384, %v2258
        %v2386 = vadd.f32 %v2385, %v2259
        %v2387 = vadd.f32 %v2386, %v2260
        %v2388 = vadd.f32 %v2387, %v2261
        %v2389 = vadd.f32 %v2388, %v2262
        %v2390 = vadd.f32 %v2389, %v2263
        %v2391 = vadd.f32 %v2390, %v2264
        %v2392 = vadd.f32 %v2391, %v2265
        %v2393 = vadd.f32 %v2392, %v2266
        %v2394 = vadd.f32 %v2393, %v2267
        %v2395 = vadd.f32 %v2394, %v2268
        %v2396 = vadd.f32 %v2395, %v2269
        %v2397 = vadd.f32 %v2396, %v2270
        %v2398 = vadd.f32 %v2397, %v2271
        %v2399 = vadd.f32 %v2398, %v2272
        %v2400 = vadd.f32 %v2399, %v2273
        %v2401 = vadd.f32 %v2400, %v2274
        %v2402 = vadd.f32 %v2401, %v2275
        %v2403 = vadd.f32 %v2402, %v2276
        %v2404 = vadd.f32 %v2403, %v2277
        %v2405 = vadd.f32 %v2404, %v2278
        %v2406 = vadd.f32 %v2405, %v2279
        %v2407 = vadd.f32 %v2406, %v2280
        %v2408 = vadd.f32 %v2407, %v2281
        %v2409 = vadd.f32 %v2408, %v2282
        %v2410 = vadd.f32 %v2409, %v2283
        %v2411 = vadd.f32 %v2410, %v2284
        %v2412 = vadd.f32 %v2411, %v2285
        %v2413 = vadd.f32 %v2412, %v2286
        %v2414 = vadd.f32 %v2413, %v2287
        %v2415 = vadd.f32 %v2414, %v2288
        %v2416 = vadd.f32 %v2415, %v2289
        %v2417 = vadd.f32 %v2416, %v2290
        %v2418 = vadd.f32 %v2417, %v2291
        %v2419 = vadd.f32 %v2418, %v2292
        %v2420 = vadd.f32 %v2419, %v2293
        %v2421 = vadd.f32 %v2420, %v2294
        %v2422 = vadd.f32 %v2421, %v2295
        %v2423 = vadd.f32 %v2422, %v2296
        %v2424 = vadd.f32 %v2423, %v2297
        %v2425 = vadd.f32 %v2424, %v2298
        %v2426 = vadd.f32 %v2425, %v2299
        %v2427 = vadd.f32 %v2426, %v2300
        %v2428 = vadd.f32 %v2427, %v2301
        %v2429 = vadd.f32 %v2428, %v2302
        %v2430 = vadd.f32 %v2429, %v2303
        %v2431 = vadd.f32 %v2430, %v2304
        %v2432 = vadd.f32 %v2431, %v2305
        %v2433 = vadd.f32 %v2432, %v2306
        %v2434 = vadd.f32 %v2433, %v2307
        %v2435 = vadd.f32 %v2434, %v2308
        %v2436 = vadd.f32 %v2435, %v2309
        %v2437 = vadd.f32 %v2436, %v2310
        %v2438 = vadd.f32 %v2437, %v2311
        %v2439 = vadd.f32 %v2438, %v2312
        %v2440 = vadd.f32 %v2439, %v2313
        %v2441 = vadd.f32 %v2440, %v2314
        %v2442 = vadd.f32 %v2441, %v2315
        %v2443 = vadd.f32 %v2442, %v2316
        %v2444 = vadd.f32 %v2443, %v2317
        %v2445 = vadd.f32 %v2444, %v2318
        %v2446 = vadd.f32 %v2445, %v2319
        %v2447 = vadd.f32 %v2446, %v2320
        %v2448 = vadd.f32 %v2447, %v2321
        %v2449 = vadd.f32 %v2448, %v2322
        %v2450 = vadd.f32 %v2449, %v2323
        %v2451 = vadd.f32 %v2450, %v2324
        %v2452 = vadd.f32 %v2451, %v2325
        %v2453 = vadd.f32 %v2452, %v2326
        %v2454 = vadd.f32 %v2453, %v2327
        %v2455 = vadd.f32 %v2454, %v2328
        %v2456 = vadd.f32 %v2455, %v2329
        %v2457 = vadd.f32 %v2456, %v2330
        %v2458 = vadd.f32 %v2457, %v2331
        %v2459 = vadd.f32 %v2458, %v2332
        %v2460 = vadd.f32 %v2459, %v2333
        %v2461 = vadd.f32 %v2460, %v2334
        %v2462 = vadd.f32 %v2461, %v2335
        %v2463 = vadd.f32 %v2462, %v2336
        %v2464 = vadd.f32 %v2463, %v2337
        %v2465 = vadd.f32 %v2464, %v2338
        %v2466 = vadd.f32 %v2465, %v2339
        %v2467 = vadd.f32 %v2466, %v2340
        %v2468 = vadd.f32 %v2467, %v2341
        %v2469 = vadd.f32 %v2468, %v2342
        %v2470 = vadd.f32 %v2469, %v2343
        %v2471 = vadd.f32 %v2470, %v2344
        %v2472 = vadd.f32 %v2471, %v2345
        %v2473 = vadd.f32 %v2472, %v2346
        %v2474 = vadd.f32 %v2473, %v2347
        %v2475 = vadd.f32 %v2474, %v2348
        %v2476 = vadd.f32 %v2475, %v2349
        %v2477 = vadd.f32 %v2476, %v2350
        %v2478 = vadd.f32 %v2477, %v2351
        %v2479 = vadd.f32 %v2478, %v2352
        %v2480 = vadd.f32 %v2479, %v2353
        %v2481 = vadd.f32 %v2480, %v2354
        %v2482 = vadd.f32 %v2481, %v2355
        %v2483 = vadd.f32 %v2482, %v2356
        %v2484 = vadd.f32 %v2483, %v2357
        %v2485 = vadd.f32 %v2484, %v2358
        %v2486 = vadd.f32 %v2485, %v2359
        %v2487 = vadd.f32 %v2486, %v2360
        %v2488 = vadd.f32 %v2487, %v2361
        %v2489 = vadd.f32 %v2488, %v2362
        %v2490 = vadd.f32 %v2489, %v2363
        %v2491 = vrot.slane %v2490, 4
        %v2492 = vadd.f32 %v2490, %v2491
        %v2493 = vrot.slane %v2492, 2
        %v2494 = vadd.f32 %v2492, %v2493
        %v2495 = vrot.slane %v2494, 1
        %v2496 = vadd.f32 %v2494, %v2495
        %vm2497 = vcmask 1040384
        %v2498 = vsel %vm2497, %v2235, %v2496
        %vm2499 = vcmask 1041408
        %v2500 = vsel %vm2499, %v2498, 0.0
        %2501 = vst [vmem:[%s237] sm:$0xff] %v2500
      $region36: #{double_conv.6} parent=27 // pred_fallthru
        _
      %s2502 = smul.u32 128, %s19
      %p2503 = scmp.lt.s32.totalorder %s2502, 1023
      %s2504 = scalar_select %p2503, %s2502, 1023
      %s2505 = smul.addr %s2504, 8
      %s2506 = scalar_lea.vmem %s2, %s2505
      %p2507 = scmp.lt.s32.totalorder %s19, 7
      %s2508 = scalar_select %p2507, %s19, 7
      %s2509 = smul.addr %s2508, 8
      %s2510 = scalar_lea.vmem %s3, %s2509
      // Predicated region
      $region37: #{double_conv.6} parent=27 // pred_check
        %p2511 = pneg %p99
      $region38: #{double_conv.6} parent=27 // pred_check_branch
        %2513 = sbr.rel (%p2511) target = $region40
      $region39: #{double_conv.6} parent=27 // pred_region
        %s2514 = smul.u32 128, %s19
      $region40: #{double_conv.6} parent=27 // pred_fallthru
        _
      // Predicated region
      $region41: #{double_conv.6} parent=27 // pred_check
        %p2515 = pneg %p125
      $region42: #{double_conv.6} parent=27 // pred_check_branch
        %2517 = sbr.rel (%p2515) target = $region44
      $region43: #{double_conv.6} parent=27 // pred_region
        _
      $region44: #{double_conv.6} parent=27 // pred_fallthru
        _
    $region28: #{double_conv.6} parent=5 // pred_fallthru
      _
    %p2518 = scmp.le.s32.totalorder 2, %s10
    // Predicated region
    $region45: #{double_conv.6} parent=5 // pred_check
      %p2519 = pneg %p2518
    $region46: #{double_conv.6} parent=5 // pred_check_branch
      %2521 = sbr.rel (%p2519) target = $region48
    $region47: #{double_conv.6} parent=5 // pred_region
      %s2522 = ssub.s32 %s10, 2
      // Predicated region
      $region49: #{double_conv.6} parent=47 // pred_check
        %p2523 = pneg %p105
      $region50: #{double_conv.6} parent=47 // pred_check_branch
        %2525 = sbr.rel (%p2523) target = $region52
      $region51: #{double_conv.6} parent=47 // pred_region
        %s2526 = smul.u32 128, %s21
        %p2527 = scmp.lt.s32.totalorder %s2526, 1023
        %s2528 = scalar_select %p2527, %s2526, 1023
        %s2529 = smul.addr %s2528, 8
        %s2530 = scalar_lea.vmem %s2, %s2529
      $region52: #{double_conv.6} parent=47 // pred_fallthru
        _
      // Predicated region
      $region53: #{double_conv.6} parent=47 // pred_check
        %p2531 = pneg %p131
      $region54: #{double_conv.6} parent=47 // pred_check_branch
        %2533 = sbr.rel (%p2531) target = $region56
      $region55: #{double_conv.6} parent=47 // pred_region
        %p2534 = scmp.lt.s32.totalorder %s21, 7
        %s2535 = scalar_select %p2534, %s21, 7
        %s2536 = smul.addr %s2535, 8
        %s2537 = scalar_lea.vmem %s3, %s2536
      $region56: #{double_conv.6} parent=47 // pred_fallthru
        _
    $region48: #{double_conv.6} parent=5 // pred_fallthru
      _
  $region6: #{double_conv.6} parent=0 // loop_footer
    %s14 = sadd.s32 1, %s10
  $region7: #{double_conv.6} parent=0 // loop_footer_branch
    %9 = sbr.rel target = $region3
  $region8: #{double_conv.6} parent=0 // loop_exit
    _

</llo_original>
